<compile_context>
chip_gen: v7x
topology: tpu7x:2x2x1
jax: 0.10.0
libtpu: 0.0.40
codegen_flags: <defaults>
</compile_context>

<pallas_src>
import jax
import jax.numpy as jnp
from jax import lax
from jax.experimental import pallas as pl
from jax.experimental.pallas import tpu as pltpu


def make_csp3_kernel(n, H, W, Cm_pad, shortcut=True):
    """Kernel for a CSP3Conv with `n` bottlenecks on an HxW image (flattened to HW)."""
    HW = H * W
    f32 = jnp.float32
    bf16 = jnp.bfloat16
    # tap index k = (dy+1)*3 + (dx+1) matches (ky, kx) row-major of the 3x3 weight
    OFFSETS = [(dy, dx) for dy in (-1, 0, 1) for dx in (-1, 0, 1)]

    def kernel(x_ref, w1_ref, b1_ref, w2_ref, b2_ref,
               wa_ref, ba_ref, wb_ref, bb_ref,
               w3a_ref, w3b_ref, b3_ref, o_ref, pad_ref):

        def silu(v):
            # exp + reciprocal both land on the EUP slot (frees VPU cycles)
            return v * pl.reciprocal(1.0 + jnp.exp(-v), approx=True)

        def dense(act_bf16, w_bf16, bias_f32):
            # bf16 operands, f32 accumulation; BN scale already folded into w.
            y = jnp.dot(act_bf16, w_bf16, preferred_element_type=f32)
            return silu(y + bias_f32)

        # Zero the padding rows of the im2col scratch once: rows [0, W) and
        # [W+HW, W+2W).  They provide SAME zero-padding at the row boundaries
        # for free; the middle rows are rewritten every bottleneck.
        pad_ref[:, pl.ds(0, W), :] = jnp.zeros((3, W, Cm_pad), bf16)
        pad_ref[:, pl.ds(W + HW, W), :] = jnp.zeros((3, W, Cm_pad), bf16)

        # cast the input once and reuse for cv1 and cv2
        xb = x_ref[...].astype(bf16)                          # (HW, Cin) bf16
        y1 = dense(xb, w1_ref[...], b1_ref[...])              # cv1 -> (HW, Cm_pad) f32
        # y2 is only ever a matmul operand -> keep it bf16 across the whole loop
        y2 = dense(xb, w2_ref[...], b2_ref[...]).astype(bf16)

        # hoisted column-boundary masks (only 2 needed with the padded-row trick)
        col = lax.broadcasted_iota(jnp.int32, (HW, 1), 0) % W
        col_lt = col < (W - 1)        # valid positions for the dx=+1 source
        col_gt = col > 0              # valid positions for the dx=-1 source

        def bottleneck(i, m):
            # bottleneck 1x1 conv-BN-SiLU
            h = dense(m.astype(bf16), wa_ref[i], ba_ref[i])   # (HW, Cm_pad) f32

            # fill the padded scratch rows [W, W+HW) with
            #   slot 0: h            (dx = 0)
            #   slot 1: h col +1     (dx = +1), col-masked
            #   slot 2: h col -1     (dx = -1), col-masked
            # rolls/selects stay f32 (v5e-safe); cast to bf16 at the store.
            pad_ref[0, pl.ds(W, HW), :] = h.astype(bf16)
            h_p = jnp.where(col_lt, pltpu.roll(h, shift=HW - 1, axis=0), 0.0)
            pad_ref[1, pl.ds(W, HW), :] = h_p.astype(bf16)
            h_m = jnp.where(col_gt, pltpu.roll(h, shift=1, axis=0), 0.0)
            pad_ref[2, pl.ds(W, HW), :] = h_m.astype(bf16)

            # 3x3 conv = 9 accumulating (HW,Cm)@(Cm,Cm) matmuls from static row
            # slices of the padded scratch (no (HW, 9*Cm) slab, no lane concat).
            acc = None
            for k, (dy, dx) in enumerate(OFFSETS):
                j = 0 if dx == 0 else (1 if dx == 1 else 2)
                tap = pad_ref[j, pl.ds(W + dy * W, HW), :]     # (HW, Cm_pad) bf16
                t = jnp.dot(tap, wb_ref[i * 9 + k], preferred_element_type=f32)
                acc = t if acc is None else acc + t
            yb = silu(acc + bb_ref[i])
            return m + yb if shortcut else yb

        m = lax.fori_loop(0, n, bottleneck, y1)

        # cv3 without the channel concat: two dots accumulate into one f32 result
        out = (jnp.dot(m.astype(bf16), w3a_ref[...], preferred_element_type=f32)
               + jnp.dot(y2, w3b_ref[...], preferred_element_type=f32)
               + b3_ref[...])
        o_ref[...] = silu(out).astype(o_ref.dtype)             # lane-dense store

    return kernel


def _const_spec(a):
    nd = a.ndim
    return pl.BlockSpec(a.shape, lambda b, _nd=nd: (0,) * _nd)


def _round_up(x, m):
    return ((x + m - 1) // m) * m


def _vmem_limit_bytes():
    # per-generation VMEM budget: ~100 MiB on 128-MiB parts (v5e/v6e),
    # <= ~48 MiB on 64-MiB parts (v7x-class); conservative fallback otherwise.
    try:
        cap = int(pltpu.get_tpu_info().vmem_capacity_bytes)
    except Exception:
        cap = 64 * 1024 * 1024
    if cap >= 128 * 1024 * 1024:
        return 100 * 1024 * 1024
    return min(cap * 3 // 4, 48 * 1024 * 1024)


def csp3conv_forward(x, params, n=1, shortcut=True):
    """x: (N, H, W, Cin) float32 NHWC.  Returns (N, H, W, Cout) float32."""
    N, H, W, Cin = x.shape
    HW = H * W
    bf16, f32 = jnp.bfloat16, jnp.float32

    w1, s1, t1 = params['cv1']
    w2, s2, t2 = params['cv2']
    w3, s3, t3 = params['cv3']
    Cm = w1.shape[1]
    Cout = w3.shape[1]
    # pad middle channels to a full MXU lane width (zero weights/biases -> padded
    # channels stay exactly 0 through SiLU and the residual adds)
    Cm_pad = _round_up(Cm, 128)
    Cout_pad = Cout if Cout % 128 == 0 else _round_up(Cout, 128)

    def pad2(a, r, c):
        return jnp.pad(a, ((0, r - a.shape[0]), (0, c - a.shape[1])))

    # --- host-side precompute: fold BN scale into weights, pad, cast to bf16 ---
    w1f = pad2(w1 * s1, Cin, Cm_pad).astype(bf16)
    w2f = pad2(w2 * s2, Cin, Cm_pad).astype(bf16)
    b1 = pad2(t1, 1, Cm_pad).astype(f32)
    b2 = pad2(t2, 1, Cm_pad).astype(f32)

    wa = jnp.stack([pad2(bp[0] * bp[1], Cm_pad, Cm_pad)
                    for bp in params['m']]).astype(bf16)             # (n, Cmp, Cmp)
    ba = jnp.stack([pad2(bp[2], 1, Cm_pad) for bp in params['m']]).astype(f32)
    wb = jnp.concatenate(
        [jnp.pad(bp[3] * bp[4],
                 ((0, 0), (0, 0), (0, Cm_pad - Cm), (0, Cm_pad - Cm))
                 ).reshape(9, Cm_pad, Cm_pad)
         for bp in params['m']], axis=0).astype(bf16)                # (n*9, Cmp, Cmp)
    bb = jnp.stack([pad2(bp[5], 1, Cm_pad) for bp in params['m']]).astype(f32)

    w3f = w3 * s3
    w3a = pad2(w3f[:Cm], Cm_pad, Cout_pad).astype(bf16)
    w3b = pad2(w3f[Cm:], Cm_pad, Cout_pad).astype(bf16)
    b3 = pad2(t3, 1, Cout_pad).astype(f32)

    x_flat = x.reshape(N, HW, Cin)                     # flatten in the wrapper

    flat = [w1f, b1, w2f, b2, wa, ba, wb, bb, w3a, w3b, b3]
    in_specs = [pl.BlockSpec((None, HW, Cin), lambda b: (b, 0, 0))]
    # Weight blocks are grid-invariant; Pallas skips re-DMA for a repeated block
    # index.  (Single-buffering them via pl.Buffered(1) is a further VMEM win but
    # is left at defaults here for compile safety.)
    in_specs += [_const_spec(a) for a in flat]

    out = pl.pallas_call(
        make_csp3_kernel(n, H, W, Cm_pad, shortcut),
        out_shape=jax.ShapeDtypeStruct((N, HW, Cout_pad), x.dtype),
        grid=(N,),
        in_specs=in_specs,
        out_specs=pl.BlockSpec((None, HW, Cout_pad), lambda b: (b, 0, 0)),
        scratch_shapes=[pltpu.VMEM((3, HW + 2 * W, Cm_pad), jnp.bfloat16)],
        compiler_params=pltpu.CompilerParams(
            dimension_semantics=("parallel",),
            vmem_limit_bytes=_vmem_limit_bytes()),
    )(x_flat, *flat)

    out = out.reshape(N, H, W, Cout_pad)
    if Cout_pad != Cout:
        out = out[..., :Cout]      # only pay the slice when Cout isn't lane-dense
    return out


def init_params(key, in_ch, out_ch, n=1, expansion=0.5):
    """Deterministic synthetic weights; BatchNorm represented as (scale, bias)."""
    cm = int(out_ch * expansion)
    keys = iter(jax.random.split(key, 64))

    def conv_p(ci, co):
        w = jax.random.normal(next(keys), (ci, co), jnp.float32) / jnp.sqrt(float(ci))
        s = 1.0 + 0.1 * jax.random.normal(next(keys), (1, co), jnp.float32)
        t = 0.1 * jax.random.normal(next(keys), (1, co), jnp.float32)
        return (w, s, t)

    def conv3_p(ci, co):
        w = jax.random.normal(next(keys), (3, 3, ci, co), jnp.float32) / jnp.sqrt(9.0 * ci)
        s = 1.0 + 0.1 * jax.random.normal(next(keys), (1, co), jnp.float32)
        t = 0.1 * jax.random.normal(next(keys), (1, co), jnp.float32)
        return (w, s, t)

    return {
        'cv1': conv_p(in_ch, cm),
        'cv2': conv_p(in_ch, cm),
        'm': [conv_p(cm, cm) + conv3_p(cm, cm) for _ in range(n)],
        'cv3': conv_p(2 * cm, out_ch),
    }


def ref_forward(x, params, n=1, shortcut=True):
    """Pure-JAX reference mirroring the kernel's precision (bf16 matmul operands,
    f32 accumulation, BN scale folded into the weights)."""
    bf16, f32 = jnp.bfloat16, jnp.float32

    def act(v):
        return v * jax.nn.sigmoid(v)

    def c1(v, p):
        w, s, t = p
        wf = (w * s).astype(bf16)
        y = jnp.einsum('nhwc,cd->nhwd', v.astype(bf16), wf, preferred_element_type=f32)
        return act(y + t[0])

    def c3(v, p):
        w, s, t = p
        wf = (w * s).astype(bf16)
        y = lax.conv_general_dilated(v.astype(bf16), wf, (1, 1), 'SAME',
                                     dimension_numbers=('NHWC', 'HWIO', 'NHWC'),
                                     preferred_element_type=f32)
        return act(y + t[0])

    y1 = c1(x, params['cv1'])
    y2 = c1(x, params['cv2'])
    m = y1
    for bp in params['m']:
        h = c3(c1(m, bp[0:3]), bp[3:6])
        m = m + h if shortcut else h
    return c1(jnp.concatenate([m, y2], axis=-1), params['cv3'])


if __name__ == "__main__":
    key = jax.random.PRNGKey(0)
    k1, k2, k3, k4 = jax.random.split(key, 4)

    # config 1: square image, 2 bottlenecks with shortcut
    N, H, W = 2, 16, 16
    in_ch, out_ch, n = 16, 16, 2          # c_middle = 8 (expansion=0.5)
    x = jax.random.normal(k1, (N, H, W, in_ch), jnp.float32)
    params = init_params(k2, in_ch, out_ch, n=n, expansion=0.5)
    out = jax.block_until_ready(csp3conv_forward(x, params, n=n, shortcut=True))
    ref = ref_forward(x, params, n=n, shortcut=True)
    err = float(jnp.max(jnp.abs(out - ref)))
    assert out.shape == (N, H, W, out_ch), out.shape
    assert err < 3e-2, f"config1 max abs err {err}"

    # config 2: non-square image (exercises the flattened-roll edge handling, H != W)
    N2, H2, W2 = 1, 16, 32
    in2, out2c, n2 = 8, 32, 1
    x2 = jax.random.normal(k3, (N2, H2, W2, in2), jnp.float32)
    params2 = init_params(k4, in2, out2c, n=n2, expansion=0.5)
    o2 = jax.block_until_ready(csp3conv_forward(x2, params2, n=n2, shortcut=True))
    r2 = ref_forward(x2, params2, n=n2, shortcut=True)
    err2 = float(jnp.max(jnp.abs(o2 - r2)))
    assert o2.shape == (N2, H2, W2, out2c), o2.shape
    assert err2 < 3e-2, f"config2 max abs err {err2}"

    print("KERNEL_OK")
</pallas_src>

<mosaic_0001>
module attributes {stable_mosaic.version = 11 : i64} {
  func.func @kernel(%arg0: i32, %arg1: memref<1x256x16xf32, #tpu.memory_space<vmem>>, %arg2: memref<16x128xbf16, #tpu.memory_space<vmem>>, %arg3: memref<1x128xf32, #tpu.memory_space<vmem>>, %arg4: memref<16x128xbf16, #tpu.memory_space<vmem>>, %arg5: memref<1x128xf32, #tpu.memory_space<vmem>>, %arg6: memref<2x128x128xbf16, #tpu.memory_space<vmem>>, %arg7: memref<2x1x128xf32, #tpu.memory_space<vmem>>, %arg8: memref<18x128x128xbf16, #tpu.memory_space<vmem>>, %arg9: memref<2x1x128xf32, #tpu.memory_space<vmem>>, %arg10: memref<128x128xbf16, #tpu.memory_space<vmem>>, %arg11: memref<128x128xbf16, #tpu.memory_space<vmem>>, %arg12: memref<1x128xf32, #tpu.memory_space<vmem>>, %arg13: memref<1x256x128xf32, #tpu.memory_space<vmem>>, %arg14: memref<3x288x128xbf16, #tpu.memory_space<vmem>>) attributes {dimension_semantics = [#tpu.dimension_semantics<parallel>], iteration_bounds = array<i64: 2>, scalar_prefetch = 0 : i64, scratch_operands = 1 : i64, tpu.core_type = #tpu.core_type<tc>, window_params = [{transform_indices = @transform_0, window_bounds = array<i64: 1, 256, 16>}, {pipeline_mode = #tpu.pipeline_mode<synchronous>, transform_indices = @transform_1, window_bounds = array<i64: 16, 128>}, {pipeline_mode = #tpu.pipeline_mode<synchronous>, transform_indices = @transform_2, window_bounds = array<i64: 1, 128>}, {pipeline_mode = #tpu.pipeline_mode<synchronous>, transform_indices = @transform_3, window_bounds = array<i64: 16, 128>}, {pipeline_mode = #tpu.pipeline_mode<synchronous>, transform_indices = @transform_4, window_bounds = array<i64: 1, 128>}, {pipeline_mode = #tpu.pipeline_mode<synchronous>, transform_indices = @transform_5, window_bounds = array<i64: 2, 128, 128>}, {pipeline_mode = #tpu.pipeline_mode<synchronous>, transform_indices = @transform_6, window_bounds = array<i64: 2, 1, 128>}, {pipeline_mode = #tpu.pipeline_mode<synchronous>, transform_indices = @transform_7, window_bounds = array<i64: 18, 128, 128>}, {pipeline_mode = #tpu.pipeline_mode<synchronous>, transform_indices = @transform_8, window_bounds = array<i64: 2, 1, 128>}, {pipeline_mode = #tpu.pipeline_mode<synchronous>, transform_indices = @transform_9, window_bounds = array<i64: 128, 128>}, {pipeline_mode = #tpu.pipeline_mode<synchronous>, transform_indices = @transform_10, window_bounds = array<i64: 128, 128>}, {pipeline_mode = #tpu.pipeline_mode<synchronous>, transform_indices = @transform_11, window_bounds = array<i64: 1, 128>}, {transform_indices = @transform_12, window_bounds = array<i64: 1, 256, 128>}]} {
    %cst = arith.constant 0.000000e+00 : bf16
    %0 = vector.broadcast %cst : bf16 to vector<3x16x128xbf16>
    %c0 = arith.constant 0 : index
    %c0_0 = arith.constant 0 : index
    %c0_1 = arith.constant 0 : index
    %1 = vector.load %arg14[%c0, %c0_0, %c0_1] : memref<3x288x128xbf16, #tpu.memory_space<vmem>>, vector<3x16x128xbf16>
    tpu.vector_store %arg14[%c0, %c0_0, %c0_1], %0 {strides = array<i32>} : memref<3x288x128xbf16, #tpu.memory_space<vmem>>, vector<3x16x128xbf16>,
    %cst_2 = arith.constant 0.000000e+00 : bf16
    %2 = vector.broadcast %cst_2 : bf16 to vector<3x16x128xbf16>
    %c0_3 = arith.constant 0 : index
    %c272 = arith.constant 272 : index
    %c0_4 = arith.constant 0 : index
    %3 = vector.load %arg14[%c0_3, %c272, %c0_4] : memref<3x288x128xbf16, #tpu.memory_space<vmem>>, vector<3x16x128xbf16>
    tpu.vector_store %arg14[%c0_3, %c272, %c0_4], %2 {strides = array<i32>} : memref<3x288x128xbf16, #tpu.memory_space<vmem>>, vector<3x16x128xbf16>,
    %c0_5 = arith.constant 0 : index
    %c0_6 = arith.constant 0 : index
    %c0_7 = arith.constant 0 : index
    %4 = vector.load %arg1[%c0_5, %c0_6, %c0_7] : memref<1x256x16xf32, #tpu.memory_space<vmem>>, vector<1x256x16xf32>
    %5 = vector.shape_cast %4 : vector<1x256x16xf32> to vector<256x16xf32>
    %6 = arith.truncf %5 : vector<256x16xf32> to vector<256x16xbf16>
    %c0_8 = arith.constant 0 : index
    %c0_9 = arith.constant 0 : index
    %7 = vector.load %arg2[%c0_8, %c0_9] : memref<16x128xbf16, #tpu.memory_space<vmem>>, vector<16x128xbf16>
    %c0_10 = arith.constant 0 : index
    %c0_11 = arith.constant 0 : index
    %8 = vector.load %arg3[%c0_10, %c0_11] : memref<1x128xf32, #tpu.memory_space<vmem>>, vector<1x128xf32>
    %cst_12 = arith.constant dense<0.000000e+00> : vector<256x128xf32>
    %9 = tpu.matmul %6, %7, %cst_12 {dimension_numbers = #tpu.dot_dimension_numbers<[1], [0], [0], [1], [0, 0, 1, 1], [], []>} : vector<256x16xbf16>, vector<16x128xbf16>, vector<256x128xf32> -> vector<256x128xf32>
    %10 = vector.broadcast %8 : vector<1x128xf32> to vector<256x128xf32>
    %11 = arith.addf %9, %10 : vector<256x128xf32>
    %cst_13 = arith.constant 0.000000e+00 : f32
    %12 = vector.broadcast %cst_13 : f32 to vector<256x128xf32>
    %13 = arith.subf %12, %11 : vector<256x128xf32>
    %14 = math.exp %13 : vector<256x128xf32>
    %cst_14 = arith.constant 1.000000e+00 : f32
    %15 = vector.broadcast %cst_14 : f32 to vector<256x128xf32>
    %16 = arith.addf %15, %14 : vector<256x128xf32>
    %17 = tpu.reciprocal %16 {approx = true} : vector<256x128xf32> -> vector<256x128xf32>
    %18 = arith.mulf %11, %17 : vector<256x128xf32>
    %c0_15 = arith.constant 0 : index
    %c0_16 = arith.constant 0 : index
    %19 = vector.load %arg4[%c0_15, %c0_16] : memref<16x128xbf16, #tpu.memory_space<vmem>>, vector<16x128xbf16>
    %c0_17 = arith.constant 0 : index
    %c0_18 = arith.constant 0 : index
    %20 = vector.load %arg5[%c0_17, %c0_18] : memref<1x128xf32, #tpu.memory_space<vmem>>, vector<1x128xf32>
    %cst_19 = arith.constant dense<0.000000e+00> : vector<256x128xf32>
    %21 = tpu.matmul %6, %19, %cst_19 {dimension_numbers = #tpu.dot_dimension_numbers<[1], [0], [0], [1], [0, 0, 1, 1], [], []>} : vector<256x16xbf16>, vector<16x128xbf16>, vector<256x128xf32> -> vector<256x128xf32>
    %22 = vector.broadcast %20 : vector<1x128xf32> to vector<256x128xf32>
    %23 = arith.addf %21, %22 : vector<256x128xf32>
    %cst_20 = arith.constant 0.000000e+00 : f32
    %24 = vector.broadcast %cst_20 : f32 to vector<256x128xf32>
    %25 = arith.subf %24, %23 : vector<256x128xf32>
    %26 = math.exp %25 : vector<256x128xf32>
    %cst_21 = arith.constant 1.000000e+00 : f32
    %27 = vector.broadcast %cst_21 : f32 to vector<256x128xf32>
    %28 = arith.addf %27, %26 : vector<256x128xf32>
    %29 = tpu.reciprocal %28 {approx = true} : vector<256x128xf32> -> vector<256x128xf32>
    %30 = arith.mulf %23, %29 : vector<256x128xf32>
    %31 = arith.truncf %30 : vector<256x128xf32> to vector<256x128xbf16>
    %32 = tpu.iota {dimensions = array<i32: 0>} : vector<256x1xi32>
    %c16_i32 = arith.constant 16 : i32
    %c0_i32 = arith.constant 0 : i32
    %33 = arith.cmpi eq, %c16_i32, %c0_i32 : i32
    %c1_i32 = arith.constant 1 : i32
    %34 = arith.select %33, %c1_i32, %c16_i32 : i32
    %35 = vector.broadcast %34 : i32 to vector<256x1xi32>
    %36 = arith.remsi %32, %35 : vector<256x1xi32>
    %c0_i32_22 = arith.constant 0 : i32
    %37 = vector.broadcast %c0_i32_22 : i32 to vector<256x1xi32>
    %38 = arith.cmpi ne, %36, %37 : vector<256x1xi32>
    %c0_i32_23 = arith.constant 0 : i32
    %39 = vector.broadcast %c0_i32_23 : i32 to vector<256x1xi32>
    %40 = arith.cmpi slt, %36, %39 : vector<256x1xi32>
    %c0_i32_24 = arith.constant 0 : i32
    %41 = arith.cmpi slt, %34, %c0_i32_24 : i32
    %42 = vector.broadcast %41 : i1 to vector<256x1xi1>
    %43 = vector.broadcast %42 : vector<256x1xi1> to vector<256x1xi1>
    %44 = arith.xori %40, %43 : vector<256x1xi1>
    %45 = arith.andi %44, %38 : vector<256x1xi1>
    %46 = vector.broadcast %34 : i32 to vector<256x1xi32>
    %47 = arith.addi %36, %46 : vector<256x1xi32>
    %48 = arith.select %45, %47, %36 : vector<256x1xi1>, vector<256x1xi32>
    %c15_i32 = arith.constant 15 : i32
    %49 = vector.broadcast %c15_i32 : i32 to vector<256x1xi32>
    %50 = arith.cmpi slt, %48, %49 : vector<256x1xi32>
    %c0_i32_25 = arith.constant 0 : i32
    %51 = vector.broadcast %c0_i32_25 : i32 to vector<256x1xi32>
    %52 = arith.cmpi sgt, %48, %51 : vector<256x1xi32>
    %c0_i32_26 = arith.constant 0 : i32
    %c2_i32 = arith.constant 2 : i32
    %53 = arith.addi %c0_i32_26, %c2_i32 : i32
    %c1_i32_27 = arith.constant 1 : i32
    %54 = scf.for %arg15 = %c0_i32_26 to %53 step %c1_i32_27 iter_args(%arg16 = %18) -> (vector<256x128xf32>)  : i32 {
      %74 = arith.truncf %arg16 : vector<256x128xf32> to vector<256x128xbf16>
      %75 = arith.index_cast %arg15 : i32 to index
      %c0_42 = arith.constant 0 : index
      %c0_43 = arith.constant 0 : index
      %76 = vector.load %arg6[%75, %c0_42, %c0_43] : memref<2x128x128xbf16, #tpu.memory_space<vmem>>, vector<1x128x128xbf16>
      %77 = vector.shape_cast %76 : vector<1x128x128xbf16> to vector<128x128xbf16>
      %78 = arith.index_cast %arg15 : i32 to index
      %c0_44 = arith.constant 0 : index
      %c0_45 = arith.constant 0 : index
      %79 = vector.load %arg7[%78, %c0_44, %c0_45] : memref<2x1x128xf32, #tpu.memory_space<vmem>>, vector<1x1x128xf32>
      %80 = vector.shape_cast %79 : vector<1x1x128xf32> to vector<1x128xf32>
      %cst_46 = arith.constant dense<0.000000e+00> : vector<256x128xf32>
      %81 = tpu.matmul %74, %77, %cst_46 {dimension_numbers = #tpu.dot_dimension_numbers<[1], [0], [0], [1], [0, 0, 1, 1], [], []>} : vector<256x128xbf16>, vector<128x128xbf16>, vector<256x128xf32> -> vector<256x128xf32>
      %82 = vector.broadcast %80 : vector<1x128xf32> to vector<256x128xf32>
      %83 = arith.addf %81, %82 : vector<256x128xf32>
      %cst_47 = arith.constant 0.000000e+00 : f32
      %84 = vector.broadcast %cst_47 : f32 to vector<256x128xf32>
      %85 = arith.subf %84, %83 : vector<256x128xf32>
      %86 = math.exp %85 : vector<256x128xf32>
      %cst_48 = arith.constant 1.000000e+00 : f32
      %87 = vector.broadcast %cst_48 : f32 to vector<256x128xf32>
      %88 = arith.addf %87, %86 : vector<256x128xf32>
      %89 = tpu.reciprocal %88 {approx = true} : vector<256x128xf32> -> vector<256x128xf32>
      %90 = arith.mulf %83, %89 : vector<256x128xf32>
      %91 = arith.truncf %90 : vector<256x128xf32> to vector<256x128xbf16>
      %c0_49 = arith.constant 0 : index
      %c16 = arith.constant 16 : index
      %c0_50 = arith.constant 0 : index
      %92 = vector.load %arg14[%c0_49, %c16, %c0_50] : memref<3x288x128xbf16, #tpu.memory_space<vmem>>, vector<1x256x128xbf16>
      %93 = vector.shape_cast %92 : vector<1x256x128xbf16> to vector<256x128xbf16>
      %94 = vector.shape_cast %91 : vector<256x128xbf16> to vector<1x256x128xbf16>
      tpu.vector_store %arg14[%c0_49, %c16, %c0_50], %94 {strides = array<i32>} : memref<3x288x128xbf16, #tpu.memory_space<vmem>>, vector<1x256x128xbf16>,
      %c255_i32 = arith.constant 255 : i32
      %95 = tpu.dynamic_rotate %90 by %c255_i32 dim 0 : vector<256x128xf32>, i32 -> vector<256x128xf32>
      %cst_51 = arith.constant 0.000000e+00 : f32
      %96 = vector.shape_cast %50 : vector<256x1xi1> to vector<256x1xi1>
      %97 = vector.broadcast %96 : vector<256x1xi1> to vector<256x128xi1>
      %98 = vector.broadcast %cst_51 : f32 to vector<256x128xf32>
      %99 = arith.select %97, %95, %98 : vector<256x128xi1>, vector<256x128xf32>
      %100 = arith.truncf %99 : vector<256x128xf32> to vector<256x128xbf16>
      %c1 = arith.constant 1 : index
      %c16_52 = arith.constant 16 : index
      %c0_53 = arith.constant 0 : index
      %101 = vector.load %arg14[%c1, %c16_52, %c0_53] : memref<3x288x128xbf16, #tpu.memory_space<vmem>>, vector<1x256x128xbf16>
      %102 = vector.shape_cast %101 : vector<1x256x128xbf16> to vector<256x128xbf16>
      %103 = vector.shape_cast %100 : vector<256x128xbf16> to vector<1x256x128xbf16>
      tpu.vector_store %arg14[%c1, %c16_52, %c0_53], %103 {strides = array<i32>} : memref<3x288x128xbf16, #tpu.memory_space<vmem>>, vector<1x256x128xbf16>,
      %c1_i32_54 = arith.constant 1 : i32
      %104 = tpu.dynamic_rotate %90 by %c1_i32_54 dim 0 : vector<256x128xf32>, i32 -> vector<256x128xf32>
      %cst_55 = arith.constant 0.000000e+00 : f32
      %105 = vector.shape_cast %52 : vector<256x1xi1> to vector<256x1xi1>
      %106 = vector.broadcast %105 : vector<256x1xi1> to vector<256x128xi1>
      %107 = vector.broadcast %cst_55 : f32 to vector<256x128xf32>
      %108 = arith.select %106, %104, %107 : vector<256x128xi1>, vector<256x128xf32>
      %109 = arith.truncf %108 : vector<256x128xf32> to vector<256x128xbf16>
      %c2 = arith.constant 2 : index
      %c16_56 = arith.constant 16 : index
      %c0_57 = arith.constant 0 : index
      %110 = vector.load %arg14[%c2, %c16_56, %c0_57] : memref<3x288x128xbf16, #tpu.memory_space<vmem>>, vector<1x256x128xbf16>
      %111 = vector.shape_cast %110 : vector<1x256x128xbf16> to vector<256x128xbf16>
      %112 = vector.shape_cast %109 : vector<256x128xbf16> to vector<1x256x128xbf16>
      tpu.vector_store %arg14[%c2, %c16_56, %c0_57], %112 {strides = array<i32>} : memref<3x288x128xbf16, #tpu.memory_space<vmem>>, vector<1x256x128xbf16>,
      %c2_58 = arith.constant 2 : index
      %c0_59 = arith.constant 0 : index
      %c0_60 = arith.constant 0 : index
      %113 = vector.load %arg14[%c2_58, %c0_59, %c0_60] : memref<3x288x128xbf16, #tpu.memory_space<vmem>>, vector<1x256x128xbf16>
      %114 = vector.shape_cast %113 : vector<1x256x128xbf16> to vector<256x128xbf16>
      %c9_i32 = arith.constant 9 : i32
      %115 = arith.muli %arg15, %c9_i32 : i32
      %c0_i32_61 = arith.constant 0 : i32
      %116 = arith.addi %115, %c0_i32_61 : i32
      %117 = arith.index_cast %116 : i32 to index
      %c0_62 = arith.constant 0 : index
      %c0_63 = arith.constant 0 : index
      %118 = vector.load %arg8[%117, %c0_62, %c0_63] : memref<18x128x128xbf16, #tpu.memory_space<vmem>>, vector<1x128x128xbf16>
      %119 = vector.shape_cast %118 : vector<1x128x128xbf16> to vector<128x128xbf16>
      %cst_64 = arith.constant dense<0.000000e+00> : vector<256x128xf32>
      %120 = tpu.matmul %114, %119, %cst_64 {dimension_numbers = #tpu.dot_dimension_numbers<[1], [0], [0], [1], [0, 0, 1, 1], [], []>} : vector<256x128xbf16>, vector<128x128xbf16>, vector<256x128xf32> -> vector<256x128xf32>
      %c0_65 = arith.constant 0 : index
      %c0_66 = arith.constant 0 : index
      %c0_67 = arith.constant 0 : index
      %121 = vector.load %arg14[%c0_65, %c0_66, %c0_67] : memref<3x288x128xbf16, #tpu.memory_space<vmem>>, vector<1x256x128xbf16>
      %122 = vector.shape_cast %121 : vector<1x256x128xbf16> to vector<256x128xbf16>
      %c9_i32_68 = arith.constant 9 : i32
      %123 = arith.muli %arg15, %c9_i32_68 : i32
      %c1_i32_69 = arith.constant 1 : i32
      %124 = arith.addi %123, %c1_i32_69 : i32
      %125 = arith.index_cast %124 : i32 to index
      %c0_70 = arith.constant 0 : index
      %c0_71 = arith.constant 0 : index
      %126 = vector.load %arg8[%125, %c0_70, %c0_71] : memref<18x128x128xbf16, #tpu.memory_space<vmem>>, vector<1x128x128xbf16>
      %127 = vector.shape_cast %126 : vector<1x128x128xbf16> to vector<128x128xbf16>
      %cst_72 = arith.constant dense<0.000000e+00> : vector<256x128xf32>
      %128 = tpu.matmul %122, %127, %cst_72 {dimension_numbers = #tpu.dot_dimension_numbers<[1], [0], [0], [1], [0, 0, 1, 1], [], []>} : vector<256x128xbf16>, vector<128x128xbf16>, vector<256x128xf32> -> vector<256x128xf32>
      %129 = arith.addf %120, %128 : vector<256x128xf32>
      %c1_73 = arith.constant 1 : index
      %c0_74 = arith.constant 0 : index
      %c0_75 = arith.constant 0 : index
      %130 = vector.load %arg14[%c1_73, %c0_74, %c0_75] : memref<3x288x128xbf16, #tpu.memory_space<vmem>>, vector<1x256x128xbf16>
      %131 = vector.shape_cast %130 : vector<1x256x128xbf16> to vector<256x128xbf16>
      %c9_i32_76 = arith.constant 9 : i32
      %132 = arith.muli %arg15, %c9_i32_76 : i32
      %c2_i32_77 = arith.constant 2 : i32
      %133 = arith.addi %132, %c2_i32_77 : i32
      %134 = arith.index_cast %133 : i32 to index
      %c0_78 = arith.constant 0 : index
      %c0_79 = arith.constant 0 : index
      %135 = vector.load %arg8[%134, %c0_78, %c0_79] : memref<18x128x128xbf16, #tpu.memory_space<vmem>>, vector<1x128x128xbf16>
      %136 = vector.shape_cast %135 : vector<1x128x128xbf16> to vector<128x128xbf16>
      %cst_80 = arith.constant dense<0.000000e+00> : vector<256x128xf32>
      %137 = tpu.matmul %131, %136, %cst_80 {dimension_numbers = #tpu.dot_dimension_numbers<[1], [0], [0], [1], [0, 0, 1, 1], [], []>} : vector<256x128xbf16>, vector<128x128xbf16>, vector<256x128xf32> -> vector<256x128xf32>
      %138 = arith.addf %129, %137 : vector<256x128xf32>
      %c2_81 = arith.constant 2 : index
      %c16_82 = arith.constant 16 : index
      %c0_83 = arith.constant 0 : index
      %139 = vector.load %arg14[%c2_81, %c16_82, %c0_83] : memref<3x288x128xbf16, #tpu.memory_space<vmem>>, vector<1x256x128xbf16>
      %140 = vector.shape_cast %139 : vector<1x256x128xbf16> to vector<256x128xbf16>
      %c9_i32_84 = arith.constant 9 : i32
      %141 = arith.muli %arg15, %c9_i32_84 : i32
      %c3_i32 = arith.constant 3 : i32
      %142 = arith.addi %141, %c3_i32 : i32
      %143 = arith.index_cast %142 : i32 to index
      %c0_85 = arith.constant 0 : index
      %c0_86 = arith.constant 0 : index
      %144 = vector.load %arg8[%143, %c0_85, %c0_86] : memref<18x128x128xbf16, #tpu.memory_space<vmem>>, vector<1x128x128xbf16>
      %145 = vector.shape_cast %144 : vector<1x128x128xbf16> to vector<128x128xbf16>
      %cst_87 = arith.constant dense<0.000000e+00> : vector<256x128xf32>
      %146 = tpu.matmul %140, %145, %cst_87 {dimension_numbers = #tpu.dot_dimension_numbers<[1], [0], [0], [1], [0, 0, 1, 1], [], []>} : vector<256x128xbf16>, vector<128x128xbf16>, vector<256x128xf32> -> vector<256x128xf32>
      %147 = arith.addf %138, %146 : vector<256x128xf32>
      %c0_88 = arith.constant 0 : index
      %c16_89 = arith.constant 16 : index
      %c0_90 = arith.constant 0 : index
      %148 = vector.load %arg14[%c0_88, %c16_89, %c0_90] : memref<3x288x128xbf16, #tpu.memory_space<vmem>>, vector<1x256x128xbf16>
      %149 = vector.shape_cast %148 : vector<1x256x128xbf16> to vector<256x128xbf16>
      %c9_i32_91 = arith.constant 9 : i32
      %150 = arith.muli %arg15, %c9_i32_91 : i32
      %c4_i32 = arith.constant 4 : i32
      %151 = arith.addi %150, %c4_i32 : i32
      %152 = arith.index_cast %151 : i32 to index
      %c0_92 = arith.constant 0 : index
      %c0_93 = arith.constant 0 : index
      %153 = vector.load %arg8[%152, %c0_92, %c0_93] : memref<18x128x128xbf16, #tpu.memory_space<vmem>>, vector<1x128x128xbf16>
      %154 = vector.shape_cast %153 : vector<1x128x128xbf16> to vector<128x128xbf16>
      %cst_94 = arith.constant dense<0.000000e+00> : vector<256x128xf32>
      %155 = tpu.matmul %149, %154, %cst_94 {dimension_numbers = #tpu.dot_dimension_numbers<[1], [0], [0], [1], [0, 0, 1, 1], [], []>} : vector<256x128xbf16>, vector<128x128xbf16>, vector<256x128xf32> -> vector<256x128xf32>
      %156 = arith.addf %147, %155 : vector<256x128xf32>
      %c1_95 = arith.constant 1 : index
      %c16_96 = arith.constant 16 : index
      %c0_97 = arith.constant 0 : index
      %157 = vector.load %arg14[%c1_95, %c16_96, %c0_97] : memref<3x288x128xbf16, #tpu.memory_space<vmem>>, vector<1x256x128xbf16>
      %158 = vector.shape_cast %157 : vector<1x256x128xbf16> to vector<256x128xbf16>
      %c9_i32_98 = arith.constant 9 : i32
      %159 = arith.muli %arg15, %c9_i32_98 : i32
      %c5_i32 = arith.constant 5 : i32
      %160 = arith.addi %159, %c5_i32 : i32
      %161 = arith.index_cast %160 : i32 to index
      %c0_99 = arith.constant 0 : index
      %c0_100 = arith.constant 0 : index
      %162 = vector.load %arg8[%161, %c0_99, %c0_100] : memref<18x128x128xbf16, #tpu.memory_space<vmem>>, vector<1x128x128xbf16>
      %163 = vector.shape_cast %162 : vector<1x128x128xbf16> to vector<128x128xbf16>
      %cst_101 = arith.constant dense<0.000000e+00> : vector<256x128xf32>
      %164 = tpu.matmul %158, %163, %cst_101 {dimension_numbers = #tpu.dot_dimension_numbers<[1], [0], [0], [1], [0, 0, 1, 1], [], []>} : vector<256x128xbf16>, vector<128x128xbf16>, vector<256x128xf32> -> vector<256x128xf32>
      %165 = arith.addf %156, %164 : vector<256x128xf32>
      %c2_102 = arith.constant 2 : index
      %c32 = arith.constant 32 : index
      %c0_103 = arith.constant 0 : index
      %166 = vector.load %arg14[%c2_102, %c32, %c0_103] : memref<3x288x128xbf16, #tpu.memory_space<vmem>>, vector<1x256x128xbf16>
      %167 = vector.shape_cast %166 : vector<1x256x128xbf16> to vector<256x128xbf16>
      %c9_i32_104 = arith.constant 9 : i32
      %168 = arith.muli %arg15, %c9_i32_104 : i32
      %c6_i32 = arith.constant 6 : i32
      %169 = arith.addi %168, %c6_i32 : i32
      %170 = arith.index_cast %169 : i32 to index
      %c0_105 = arith.constant 0 : index
      %c0_106 = arith.constant 0 : index
      %171 = vector.load %arg8[%170, %c0_105, %c0_106] : memref<18x128x128xbf16, #tpu.memory_space<vmem>>, vector<1x128x128xbf16>
      %172 = vector.shape_cast %171 : vector<1x128x128xbf16> to vector<128x128xbf16>
      %cst_107 = arith.constant dense<0.000000e+00> : vector<256x128xf32>
      %173 = tpu.matmul %167, %172, %cst_107 {dimension_numbers = #tpu.dot_dimension_numbers<[1], [0], [0], [1], [0, 0, 1, 1], [], []>} : vector<256x128xbf16>, vector<128x128xbf16>, vector<256x128xf32> -> vector<256x128xf32>
      %174 = arith.addf %165, %173 : vector<256x128xf32>
      %c0_108 = arith.constant 0 : index
      %c32_109 = arith.constant 32 : index
      %c0_110 = arith.constant 0 : index
      %175 = vector.load %arg14[%c0_108, %c32_109, %c0_110] : memref<3x288x128xbf16, #tpu.memory_space<vmem>>, vector<1x256x128xbf16>
      %176 = vector.shape_cast %175 : vector<1x256x128xbf16> to vector<256x128xbf16>
      %c9_i32_111 = arith.constant 9 : i32
      %177 = arith.muli %arg15, %c9_i32_111 : i32
      %c7_i32 = arith.constant 7 : i32
      %178 = arith.addi %177, %c7_i32 : i32
      %179 = arith.index_cast %178 : i32 to index
      %c0_112 = arith.constant 0 : index
      %c0_113 = arith.constant 0 : index
      %180 = vector.load %arg8[%179, %c0_112, %c0_113] : memref<18x128x128xbf16, #tpu.memory_space<vmem>>, vector<1x128x128xbf16>
      %181 = vector.shape_cast %180 : vector<1x128x128xbf16> to vector<128x128xbf16>
      %cst_114 = arith.constant dense<0.000000e+00> : vector<256x128xf32>
      %182 = tpu.matmul %176, %181, %cst_114 {dimension_numbers = #tpu.dot_dimension_numbers<[1], [0], [0], [1], [0, 0, 1, 1], [], []>} : vector<256x128xbf16>, vector<128x128xbf16>, vector<256x128xf32> -> vector<256x128xf32>
      %183 = arith.addf %174, %182 : vector<256x128xf32>
      %c1_115 = arith.constant 1 : index
      %c32_116 = arith.constant 32 : index
      %c0_117 = arith.constant 0 : index
      %184 = vector.load %arg14[%c1_115, %c32_116, %c0_117] : memref<3x288x128xbf16, #tpu.memory_space<vmem>>, vector<1x256x128xbf16>
      %185 = vector.shape_cast %184 : vector<1x256x128xbf16> to vector<256x128xbf16>
      %c9_i32_118 = arith.constant 9 : i32
      %186 = arith.muli %arg15, %c9_i32_118 : i32
      %c8_i32 = arith.constant 8 : i32
      %187 = arith.addi %186, %c8_i32 : i32
      %188 = arith.index_cast %187 : i32 to index
      %c0_119 = arith.constant 0 : index
      %c0_120 = arith.constant 0 : index
      %189 = vector.load %arg8[%188, %c0_119, %c0_120] : memref<18x128x128xbf16, #tpu.memory_space<vmem>>, vector<1x128x128xbf16>
      %190 = vector.shape_cast %189 : vector<1x128x128xbf16> to vector<128x128xbf16>
      %cst_121 = arith.constant dense<0.000000e+00> : vector<256x128xf32>
      %191 = tpu.matmul %185, %190, %cst_121 {dimension_numbers = #tpu.dot_dimension_numbers<[1], [0], [0], [1], [0, 0, 1, 1], [], []>} : vector<256x128xbf16>, vector<128x128xbf16>, vector<256x128xf32> -> vector<256x128xf32>
      %192 = arith.addf %183, %191 : vector<256x128xf32>
      %193 = arith.index_cast %arg15 : i32 to index
      %c0_122 = arith.constant 0 : index
      %c0_123 = arith.constant 0 : index
      %194 = vector.load %arg9[%193, %c0_122, %c0_123] : memref<2x1x128xf32, #tpu.memory_space<vmem>>, vector<1x1x128xf32>
      %195 = vector.shape_cast %194 : vector<1x1x128xf32> to vector<1x128xf32>
      %196 = vector.broadcast %195 : vector<1x128xf32> to vector<256x128xf32>
      %197 = arith.addf %192, %196 : vector<256x128xf32>
      %cst_124 = arith.constant 0.000000e+00 : f32
      %198 = vector.broadcast %cst_124 : f32 to vector<256x128xf32>
      %199 = arith.subf %198, %197 : vector<256x128xf32>
      %200 = math.exp %199 : vector<256x128xf32>
      %cst_125 = arith.constant 1.000000e+00 : f32
      %201 = vector.broadcast %cst_125 : f32 to vector<256x128xf32>
      %202 = arith.addf %201, %200 : vector<256x128xf32>
      %203 = tpu.reciprocal %202 {approx = true} : vector<256x128xf32> -> vector<256x128xf32>
      %204 = arith.mulf %197, %203 : vector<256x128xf32>
      %205 = arith.addf %arg16, %204 : vector<256x128xf32>
      scf.yield %205 : vector<256x128xf32>
    }
    %c2_i32_28 = arith.constant 2 : i32
    %55 = arith.truncf %54 : vector<256x128xf32> to vector<256x128xbf16>
    %c0_29 = arith.constant 0 : index
    %c0_30 = arith.constant 0 : index
    %56 = vector.load %arg10[%c0_29, %c0_30] : memref<128x128xbf16, #tpu.memory_space<vmem>>, vector<128x128xbf16>
    %cst_31 = arith.constant dense<0.000000e+00> : vector<256x128xf32>
    %57 = tpu.matmul %55, %56, %cst_31 {dimension_numbers = #tpu.dot_dimension_numbers<[1], [0], [0], [1], [0, 0, 1, 1], [], []>} : vector<256x128xbf16>, vector<128x128xbf16>, vector<256x128xf32> -> vector<256x128xf32>
    %c0_32 = arith.constant 0 : index
    %c0_33 = arith.constant 0 : index
    %58 = vector.load %arg11[%c0_32, %c0_33] : memref<128x128xbf16, #tpu.memory_space<vmem>>, vector<128x128xbf16>
    %cst_34 = arith.constant dense<0.000000e+00> : vector<256x128xf32>
    %59 = tpu.matmul %31, %58, %cst_34 {dimension_numbers = #tpu.dot_dimension_numbers<[1], [0], [0], [1], [0, 0, 1, 1], [], []>} : vector<256x128xbf16>, vector<128x128xbf16>, vector<256x128xf32> -> vector<256x128xf32>
    %60 = arith.addf %57, %59 : vector<256x128xf32>
    %c0_35 = arith.constant 0 : index
    %c0_36 = arith.constant 0 : index
    %61 = vector.load %arg12[%c0_35, %c0_36] : memref<1x128xf32, #tpu.memory_space<vmem>>, vector<1x128xf32>
    %62 = vector.broadcast %61 : vector<1x128xf32> to vector<256x128xf32>
    %63 = arith.addf %60, %62 : vector<256x128xf32>
    %cst_37 = arith.constant 0.000000e+00 : f32
    %64 = vector.broadcast %cst_37 : f32 to vector<256x128xf32>
    %65 = arith.subf %64, %63 : vector<256x128xf32>
    %66 = math.exp %65 : vector<256x128xf32>
    %cst_38 = arith.constant 1.000000e+00 : f32
    %67 = vector.broadcast %cst_38 : f32 to vector<256x128xf32>
    %68 = arith.addf %67, %66 : vector<256x128xf32>
    %69 = tpu.reciprocal %68 {approx = true} : vector<256x128xf32> -> vector<256x128xf32>
    %70 = arith.mulf %63, %69 : vector<256x128xf32>
    %c0_39 = arith.constant 0 : index
    %c0_40 = arith.constant 0 : index
    %c0_41 = arith.constant 0 : index
    %71 = vector.load %arg13[%c0_39, %c0_40, %c0_41] : memref<1x256x128xf32, #tpu.memory_space<vmem>>, vector<1x256x128xf32>
    %72 = vector.shape_cast %71 : vector<1x256x128xf32> to vector<256x128xf32>
    %73 = vector.shape_cast %70 : vector<256x128xf32> to vector<1x256x128xf32>
    tpu.vector_store %arg13[%c0_39, %c0_40, %c0_41], %73 {strides = array<i32>} : memref<1x256x128xf32, #tpu.memory_space<vmem>>, vector<1x256x128xf32>,
    return
  }
  func.func @transform_0(%arg0: i32) -> (i32, i32, i32) {
    %c0_i32 = arith.constant 0 : i32
    %c0_i32_0 = arith.constant 0 : i32
    %c0_i32_1 = arith.constant 0 : i32
    return %arg0, %c0_i32, %c0_i32_0 : i32, i32, i32
  }
  func.func @transform_1(%arg0: i32) -> (i32, i32) {
    %c0_i32 = arith.constant 0 : i32
    %c0_i32_0 = arith.constant 0 : i32
    %c0_i32_1 = arith.constant 0 : i32
    return %c0_i32, %c0_i32_0 : i32, i32
  }
  func.func @transform_2(%arg0: i32) -> (i32, i32) {
    %c0_i32 = arith.constant 0 : i32
    %c0_i32_0 = arith.constant 0 : i32
    %c0_i32_1 = arith.constant 0 : i32
    return %c0_i32, %c0_i32_0 : i32, i32
  }
  func.func @transform_3(%arg0: i32) -> (i32, i32) {
    %c0_i32 = arith.constant 0 : i32
    %c0_i32_0 = arith.constant 0 : i32
    %c0_i32_1 = arith.constant 0 : i32
    return %c0_i32, %c0_i32_0 : i32, i32
  }
  func.func @transform_4(%arg0: i32) -> (i32, i32) {
    %c0_i32 = arith.constant 0 : i32
    %c0_i32_0 = arith.constant 0 : i32
    %c0_i32_1 = arith.constant 0 : i32
    return %c0_i32, %c0_i32_0 : i32, i32
  }
  func.func @transform_5(%arg0: i32) -> (i32, i32, i32) {
    %c0_i32 = arith.constant 0 : i32
    %c0_i32_0 = arith.constant 0 : i32
    %c0_i32_1 = arith.constant 0 : i32
    %c0_i32_2 = arith.constant 0 : i32
    return %c0_i32, %c0_i32_0, %c0_i32_1 : i32, i32, i32
  }
  func.func @transform_6(%arg0: i32) -> (i32, i32, i32) {
    %c0_i32 = arith.constant 0 : i32
    %c0_i32_0 = arith.constant 0 : i32
    %c0_i32_1 = arith.constant 0 : i32
    %c0_i32_2 = arith.constant 0 : i32
    return %c0_i32, %c0_i32_0, %c0_i32_1 : i32, i32, i32
  }
  func.func @transform_7(%arg0: i32) -> (i32, i32, i32) {
    %c0_i32 = arith.constant 0 : i32
    %c0_i32_0 = arith.constant 0 : i32
    %c0_i32_1 = arith.constant 0 : i32
    %c0_i32_2 = arith.constant 0 : i32
    return %c0_i32, %c0_i32_0, %c0_i32_1 : i32, i32, i32
  }
  func.func @transform_8(%arg0: i32) -> (i32, i32, i32) {
    %c0_i32 = arith.constant 0 : i32
    %c0_i32_0 = arith.constant 0 : i32
    %c0_i32_1 = arith.constant 0 : i32
    %c0_i32_2 = arith.constant 0 : i32
    return %c0_i32, %c0_i32_0, %c0_i32_1 : i32, i32, i32
  }
  func.func @transform_9(%arg0: i32) -> (i32, i32) {
    %c0_i32 = arith.constant 0 : i32
    %c0_i32_0 = arith.constant 0 : i32
    %c0_i32_1 = arith.constant 0 : i32
    return %c0_i32, %c0_i32_0 : i32, i32
  }
  func.func @transform_10(%arg0: i32) -> (i32, i32) {
    %c0_i32 = arith.constant 0 : i32
    %c0_i32_0 = arith.constant 0 : i32
    %c0_i32_1 = arith.constant 0 : i32
    return %c0_i32, %c0_i32_0 : i32, i32
  }
  func.func @transform_11(%arg0: i32) -> (i32, i32) {
    %c0_i32 = arith.constant 0 : i32
    %c0_i32_0 = arith.constant 0 : i32
    %c0_i32_1 = arith.constant 0 : i32
    return %c0_i32, %c0_i32_0 : i32, i32
  }
  func.func @transform_12(%arg0: i32) -> (i32, i32, i32) {
    %c0_i32 = arith.constant 0 : i32
    %c0_i32_0 = arith.constant 0 : i32
    %c0_i32_1 = arith.constant 0 : i32
    return %arg0, %c0_i32, %c0_i32_0 : i32, i32, i32
  }
}

</mosaic_0001>

<llo_original>
// kernel: tpu_custom_call.1
$region0: #{tpu_custom_call.1}
  #allocation0 [shape = 'u32[]', space=smem, size = 0x4, offset = 0x4, fixed_abs, tag = 'smem constant byte address 0x4 - core index']
  #allocation1 [shape = 'u32[144,128]{1,0:T(1,128)}', space=vmem, size = 0x12000, scoped, tag = 'internal scratch']
  #allocation2 [shape = 'bf16[3,288,128]{2,1,0:T(16,128)(2,1)}', space=vmem, size = 0x36000, scoped, tag = 'scratch operand']
  %s0 = inlined_call_operand.vmem [shape: f32[2,256,16], index: 0, kind: input, shape index: {}]
  %s1 = inlined_call_operand.vmem [shape: bf16[16,128], index: 1, kind: input, shape index: {}]
  %s2 = inlined_call_operand.vmem [shape: f32[1,128], index: 2, kind: input, shape index: {}]
  %s3 = inlined_call_operand.vmem [shape: bf16[16,128], index: 3, kind: input, shape index: {}]
  %s4 = inlined_call_operand.vmem [shape: f32[1,128], index: 4, kind: input, shape index: {}]
  %s5 = inlined_call_operand.vmem [shape: bf16[2,128,128], index: 5, kind: input, shape index: {}]
  %s6 = inlined_call_operand.vmem [shape: f32[2,1,128], index: 6, kind: input, shape index: {}]
  %s7 = inlined_call_operand.hbm [shape: bf16[18,128,128], index: 7, kind: input, shape index: {}]
  %s8 = inlined_call_operand.vmem [shape: f32[2,1,128], index: 8, kind: input, shape index: {}]
  %s9 = inlined_call_operand.vmem [shape: bf16[128,128], index: 9, kind: input, shape index: {}]
  %s10 = inlined_call_operand.vmem [shape: bf16[128,128], index: 10, kind: input, shape index: {}]
  %s11 = inlined_call_operand.vmem [shape: f32[1,128], index: 11, kind: input, shape index: {}]
  %s12 = inlined_call_operand.hbm [shape: f32[2,256,128], index: 12, kind: output, shape index: {}]
  %s13 = sld [smem:[#allocation0]]
  $region92: #{tpu_custom_call.1} parent=0
    _
  %s15 = ssub.s32 1, %s13
  %s16 = scalar_select 0, %s15, %s13
  $region1: #{tpu_custom_call.1} parent=0
    #allocation3 [shape = 'u8[589824]{0}', space=vmem, size = 0x90000, scoped, tag = 'input window, operand 7, single buffered']
    #allocation4 [shape = 's32[2]{0}', space=sflag, size = 0x8, scoped, tag = 'scoped memory for tpu_custom_call.1']
    #allocation5 [shape = 's32[2]{0}', space=sflag, size = 0x8, scoped, tag = 'scoped memory for tpu_custom_call.1']
    #allocation6 [shape = 'u8[262144]{0}', space=vmem, size = 0x40000, scoped, tag = 'output window, operand 0']
    %17 = vsyncpa [#allocation4], 0
    %18 = vsyncpa [#allocation5], 0
    %s19 = scalar_lea.sflag [#allocation5], 1
    %20 = vsyncpa %s19, 0
    loop: start=0, step=1, limit=4
    $region2: #{tpu_custom_call.1} parent=1 // loop_pre_header
      _
    $region3: #{tpu_custom_call.1} parent=1 // loop_header
      %s22 = sphi 0, %s26
      %p23 = scmp.ge.s32.totalorder %s22, 4
      %s32 = sphi 0, %s34
      %s35 = sphi 0, %s32
      %s36 = sphi 0, %s35
      %s52 = sphi 0, %s36
      %s56 = sphi 0, %s56
      %s58 = sphi 0, %s56
      %s59 = sphi 0, %s58
      %s73 = sphi 0, %s59
      %s77 = sphi 0, %s77
      %s79 = sphi 0, %s77
      %s80 = sphi 0, %s79
      %s94 = sphi 0, %s80
      %s98 = sphi 0, %s98
      %s100 = sphi 0, %s98
      %s101 = sphi 0, %s100
      %s115 = sphi 0, %s101
      %s119 = sphi 0, %s119
      %s121 = sphi 0, %s119
      %s122 = sphi 0, %s121
      %s136 = sphi 0, %s122
      %s140 = sphi 0, %s140
      %s142 = sphi 0, %s140
      %s143 = sphi 0, %s142
      %s157 = sphi 0, %s143
      %s161 = sphi 0, %s161
      %s163 = sphi 0, %s161
      %s164 = sphi 0, %s163
      %s178 = sphi 0, %s164
      %s182 = sphi 0, %s182
      %s184 = sphi 0, %s182
      %s185 = sphi 0, %s184
      %s199 = sphi 0, %s185
      %s203 = sphi 0, %s203
      %s205 = sphi 0, %s203
      %s206 = sphi 0, %s205
      %s220 = sphi 0, %s206
      %s224 = sphi 0, %s224
      %s226 = sphi 0, %s224
      %s227 = sphi 0, %s226
      %s241 = sphi 0, %s227
      %s245 = sphi 0, %s245
      %s247 = sphi 0, %s245
      %s248 = sphi 0, %s247
      %s262 = sphi 0, %s248
      %s266 = sphi 0, %s266
      %s268 = sphi 0, %s266
      %s269 = sphi 0, %s268
      %s283 = sphi 0, %s269
      %s289 = sphi 0, %s291
      %s292 = sphi 0, %s289
      %s293 = sphi 0, %s292
      %s309 = sphi 0, %s293
    $region4: #{tpu_custom_call.1} parent=1 // loop_header_branch
      %25 = sbr.rel (%p23) target = $region8
    $region5: #{tpu_custom_call.1} parent=1 // loop_body
      %s27 = ssub.s32 %s22, 1
      %s28 = ssub.s32 %s22, 2
      %s29 = sadd.s32 %s22, 1
      %s30 = ssub.s32 %s22, %s29
      %p31 = scmp.eq.s32.totalorder %s30, 0
      %s33 = sadd.s32 %s32, 1
      %s34 = scalar_select %p31, %s32, %s33
      %p37 = pneg %p31
      %p38 = scmp.eq.s32.totalorder %s22, 1
      %p39 = por %p37, %p38
      %p40 = scmp.ne.s32.totalorder %s32, %s35
      %p41 = scmp.eq.s32.totalorder %s22, 0
      %p42 = por %p40, %p41
      %p43 = scmp.ne.s32.totalorder %s32, %s35
      %p44 = scmp.eq.s32.totalorder %s27, 1
      %p45 = por %p43, %p44
      %p46 = scmp.ne.s32.totalorder %s35, %s36
      %p47 = scmp.eq.s32.totalorder %s27, 0
      %p48 = por %p46, %p47
      %p49 = scmp.ne.s32.totalorder %s35, %s36
      %p50 = scmp.eq.s32.totalorder %s28, 1
      %p51 = por %p49, %p50
      %p53 = scmp.ne.s32.totalorder %s36, %s52
      %p54 = scmp.eq.s32.totalorder %s28, 0
      %p55 = por %p53, %p54
      %s57 = sadd.s32 %s56, 1
      %p60 = scmp.eq.s32.totalorder %s22, 1
      %p61 = scmp.ne.s32.totalorder %s56, %s58
      %p62 = scmp.eq.s32.totalorder %s22, 0
      %p63 = por %p61, %p62
      %p64 = scmp.ne.s32.totalorder %s56, %s58
      %p65 = scmp.eq.s32.totalorder %s27, 1
      %p66 = por %p64, %p65
      %p67 = scmp.ne.s32.totalorder %s58, %s59
      %p68 = scmp.eq.s32.totalorder %s27, 0
      %p69 = por %p67, %p68
      %p70 = scmp.ne.s32.totalorder %s58, %s59
      %p71 = scmp.eq.s32.totalorder %s28, 1
      %p72 = por %p70, %p71
      %p74 = scmp.ne.s32.totalorder %s59, %s73
      %p75 = scmp.eq.s32.totalorder %s28, 0
      %p76 = por %p74, %p75
      %s78 = sadd.s32 %s77, 1
      %p81 = scmp.eq.s32.totalorder %s22, 1
      %p82 = scmp.ne.s32.totalorder %s77, %s79
      %p83 = scmp.eq.s32.totalorder %s22, 0
      %p84 = por %p82, %p83
      %p85 = scmp.ne.s32.totalorder %s77, %s79
      %p86 = scmp.eq.s32.totalorder %s27, 1
      %p87 = por %p85, %p86
      %p88 = scmp.ne.s32.totalorder %s79, %s80
      %p89 = scmp.eq.s32.totalorder %s27, 0
      %p90 = por %p88, %p89
      %p91 = scmp.ne.s32.totalorder %s79, %s80
      %p92 = scmp.eq.s32.totalorder %s28, 1
      %p93 = por %p91, %p92
      %p95 = scmp.ne.s32.totalorder %s80, %s94
      %p96 = scmp.eq.s32.totalorder %s28, 0
      %p97 = por %p95, %p96
      %s99 = sadd.s32 %s98, 1
      %p102 = scmp.eq.s32.totalorder %s22, 1
      %p103 = scmp.ne.s32.totalorder %s98, %s100
      %p104 = scmp.eq.s32.totalorder %s22, 0
      %p105 = por %p103, %p104
      %p106 = scmp.ne.s32.totalorder %s98, %s100
      %p107 = scmp.eq.s32.totalorder %s27, 1
      %p108 = por %p106, %p107
      %p109 = scmp.ne.s32.totalorder %s100, %s101
      %p110 = scmp.eq.s32.totalorder %s27, 0
      %p111 = por %p109, %p110
      %p112 = scmp.ne.s32.totalorder %s100, %s101
      %p113 = scmp.eq.s32.totalorder %s28, 1
      %p114 = por %p112, %p113
      %p116 = scmp.ne.s32.totalorder %s101, %s115
      %p117 = scmp.eq.s32.totalorder %s28, 0
      %p118 = por %p116, %p117
      %s120 = sadd.s32 %s119, 1
      %p123 = scmp.eq.s32.totalorder %s22, 1
      %p124 = scmp.ne.s32.totalorder %s119, %s121
      %p125 = scmp.eq.s32.totalorder %s22, 0
      %p126 = por %p124, %p125
      %p127 = scmp.ne.s32.totalorder %s119, %s121
      %p128 = scmp.eq.s32.totalorder %s27, 1
      %p129 = por %p127, %p128
      %p130 = scmp.ne.s32.totalorder %s121, %s122
      %p131 = scmp.eq.s32.totalorder %s27, 0
      %p132 = por %p130, %p131
      %p133 = scmp.ne.s32.totalorder %s121, %s122
      %p134 = scmp.eq.s32.totalorder %s28, 1
      %p135 = por %p133, %p134
      %p137 = scmp.ne.s32.totalorder %s122, %s136
      %p138 = scmp.eq.s32.totalorder %s28, 0
      %p139 = por %p137, %p138
      %s141 = sadd.s32 %s140, 1
      %p144 = scmp.eq.s32.totalorder %s22, 1
      %p145 = scmp.ne.s32.totalorder %s140, %s142
      %p146 = scmp.eq.s32.totalorder %s22, 0
      %p147 = por %p145, %p146
      %p148 = scmp.ne.s32.totalorder %s140, %s142
      %p149 = scmp.eq.s32.totalorder %s27, 1
      %p150 = por %p148, %p149
      %p151 = scmp.ne.s32.totalorder %s142, %s143
      %p152 = scmp.eq.s32.totalorder %s27, 0
      %p153 = por %p151, %p152
      %p154 = scmp.ne.s32.totalorder %s142, %s143
      %p155 = scmp.eq.s32.totalorder %s28, 1
      %p156 = por %p154, %p155
      %p158 = scmp.ne.s32.totalorder %s143, %s157
      %p159 = scmp.eq.s32.totalorder %s28, 0
      %p160 = por %p158, %p159
      %s162 = sadd.s32 %s161, 1
      %p165 = scmp.eq.s32.totalorder %s22, 1
      %p166 = scmp.ne.s32.totalorder %s161, %s163
      %p167 = scmp.eq.s32.totalorder %s22, 0
      %p168 = por %p166, %p167
      %p169 = scmp.ne.s32.totalorder %s161, %s163
      %p170 = scmp.eq.s32.totalorder %s27, 1
      %p171 = por %p169, %p170
      %p172 = scmp.ne.s32.totalorder %s163, %s164
      %p173 = scmp.eq.s32.totalorder %s27, 0
      %p174 = por %p172, %p173
      %p175 = scmp.ne.s32.totalorder %s163, %s164
      %p176 = scmp.eq.s32.totalorder %s28, 1
      %p177 = por %p175, %p176
      %p179 = scmp.ne.s32.totalorder %s164, %s178
      %p180 = scmp.eq.s32.totalorder %s28, 0
      %p181 = por %p179, %p180
      %s183 = sadd.s32 %s182, 1
      %p186 = scmp.eq.s32.totalorder %s22, 1
      %p187 = scmp.ne.s32.totalorder %s182, %s184
      %p188 = scmp.eq.s32.totalorder %s22, 0
      %p189 = por %p187, %p188
      %p190 = scmp.ne.s32.totalorder %s182, %s184
      %p191 = scmp.eq.s32.totalorder %s27, 1
      %p192 = por %p190, %p191
      %p193 = scmp.ne.s32.totalorder %s184, %s185
      %p194 = scmp.eq.s32.totalorder %s27, 0
      %p195 = por %p193, %p194
      %p196 = scmp.ne.s32.totalorder %s184, %s185
      %p197 = scmp.eq.s32.totalorder %s28, 1
      %p198 = por %p196, %p197
      %p200 = scmp.ne.s32.totalorder %s185, %s199
      %p201 = scmp.eq.s32.totalorder %s28, 0
      %p202 = por %p200, %p201
      %s204 = sadd.s32 %s203, 1
      %p207 = scmp.eq.s32.totalorder %s22, 1
      %p208 = scmp.ne.s32.totalorder %s203, %s205
      %p209 = scmp.eq.s32.totalorder %s22, 0
      %p210 = por %p208, %p209
      %p211 = scmp.ne.s32.totalorder %s203, %s205
      %p212 = scmp.eq.s32.totalorder %s27, 1
      %p213 = por %p211, %p212
      %p214 = scmp.ne.s32.totalorder %s205, %s206
      %p215 = scmp.eq.s32.totalorder %s27, 0
      %p216 = por %p214, %p215
      %p217 = scmp.ne.s32.totalorder %s205, %s206
      %p218 = scmp.eq.s32.totalorder %s28, 1
      %p219 = por %p217, %p218
      %p221 = scmp.ne.s32.totalorder %s206, %s220
      %p222 = scmp.eq.s32.totalorder %s28, 0
      %p223 = por %p221, %p222
      %s225 = sadd.s32 %s224, 1
      %p228 = scmp.eq.s32.totalorder %s22, 1
      %p229 = scmp.ne.s32.totalorder %s224, %s226
      %p230 = scmp.eq.s32.totalorder %s22, 0
      %p231 = por %p229, %p230
      %p232 = scmp.ne.s32.totalorder %s224, %s226
      %p233 = scmp.eq.s32.totalorder %s27, 1
      %p234 = por %p232, %p233
      %p235 = scmp.ne.s32.totalorder %s226, %s227
      %p236 = scmp.eq.s32.totalorder %s27, 0
      %p237 = por %p235, %p236
      %p238 = scmp.ne.s32.totalorder %s226, %s227
      %p239 = scmp.eq.s32.totalorder %s28, 1
      %p240 = por %p238, %p239
      %p242 = scmp.ne.s32.totalorder %s227, %s241
      %p243 = scmp.eq.s32.totalorder %s28, 0
      %p244 = por %p242, %p243
      %s246 = sadd.s32 %s245, 1
      %p249 = scmp.eq.s32.totalorder %s22, 1
      %p250 = scmp.ne.s32.totalorder %s245, %s247
      %p251 = scmp.eq.s32.totalorder %s22, 0
      %p252 = por %p250, %p251
      %p253 = scmp.ne.s32.totalorder %s245, %s247
      %p254 = scmp.eq.s32.totalorder %s27, 1
      %p255 = por %p253, %p254
      %p256 = scmp.ne.s32.totalorder %s247, %s248
      %p257 = scmp.eq.s32.totalorder %s27, 0
      %p258 = por %p256, %p257
      %p259 = scmp.ne.s32.totalorder %s247, %s248
      %p260 = scmp.eq.s32.totalorder %s28, 1
      %p261 = por %p259, %p260
      %p263 = scmp.ne.s32.totalorder %s248, %s262
      %p264 = scmp.eq.s32.totalorder %s28, 0
      %p265 = por %p263, %p264
      %s267 = sadd.s32 %s266, 1
      %p270 = scmp.eq.s32.totalorder %s22, 1
      %p271 = scmp.ne.s32.totalorder %s266, %s268
      %p272 = scmp.eq.s32.totalorder %s22, 0
      %p273 = por %p271, %p272
      %p274 = scmp.ne.s32.totalorder %s266, %s268
      %p275 = scmp.eq.s32.totalorder %s27, 1
      %p276 = por %p274, %p275
      %p277 = scmp.ne.s32.totalorder %s268, %s269
      %p278 = scmp.eq.s32.totalorder %s27, 0
      %p279 = por %p277, %p278
      %p280 = scmp.ne.s32.totalorder %s268, %s269
      %p281 = scmp.eq.s32.totalorder %s28, 1
      %p282 = por %p280, %p281
      %p284 = scmp.ne.s32.totalorder %s269, %s283
      %p285 = scmp.eq.s32.totalorder %s28, 0
      %p286 = por %p284, %p285
      %s287 = ssub.s32 %s22, %s29
      %p288 = scmp.eq.s32.totalorder %s287, 0
      %s290 = sadd.s32 %s289, 1
      %s291 = scalar_select %p288, %s289, %s290
      %p294 = pneg %p288
      %p295 = scmp.eq.s32.totalorder %s22, 1
      %p296 = por %p294, %p295
      %p297 = scmp.ne.s32.totalorder %s289, %s292
      %p298 = scmp.eq.s32.totalorder %s22, 0
      %p299 = por %p297, %p298
      %p300 = scmp.ne.s32.totalorder %s289, %s292
      %p301 = scmp.eq.s32.totalorder %s27, 1
      %p302 = por %p300, %p301
      %p303 = scmp.ne.s32.totalorder %s292, %s293
      %p304 = scmp.eq.s32.totalorder %s27, 0
      %p305 = por %p303, %p304
      %p306 = scmp.ne.s32.totalorder %s292, %s293
      %p307 = scmp.eq.s32.totalorder %s28, 1
      %p308 = por %p306, %p307
      %p310 = scmp.ne.s32.totalorder %s293, %s309
      %p311 = scmp.eq.s32.totalorder %s28, 0
      %p312 = por %p310, %p311
      %p313 = scmp.le.s32.totalorder 1, %s22
      %p314 = scmp.lt.s32.totalorder %s22, 3
      %p315 = pnand %p313, %p314
      %p316 = pneg %p315
      // Predicated region
      $region9: #{tpu_custom_call.1} parent=5 // pred_check
        _
      $region10: #{tpu_custom_call.1} parent=5 // pred_check_branch
        %318 = sbr.rel (%p315) target = $region12
      $region11: #{tpu_custom_call.1} parent=5 // pred_region
        %s319 = ssub.s32 %s22, 1
        // Predicated region
        $region13: #{tpu_custom_call.1} parent=11 // pred_check
          %p320 = pneg %p69
        $region14: #{tpu_custom_call.1} parent=11 // pred_check_branch
          %322 = sbr.rel (%p320) target = $region16
        $region15: #{tpu_custom_call.1} parent=11 // pred_region
          _
        $region16: #{tpu_custom_call.1} parent=11 // pred_fallthru
          _
        // Predicated region
        $region17: #{tpu_custom_call.1} parent=11 // pred_check
          %p323 = pneg %p90
        $region18: #{tpu_custom_call.1} parent=11 // pred_check_branch
          %325 = sbr.rel (%p323) target = $region20
        $region19: #{tpu_custom_call.1} parent=11 // pred_region
          _
        $region20: #{tpu_custom_call.1} parent=11 // pred_fallthru
          _
        // Predicated region
        $region21: #{tpu_custom_call.1} parent=11 // pred_check
          %p326 = pneg %p111
        $region22: #{tpu_custom_call.1} parent=11 // pred_check_branch
          %328 = sbr.rel (%p326) target = $region24
        $region23: #{tpu_custom_call.1} parent=11 // pred_region
          _
        $region24: #{tpu_custom_call.1} parent=11 // pred_fallthru
          _
        // Predicated region
        $region25: #{tpu_custom_call.1} parent=11 // pred_check
          %p329 = pneg %p132
        $region26: #{tpu_custom_call.1} parent=11 // pred_check_branch
          %331 = sbr.rel (%p329) target = $region28
        $region27: #{tpu_custom_call.1} parent=11 // pred_region
          _
        $region28: #{tpu_custom_call.1} parent=11 // pred_fallthru
          _
        // Predicated region
        $region29: #{tpu_custom_call.1} parent=11 // pred_check
          %p332 = pneg %p153
        $region30: #{tpu_custom_call.1} parent=11 // pred_check_branch
          %334 = sbr.rel (%p332) target = $region32
        $region31: #{tpu_custom_call.1} parent=11 // pred_region
          _
        $region32: #{tpu_custom_call.1} parent=11 // pred_fallthru
          _
        // Predicated region
        $region33: #{tpu_custom_call.1} parent=11 // pred_check
          %p335 = pneg %p174
        $region34: #{tpu_custom_call.1} parent=11 // pred_check_branch
          %337 = sbr.rel (%p335) target = $region36
        $region35: #{tpu_custom_call.1} parent=11 // pred_region
          _
        $region36: #{tpu_custom_call.1} parent=11 // pred_fallthru
          _
        // Predicated region
        $region37: #{tpu_custom_call.1} parent=11 // pred_check
          %p338 = pneg %p195
        $region38: #{tpu_custom_call.1} parent=11 // pred_check_branch
          %340 = sbr.rel (%p338) target = $region40
        $region39: #{tpu_custom_call.1} parent=11 // pred_region
          %s342 = ssub.s32 18432, 18432
          %343 = vsyncadd [#allocation4], %s342
          %s344 = sshll.u32 [#allocation3], 4
          %s345 = int_to_ptr.vmem [resolvable:$true] %s344
          %350 = dma.hbm_to_vmem [thread:$0]  %s7, 18432, %s345, [#allocation4], 64, 64, 4
        $region40: #{tpu_custom_call.1} parent=11 // pred_fallthru
          _
        // Predicated region
        $region41: #{tpu_custom_call.1} parent=11 // pred_check
          %p351 = pneg %p216
        $region42: #{tpu_custom_call.1} parent=11 // pred_check_branch
          %353 = sbr.rel (%p351) target = $region44
        $region43: #{tpu_custom_call.1} parent=11 // pred_region
          _
        $region44: #{tpu_custom_call.1} parent=11 // pred_fallthru
          _
        // Predicated region
        $region45: #{tpu_custom_call.1} parent=11 // pred_check
          %p354 = pneg %p237
        $region46: #{tpu_custom_call.1} parent=11 // pred_check_branch
          %356 = sbr.rel (%p354) target = $region48
        $region47: #{tpu_custom_call.1} parent=11 // pred_region
          _
        $region48: #{tpu_custom_call.1} parent=11 // pred_fallthru
          _
        // Predicated region
        $region49: #{tpu_custom_call.1} parent=11 // pred_check
          %p357 = pneg %p258
        $region50: #{tpu_custom_call.1} parent=11 // pred_check_branch
          %359 = sbr.rel (%p357) target = $region52
        $region51: #{tpu_custom_call.1} parent=11 // pred_region
          _
        $region52: #{tpu_custom_call.1} parent=11 // pred_fallthru
          _
        // Predicated region
        $region53: #{tpu_custom_call.1} parent=11 // pred_check
          %p360 = pneg %p279
        $region54: #{tpu_custom_call.1} parent=11 // pred_check_branch
          %362 = sbr.rel (%p360) target = $region56
        $region55: #{tpu_custom_call.1} parent=11 // pred_region
          _
        $region56: #{tpu_custom_call.1} parent=11 // pred_fallthru
          _
      $region12: #{tpu_custom_call.1} parent=5 // pred_fallthru
        _
      %p363 = scmp.lt.s32.totalorder %s22, 2
      // Predicated region
      $region57: #{tpu_custom_call.1} parent=5 // pred_check
        %p364 = pneg %p363
      $region58: #{tpu_custom_call.1} parent=5 // pred_check_branch
        %366 = sbr.rel (%p364) target = $region60
      $region59: #{tpu_custom_call.1} parent=5 // pred_region
        // Predicated region
        $region61: #{tpu_custom_call.1} parent=59 // pred_check
          %p367 = pneg %p42
        $region62: #{tpu_custom_call.1} parent=59 // pred_check_branch
          %369 = sbr.rel (%p367) target = $region64
        $region63: #{tpu_custom_call.1} parent=59 // pred_region
          %p370 = scmp.lt.s32.totalorder %s22, 1
          %s371 = scalar_select %p370, %s22, 1
          %s372 = smul.addr %s371, 32
          %s373 = smul.addr %s372, 8
          %s374 = scalar_lea.vmem %s0, %s373
        $region64: #{tpu_custom_call.1} parent=59 // pred_fallthru
          _
      $region60: #{tpu_custom_call.1} parent=5 // pred_fallthru
        _
      %p375 = scmp.le.s32.totalorder 1, %s22
      %p376 = scmp.lt.s32.totalorder %s22, 3
      %p377 = pnand %p375, %p376
      %p378 = pneg %p377
      // Predicated region
      $region65: #{tpu_custom_call.1} parent=5 // pred_check
        _
      $region66: #{tpu_custom_call.1} parent=5 // pred_check_branch
        %380 = sbr.rel (%p377) target = $region68
      $region67: #{tpu_custom_call.1} parent=5 // pred_region
        %s381 = ssub.s32 %s22, 1
        // Predicated region
        $region69: #{tpu_custom_call.1} parent=67 // pred_check
          %p382 = pneg %p195
        $region70: #{tpu_custom_call.1} parent=67 // pred_check_branch
          %384 = sbr.rel (%p382) target = $region72
        $region71: #{tpu_custom_call.1} parent=67 // pred_region
          %385 = dma.done [#allocation4], 18432
        $region72: #{tpu_custom_call.1} parent=67 // pred_fallthru
          _
        %p386 = scmp.lt.s32.totalorder %s27, 1
        %s387 = scalar_select %p386, %s27, 1
        %s388 = smul.addr %s387, 32
        %s389 = smul.addr %s388, 8
        %s390 = scalar_lea.vmem %s0, %s389
        %p391 = pneg %p48
        %p392 = pneg %p45
        %p393 = pneg %p69
        %p394 = pneg %p66
        %p395 = pneg %p90
        %p396 = pneg %p87
        %p397 = pneg %p111
        %p398 = pneg %p108
        %p399 = pneg %p132
        %p400 = pneg %p129
        %p401 = pneg %p153
        %p402 = pneg %p150
        %p403 = pneg %p174
        %p404 = pneg %p171
        %p405 = pneg %p195
        %p406 = pneg %p192
        %p407 = pneg %p216
        %p408 = pneg %p213
        %p409 = pneg %p237
        %p410 = pneg %p234
        %p411 = pneg %p258
        %p412 = pneg %p255
        %p413 = pneg %p279
        %p414 = pneg %p276
        %p415 = pneg %p305
        %p416 = pneg %p302
        %s417 = sand.u32 %s292, 1
        %s418 = scalar_lea.sflag [#allocation5], %s417
        %s419 = sand.u32 %s292, 1
        %s420 = smul.addr %s419, 256
        %s421 = scalar_lea.vmem [#allocation6], %s420
        %p422 = scmp.lt.s32.totalorder %s27, 1
        %s423 = scalar_select %p422, %s27, 1
        %s424 = smul.addr %s423, 32
        %s425 = smul.addr %s424, 8
        %s426 = scalar_lea.vmem %s0, %s425
        %428 = vst [vmem:[#allocation2] sm:$0xff] 0
        %429 = vst [vmem:[#allocation2 + $0x90] sm:$0xff] 0
        %430 = vst [vmem:[#allocation2 + $0x120] sm:$0xff] 0
        %431 = vst [vmem:[#allocation2 + $0x88] sm:$0xff] 0
        %432 = vst [vmem:[#allocation2 + $0x118] sm:$0xff] 0
        %433 = vst [vmem:[#allocation2 + $0x1a8] sm:$0xff] 0
        %v434 = vld [vmem:[%s426] sm:$0xff]
        %v435 = vld [vmem:[%s426 + $0x8] sm:$0xff]
        %v436 = vld [vmem:[%s426 + $0x10] sm:$0xff]
        %v437 = vld [vmem:[%s426 + $0x18] sm:$0xff]
        %v438 = vld [vmem:[%s426 + $0x20] sm:$0xff]
        %v439 = vld [vmem:[%s426 + $0x28] sm:$0xff]
        %v440 = vld [vmem:[%s426 + $0x30] sm:$0xff]
        %v441 = vld [vmem:[%s426 + $0x38] sm:$0xff]
        %v442 = vld [vmem:[%s426 + $0x40] sm:$0xff]
        %v443 = vld [vmem:[%s426 + $0x48] sm:$0xff]
        %v444 = vld [vmem:[%s426 + $0x50] sm:$0xff]
        %v445 = vld [vmem:[%s426 + $0x58] sm:$0xff]
        %v446 = vld [vmem:[%s426 + $0x60] sm:$0xff]
        %v447 = vld [vmem:[%s426 + $0x68] sm:$0xff]
        %v448 = vld [vmem:[%s426 + $0x70] sm:$0xff]
        %v449 = vld [vmem:[%s426 + $0x78] sm:$0xff]
        %v450 = vld [vmem:[%s426 + $0x80] sm:$0xff]
        %v451 = vld [vmem:[%s426 + $0x88] sm:$0xff]
        %v452 = vld [vmem:[%s426 + $0x90] sm:$0xff]
        %v453 = vld [vmem:[%s426 + $0x98] sm:$0xff]
        %v454 = vld [vmem:[%s426 + $0xa0] sm:$0xff]
        %v455 = vld [vmem:[%s426 + $0xa8] sm:$0xff]
        %v456 = vld [vmem:[%s426 + $0xb0] sm:$0xff]
        %v457 = vld [vmem:[%s426 + $0xb8] sm:$0xff]
        %v458 = vld [vmem:[%s426 + $0xc0] sm:$0xff]
        %v459 = vld [vmem:[%s426 + $0xc8] sm:$0xff]
        %v460 = vld [vmem:[%s426 + $0xd0] sm:$0xff]
        %v461 = vld [vmem:[%s426 + $0xd8] sm:$0xff]
        %v462 = vld [vmem:[%s426 + $0xe0] sm:$0xff]
        %v463 = vld [vmem:[%s426 + $0xe8] sm:$0xff]
        %v464 = vld [vmem:[%s426 + $0xf0] sm:$0xff]
        %v465 = vld [vmem:[%s426 + $0xf8] sm:$0xff]
        %v466 = vpack.c.bf16 %v435, %v434
        %v467 = vpack.c.bf16 %v437, %v436
        %v468 = vpack.c.bf16 %v439, %v438
        %v469 = vpack.c.bf16 %v441, %v440
        %v470 = vpack.c.bf16 %v443, %v442
        %v471 = vpack.c.bf16 %v445, %v444
        %v472 = vpack.c.bf16 %v447, %v446
        %v473 = vpack.c.bf16 %v449, %v448
        %v474 = vpack.c.bf16 %v451, %v450
        %v475 = vpack.c.bf16 %v453, %v452
        %v476 = vpack.c.bf16 %v455, %v454
        %v477 = vpack.c.bf16 %v457, %v456
        %v478 = vpack.c.bf16 %v459, %v458
        %v479 = vpack.c.bf16 %v461, %v460
        %v480 = vpack.c.bf16 %v463, %v462
        %v481 = vpack.c.bf16 %v465, %v464
        %v482 = vld [vmem:[%s1] sm:$0xf]
        %v483 = vld [vmem:[%s1 + $0x4] sm:$0xf]
        %v484 = vld [vmem:[%s2] sm:$0x1]
        %v486 = vlaneseq
        %v487 = vshrl.u32 %v486, 7
        %v488 = vsub.s32 0, %v487
        %v489 = vrot.slane %v484, %v488
        %v493 = vunpack.c.l.b16 %v482
        %v494 = vunpack.c.l.b16 %v483
        %v495 = vpack.c.b16 %v494, %v493
        %vm497 = vcmask 130048
        %v499 = vsel %vm497, %v466, 0
        %v502 = vsel %vm497, %v467, 0
        %v505 = vsel %vm497, %v468, 0
        %v508 = vsel %vm497, %v469, 0
        %v511 = vsel %vm497, %v470, 0
        %v514 = vsel %vm497, %v471, 0
        %v517 = vsel %vm497, %v472, 0
        %v520 = vsel %vm497, %v473, 0
        %v523 = vsel %vm497, %v474, 0
        %v526 = vsel %vm497, %v475, 0
        %v529 = vsel %vm497, %v476, 0
        %v532 = vsel %vm497, %v477, 0
        %v535 = vsel %vm497, %v478, 0
        %v538 = vsel %vm497, %v479, 0
        %v541 = vsel %vm497, %v480, 0
        %v544 = vsel %vm497, %v481, 0
        %546 = vmatprep.subr.bf16.mxu0 0
        %547 = vmatpush1.bf16.msra.mxu0 %v495
        %548 = vmatprep.subr.bf16.mxu0 0
        %549 = vmatpush1.bf16.msra.mxu0 0
        %550 = vmatprep.subr.bf16.mxu0 0
        %551 = vmatpush1.bf16.msra.mxu0 0
        %552 = vmatprep.subr.bf16.mxu0 0
        %553 = vmatpush1.bf16.msra.mxu0 0
        %554 = vmatprep.subr.bf16.mxu0 0
        %555 = vmatpush1.bf16.msra.mxu0 0
        %556 = vmatprep.subr.bf16.mxu0 0
        %557 = vmatpush1.bf16.msra.mxu0 0
        %558 = vmatprep.subr.bf16.mxu0 0
        %559 = vmatpush1.bf16.msra.mxu0 0
        %560 = vmatprep.subr.bf16.mxu0 0
        %561 = vmatpush1.bf16.msra.mxu0 0
        %562 = vmatprep.subr.bf16.mxu0 0
        %563 = vmatpush1.bf16.msra.mxu0 0
        %564 = vmatprep.subr.bf16.mxu0 0
        %565 = vmatpush1.bf16.msra.mxu0 0
        %566 = vmatprep.subr.bf16.mxu0 0
        %567 = vmatpush1.bf16.msra.mxu0 0
        %568 = vmatprep.subr.bf16.mxu0 0
        %569 = vmatpush1.bf16.msra.mxu0 0
        %570 = vmatprep.subr.bf16.mxu0 0
        %571 = vmatpush1.bf16.msra.mxu0 0
        %572 = vmatprep.subr.bf16.mxu0 0
        %573 = vmatpush1.bf16.msra.mxu0 0
        %574 = vmatprep.subr.bf16.mxu0 0
        %575 = vmatpush1.bf16.msra.mxu0 0
        %576 = vmatprep.subr.bf16.mxu0 0
        %577 = vmatpush1.bf16.msra.mxu0 0
        %578 = vmatprep.mubr.bf16.mxu0 0
        %579 = vmatmul.mubr.bf16.gmra.mrb[0].mxu0 %v499
        %v580 = vpop.f32.mrb[0].mxu0
        %v581 = vadd.f32 %v489, %v580
        %v582 = vpop.f32.mrb[0].mxu0
        %v583 = vpop.f32.mrb[0].mxu0
        %v584 = vadd.f32 %v489, %v583
        %v585 = vpop.f32.mrb[0].mxu0
        %586 = vmatprep.mubr.bf16.mxu0 0
        %587 = vmatmul.mubr.bf16.gmra.mrb[0].mxu0 %v502
        %v588 = vpop.f32.mrb[0].mxu0
        %v589 = vadd.f32 %v489, %v588
        %v590 = vpop.f32.mrb[0].mxu0
        %v591 = vpop.f32.mrb[0].mxu0
        %v592 = vadd.f32 %v489, %v591
        %v593 = vpop.f32.mrb[0].mxu0
        %594 = vmatprep.mubr.bf16.mxu0 0
        %595 = vmatmul.mubr.bf16.gmra.mrb[0].mxu0 %v505
        %v596 = vpop.f32.mrb[0].mxu0
        %v597 = vadd.f32 %v489, %v596
        %v598 = vpop.f32.mrb[0].mxu0
        %v599 = vpop.f32.mrb[0].mxu0
        %v600 = vadd.f32 %v489, %v599
        %v601 = vpop.f32.mrb[0].mxu0
        %602 = vmatprep.mubr.bf16.mxu0 0
        %603 = vmatmul.mubr.bf16.gmra.mrb[0].mxu0 %v508
        %v604 = vpop.f32.mrb[0].mxu0
        %v605 = vadd.f32 %v489, %v604
        %v606 = vpop.f32.mrb[0].mxu0
        %v607 = vpop.f32.mrb[0].mxu0
        %v608 = vadd.f32 %v489, %v607
        %v609 = vpop.f32.mrb[0].mxu0
        %610 = vmatprep.mubr.bf16.mxu0 0
        %611 = vmatmul.mubr.bf16.gmra.mrb[0].mxu0 %v511
        %v612 = vpop.f32.mrb[0].mxu0
        %v613 = vadd.f32 %v489, %v612
        %v614 = vpop.f32.mrb[0].mxu0
        %v615 = vpop.f32.mrb[0].mxu0
        %v616 = vadd.f32 %v489, %v615
        %v617 = vpop.f32.mrb[0].mxu0
        %618 = vmatprep.mubr.bf16.mxu0 0
        %619 = vmatmul.mubr.bf16.gmra.mrb[0].mxu0 %v514
        %v620 = vpop.f32.mrb[0].mxu0
        %v621 = vadd.f32 %v489, %v620
        %v622 = vpop.f32.mrb[0].mxu0
        %v623 = vpop.f32.mrb[0].mxu0
        %v624 = vadd.f32 %v489, %v623
        %v625 = vpop.f32.mrb[0].mxu0
        %626 = vmatprep.mubr.bf16.mxu0 0
        %627 = vmatmul.mubr.bf16.gmra.mrb[0].mxu0 %v517
        %v628 = vpop.f32.mrb[0].mxu0
        %v629 = vadd.f32 %v489, %v628
        %v630 = vpop.f32.mrb[0].mxu0
        %v631 = vpop.f32.mrb[0].mxu0
        %v632 = vadd.f32 %v489, %v631
        %v633 = vpop.f32.mrb[0].mxu0
        %634 = vmatprep.mubr.bf16.mxu0 0
        %635 = vmatmul.mubr.bf16.gmra.mrb[0].mxu0 %v520
        %v636 = vpop.f32.mrb[0].mxu0
        %v637 = vadd.f32 %v489, %v636
        %v638 = vpop.f32.mrb[0].mxu0
        %v639 = vpop.f32.mrb[0].mxu0
        %v640 = vadd.f32 %v489, %v639
        %v641 = vpop.f32.mrb[0].mxu0
        %642 = vmatprep.mubr.bf16.mxu0 0
        %643 = vmatmul.mubr.bf16.gmra.mrb[0].mxu0 %v523
        %v644 = vpop.f32.mrb[0].mxu0
        %v645 = vadd.f32 %v489, %v644
        %v646 = vpop.f32.mrb[0].mxu0
        %v647 = vpop.f32.mrb[0].mxu0
        %v648 = vadd.f32 %v489, %v647
        %v649 = vpop.f32.mrb[0].mxu0
        %650 = vmatprep.mubr.bf16.mxu0 0
        %651 = vmatmul.mubr.bf16.gmra.mrb[0].mxu0 %v526
        %v652 = vpop.f32.mrb[0].mxu0
        %v653 = vadd.f32 %v489, %v652
        %v654 = vpop.f32.mrb[0].mxu0
        %v655 = vpop.f32.mrb[0].mxu0
        %v656 = vadd.f32 %v489, %v655
        %v657 = vpop.f32.mrb[0].mxu0
        %658 = vmatprep.mubr.bf16.mxu0 0
        %659 = vmatmul.mubr.bf16.gmra.mrb[0].mxu0 %v529
        %v660 = vpop.f32.mrb[0].mxu0
        %v661 = vadd.f32 %v489, %v660
        %v662 = vpop.f32.mrb[0].mxu0
        %v663 = vpop.f32.mrb[0].mxu0
        %v664 = vadd.f32 %v489, %v663
        %v665 = vpop.f32.mrb[0].mxu0
        %666 = vmatprep.mubr.bf16.mxu0 0
        %667 = vmatmul.mubr.bf16.gmra.mrb[0].mxu0 %v532
        %v668 = vpop.f32.mrb[0].mxu0
        %v669 = vadd.f32 %v489, %v668
        %v670 = vpop.f32.mrb[0].mxu0
        %v671 = vpop.f32.mrb[0].mxu0
        %v672 = vadd.f32 %v489, %v671
        %v673 = vpop.f32.mrb[0].mxu0
        %674 = vmatprep.mubr.bf16.mxu0 0
        %675 = vmatmul.mubr.bf16.gmra.mrb[0].mxu0 %v535
        %v676 = vpop.f32.mrb[0].mxu0
        %v677 = vadd.f32 %v489, %v676
        %v678 = vpop.f32.mrb[0].mxu0
        %v679 = vpop.f32.mrb[0].mxu0
        %v680 = vadd.f32 %v489, %v679
        %v681 = vpop.f32.mrb[0].mxu0
        %682 = vmatprep.mubr.bf16.mxu0 0
        %683 = vmatmul.mubr.bf16.gmra.mrb[0].mxu0 %v538
        %v684 = vpop.f32.mrb[0].mxu0
        %v685 = vadd.f32 %v489, %v684
        %v686 = vpop.f32.mrb[0].mxu0
        %v687 = vpop.f32.mrb[0].mxu0
        %v688 = vadd.f32 %v489, %v687
        %v689 = vpop.f32.mrb[0].mxu0
        %690 = vmatprep.mubr.bf16.mxu0 0
        %691 = vmatmul.mubr.bf16.gmra.mrb[0].mxu0 %v541
        %v692 = vpop.f32.mrb[0].mxu0
        %v693 = vadd.f32 %v489, %v692
        %v694 = vpop.f32.mrb[0].mxu0
        %v695 = vpop.f32.mrb[0].mxu0
        %v696 = vadd.f32 %v489, %v695
        %v697 = vpop.f32.mrb[0].mxu0
        %698 = vmatprep.mubr.bf16.mxu0 0
        %699 = vmatmul.mubr.bf16.gmra.mrb[0].mxu0 %v544
        %v700 = vpop.f32.mrb[0].mxu0
        %v701 = vadd.f32 %v489, %v700
        %v702 = vpop.f32.mrb[0].mxu0
        %v703 = vpop.f32.mrb[0].mxu0
        %v704 = vadd.f32 %v489, %v703
        %v705 = vpop.f32.mrb[0].mxu0
        %706 = vdwg.mxu0
        %v707 = vsub.f32 0.0, %v581
        %v708 = vsub.f32 0.0, %v584
        %v709 = vsub.f32 0.0, %v589
        %v710 = vsub.f32 0.0, %v592
        %v711 = vsub.f32 0.0, %v597
        %v712 = vsub.f32 0.0, %v600
        %v713 = vsub.f32 0.0, %v605
        %v714 = vsub.f32 0.0, %v608
        %v715 = vsub.f32 0.0, %v613
        %v716 = vsub.f32 0.0, %v616
        %v717 = vsub.f32 0.0, %v621
        %v718 = vsub.f32 0.0, %v624
        %v719 = vsub.f32 0.0, %v629
        %v720 = vsub.f32 0.0, %v632
        %v721 = vsub.f32 0.0, %v637
        %v722 = vsub.f32 0.0, %v640
        %v723 = vsub.f32 0.0, %v645
        %v724 = vsub.f32 0.0, %v648
        %v725 = vsub.f32 0.0, %v653
        %v726 = vsub.f32 0.0, %v656
        %v727 = vsub.f32 0.0, %v661
        %v728 = vsub.f32 0.0, %v664
        %v729 = vsub.f32 0.0, %v669
        %v730 = vsub.f32 0.0, %v672
        %v731 = vsub.f32 0.0, %v677
        %v732 = vsub.f32 0.0, %v680
        %v733 = vsub.f32 0.0, %v685
        %v734 = vsub.f32 0.0, %v688
        %v735 = vsub.f32 0.0, %v693
        %v736 = vsub.f32 0.0, %v696
        %v737 = vsub.f32 0.0, %v701
        %v738 = vsub.f32 0.0, %v704
        %v739 = vmul.f32 %v707, 1.442695
        %v740 = vpow.pop %v739
        %v741 = vmul.f32 %v708, 1.442695
        %v742 = vpow.pop %v741
        %v743 = vmul.f32 %v709, 1.442695
        %v744 = vpow.pop %v743
        %v745 = vmul.f32 %v710, 1.442695
        %v746 = vpow.pop %v745
        %v747 = vmul.f32 %v711, 1.442695
        %v748 = vpow.pop %v747
        %v749 = vmul.f32 %v712, 1.442695
        %v750 = vpow.pop %v749
        %v751 = vmul.f32 %v713, 1.442695
        %v752 = vpow.pop %v751
        %v753 = vmul.f32 %v714, 1.442695
        %v754 = vpow.pop %v753
        %v755 = vmul.f32 %v715, 1.442695
        %v756 = vpow.pop %v755
        %v757 = vmul.f32 %v716, 1.442695
        %v758 = vpow.pop %v757
        %v759 = vmul.f32 %v717, 1.442695
        %v760 = vpow.pop %v759
        %v761 = vmul.f32 %v718, 1.442695
        %v762 = vpow.pop %v761
        %v763 = vmul.f32 %v719, 1.442695
        %v764 = vpow.pop %v763
        %v765 = vmul.f32 %v720, 1.442695
        %v766 = vpow.pop %v765
        %v767 = vmul.f32 %v721, 1.442695
        %v768 = vpow.pop %v767
        %v769 = vmul.f32 %v722, 1.442695
        %v770 = vpow.pop %v769
        %v771 = vmul.f32 %v723, 1.442695
        %v772 = vpow.pop %v771
        %v773 = vmul.f32 %v724, 1.442695
        %v774 = vpow.pop %v773
        %v775 = vmul.f32 %v725, 1.442695
        %v776 = vpow.pop %v775
        %v777 = vmul.f32 %v726, 1.442695
        %v778 = vpow.pop %v777
        %v779 = vmul.f32 %v727, 1.442695
        %v780 = vpow.pop %v779
        %v781 = vmul.f32 %v728, 1.442695
        %v782 = vpow.pop %v781
        %v783 = vmul.f32 %v729, 1.442695
        %v784 = vpow.pop %v783
        %v785 = vmul.f32 %v730, 1.442695
        %v786 = vpow.pop %v785
        %v787 = vmul.f32 %v731, 1.442695
        %v788 = vpow.pop %v787
        %v789 = vmul.f32 %v732, 1.442695
        %v790 = vpow.pop %v789
        %v791 = vmul.f32 %v733, 1.442695
        %v792 = vpow.pop %v791
        %v793 = vmul.f32 %v734, 1.442695
        %v794 = vpow.pop %v793
        %v795 = vmul.f32 %v735, 1.442695
        %v796 = vpow.pop %v795
        %v797 = vmul.f32 %v736, 1.442695
        %v798 = vpow.pop %v797
        %v799 = vmul.f32 %v737, 1.442695
        %v800 = vpow.pop %v799
        %v801 = vmul.f32 %v738, 1.442695
        %v802 = vpow.pop %v801
        %v803 = vadd.f32 %v740, 1.0
        %v804 = vadd.f32 %v742, 1.0
        %v805 = vadd.f32 %v744, 1.0
        %v806 = vadd.f32 %v746, 1.0
        %v807 = vadd.f32 %v748, 1.0
        %v808 = vadd.f32 %v750, 1.0
        %v809 = vadd.f32 %v752, 1.0
        %v810 = vadd.f32 %v754, 1.0
        %v811 = vadd.f32 %v756, 1.0
        %v812 = vadd.f32 %v758, 1.0
        %v813 = vadd.f32 %v760, 1.0
        %v814 = vadd.f32 %v762, 1.0
        %v815 = vadd.f32 %v764, 1.0
        %v816 = vadd.f32 %v766, 1.0
        %v817 = vadd.f32 %v768, 1.0
        %v818 = vadd.f32 %v770, 1.0
        %v819 = vadd.f32 %v772, 1.0
        %v820 = vadd.f32 %v774, 1.0
        %v821 = vadd.f32 %v776, 1.0
        %v822 = vadd.f32 %v778, 1.0
        %v823 = vadd.f32 %v780, 1.0
        %v824 = vadd.f32 %v782, 1.0
        %v825 = vadd.f32 %v784, 1.0
        %v826 = vadd.f32 %v786, 1.0
        %v827 = vadd.f32 %v788, 1.0
        %v828 = vadd.f32 %v790, 1.0
        %v829 = vadd.f32 %v792, 1.0
        %v830 = vadd.f32 %v794, 1.0
        %v831 = vadd.f32 %v796, 1.0
        %v832 = vadd.f32 %v798, 1.0
        %v833 = vadd.f32 %v800, 1.0
        %v834 = vadd.f32 %v802, 1.0
        %v835 = vrcp.pop %v803
        %v836 = vrcp.pop %v804
        %v837 = vrcp.pop %v805
        %v838 = vrcp.pop %v806
        %v839 = vrcp.pop %v807
        %v840 = vrcp.pop %v808
        %v841 = vrcp.pop %v809
        %v842 = vrcp.pop %v810
        %v843 = vrcp.pop %v811
        %v844 = vrcp.pop %v812
        %v845 = vrcp.pop %v813
        %v846 = vrcp.pop %v814
        %v847 = vrcp.pop %v815
        %v848 = vrcp.pop %v816
        %v849 = vrcp.pop %v817
        %v850 = vrcp.pop %v818
        %v851 = vrcp.pop %v819
        %v852 = vrcp.pop %v820
        %v853 = vrcp.pop %v821
        %v854 = vrcp.pop %v822
        %v855 = vrcp.pop %v823
        %v856 = vrcp.pop %v824
        %v857 = vrcp.pop %v825
        %v858 = vrcp.pop %v826
        %v859 = vrcp.pop %v827
        %v860 = vrcp.pop %v828
        %v861 = vrcp.pop %v829
        %v862 = vrcp.pop %v830
        %v863 = vrcp.pop %v831
        %v864 = vrcp.pop %v832
        %v865 = vrcp.pop %v833
        %v866 = vrcp.pop %v834
        %v867 = vmul.f32 %v581, %v835
        %v868 = vmul.f32 %v584, %v836
        %v869 = vmul.f32 %v589, %v837
        %v870 = vmul.f32 %v592, %v838
        %v871 = vmul.f32 %v597, %v839
        %v872 = vmul.f32 %v600, %v840
        %v873 = vmul.f32 %v605, %v841
        %v874 = vmul.f32 %v608, %v842
        %v875 = vmul.f32 %v613, %v843
        %v876 = vmul.f32 %v616, %v844
        %v877 = vmul.f32 %v621, %v845
        %v878 = vmul.f32 %v624, %v846
        %v879 = vmul.f32 %v629, %v847
        %v880 = vmul.f32 %v632, %v848
        %v881 = vmul.f32 %v637, %v849
        %v882 = vmul.f32 %v640, %v850
        %v883 = vmul.f32 %v645, %v851
        %v884 = vmul.f32 %v648, %v852
        %v885 = vmul.f32 %v653, %v853
        %v886 = vmul.f32 %v656, %v854
        %v887 = vmul.f32 %v661, %v855
        %v888 = vmul.f32 %v664, %v856
        %v889 = vmul.f32 %v669, %v857
        %v890 = vmul.f32 %v672, %v858
        %v891 = vmul.f32 %v677, %v859
        %v892 = vmul.f32 %v680, %v860
        %v893 = vmul.f32 %v685, %v861
        %v894 = vmul.f32 %v688, %v862
        %v895 = vmul.f32 %v693, %v863
        %v896 = vmul.f32 %v696, %v864
        %v897 = vmul.f32 %v701, %v865
        %v898 = vmul.f32 %v704, %v866
        %v899 = vld [vmem:[%s3] sm:$0xf]
        %v900 = vld [vmem:[%s3 + $0x4] sm:$0xf]
        %v901 = vld [vmem:[%s4] sm:$0x1]
        %v903 = vlaneseq
        %v904 = vshrl.u32 %v903, 7
        %v905 = vsub.s32 0, %v904
        %v906 = vrot.slane %v901, %v905
        %v910 = vunpack.c.l.b16 %v899
        %v911 = vunpack.c.l.b16 %v900
        %v912 = vpack.c.b16 %v911, %v910
        %914 = vmatprep.subr.bf16.mxu0 0
        %915 = vmatpush1.bf16.msra.mxu0 %v912
        %916 = vmatprep.subr.bf16.mxu0 0
        %917 = vmatpush1.bf16.msra.mxu0 0
        %918 = vmatprep.subr.bf16.mxu0 0
        %919 = vmatpush1.bf16.msra.mxu0 0
        %920 = vmatprep.subr.bf16.mxu0 0
        %921 = vmatpush1.bf16.msra.mxu0 0
        %922 = vmatprep.subr.bf16.mxu0 0
        %923 = vmatpush1.bf16.msra.mxu0 0
        %924 = vmatprep.subr.bf16.mxu0 0
        %925 = vmatpush1.bf16.msra.mxu0 0
        %926 = vmatprep.subr.bf16.mxu0 0
        %927 = vmatpush1.bf16.msra.mxu0 0
        %928 = vmatprep.subr.bf16.mxu0 0
        %929 = vmatpush1.bf16.msra.mxu0 0
        %930 = vmatprep.subr.bf16.mxu0 0
        %931 = vmatpush1.bf16.msra.mxu0 0
        %932 = vmatprep.subr.bf16.mxu0 0
        %933 = vmatpush1.bf16.msra.mxu0 0
        %934 = vmatprep.subr.bf16.mxu0 0
        %935 = vmatpush1.bf16.msra.mxu0 0
        %936 = vmatprep.subr.bf16.mxu0 0
        %937 = vmatpush1.bf16.msra.mxu0 0
        %938 = vmatprep.subr.bf16.mxu0 0
        %939 = vmatpush1.bf16.msra.mxu0 0
        %940 = vmatprep.subr.bf16.mxu0 0
        %941 = vmatpush1.bf16.msra.mxu0 0
        %942 = vmatprep.subr.bf16.mxu0 0
        %943 = vmatpush1.bf16.msra.mxu0 0
        %944 = vmatprep.subr.bf16.mxu0 0
        %945 = vmatpush1.bf16.msra.mxu0 0
        %946 = vmatprep.mubr.bf16.mxu0 0
        %947 = vmatmul.mubr.bf16.gmra.mrb[0].mxu0 %v499
        %v948 = vpop.f32.mrb[0].mxu0
        %v949 = vadd.f32 %v906, %v948
        %v950 = vpop.f32.mrb[0].mxu0
        %v951 = vpop.f32.mrb[0].mxu0
        %v952 = vadd.f32 %v906, %v951
        %v953 = vpop.f32.mrb[0].mxu0
        %954 = vmatprep.mubr.bf16.mxu0 0
        %955 = vmatmul.mubr.bf16.gmra.mrb[0].mxu0 %v502
        %v956 = vpop.f32.mrb[0].mxu0
        %v957 = vadd.f32 %v906, %v956
        %v958 = vpop.f32.mrb[0].mxu0
        %v959 = vpop.f32.mrb[0].mxu0
        %v960 = vadd.f32 %v906, %v959
        %v961 = vpop.f32.mrb[0].mxu0
        %962 = vmatprep.mubr.bf16.mxu0 0
        %963 = vmatmul.mubr.bf16.gmra.mrb[0].mxu0 %v505
        %v964 = vpop.f32.mrb[0].mxu0
        %v965 = vadd.f32 %v906, %v964
        %v966 = vpop.f32.mrb[0].mxu0
        %v967 = vpop.f32.mrb[0].mxu0
        %v968 = vadd.f32 %v906, %v967
        %v969 = vpop.f32.mrb[0].mxu0
        %970 = vmatprep.mubr.bf16.mxu0 0
        %971 = vmatmul.mubr.bf16.gmra.mrb[0].mxu0 %v508
        %v972 = vpop.f32.mrb[0].mxu0
        %v973 = vadd.f32 %v906, %v972
        %v974 = vpop.f32.mrb[0].mxu0
        %v975 = vpop.f32.mrb[0].mxu0
        %v976 = vadd.f32 %v906, %v975
        %v977 = vpop.f32.mrb[0].mxu0
        %978 = vmatprep.mubr.bf16.mxu0 0
        %979 = vmatmul.mubr.bf16.gmra.mrb[0].mxu0 %v511
        %v980 = vpop.f32.mrb[0].mxu0
        %v981 = vadd.f32 %v906, %v980
        %v982 = vpop.f32.mrb[0].mxu0
        %v983 = vpop.f32.mrb[0].mxu0
        %v984 = vadd.f32 %v906, %v983
        %v985 = vpop.f32.mrb[0].mxu0
        %986 = vmatprep.mubr.bf16.mxu0 0
        %987 = vmatmul.mubr.bf16.gmra.mrb[0].mxu0 %v514
        %v988 = vpop.f32.mrb[0].mxu0
        %v989 = vadd.f32 %v906, %v988
        %v990 = vpop.f32.mrb[0].mxu0
        %v991 = vpop.f32.mrb[0].mxu0
        %v992 = vadd.f32 %v906, %v991
        %v993 = vpop.f32.mrb[0].mxu0
        %994 = vmatprep.mubr.bf16.mxu0 0
        %995 = vmatmul.mubr.bf16.gmra.mrb[0].mxu0 %v517
        %v996 = vpop.f32.mrb[0].mxu0
        %v997 = vadd.f32 %v906, %v996
        %v998 = vpop.f32.mrb[0].mxu0
        %v999 = vpop.f32.mrb[0].mxu0
        %v1000 = vadd.f32 %v906, %v999
        %v1001 = vpop.f32.mrb[0].mxu0
        %1002 = vmatprep.mubr.bf16.mxu0 0
        %1003 = vmatmul.mubr.bf16.gmra.mrb[0].mxu0 %v520
        %v1004 = vpop.f32.mrb[0].mxu0
        %v1005 = vadd.f32 %v906, %v1004
        %v1006 = vpop.f32.mrb[0].mxu0
        %v1007 = vpop.f32.mrb[0].mxu0
        %v1008 = vadd.f32 %v906, %v1007
        %v1009 = vpop.f32.mrb[0].mxu0
        %1010 = vmatprep.mubr.bf16.mxu0 0
        %1011 = vmatmul.mubr.bf16.gmra.mrb[0].mxu0 %v523
        %v1012 = vpop.f32.mrb[0].mxu0
        %v1013 = vadd.f32 %v906, %v1012
        %v1014 = vpop.f32.mrb[0].mxu0
        %v1015 = vpop.f32.mrb[0].mxu0
        %v1016 = vadd.f32 %v906, %v1015
        %v1017 = vpop.f32.mrb[0].mxu0
        %1018 = vmatprep.mubr.bf16.mxu0 0
        %1019 = vmatmul.mubr.bf16.gmra.mrb[0].mxu0 %v526
        %v1020 = vpop.f32.mrb[0].mxu0
        %v1021 = vadd.f32 %v906, %v1020
        %v1022 = vpop.f32.mrb[0].mxu0
        %v1023 = vpop.f32.mrb[0].mxu0
        %v1024 = vadd.f32 %v906, %v1023
        %v1025 = vpop.f32.mrb[0].mxu0
        %1026 = vmatprep.mubr.bf16.mxu0 0
        %1027 = vmatmul.mubr.bf16.gmra.mrb[0].mxu0 %v529
        %v1028 = vpop.f32.mrb[0].mxu0
        %v1029 = vadd.f32 %v906, %v1028
        %v1030 = vpop.f32.mrb[0].mxu0
        %v1031 = vpop.f32.mrb[0].mxu0
        %v1032 = vadd.f32 %v906, %v1031
        %v1033 = vpop.f32.mrb[0].mxu0
        %1034 = vmatprep.mubr.bf16.mxu0 0
        %1035 = vmatmul.mubr.bf16.gmra.mrb[0].mxu0 %v532
        %v1036 = vpop.f32.mrb[0].mxu0
        %v1037 = vadd.f32 %v906, %v1036
        %v1038 = vpop.f32.mrb[0].mxu0
        %v1039 = vpop.f32.mrb[0].mxu0
        %v1040 = vadd.f32 %v906, %v1039
        %v1041 = vpop.f32.mrb[0].mxu0
        %1042 = vmatprep.mubr.bf16.mxu0 0
        %1043 = vmatmul.mubr.bf16.gmra.mrb[0].mxu0 %v535
        %v1044 = vpop.f32.mrb[0].mxu0
        %v1045 = vadd.f32 %v906, %v1044
        %v1046 = vpop.f32.mrb[0].mxu0
        %v1047 = vpop.f32.mrb[0].mxu0
        %v1048 = vadd.f32 %v906, %v1047
        %v1049 = vpop.f32.mrb[0].mxu0
        %1050 = vmatprep.mubr.bf16.mxu0 0
        %1051 = vmatmul.mubr.bf16.gmra.mrb[0].mxu0 %v538
        %v1052 = vpop.f32.mrb[0].mxu0
        %v1053 = vadd.f32 %v906, %v1052
        %v1054 = vpop.f32.mrb[0].mxu0
        %v1055 = vpop.f32.mrb[0].mxu0
        %v1056 = vadd.f32 %v906, %v1055
        %v1057 = vpop.f32.mrb[0].mxu0
        %1058 = vmatprep.mubr.bf16.mxu0 0
        %1059 = vmatmul.mubr.bf16.gmra.mrb[0].mxu0 %v541
        %v1060 = vpop.f32.mrb[0].mxu0
        %v1061 = vadd.f32 %v906, %v1060
        %v1062 = vpop.f32.mrb[0].mxu0
        %v1063 = vpop.f32.mrb[0].mxu0
        %v1064 = vadd.f32 %v906, %v1063
        %v1065 = vpop.f32.mrb[0].mxu0
        %1066 = vmatprep.mubr.bf16.mxu0 0
        %1067 = vmatmul.mubr.bf16.gmra.mrb[0].mxu0 %v544
        %v1068 = vpop.f32.mrb[0].mxu0
        %v1069 = vadd.f32 %v906, %v1068
        %v1070 = vpop.f32.mrb[0].mxu0
        %v1071 = vpop.f32.mrb[0].mxu0
        %v1072 = vadd.f32 %v906, %v1071
        %v1073 = vpop.f32.mrb[0].mxu0
        %1074 = vdwg.mxu0
        %v1075 = vsub.f32 0.0, %v949
        %v1076 = vsub.f32 0.0, %v952
        %v1077 = vsub.f32 0.0, %v957
        %v1078 = vsub.f32 0.0, %v960
        %v1079 = vsub.f32 0.0, %v965
        %v1080 = vsub.f32 0.0, %v968
        %v1081 = vsub.f32 0.0, %v973
        %v1082 = vsub.f32 0.0, %v976
        %v1083 = vsub.f32 0.0, %v981
        %v1084 = vsub.f32 0.0, %v984
        %v1085 = vsub.f32 0.0, %v989
        %v1086 = vsub.f32 0.0, %v992
        %v1087 = vsub.f32 0.0, %v997
        %v1088 = vsub.f32 0.0, %v1000
        %v1089 = vsub.f32 0.0, %v1005
        %v1090 = vsub.f32 0.0, %v1008
        %v1091 = vsub.f32 0.0, %v1013
        %v1092 = vsub.f32 0.0, %v1016
        %v1093 = vsub.f32 0.0, %v1021
        %v1094 = vsub.f32 0.0, %v1024
        %v1095 = vsub.f32 0.0, %v1029
        %v1096 = vsub.f32 0.0, %v1032
        %v1097 = vsub.f32 0.0, %v1037
        %v1098 = vsub.f32 0.0, %v1040
        %v1099 = vsub.f32 0.0, %v1045
        %v1100 = vsub.f32 0.0, %v1048
        %v1101 = vsub.f32 0.0, %v1053
        %v1102 = vsub.f32 0.0, %v1056
        %v1103 = vsub.f32 0.0, %v1061
        %v1104 = vsub.f32 0.0, %v1064
        %v1105 = vsub.f32 0.0, %v1069
        %v1106 = vsub.f32 0.0, %v1072
        %v1107 = vmul.f32 %v1075, 1.442695
        %v1108 = vpow.pop %v1107
        %v1109 = vmul.f32 %v1076, 1.442695
        %v1110 = vpow.pop %v1109
        %v1111 = vmul.f32 %v1077, 1.442695
        %v1112 = vpow.pop %v1111
        %v1113 = vmul.f32 %v1078, 1.442695
        %v1114 = vpow.pop %v1113
        %v1115 = vmul.f32 %v1079, 1.442695
        %v1116 = vpow.pop %v1115
        %v1117 = vmul.f32 %v1080, 1.442695
        %v1118 = vpow.pop %v1117
        %v1119 = vmul.f32 %v1081, 1.442695
        %v1120 = vpow.pop %v1119
        %v1121 = vmul.f32 %v1082, 1.442695
        %v1122 = vpow.pop %v1121
        %v1123 = vmul.f32 %v1083, 1.442695
        %v1124 = vpow.pop %v1123
        %v1125 = vmul.f32 %v1084, 1.442695
        %v1126 = vpow.pop %v1125
        %v1127 = vmul.f32 %v1085, 1.442695
        %v1128 = vpow.pop %v1127
        %v1129 = vmul.f32 %v1086, 1.442695
        %v1130 = vpow.pop %v1129
        %v1131 = vmul.f32 %v1087, 1.442695
        %v1132 = vpow.pop %v1131
        %v1133 = vmul.f32 %v1088, 1.442695
        %v1134 = vpow.pop %v1133
        %v1135 = vmul.f32 %v1089, 1.442695
        %v1136 = vpow.pop %v1135
        %v1137 = vmul.f32 %v1090, 1.442695
        %v1138 = vpow.pop %v1137
        %v1139 = vmul.f32 %v1091, 1.442695
        %v1140 = vpow.pop %v1139
        %v1141 = vmul.f32 %v1092, 1.442695
        %v1142 = vpow.pop %v1141
        %v1143 = vmul.f32 %v1093, 1.442695
        %v1144 = vpow.pop %v1143
        %v1145 = vmul.f32 %v1094, 1.442695
        %v1146 = vpow.pop %v1145
        %v1147 = vmul.f32 %v1095, 1.442695
        %v1148 = vpow.pop %v1147
        %v1149 = vmul.f32 %v1096, 1.442695
        %v1150 = vpow.pop %v1149
        %v1151 = vmul.f32 %v1097, 1.442695
        %v1152 = vpow.pop %v1151
        %v1153 = vmul.f32 %v1098, 1.442695
        %v1154 = vpow.pop %v1153
        %v1155 = vmul.f32 %v1099, 1.442695
        %v1156 = vpow.pop %v1155
        %v1157 = vmul.f32 %v1100, 1.442695
        %v1158 = vpow.pop %v1157
        %v1159 = vmul.f32 %v1101, 1.442695
        %v1160 = vpow.pop %v1159
        %v1161 = vmul.f32 %v1102, 1.442695
        %v1162 = vpow.pop %v1161
        %v1163 = vmul.f32 %v1103, 1.442695
        %v1164 = vpow.pop %v1163
        %v1165 = vmul.f32 %v1104, 1.442695
        %v1166 = vpow.pop %v1165
        %v1167 = vmul.f32 %v1105, 1.442695
        %v1168 = vpow.pop %v1167
        %v1169 = vmul.f32 %v1106, 1.442695
        %v1170 = vpow.pop %v1169
        %v1171 = vadd.f32 %v1108, 1.0
        %v1172 = vadd.f32 %v1110, 1.0
        %v1173 = vadd.f32 %v1112, 1.0
        %v1174 = vadd.f32 %v1114, 1.0
        %v1175 = vadd.f32 %v1116, 1.0
        %v1176 = vadd.f32 %v1118, 1.0
        %v1177 = vadd.f32 %v1120, 1.0
        %v1178 = vadd.f32 %v1122, 1.0
        %v1179 = vadd.f32 %v1124, 1.0
        %v1180 = vadd.f32 %v1126, 1.0
        %v1181 = vadd.f32 %v1128, 1.0
        %v1182 = vadd.f32 %v1130, 1.0
        %v1183 = vadd.f32 %v1132, 1.0
        %v1184 = vadd.f32 %v1134, 1.0
        %v1185 = vadd.f32 %v1136, 1.0
        %v1186 = vadd.f32 %v1138, 1.0
        %v1187 = vadd.f32 %v1140, 1.0
        %v1188 = vadd.f32 %v1142, 1.0
        %v1189 = vadd.f32 %v1144, 1.0
        %v1190 = vadd.f32 %v1146, 1.0
        %v1191 = vadd.f32 %v1148, 1.0
        %v1192 = vadd.f32 %v1150, 1.0
        %v1193 = vadd.f32 %v1152, 1.0
        %v1194 = vadd.f32 %v1154, 1.0
        %v1195 = vadd.f32 %v1156, 1.0
        %v1196 = vadd.f32 %v1158, 1.0
        %v1197 = vadd.f32 %v1160, 1.0
        %v1198 = vadd.f32 %v1162, 1.0
        %v1199 = vadd.f32 %v1164, 1.0
        %v1200 = vadd.f32 %v1166, 1.0
        %v1201 = vadd.f32 %v1168, 1.0
        %v1202 = vadd.f32 %v1170, 1.0
        %v1203 = vrcp.pop %v1171
        %v1204 = vrcp.pop %v1172
        %v1205 = vrcp.pop %v1173
        %v1206 = vrcp.pop %v1174
        %v1207 = vrcp.pop %v1175
        %v1208 = vrcp.pop %v1176
        %v1209 = vrcp.pop %v1177
        %v1210 = vrcp.pop %v1178
        %v1211 = vrcp.pop %v1179
        %v1212 = vrcp.pop %v1180
        %v1213 = vrcp.pop %v1181
        %v1214 = vrcp.pop %v1182
        %v1215 = vrcp.pop %v1183
        %v1216 = vrcp.pop %v1184
        %v1217 = vrcp.pop %v1185
        %v1218 = vrcp.pop %v1186
        %v1219 = vrcp.pop %v1187
        %v1220 = vrcp.pop %v1188
        %v1221 = vrcp.pop %v1189
        %v1222 = vrcp.pop %v1190
        %v1223 = vrcp.pop %v1191
        %v1224 = vrcp.pop %v1192
        %v1225 = vrcp.pop %v1193
        %v1226 = vrcp.pop %v1194
        %v1227 = vrcp.pop %v1195
        %v1228 = vrcp.pop %v1196
        %v1229 = vrcp.pop %v1197
        %v1230 = vrcp.pop %v1198
        %v1231 = vrcp.pop %v1199
        %v1232 = vrcp.pop %v1200
        %v1233 = vrcp.pop %v1201
        %v1234 = vrcp.pop %v1202
        %v1235 = vmul.f32 %v949, %v1203
        %v1236 = vmul.f32 %v952, %v1204
        %v1237 = vmul.f32 %v957, %v1205
        %v1238 = vmul.f32 %v960, %v1206
        %v1239 = vmul.f32 %v965, %v1207
        %v1240 = vmul.f32 %v968, %v1208
        %v1241 = vmul.f32 %v973, %v1209
        %v1242 = vmul.f32 %v976, %v1210
        %v1243 = vmul.f32 %v981, %v1211
        %v1244 = vmul.f32 %v984, %v1212
        %v1245 = vmul.f32 %v989, %v1213
        %v1246 = vmul.f32 %v992, %v1214
        %v1247 = vmul.f32 %v997, %v1215
        %v1248 = vmul.f32 %v1000, %v1216
        %v1249 = vmul.f32 %v1005, %v1217
        %v1250 = vmul.f32 %v1008, %v1218
        %v1251 = vmul.f32 %v1013, %v1219
        %v1252 = vmul.f32 %v1016, %v1220
        %v1253 = vmul.f32 %v1021, %v1221
        %v1254 = vmul.f32 %v1024, %v1222
        %v1255 = vmul.f32 %v1029, %v1223
        %v1256 = vmul.f32 %v1032, %v1224
        %v1257 = vmul.f32 %v1037, %v1225
        %v1258 = vmul.f32 %v1040, %v1226
        %v1259 = vmul.f32 %v1045, %v1227
        %v1260 = vmul.f32 %v1048, %v1228
        %v1261 = vmul.f32 %v1053, %v1229
        %v1262 = vmul.f32 %v1056, %v1230
        %v1263 = vmul.f32 %v1061, %v1231
        %v1264 = vmul.f32 %v1064, %v1232
        %v1265 = vmul.f32 %v1069, %v1233
        %v1266 = vmul.f32 %v1072, %v1234
        %v1267 = vpack.c.bf16 %v1236, %v1235
        %v1268 = vpack.c.bf16 %v1238, %v1237
        %v1269 = vpack.c.bf16 %v1240, %v1239
        %v1270 = vpack.c.bf16 %v1242, %v1241
        %v1271 = vpack.c.bf16 %v1244, %v1243
        %v1272 = vpack.c.bf16 %v1246, %v1245
        %v1273 = vpack.c.bf16 %v1248, %v1247
        %v1274 = vpack.c.bf16 %v1250, %v1249
        %v1275 = vpack.c.bf16 %v1252, %v1251
        %v1276 = vpack.c.bf16 %v1254, %v1253
        %v1277 = vpack.c.bf16 %v1256, %v1255
        %v1278 = vpack.c.bf16 %v1258, %v1257
        %v1279 = vpack.c.bf16 %v1260, %v1259
        %v1280 = vpack.c.bf16 %v1262, %v1261
        %v1281 = vpack.c.bf16 %v1264, %v1263
        %v1282 = vpack.c.bf16 %v1266, %v1265
        %v1283 = vlaneseq
        %v1284 = vshrl.u32 %v1283, 7
        %v1285 = vadd.s32 %v1284, 8
        %v1286 = vadd.s32 %v1284, 16
        %v1287 = vadd.s32 %v1284, 24
        %v1288 = vadd.s32 %v1284, 32
        %v1289 = vadd.s32 %v1284, 40
        %v1290 = vadd.s32 %v1284, 48
        %v1291 = vadd.s32 %v1284, 56
        %v1292 = vadd.s32 %v1284, 64
        %v1293 = vadd.s32 %v1284, 72
        %v1294 = vadd.s32 %v1284, 80
        %v1295 = vadd.s32 %v1284, 88
        %v1296 = vadd.s32 %v1284, 96
        %v1297 = vadd.s32 %v1284, 104
        %v1298 = vadd.s32 %v1284, 112
        %v1299 = vadd.s32 %v1284, 120
        %v1300 = vadd.s32 %v1284, 128
        %v1301 = vadd.s32 %v1284, 136
        %v1302 = vadd.s32 %v1284, 144
        %v1303 = vadd.s32 %v1284, 152
        %v1304 = vadd.s32 %v1284, 160
        %v1305 = vadd.s32 %v1284, 168
        %v1306 = vadd.s32 %v1284, 176
        %v1307 = vadd.s32 %v1284, 184
        %v1308 = vadd.s32 %v1284, 192
        %v1309 = vadd.s32 %v1284, 200
        %v1310 = vadd.s32 %v1284, 208
        %v1311 = vadd.s32 %v1284, 216
        %v1312 = vadd.s32 %v1284, 224
        %v1313 = vadd.s32 %v1284, 232
        %v1314 = vadd.s32 %v1284, 240
        %v1315 = vadd.s32 %v1284, 248
        %vm1316 = vcmp.lt.s32.totalorder %v1284, 0
        %v1317 = vsub.s32 0, %v1284
        %v1318 = vsel %vm1316, %v1317, %v1284
        %v1319 = vshrl.u32 %v1318, 4
        %v1320 = vand.u32 %v1318, 15
        %v1321 = vsub.s32 0, %v1320
        %v1322 = vsel %vm1316, %v1321, %v1320
        %vm1323 = vcmp.lt.s32.totalorder %v1285, 0
        %v1324 = vsub.s32 0, %v1285
        %v1325 = vsel %vm1323, %v1324, %v1285
        %v1326 = vshrl.u32 %v1325, 4
        %v1327 = vand.u32 %v1325, 15
        %v1328 = vsub.s32 0, %v1327
        %v1329 = vsel %vm1323, %v1328, %v1327
        %vm1330 = vcmp.lt.s32.totalorder %v1286, 0
        %v1331 = vsub.s32 0, %v1286
        %v1332 = vsel %vm1330, %v1331, %v1286
        %v1333 = vshrl.u32 %v1332, 4
        %v1334 = vand.u32 %v1332, 15
        %v1335 = vsub.s32 0, %v1334
        %v1336 = vsel %vm1330, %v1335, %v1334
        %vm1337 = vcmp.lt.s32.totalorder %v1287, 0
        %v1338 = vsub.s32 0, %v1287
        %v1339 = vsel %vm1337, %v1338, %v1287
        %v1340 = vshrl.u32 %v1339, 4
        %v1341 = vand.u32 %v1339, 15
        %v1342 = vsub.s32 0, %v1341
        %v1343 = vsel %vm1337, %v1342, %v1341
        %vm1344 = vcmp.lt.s32.totalorder %v1288, 0
        %v1345 = vsub.s32 0, %v1288
        %v1346 = vsel %vm1344, %v1345, %v1288
        %v1347 = vshrl.u32 %v1346, 4
        %v1348 = vand.u32 %v1346, 15
        %v1349 = vsub.s32 0, %v1348
        %v1350 = vsel %vm1344, %v1349, %v1348
        %vm1351 = vcmp.lt.s32.totalorder %v1289, 0
        %v1352 = vsub.s32 0, %v1289
        %v1353 = vsel %vm1351, %v1352, %v1289
        %v1354 = vshrl.u32 %v1353, 4
        %v1355 = vand.u32 %v1353, 15
        %v1356 = vsub.s32 0, %v1355
        %v1357 = vsel %vm1351, %v1356, %v1355
        %vm1358 = vcmp.lt.s32.totalorder %v1290, 0
        %v1359 = vsub.s32 0, %v1290
        %v1360 = vsel %vm1358, %v1359, %v1290
        %v1361 = vshrl.u32 %v1360, 4
        %v1362 = vand.u32 %v1360, 15
        %v1363 = vsub.s32 0, %v1362
        %v1364 = vsel %vm1358, %v1363, %v1362
        %vm1365 = vcmp.lt.s32.totalorder %v1291, 0
        %v1366 = vsub.s32 0, %v1291
        %v1367 = vsel %vm1365, %v1366, %v1291
        %v1368 = vshrl.u32 %v1367, 4
        %v1369 = vand.u32 %v1367, 15
        %v1370 = vsub.s32 0, %v1369
        %v1371 = vsel %vm1365, %v1370, %v1369
        %vm1372 = vcmp.lt.s32.totalorder %v1292, 0
        %v1373 = vsub.s32 0, %v1292
        %v1374 = vsel %vm1372, %v1373, %v1292
        %v1375 = vshrl.u32 %v1374, 4
        %v1376 = vand.u32 %v1374, 15
        %v1377 = vsub.s32 0, %v1376
        %v1378 = vsel %vm1372, %v1377, %v1376
        %vm1379 = vcmp.lt.s32.totalorder %v1293, 0
        %v1380 = vsub.s32 0, %v1293
        %v1381 = vsel %vm1379, %v1380, %v1293
        %v1382 = vshrl.u32 %v1381, 4
        %v1383 = vand.u32 %v1381, 15
        %v1384 = vsub.s32 0, %v1383
        %v1385 = vsel %vm1379, %v1384, %v1383
        %vm1386 = vcmp.lt.s32.totalorder %v1294, 0
        %v1387 = vsub.s32 0, %v1294
        %v1388 = vsel %vm1386, %v1387, %v1294
        %v1389 = vshrl.u32 %v1388, 4
        %v1390 = vand.u32 %v1388, 15
        %v1391 = vsub.s32 0, %v1390
        %v1392 = vsel %vm1386, %v1391, %v1390
        %vm1393 = vcmp.lt.s32.totalorder %v1295, 0
        %v1394 = vsub.s32 0, %v1295
        %v1395 = vsel %vm1393, %v1394, %v1295
        %v1396 = vshrl.u32 %v1395, 4
        %v1397 = vand.u32 %v1395, 15
        %v1398 = vsub.s32 0, %v1397
        %v1399 = vsel %vm1393, %v1398, %v1397
        %vm1400 = vcmp.lt.s32.totalorder %v1296, 0
        %v1401 = vsub.s32 0, %v1296
        %v1402 = vsel %vm1400, %v1401, %v1296
        %v1403 = vshrl.u32 %v1402, 4
        %v1404 = vand.u32 %v1402, 15
        %v1405 = vsub.s32 0, %v1404
        %v1406 = vsel %vm1400, %v1405, %v1404
        %vm1407 = vcmp.lt.s32.totalorder %v1297, 0
        %v1408 = vsub.s32 0, %v1297
        %v1409 = vsel %vm1407, %v1408, %v1297
        %v1410 = vshrl.u32 %v1409, 4
        %v1411 = vand.u32 %v1409, 15
        %v1412 = vsub.s32 0, %v1411
        %v1413 = vsel %vm1407, %v1412, %v1411
        %vm1414 = vcmp.lt.s32.totalorder %v1298, 0
        %v1415 = vsub.s32 0, %v1298
        %v1416 = vsel %vm1414, %v1415, %v1298
        %v1417 = vshrl.u32 %v1416, 4
        %v1418 = vand.u32 %v1416, 15
        %v1419 = vsub.s32 0, %v1418
        %v1420 = vsel %vm1414, %v1419, %v1418
        %vm1421 = vcmp.lt.s32.totalorder %v1299, 0
        %v1422 = vsub.s32 0, %v1299
        %v1423 = vsel %vm1421, %v1422, %v1299
        %v1424 = vshrl.u32 %v1423, 4
        %v1425 = vand.u32 %v1423, 15
        %v1426 = vsub.s32 0, %v1425
        %v1427 = vsel %vm1421, %v1426, %v1425
        %vm1428 = vcmp.lt.s32.totalorder %v1300, 0
        %v1429 = vsub.s32 0, %v1300
        %v1430 = vsel %vm1428, %v1429, %v1300
        %v1431 = vshrl.u32 %v1430, 4
        %v1432 = vand.u32 %v1430, 15
        %v1433 = vsub.s32 0, %v1432
        %v1434 = vsel %vm1428, %v1433, %v1432
        %vm1435 = vcmp.lt.s32.totalorder %v1301, 0
        %v1436 = vsub.s32 0, %v1301
        %v1437 = vsel %vm1435, %v1436, %v1301
        %v1438 = vshrl.u32 %v1437, 4
        %v1439 = vand.u32 %v1437, 15
        %v1440 = vsub.s32 0, %v1439
        %v1441 = vsel %vm1435, %v1440, %v1439
        %vm1442 = vcmp.lt.s32.totalorder %v1302, 0
        %v1443 = vsub.s32 0, %v1302
        %v1444 = vsel %vm1442, %v1443, %v1302
        %v1445 = vshrl.u32 %v1444, 4
        %v1446 = vand.u32 %v1444, 15
        %v1447 = vsub.s32 0, %v1446
        %v1448 = vsel %vm1442, %v1447, %v1446
        %vm1449 = vcmp.lt.s32.totalorder %v1303, 0
        %v1450 = vsub.s32 0, %v1303
        %v1451 = vsel %vm1449, %v1450, %v1303
        %v1452 = vshrl.u32 %v1451, 4
        %v1453 = vand.u32 %v1451, 15
        %v1454 = vsub.s32 0, %v1453
        %v1455 = vsel %vm1449, %v1454, %v1453
        %vm1456 = vcmp.lt.s32.totalorder %v1304, 0
        %v1457 = vsub.s32 0, %v1304
        %v1458 = vsel %vm1456, %v1457, %v1304
        %v1459 = vshrl.u32 %v1458, 4
        %v1460 = vand.u32 %v1458, 15
        %v1461 = vsub.s32 0, %v1460
        %v1462 = vsel %vm1456, %v1461, %v1460
        %vm1463 = vcmp.lt.s32.totalorder %v1305, 0
        %v1464 = vsub.s32 0, %v1305
        %v1465 = vsel %vm1463, %v1464, %v1305
        %v1466 = vshrl.u32 %v1465, 4
        %v1467 = vand.u32 %v1465, 15
        %v1468 = vsub.s32 0, %v1467
        %v1469 = vsel %vm1463, %v1468, %v1467
        %vm1470 = vcmp.lt.s32.totalorder %v1306, 0
        %v1471 = vsub.s32 0, %v1306
        %v1472 = vsel %vm1470, %v1471, %v1306
        %v1473 = vshrl.u32 %v1472, 4
        %v1474 = vand.u32 %v1472, 15
        %v1475 = vsub.s32 0, %v1474
        %v1476 = vsel %vm1470, %v1475, %v1474
        %vm1477 = vcmp.lt.s32.totalorder %v1307, 0
        %v1478 = vsub.s32 0, %v1307
        %v1479 = vsel %vm1477, %v1478, %v1307
        %v1480 = vshrl.u32 %v1479, 4
        %v1481 = vand.u32 %v1479, 15
        %v1482 = vsub.s32 0, %v1481
        %v1483 = vsel %vm1477, %v1482, %v1481
        %vm1484 = vcmp.lt.s32.totalorder %v1308, 0
        %v1485 = vsub.s32 0, %v1308
        %v1486 = vsel %vm1484, %v1485, %v1308
        %v1487 = vshrl.u32 %v1486, 4
        %v1488 = vand.u32 %v1486, 15
        %v1489 = vsub.s32 0, %v1488
        %v1490 = vsel %vm1484, %v1489, %v1488
        %vm1491 = vcmp.lt.s32.totalorder %v1309, 0
        %v1492 = vsub.s32 0, %v1309
        %v1493 = vsel %vm1491, %v1492, %v1309
        %v1494 = vshrl.u32 %v1493, 4
        %v1495 = vand.u32 %v1493, 15
        %v1496 = vsub.s32 0, %v1495
        %v1497 = vsel %vm1491, %v1496, %v1495
        %vm1498 = vcmp.lt.s32.totalorder %v1310, 0
        %v1499 = vsub.s32 0, %v1310
        %v1500 = vsel %vm1498, %v1499, %v1310
        %v1501 = vshrl.u32 %v1500, 4
        %v1502 = vand.u32 %v1500, 15
        %v1503 = vsub.s32 0, %v1502
        %v1504 = vsel %vm1498, %v1503, %v1502
        %vm1505 = vcmp.lt.s32.totalorder %v1311, 0
        %v1506 = vsub.s32 0, %v1311
        %v1507 = vsel %vm1505, %v1506, %v1311
        %v1508 = vshrl.u32 %v1507, 4
        %v1509 = vand.u32 %v1507, 15
        %v1510 = vsub.s32 0, %v1509
        %v1511 = vsel %vm1505, %v1510, %v1509
        %vm1512 = vcmp.lt.s32.totalorder %v1312, 0
        %v1513 = vsub.s32 0, %v1312
        %v1514 = vsel %vm1512, %v1513, %v1312
        %v1515 = vshrl.u32 %v1514, 4
        %v1516 = vand.u32 %v1514, 15
        %v1517 = vsub.s32 0, %v1516
        %v1518 = vsel %vm1512, %v1517, %v1516
        %vm1519 = vcmp.lt.s32.totalorder %v1313, 0
        %v1520 = vsub.s32 0, %v1313
        %v1521 = vsel %vm1519, %v1520, %v1313
        %v1522 = vshrl.u32 %v1521, 4
        %v1523 = vand.u32 %v1521, 15
        %v1524 = vsub.s32 0, %v1523
        %v1525 = vsel %vm1519, %v1524, %v1523
        %vm1526 = vcmp.lt.s32.totalorder %v1314, 0
        %v1527 = vsub.s32 0, %v1314
        %v1528 = vsel %vm1526, %v1527, %v1314
        %v1529 = vshrl.u32 %v1528, 4
        %v1530 = vand.u32 %v1528, 15
        %v1531 = vsub.s32 0, %v1530
        %v1532 = vsel %vm1526, %v1531, %v1530
        %vm1533 = vcmp.lt.s32.totalorder %v1315, 0
        %v1534 = vsub.s32 0, %v1315
        %v1535 = vsel %vm1533, %v1534, %v1315
        %v1536 = vshrl.u32 %v1535, 4
        %v1537 = vand.u32 %v1535, 15
        %v1538 = vsub.s32 0, %v1537
        %v1539 = vsel %vm1533, %v1538, %v1537
        %vm1540 = vcmp.ne.s32.totalorder %v1322, 0
        %vm1541 = vcmp.ne.s32.totalorder %v1329, 0
        %vm1542 = vcmp.ne.s32.totalorder %v1336, 0
        %vm1543 = vcmp.ne.s32.totalorder %v1343, 0
        %vm1544 = vcmp.ne.s32.totalorder %v1350, 0
        %vm1545 = vcmp.ne.s32.totalorder %v1357, 0
        %vm1546 = vcmp.ne.s32.totalorder %v1364, 0
        %vm1547 = vcmp.ne.s32.totalorder %v1371, 0
        %vm1548 = vcmp.ne.s32.totalorder %v1378, 0
        %vm1549 = vcmp.ne.s32.totalorder %v1385, 0
        %vm1550 = vcmp.ne.s32.totalorder %v1392, 0
        %vm1551 = vcmp.ne.s32.totalorder %v1399, 0
        %vm1552 = vcmp.ne.s32.totalorder %v1406, 0
        %vm1553 = vcmp.ne.s32.totalorder %v1413, 0
        %vm1554 = vcmp.ne.s32.totalorder %v1420, 0
        %vm1555 = vcmp.ne.s32.totalorder %v1427, 0
        %vm1556 = vcmp.ne.s32.totalorder %v1434, 0
        %vm1557 = vcmp.ne.s32.totalorder %v1441, 0
        %vm1558 = vcmp.ne.s32.totalorder %v1448, 0
        %vm1559 = vcmp.ne.s32.totalorder %v1455, 0
        %vm1560 = vcmp.ne.s32.totalorder %v1462, 0
        %vm1561 = vcmp.ne.s32.totalorder %v1469, 0
        %vm1562 = vcmp.ne.s32.totalorder %v1476, 0
        %vm1563 = vcmp.ne.s32.totalorder %v1483, 0
        %vm1564 = vcmp.ne.s32.totalorder %v1490, 0
        %vm1565 = vcmp.ne.s32.totalorder %v1497, 0
        %vm1566 = vcmp.ne.s32.totalorder %v1504, 0
        %vm1567 = vcmp.ne.s32.totalorder %v1511, 0
        %vm1568 = vcmp.ne.s32.totalorder %v1518, 0
        %vm1569 = vcmp.ne.s32.totalorder %v1525, 0
        %vm1570 = vcmp.ne.s32.totalorder %v1532, 0
        %vm1571 = vcmp.ne.s32.totalorder %v1539, 0
        %vm1572 = vcmp.lt.s32.totalorder %v1322, 0
        %vm1573 = vcmp.lt.s32.totalorder %v1329, 0
        %vm1574 = vcmp.lt.s32.totalorder %v1336, 0
        %vm1575 = vcmp.lt.s32.totalorder %v1343, 0
        %vm1576 = vcmp.lt.s32.totalorder %v1350, 0
        %vm1577 = vcmp.lt.s32.totalorder %v1357, 0
        %vm1578 = vcmp.lt.s32.totalorder %v1364, 0
        %vm1579 = vcmp.lt.s32.totalorder %v1371, 0
        %vm1580 = vcmp.lt.s32.totalorder %v1378, 0
        %vm1581 = vcmp.lt.s32.totalorder %v1385, 0
        %vm1582 = vcmp.lt.s32.totalorder %v1392, 0
        %vm1583 = vcmp.lt.s32.totalorder %v1399, 0
        %vm1584 = vcmp.lt.s32.totalorder %v1406, 0
        %vm1585 = vcmp.lt.s32.totalorder %v1413, 0
        %vm1586 = vcmp.lt.s32.totalorder %v1420, 0
        %vm1587 = vcmp.lt.s32.totalorder %v1427, 0
        %vm1588 = vcmp.lt.s32.totalorder %v1434, 0
        %vm1589 = vcmp.lt.s32.totalorder %v1441, 0
        %vm1590 = vcmp.lt.s32.totalorder %v1448, 0
        %vm1591 = vcmp.lt.s32.totalorder %v1455, 0
        %vm1592 = vcmp.lt.s32.totalorder %v1462, 0
        %vm1593 = vcmp.lt.s32.totalorder %v1469, 0
        %vm1594 = vcmp.lt.s32.totalorder %v1476, 0
        %vm1595 = vcmp.lt.s32.totalorder %v1483, 0
        %vm1596 = vcmp.lt.s32.totalorder %v1490, 0
        %vm1597 = vcmp.lt.s32.totalorder %v1497, 0
        %vm1598 = vcmp.lt.s32.totalorder %v1504, 0
        %vm1599 = vcmp.lt.s32.totalorder %v1511, 0
        %vm1600 = vcmp.lt.s32.totalorder %v1518, 0
        %vm1601 = vcmp.lt.s32.totalorder %v1525, 0
        %vm1602 = vcmp.lt.s32.totalorder %v1532, 0
        %vm1603 = vcmp.lt.s32.totalorder %v1539, 0
        %vm1604 = vmand %vm1572, %vm1540
        %vm1605 = vmand %vm1573, %vm1541
        %vm1606 = vmand %vm1574, %vm1542
        %vm1607 = vmand %vm1575, %vm1543
        %vm1608 = vmand %vm1576, %vm1544
        %vm1609 = vmand %vm1577, %vm1545
        %vm1610 = vmand %vm1578, %vm1546
        %vm1611 = vmand %vm1579, %vm1547
        %vm1612 = vmand %vm1580, %vm1548
        %vm1613 = vmand %vm1581, %vm1549
        %vm1614 = vmand %vm1582, %vm1550
        %vm1615 = vmand %vm1583, %vm1551
        %vm1616 = vmand %vm1584, %vm1552
        %vm1617 = vmand %vm1585, %vm1553
        %vm1618 = vmand %vm1586, %vm1554
        %vm1619 = vmand %vm1587, %vm1555
        %vm1620 = vmand %vm1588, %vm1556
        %vm1621 = vmand %vm1589, %vm1557
        %vm1622 = vmand %vm1590, %vm1558
        %vm1623 = vmand %vm1591, %vm1559
        %vm1624 = vmand %vm1592, %vm1560
        %vm1625 = vmand %vm1593, %vm1561
        %vm1626 = vmand %vm1594, %vm1562
        %vm1627 = vmand %vm1595, %vm1563
        %vm1628 = vmand %vm1596, %vm1564
        %vm1629 = vmand %vm1597, %vm1565
        %vm1630 = vmand %vm1598, %vm1566
        %vm1631 = vmand %vm1599, %vm1567
        %vm1632 = vmand %vm1600, %vm1568
        %vm1633 = vmand %vm1601, %vm1569
        %vm1634 = vmand %vm1602, %vm1570
        %vm1635 = vmand %vm1603, %vm1571
        %v1636 = vadd.s32 %v1322, 16
        %v1637 = vadd.s32 %v1329, 16
        %v1638 = vadd.s32 %v1336, 16
        %v1639 = vadd.s32 %v1343, 16
        %v1640 = vadd.s32 %v1350, 16
        %v1641 = vadd.s32 %v1357, 16
        %v1642 = vadd.s32 %v1364, 16
        %v1643 = vadd.s32 %v1371, 16
        %v1644 = vadd.s32 %v1378, 16
        %v1645 = vadd.s32 %v1385, 16
        %v1646 = vadd.s32 %v1392, 16
        %v1647 = vadd.s32 %v1399, 16
        %v1648 = vadd.s32 %v1406, 16
        %v1649 = vadd.s32 %v1413, 16
        %v1650 = vadd.s32 %v1420, 16
        %v1651 = vadd.s32 %v1427, 16
        %v1652 = vadd.s32 %v1434, 16
        %v1653 = vadd.s32 %v1441, 16
        %v1654 = vadd.s32 %v1448, 16
        %v1655 = vadd.s32 %v1455, 16
        %v1656 = vadd.s32 %v1462, 16
        %v1657 = vadd.s32 %v1469, 16
        %v1658 = vadd.s32 %v1476, 16
        %v1659 = vadd.s32 %v1483, 16
        %v1660 = vadd.s32 %v1490, 16
        %v1661 = vadd.s32 %v1497, 16
        %v1662 = vadd.s32 %v1504, 16
        %v1663 = vadd.s32 %v1511, 16
        %v1664 = vadd.s32 %v1518, 16
        %v1665 = vadd.s32 %v1525, 16
        %v1666 = vadd.s32 %v1532, 16
        %v1667 = vadd.s32 %v1539, 16
        %v1668 = vsel %vm1604, %v1636, %v1322
        %v1669 = vsel %vm1605, %v1637, %v1329
        %v1670 = vsel %vm1606, %v1638, %v1336
        %v1671 = vsel %vm1607, %v1639, %v1343
        %v1672 = vsel %vm1608, %v1640, %v1350
        %v1673 = vsel %vm1609, %v1641, %v1357
        %v1674 = vsel %vm1610, %v1642, %v1364
        %v1675 = vsel %vm1611, %v1643, %v1371
        %v1676 = vsel %vm1612, %v1644, %v1378
        %v1677 = vsel %vm1613, %v1645, %v1385
        %v1678 = vsel %vm1614, %v1646, %v1392
        %v1679 = vsel %vm1615, %v1647, %v1399
        %v1680 = vsel %vm1616, %v1648, %v1406
        %v1681 = vsel %vm1617, %v1649, %v1413
        %v1682 = vsel %vm1618, %v1650, %v1420
        %v1683 = vsel %vm1619, %v1651, %v1427
        %v1684 = vsel %vm1620, %v1652, %v1434
        %v1685 = vsel %vm1621, %v1653, %v1441
        %v1686 = vsel %vm1622, %v1654, %v1448
        %v1687 = vsel %vm1623, %v1655, %v1455
        %v1688 = vsel %vm1624, %v1656, %v1462
        %v1689 = vsel %vm1625, %v1657, %v1469
        %v1690 = vsel %vm1626, %v1658, %v1476
        %v1691 = vsel %vm1627, %v1659, %v1483
        %v1692 = vsel %vm1628, %v1660, %v1490
        %v1693 = vsel %vm1629, %v1661, %v1497
        %v1694 = vsel %vm1630, %v1662, %v1504
        %v1695 = vsel %vm1631, %v1663, %v1511
        %v1696 = vsel %vm1632, %v1664, %v1518
        %v1697 = vsel %vm1633, %v1665, %v1525
        %v1698 = vsel %vm1634, %v1666, %v1532
        %v1699 = vsel %vm1635, %v1667, %v1539
        %vm1700 = vcmp.lt.s32.totalorder %v1668, 15
        %vm1701 = vcmp.lt.s32.totalorder %v1669, 15
        %vm1702 = vcmp.lt.s32.totalorder %v1670, 15
        %vm1703 = vcmp.lt.s32.totalorder %v1671, 15
        %vm1704 = vcmp.lt.s32.totalorder %v1672, 15
        %vm1705 = vcmp.lt.s32.totalorder %v1673, 15
        %vm1706 = vcmp.lt.s32.totalorder %v1674, 15
        %vm1707 = vcmp.lt.s32.totalorder %v1675, 15
        %vm1708 = vcmp.lt.s32.totalorder %v1676, 15
        %vm1709 = vcmp.lt.s32.totalorder %v1677, 15
        %vm1710 = vcmp.lt.s32.totalorder %v1678, 15
        %vm1711 = vcmp.lt.s32.totalorder %v1679, 15
        %vm1712 = vcmp.lt.s32.totalorder %v1680, 15
        %vm1713 = vcmp.lt.s32.totalorder %v1681, 15
        %vm1714 = vcmp.lt.s32.totalorder %v1682, 15
        %vm1715 = vcmp.lt.s32.totalorder %v1683, 15
        %vm1716 = vcmp.lt.s32.totalorder %v1684, 15
        %vm1717 = vcmp.lt.s32.totalorder %v1685, 15
        %vm1718 = vcmp.lt.s32.totalorder %v1686, 15
        %vm1719 = vcmp.lt.s32.totalorder %v1687, 15
        %vm1720 = vcmp.lt.s32.totalorder %v1688, 15
        %vm1721 = vcmp.lt.s32.totalorder %v1689, 15
        %vm1722 = vcmp.lt.s32.totalorder %v1690, 15
        %vm1723 = vcmp.lt.s32.totalorder %v1691, 15
        %vm1724 = vcmp.lt.s32.totalorder %v1692, 15
        %vm1725 = vcmp.lt.s32.totalorder %v1693, 15
        %vm1726 = vcmp.lt.s32.totalorder %v1694, 15
        %vm1727 = vcmp.lt.s32.totalorder %v1695, 15
        %vm1728 = vcmp.lt.s32.totalorder %v1696, 15
        %vm1729 = vcmp.lt.s32.totalorder %v1697, 15
        %vm1730 = vcmp.lt.s32.totalorder %v1698, 15
        %vm1731 = vcmp.lt.s32.totalorder %v1699, 15
        %vm1732 = vcmp.gt.s32.totalorder %v1668, 0
        %vm1733 = vcmp.gt.s32.totalorder %v1669, 0
        %vm1734 = vcmp.gt.s32.totalorder %v1670, 0
        %vm1735 = vcmp.gt.s32.totalorder %v1671, 0
        %vm1736 = vcmp.gt.s32.totalorder %v1672, 0
        %vm1737 = vcmp.gt.s32.totalorder %v1673, 0
        %vm1738 = vcmp.gt.s32.totalorder %v1674, 0
        %vm1739 = vcmp.gt.s32.totalorder %v1675, 0
        %vm1740 = vcmp.gt.s32.totalorder %v1676, 0
        %vm1741 = vcmp.gt.s32.totalorder %v1677, 0
        %vm1742 = vcmp.gt.s32.totalorder %v1678, 0
        %vm1743 = vcmp.gt.s32.totalorder %v1679, 0
        %vm1744 = vcmp.gt.s32.totalorder %v1680, 0
        %vm1745 = vcmp.gt.s32.totalorder %v1681, 0
        %vm1746 = vcmp.gt.s32.totalorder %v1682, 0
        %vm1747 = vcmp.gt.s32.totalorder %v1683, 0
        %vm1748 = vcmp.gt.s32.totalorder %v1684, 0
        %vm1749 = vcmp.gt.s32.totalorder %v1685, 0
        %vm1750 = vcmp.gt.s32.totalorder %v1686, 0
        %vm1751 = vcmp.gt.s32.totalorder %v1687, 0
        %vm1752 = vcmp.gt.s32.totalorder %v1688, 0
        %vm1753 = vcmp.gt.s32.totalorder %v1689, 0
        %vm1754 = vcmp.gt.s32.totalorder %v1690, 0
        %vm1755 = vcmp.gt.s32.totalorder %v1691, 0
        %vm1756 = vcmp.gt.s32.totalorder %v1692, 0
        %vm1757 = vcmp.gt.s32.totalorder %v1693, 0
        %vm1758 = vcmp.gt.s32.totalorder %v1694, 0
        %vm1759 = vcmp.gt.s32.totalorder %v1695, 0
        %vm1760 = vcmp.gt.s32.totalorder %v1696, 0
        %vm1761 = vcmp.gt.s32.totalorder %v1697, 0
        %vm1762 = vcmp.gt.s32.totalorder %v1698, 0
        %vm1763 = vcmp.gt.s32.totalorder %v1699, 0
        loop: start=0, step=1, limit=2
        $region73: #{tpu_custom_call.1} parent=67 // loop_pre_header
          _
        $region74: #{tpu_custom_call.1} parent=67 // loop_header
          %s1765 = sphi 0, %s1769
          %p1766 = scmp.ge.s32.totalorder %s1765, 2
          %v1770 = vphi %v867, %v5327
          %v1771 = vphi %v868, %v5328
          %v1772 = vphi %v869, %v5329
          %v1773 = vphi %v870, %v5330
          %v1774 = vphi %v871, %v5331
          %v1775 = vphi %v872, %v5332
          %v1776 = vphi %v873, %v5333
          %v1777 = vphi %v874, %v5334
          %v1778 = vphi %v875, %v5335
          %v1779 = vphi %v876, %v5336
          %v1780 = vphi %v877, %v5337
          %v1781 = vphi %v878, %v5338
          %v1782 = vphi %v879, %v5339
          %v1783 = vphi %v880, %v5340
          %v1784 = vphi %v881, %v5341
          %v1785 = vphi %v882, %v5342
          %v1786 = vphi %v883, %v5343
          %v1787 = vphi %v884, %v5344
          %v1788 = vphi %v885, %v5345
          %v1789 = vphi %v886, %v5346
          %v1790 = vphi %v887, %v5347
          %v1791 = vphi %v888, %v5348
          %v1792 = vphi %v889, %v5349
          %v1793 = vphi %v890, %v5350
          %v1794 = vphi %v891, %v5351
          %v1795 = vphi %v892, %v5352
          %v1796 = vphi %v893, %v5353
          %v1797 = vphi %v894, %v5354
          %v1798 = vphi %v895, %v5355
          %v1799 = vphi %v896, %v5356
          %v1800 = vphi %v897, %v5357
          %v1801 = vphi %v898, %v5358
        $region75: #{tpu_custom_call.1} parent=67 // loop_header_branch
          %1768 = sbr.rel (%p1766) target = $region79
        $region76: #{tpu_custom_call.1} parent=67 // loop_body
          %v1802 = vpack.c.bf16 %v1771, %v1770
          %v1803 = vpack.c.bf16 %v1773, %v1772
          %v1804 = vpack.c.bf16 %v1775, %v1774
          %v1805 = vpack.c.bf16 %v1777, %v1776
          %v1806 = vpack.c.bf16 %v1779, %v1778
          %v1807 = vpack.c.bf16 %v1781, %v1780
          %v1808 = vpack.c.bf16 %v1783, %v1782
          %v1809 = vpack.c.bf16 %v1785, %v1784
          %v1810 = vpack.c.bf16 %v1787, %v1786
          %v1811 = vpack.c.bf16 %v1789, %v1788
          %v1812 = vpack.c.bf16 %v1791, %v1790
          %v1813 = vpack.c.bf16 %v1793, %v1792
          %v1814 = vpack.c.bf16 %v1795, %v1794
          %v1815 = vpack.c.bf16 %v1797, %v1796
          %v1816 = vpack.c.bf16 %v1799, %v1798
          %v1817 = vpack.c.bf16 %v1801, %v1800
          %s1818 = smul.u32 %s1765, 16
          %s1819 = smul.addr %s1818, 4
          %s1820 = scalar_lea.vmem %s5, %s1819
          %v1821 = vld [vmem:[%s1820] sm:$0xf]
          %v1822 = vld [vmem:[%s1820 + $0x4] sm:$0xf]
          %v1823 = vld [vmem:[%s1820 + $0x8] sm:$0xf]
          %v1824 = vld [vmem:[%s1820 + $0xc] sm:$0xf]
          %v1825 = vld [vmem:[%s1820 + $0x10] sm:$0xf]
          %v1826 = vld [vmem:[%s1820 + $0x14] sm:$0xf]
          %v1827 = vld [vmem:[%s1820 + $0x18] sm:$0xf]
          %v1828 = vld [vmem:[%s1820 + $0x1c] sm:$0xf]
          %v1829 = vld [vmem:[%s1820 + $0x20] sm:$0xf]
          %v1830 = vld [vmem:[%s1820 + $0x24] sm:$0xf]
          %v1831 = vld [vmem:[%s1820 + $0x28] sm:$0xf]
          %v1832 = vld [vmem:[%s1820 + $0x2c] sm:$0xf]
          %v1833 = vld [vmem:[%s1820 + $0x30] sm:$0xf]
          %v1834 = vld [vmem:[%s1820 + $0x34] sm:$0xf]
          %v1835 = vld [vmem:[%s1820 + $0x38] sm:$0xf]
          %v1836 = vld [vmem:[%s1820 + $0x3c] sm:$0xf]
          %s1837 = scalar_lea.vmem %s6, %s1765
          %v1838 = vld [vmem:[%s1837] sm:$0x1]
          %v1840 = vlaneseq
          %v1841 = vshrl.u32 %v1840, 7
          %v1842 = vsub.s32 0, %v1841
          %v1843 = vrot.slane %v1838, %v1842
          %v1861 = vunpack.c.l.b16 %v1821
          %v1862 = vunpack.c.l.b16 %v1822
          %v1863 = vunpack.c.l.b16 %v1823
          %v1864 = vunpack.c.l.b16 %v1824
          %v1865 = vunpack.c.l.b16 %v1825
          %v1866 = vunpack.c.l.b16 %v1826
          %v1867 = vunpack.c.l.b16 %v1827
          %v1868 = vunpack.c.l.b16 %v1828
          %v1869 = vunpack.c.l.b16 %v1829
          %v1870 = vunpack.c.l.b16 %v1830
          %v1871 = vunpack.c.l.b16 %v1831
          %v1872 = vunpack.c.l.b16 %v1832
          %v1873 = vunpack.c.l.b16 %v1833
          %v1874 = vunpack.c.l.b16 %v1834
          %v1875 = vunpack.c.l.b16 %v1835
          %v1876 = vunpack.c.l.b16 %v1836
          %v1877 = vpack.c.b16 %v1862, %v1861
          %v1878 = vpack.c.b16 %v1864, %v1863
          %v1879 = vpack.c.b16 %v1866, %v1865
          %v1880 = vpack.c.b16 %v1868, %v1867
          %v1881 = vpack.c.b16 %v1870, %v1869
          %v1882 = vpack.c.b16 %v1872, %v1871
          %v1883 = vpack.c.b16 %v1874, %v1873
          %v1884 = vpack.c.b16 %v1876, %v1875
          %1893 = vmatprep.subr.bf16.mxu0 0
          %1894 = vmatpush1.bf16.msra.mxu0 %v1877
          %1895 = vmatprep.subr.bf16.mxu0 0
          %1896 = vmatpush1.bf16.msra.mxu0 %v1878
          %1897 = vmatprep.subr.bf16.mxu0 0
          %1898 = vmatpush1.bf16.msra.mxu0 %v1879
          %1899 = vmatprep.subr.bf16.mxu0 0
          %1900 = vmatpush1.bf16.msra.mxu0 %v1880
          %1901 = vmatprep.subr.bf16.mxu0 0
          %1902 = vmatpush1.bf16.msra.mxu0 %v1881
          %1903 = vmatprep.subr.bf16.mxu0 0
          %1904 = vmatpush1.bf16.msra.mxu0 %v1882
          %1905 = vmatprep.subr.bf16.mxu0 0
          %1906 = vmatpush1.bf16.msra.mxu0 %v1883
          %1907 = vmatprep.subr.bf16.mxu0 0
          %1908 = vmatpush1.bf16.msra.mxu0 %v1884
          %1909 = vmatprep.subr.bf16.mxu0 0
          %1910 = vmatpush1.bf16.msra.mxu0 0
          %1911 = vmatprep.subr.bf16.mxu0 0
          %1912 = vmatpush1.bf16.msra.mxu0 0
          %1913 = vmatprep.subr.bf16.mxu0 0
          %1914 = vmatpush1.bf16.msra.mxu0 0
          %1915 = vmatprep.subr.bf16.mxu0 0
          %1916 = vmatpush1.bf16.msra.mxu0 0
          %1917 = vmatprep.subr.bf16.mxu0 0
          %1918 = vmatpush1.bf16.msra.mxu0 0
          %1919 = vmatprep.subr.bf16.mxu0 0
          %1920 = vmatpush1.bf16.msra.mxu0 0
          %1921 = vmatprep.subr.bf16.mxu0 0
          %1922 = vmatpush1.bf16.msra.mxu0 0
          %1923 = vmatprep.subr.bf16.mxu0 0
          %1924 = vmatpush1.bf16.msra.mxu0 0
          %1925 = vmatprep.mubr.bf16.mxu0 0
          %1926 = vmatmul.mubr.bf16.gmra.mrb[0].mxu0 %v1802
          %v1927 = vpop.f32.mrb[0].mxu0
          %v1928 = vadd.f32 %v1843, %v1927
          %v1929 = vpop.f32.mrb[0].mxu0
          %v1930 = vpop.f32.mrb[0].mxu0
          %v1931 = vadd.f32 %v1843, %v1930
          %v1932 = vpop.f32.mrb[0].mxu0
          %1933 = vmatprep.mubr.bf16.mxu0 0
          %1934 = vmatmul.mubr.bf16.gmra.mrb[0].mxu0 %v1803
          %v1935 = vpop.f32.mrb[0].mxu0
          %v1936 = vadd.f32 %v1843, %v1935
          %v1937 = vpop.f32.mrb[0].mxu0
          %v1938 = vpop.f32.mrb[0].mxu0
          %v1939 = vadd.f32 %v1843, %v1938
          %v1940 = vpop.f32.mrb[0].mxu0
          %1941 = vmatprep.mubr.bf16.mxu0 0
          %1942 = vmatmul.mubr.bf16.gmra.mrb[0].mxu0 %v1804
          %v1943 = vpop.f32.mrb[0].mxu0
          %v1944 = vadd.f32 %v1843, %v1943
          %v1945 = vpop.f32.mrb[0].mxu0
          %v1946 = vpop.f32.mrb[0].mxu0
          %v1947 = vadd.f32 %v1843, %v1946
          %v1948 = vpop.f32.mrb[0].mxu0
          %1949 = vmatprep.mubr.bf16.mxu0 0
          %1950 = vmatmul.mubr.bf16.gmra.mrb[0].mxu0 %v1805
          %v1951 = vpop.f32.mrb[0].mxu0
          %v1952 = vadd.f32 %v1843, %v1951
          %v1953 = vpop.f32.mrb[0].mxu0
          %v1954 = vpop.f32.mrb[0].mxu0
          %v1955 = vadd.f32 %v1843, %v1954
          %v1956 = vpop.f32.mrb[0].mxu0
          %1957 = vmatprep.mubr.bf16.mxu0 0
          %1958 = vmatmul.mubr.bf16.gmra.mrb[0].mxu0 %v1806
          %v1959 = vpop.f32.mrb[0].mxu0
          %v1960 = vadd.f32 %v1843, %v1959
          %v1961 = vpop.f32.mrb[0].mxu0
          %v1962 = vpop.f32.mrb[0].mxu0
          %v1963 = vadd.f32 %v1843, %v1962
          %v1964 = vpop.f32.mrb[0].mxu0
          %1965 = vmatprep.mubr.bf16.mxu0 0
          %1966 = vmatmul.mubr.bf16.gmra.mrb[0].mxu0 %v1807
          %v1967 = vpop.f32.mrb[0].mxu0
          %v1968 = vadd.f32 %v1843, %v1967
          %v1969 = vpop.f32.mrb[0].mxu0
          %v1970 = vpop.f32.mrb[0].mxu0
          %v1971 = vadd.f32 %v1843, %v1970
          %v1972 = vpop.f32.mrb[0].mxu0
          %1973 = vmatprep.mubr.bf16.mxu0 0
          %1974 = vmatmul.mubr.bf16.gmra.mrb[0].mxu0 %v1808
          %v1975 = vpop.f32.mrb[0].mxu0
          %v1976 = vadd.f32 %v1843, %v1975
          %v1977 = vpop.f32.mrb[0].mxu0
          %v1978 = vpop.f32.mrb[0].mxu0
          %v1979 = vadd.f32 %v1843, %v1978
          %v1980 = vpop.f32.mrb[0].mxu0
          %1981 = vmatprep.mubr.bf16.mxu0 0
          %1982 = vmatmul.mubr.bf16.gmra.mrb[0].mxu0 %v1809
          %v1983 = vpop.f32.mrb[0].mxu0
          %v1984 = vadd.f32 %v1843, %v1983
          %v1985 = vpop.f32.mrb[0].mxu0
          %v1986 = vpop.f32.mrb[0].mxu0
          %v1987 = vadd.f32 %v1843, %v1986
          %v1988 = vpop.f32.mrb[0].mxu0
          %1989 = vmatprep.mubr.bf16.mxu0 0
          %1990 = vmatmul.mubr.bf16.gmra.mrb[0].mxu0 %v1810
          %v1991 = vpop.f32.mrb[0].mxu0
          %v1992 = vadd.f32 %v1843, %v1991
          %v1993 = vpop.f32.mrb[0].mxu0
          %v1994 = vpop.f32.mrb[0].mxu0
          %v1995 = vadd.f32 %v1843, %v1994
          %v1996 = vpop.f32.mrb[0].mxu0
          %1997 = vmatprep.mubr.bf16.mxu0 0
          %1998 = vmatmul.mubr.bf16.gmra.mrb[0].mxu0 %v1811
          %v1999 = vpop.f32.mrb[0].mxu0
          %v2000 = vadd.f32 %v1843, %v1999
          %v2001 = vpop.f32.mrb[0].mxu0
          %v2002 = vpop.f32.mrb[0].mxu0
          %v2003 = vadd.f32 %v1843, %v2002
          %v2004 = vpop.f32.mrb[0].mxu0
          %2005 = vmatprep.mubr.bf16.mxu0 0
          %2006 = vmatmul.mubr.bf16.gmra.mrb[0].mxu0 %v1812
          %v2007 = vpop.f32.mrb[0].mxu0
          %v2008 = vadd.f32 %v1843, %v2007
          %v2009 = vpop.f32.mrb[0].mxu0
          %v2010 = vpop.f32.mrb[0].mxu0
          %v2011 = vadd.f32 %v1843, %v2010
          %v2012 = vpop.f32.mrb[0].mxu0
          %2013 = vmatprep.mubr.bf16.mxu0 0
          %2014 = vmatmul.mubr.bf16.gmra.mrb[0].mxu0 %v1813
          %v2015 = vpop.f32.mrb[0].mxu0
          %v2016 = vadd.f32 %v1843, %v2015
          %v2017 = vpop.f32.mrb[0].mxu0
          %v2018 = vpop.f32.mrb[0].mxu0
          %v2019 = vadd.f32 %v1843, %v2018
          %v2020 = vpop.f32.mrb[0].mxu0
          %2021 = vmatprep.mubr.bf16.mxu0 0
          %2022 = vmatmul.mubr.bf16.gmra.mrb[0].mxu0 %v1814
          %v2023 = vpop.f32.mrb[0].mxu0
          %v2024 = vadd.f32 %v1843, %v2023
          %v2025 = vpop.f32.mrb[0].mxu0
          %v2026 = vpop.f32.mrb[0].mxu0
          %v2027 = vadd.f32 %v1843, %v2026
          %v2028 = vpop.f32.mrb[0].mxu0
          %2029 = vmatprep.mubr.bf16.mxu0 0
          %2030 = vmatmul.mubr.bf16.gmra.mrb[0].mxu0 %v1815
          %v2031 = vpop.f32.mrb[0].mxu0
          %v2032 = vadd.f32 %v1843, %v2031
          %v2033 = vpop.f32.mrb[0].mxu0
          %v2034 = vpop.f32.mrb[0].mxu0
          %v2035 = vadd.f32 %v1843, %v2034
          %v2036 = vpop.f32.mrb[0].mxu0
          %2037 = vmatprep.mubr.bf16.mxu0 0
          %2038 = vmatmul.mubr.bf16.gmra.mrb[0].mxu0 %v1816
          %v2039 = vpop.f32.mrb[0].mxu0
          %v2040 = vadd.f32 %v1843, %v2039
          %v2041 = vpop.f32.mrb[0].mxu0
          %v2042 = vpop.f32.mrb[0].mxu0
          %v2043 = vadd.f32 %v1843, %v2042
          %v2044 = vpop.f32.mrb[0].mxu0
          %2045 = vmatprep.mubr.bf16.mxu0 0
          %2046 = vmatmul.mubr.bf16.gmra.mrb[0].mxu0 %v1817
          %v2047 = vpop.f32.mrb[0].mxu0
          %v2048 = vadd.f32 %v1843, %v2047
          %v2049 = vpop.f32.mrb[0].mxu0
          %v2050 = vpop.f32.mrb[0].mxu0
          %v2051 = vadd.f32 %v1843, %v2050
          %v2052 = vpop.f32.mrb[0].mxu0
          %2053 = vdwg.mxu0
          %v2054 = vsub.f32 0.0, %v1928
          %v2055 = vsub.f32 0.0, %v1931
          %v2056 = vsub.f32 0.0, %v1936
          %v2057 = vsub.f32 0.0, %v1939
          %v2058 = vsub.f32 0.0, %v1944
          %v2059 = vsub.f32 0.0, %v1947
          %v2060 = vsub.f32 0.0, %v1952
          %v2061 = vsub.f32 0.0, %v1955
          %v2062 = vsub.f32 0.0, %v1960
          %v2063 = vsub.f32 0.0, %v1963
          %v2064 = vsub.f32 0.0, %v1968
          %v2065 = vsub.f32 0.0, %v1971
          %v2066 = vsub.f32 0.0, %v1976
          %v2067 = vsub.f32 0.0, %v1979
          %v2068 = vsub.f32 0.0, %v1984
          %v2069 = vsub.f32 0.0, %v1987
          %v2070 = vsub.f32 0.0, %v1992
          %v2071 = vsub.f32 0.0, %v1995
          %v2072 = vsub.f32 0.0, %v2000
          %v2073 = vsub.f32 0.0, %v2003
          %v2074 = vsub.f32 0.0, %v2008
          %v2075 = vsub.f32 0.0, %v2011
          %v2076 = vsub.f32 0.0, %v2016
          %v2077 = vsub.f32 0.0, %v2019
          %v2078 = vsub.f32 0.0, %v2024
          %v2079 = vsub.f32 0.0, %v2027
          %v2080 = vsub.f32 0.0, %v2032
          %v2081 = vsub.f32 0.0, %v2035
          %v2082 = vsub.f32 0.0, %v2040
          %v2083 = vsub.f32 0.0, %v2043
          %v2084 = vsub.f32 0.0, %v2048
          %v2085 = vsub.f32 0.0, %v2051
          %v2086 = vmul.f32 %v2054, 1.442695
          %v2087 = vpow.pop %v2086
          %v2088 = vmul.f32 %v2055, 1.442695
          %v2089 = vpow.pop %v2088
          %v2090 = vmul.f32 %v2056, 1.442695
          %v2091 = vpow.pop %v2090
          %v2092 = vmul.f32 %v2057, 1.442695
          %v2093 = vpow.pop %v2092
          %v2094 = vmul.f32 %v2058, 1.442695
          %v2095 = vpow.pop %v2094
          %v2096 = vmul.f32 %v2059, 1.442695
          %v2097 = vpow.pop %v2096
          %v2098 = vmul.f32 %v2060, 1.442695
          %v2099 = vpow.pop %v2098
          %v2100 = vmul.f32 %v2061, 1.442695
          %v2101 = vpow.pop %v2100
          %v2102 = vmul.f32 %v2062, 1.442695
          %v2103 = vpow.pop %v2102
          %v2104 = vmul.f32 %v2063, 1.442695
          %v2105 = vpow.pop %v2104
          %v2106 = vmul.f32 %v2064, 1.442695
          %v2107 = vpow.pop %v2106
          %v2108 = vmul.f32 %v2065, 1.442695
          %v2109 = vpow.pop %v2108
          %v2110 = vmul.f32 %v2066, 1.442695
          %v2111 = vpow.pop %v2110
          %v2112 = vmul.f32 %v2067, 1.442695
          %v2113 = vpow.pop %v2112
          %v2114 = vmul.f32 %v2068, 1.442695
          %v2115 = vpow.pop %v2114
          %v2116 = vmul.f32 %v2069, 1.442695
          %v2117 = vpow.pop %v2116
          %v2118 = vmul.f32 %v2070, 1.442695
          %v2119 = vpow.pop %v2118
          %v2120 = vmul.f32 %v2071, 1.442695
          %v2121 = vpow.pop %v2120
          %v2122 = vmul.f32 %v2072, 1.442695
          %v2123 = vpow.pop %v2122
          %v2124 = vmul.f32 %v2073, 1.442695
          %v2125 = vpow.pop %v2124
          %v2126 = vmul.f32 %v2074, 1.442695
          %v2127 = vpow.pop %v2126
          %v2128 = vmul.f32 %v2075, 1.442695
          %v2129 = vpow.pop %v2128
          %v2130 = vmul.f32 %v2076, 1.442695
          %v2131 = vpow.pop %v2130
          %v2132 = vmul.f32 %v2077, 1.442695
          %v2133 = vpow.pop %v2132
          %v2134 = vmul.f32 %v2078, 1.442695
          %v2135 = vpow.pop %v2134
          %v2136 = vmul.f32 %v2079, 1.442695
          %v2137 = vpow.pop %v2136
          %v2138 = vmul.f32 %v2080, 1.442695
          %v2139 = vpow.pop %v2138
          %v2140 = vmul.f32 %v2081, 1.442695
          %v2141 = vpow.pop %v2140
          %v2142 = vmul.f32 %v2082, 1.442695
          %v2143 = vpow.pop %v2142
          %v2144 = vmul.f32 %v2083, 1.442695
          %v2145 = vpow.pop %v2144
          %v2146 = vmul.f32 %v2084, 1.442695
          %v2147 = vpow.pop %v2146
          %v2148 = vmul.f32 %v2085, 1.442695
          %v2149 = vpow.pop %v2148
          %v2150 = vadd.f32 %v2087, 1.0
          %v2151 = vadd.f32 %v2089, 1.0
          %v2152 = vadd.f32 %v2091, 1.0
          %v2153 = vadd.f32 %v2093, 1.0
          %v2154 = vadd.f32 %v2095, 1.0
          %v2155 = vadd.f32 %v2097, 1.0
          %v2156 = vadd.f32 %v2099, 1.0
          %v2157 = vadd.f32 %v2101, 1.0
          %v2158 = vadd.f32 %v2103, 1.0
          %v2159 = vadd.f32 %v2105, 1.0
          %v2160 = vadd.f32 %v2107, 1.0
          %v2161 = vadd.f32 %v2109, 1.0
          %v2162 = vadd.f32 %v2111, 1.0
          %v2163 = vadd.f32 %v2113, 1.0
          %v2164 = vadd.f32 %v2115, 1.0
          %v2165 = vadd.f32 %v2117, 1.0
          %v2166 = vadd.f32 %v2119, 1.0
          %v2167 = vadd.f32 %v2121, 1.0
          %v2168 = vadd.f32 %v2123, 1.0
          %v2169 = vadd.f32 %v2125, 1.0
          %v2170 = vadd.f32 %v2127, 1.0
          %v2171 = vadd.f32 %v2129, 1.0
          %v2172 = vadd.f32 %v2131, 1.0
          %v2173 = vadd.f32 %v2133, 1.0
          %v2174 = vadd.f32 %v2135, 1.0
          %v2175 = vadd.f32 %v2137, 1.0
          %v2176 = vadd.f32 %v2139, 1.0
          %v2177 = vadd.f32 %v2141, 1.0
          %v2178 = vadd.f32 %v2143, 1.0
          %v2179 = vadd.f32 %v2145, 1.0
          %v2180 = vadd.f32 %v2147, 1.0
          %v2181 = vadd.f32 %v2149, 1.0
          %v2182 = vrcp.pop %v2150
          %v2183 = vrcp.pop %v2151
          %v2184 = vrcp.pop %v2152
          %v2185 = vrcp.pop %v2153
          %v2186 = vrcp.pop %v2154
          %v2187 = vrcp.pop %v2155
          %v2188 = vrcp.pop %v2156
          %v2189 = vrcp.pop %v2157
          %v2190 = vrcp.pop %v2158
          %v2191 = vrcp.pop %v2159
          %v2192 = vrcp.pop %v2160
          %v2193 = vrcp.pop %v2161
          %v2194 = vrcp.pop %v2162
          %v2195 = vrcp.pop %v2163
          %v2196 = vrcp.pop %v2164
          %v2197 = vrcp.pop %v2165
          %v2198 = vrcp.pop %v2166
          %v2199 = vrcp.pop %v2167
          %v2200 = vrcp.pop %v2168
          %v2201 = vrcp.pop %v2169
          %v2202 = vrcp.pop %v2170
          %v2203 = vrcp.pop %v2171
          %v2204 = vrcp.pop %v2172
          %v2205 = vrcp.pop %v2173
          %v2206 = vrcp.pop %v2174
          %v2207 = vrcp.pop %v2175
          %v2208 = vrcp.pop %v2176
          %v2209 = vrcp.pop %v2177
          %v2210 = vrcp.pop %v2178
          %v2211 = vrcp.pop %v2179
          %v2212 = vrcp.pop %v2180
          %v2213 = vrcp.pop %v2181
          %v2214 = vmul.f32 %v1928, %v2182
          %v2215 = vmul.f32 %v1931, %v2183
          %v2216 = vmul.f32 %v1936, %v2184
          %v2217 = vmul.f32 %v1939, %v2185
          %v2218 = vmul.f32 %v1944, %v2186
          %v2219 = vmul.f32 %v1947, %v2187
          %v2220 = vmul.f32 %v1952, %v2188
          %v2221 = vmul.f32 %v1955, %v2189
          %v2222 = vmul.f32 %v1960, %v2190
          %v2223 = vmul.f32 %v1963, %v2191
          %v2224 = vmul.f32 %v1968, %v2192
          %v2225 = vmul.f32 %v1971, %v2193
          %v2226 = vmul.f32 %v1976, %v2194
          %v2227 = vmul.f32 %v1979, %v2195
          %v2228 = vmul.f32 %v1984, %v2196
          %v2229 = vmul.f32 %v1987, %v2197
          %v2230 = vmul.f32 %v1992, %v2198
          %v2231 = vmul.f32 %v1995, %v2199
          %v2232 = vmul.f32 %v2000, %v2200
          %v2233 = vmul.f32 %v2003, %v2201
          %v2234 = vmul.f32 %v2008, %v2202
          %v2235 = vmul.f32 %v2011, %v2203
          %v2236 = vmul.f32 %v2016, %v2204
          %v2237 = vmul.f32 %v2019, %v2205
          %v2238 = vmul.f32 %v2024, %v2206
          %v2239 = vmul.f32 %v2027, %v2207
          %v2240 = vmul.f32 %v2032, %v2208
          %v2241 = vmul.f32 %v2035, %v2209
          %v2242 = vmul.f32 %v2040, %v2210
          %v2243 = vmul.f32 %v2043, %v2211
          %v2244 = vmul.f32 %v2048, %v2212
          %v2245 = vmul.f32 %v2051, %v2213
          %v2246 = vpack.c.bf16 %v2215, %v2214
          %v2247 = vpack.c.bf16 %v2217, %v2216
          %v2248 = vpack.c.bf16 %v2219, %v2218
          %v2249 = vpack.c.bf16 %v2221, %v2220
          %v2250 = vpack.c.bf16 %v2223, %v2222
          %v2251 = vpack.c.bf16 %v2225, %v2224
          %v2252 = vpack.c.bf16 %v2227, %v2226
          %v2253 = vpack.c.bf16 %v2229, %v2228
          %v2254 = vpack.c.bf16 %v2231, %v2230
          %v2255 = vpack.c.bf16 %v2233, %v2232
          %v2256 = vpack.c.bf16 %v2235, %v2234
          %v2257 = vpack.c.bf16 %v2237, %v2236
          %v2258 = vpack.c.bf16 %v2239, %v2238
          %v2259 = vpack.c.bf16 %v2241, %v2240
          %v2260 = vpack.c.bf16 %v2243, %v2242
          %v2261 = vpack.c.bf16 %v2245, %v2244
          %2262 = vst [vmem:[#allocation2 + $0x8] sm:$0xff] %v2246
          %2263 = vst [vmem:[#allocation2 + $0x10] sm:$0xff] %v2247
          %2264 = vst [vmem:[#allocation2 + $0x18] sm:$0xff] %v2248
          %2265 = vst [vmem:[#allocation2 + $0x20] sm:$0xff] %v2249
          %2266 = vst [vmem:[#allocation2 + $0x28] sm:$0xff] %v2250
          %2267 = vst [vmem:[#allocation2 + $0x30] sm:$0xff] %v2251
          %2268 = vst [vmem:[#allocation2 + $0x38] sm:$0xff] %v2252
          %2269 = vst [vmem:[#allocation2 + $0x40] sm:$0xff] %v2253
          %2270 = vst [vmem:[#allocation2 + $0x48] sm:$0xff] %v2254
          %2271 = vst [vmem:[#allocation2 + $0x50] sm:$0xff] %v2255
          %2272 = vst [vmem:[#allocation2 + $0x58] sm:$0xff] %v2256
          %2273 = vst [vmem:[#allocation2 + $0x60] sm:$0xff] %v2257
          %2274 = vst [vmem:[#allocation2 + $0x68] sm:$0xff] %v2258
          %2275 = vst [vmem:[#allocation2 + $0x70] sm:$0xff] %v2259
          %2276 = vst [vmem:[#allocation2 + $0x78] sm:$0xff] %v2260
          %2277 = vst [vmem:[#allocation2 + $0x80] sm:$0xff] %v2261
          %v2278 = vrot.slane %v2214, 1
          %v2279 = vrot.slane %v2215, 1
          %v2280 = vrot.slane %v2216, 1
          %v2281 = vrot.slane %v2217, 1
          %v2282 = vrot.slane %v2218, 1
          %v2283 = vrot.slane %v2219, 1
          %v2284 = vrot.slane %v2220, 1
          %v2285 = vrot.slane %v2221, 1
          %v2286 = vrot.slane %v2222, 1
          %v2287 = vrot.slane %v2223, 1
          %v2288 = vrot.slane %v2224, 1
          %v2289 = vrot.slane %v2225, 1
          %v2290 = vrot.slane %v2226, 1
          %v2291 = vrot.slane %v2227, 1
          %v2292 = vrot.slane %v2228, 1
          %v2293 = vrot.slane %v2229, 1
          %v2294 = vrot.slane %v2230, 1
          %v2295 = vrot.slane %v2231, 1
          %v2296 = vrot.slane %v2232, 1
          %v2297 = vrot.slane %v2233, 1
          %v2298 = vrot.slane %v2234, 1
          %v2299 = vrot.slane %v2235, 1
          %v2300 = vrot.slane %v2236, 1
          %v2301 = vrot.slane %v2237, 1
          %v2302 = vrot.slane %v2238, 1
          %v2303 = vrot.slane %v2239, 1
          %v2304 = vrot.slane %v2240, 1
          %v2305 = vrot.slane %v2241, 1
          %v2306 = vrot.slane %v2242, 1
          %v2307 = vrot.slane %v2243, 1
          %v2308 = vrot.slane %v2244, 1
          %v2309 = vrot.slane %v2245, 1
          %vm2310 = vcmp.lt.s32.totalorder %v1284, 7
          %v2311 = vsel %vm2310, %v2308, %v2309
          %v2312 = vsel %vm2310, %v2307, %v2308
          %v2313 = vsel %vm2310, %v2306, %v2307
          %v2314 = vsel %vm2310, %v2305, %v2306
          %v2315 = vsel %vm2310, %v2304, %v2305
          %v2316 = vsel %vm2310, %v2303, %v2304
          %v2317 = vsel %vm2310, %v2302, %v2303
          %v2318 = vsel %vm2310, %v2301, %v2302
          %v2319 = vsel %vm2310, %v2300, %v2301
          %v2320 = vsel %vm2310, %v2299, %v2300
          %v2321 = vsel %vm2310, %v2298, %v2299
          %v2322 = vsel %vm2310, %v2297, %v2298
          %v2323 = vsel %vm2310, %v2296, %v2297
          %v2324 = vsel %vm2310, %v2295, %v2296
          %v2325 = vsel %vm2310, %v2294, %v2295
          %v2326 = vsel %vm2310, %v2293, %v2294
          %v2327 = vsel %vm2310, %v2292, %v2293
          %v2328 = vsel %vm2310, %v2291, %v2292
          %v2329 = vsel %vm2310, %v2290, %v2291
          %v2330 = vsel %vm2310, %v2289, %v2290
          %v2331 = vsel %vm2310, %v2288, %v2289
          %v2332 = vsel %vm2310, %v2287, %v2288
          %v2333 = vsel %vm2310, %v2286, %v2287
          %v2334 = vsel %vm2310, %v2285, %v2286
          %v2335 = vsel %vm2310, %v2284, %v2285
          %v2336 = vsel %vm2310, %v2283, %v2284
          %v2337 = vsel %vm2310, %v2282, %v2283
          %v2338 = vsel %vm2310, %v2281, %v2282
          %v2339 = vsel %vm2310, %v2280, %v2281
          %v2340 = vsel %vm2310, %v2279, %v2280
          %v2341 = vsel %vm2310, %v2278, %v2279
          %v2342 = vsel %vm2310, %v2309, %v2278
          %v2343 = vsel %vm1700, 1, 0
          %v2344 = vsel %vm1701, 1, 0
          %v2345 = vsel %vm1702, 1, 0
          %v2346 = vsel %vm1703, 1, 0
          %v2347 = vsel %vm1704, 1, 0
          %v2348 = vsel %vm1705, 1, 0
          %v2349 = vsel %vm1706, 1, 0
          %v2350 = vsel %vm1707, 1, 0
          %v2351 = vsel %vm1708, 1, 0
          %v2352 = vsel %vm1709, 1, 0
          %v2353 = vsel %vm1710, 1, 0
          %v2354 = vsel %vm1711, 1, 0
          %v2355 = vsel %vm1712, 1, 0
          %v2356 = vsel %vm1713, 1, 0
          %v2357 = vsel %vm1714, 1, 0
          %v2358 = vsel %vm1715, 1, 0
          %v2359 = vsel %vm1716, 1, 0
          %v2360 = vsel %vm1717, 1, 0
          %v2361 = vsel %vm1718, 1, 0
          %v2362 = vsel %vm1719, 1, 0
          %v2363 = vsel %vm1720, 1, 0
          %v2364 = vsel %vm1721, 1, 0
          %v2365 = vsel %vm1722, 1, 0
          %v2366 = vsel %vm1723, 1, 0
          %v2367 = vsel %vm1724, 1, 0
          %v2368 = vsel %vm1725, 1, 0
          %v2369 = vsel %vm1726, 1, 0
          %v2370 = vsel %vm1727, 1, 0
          %v2371 = vsel %vm1728, 1, 0
          %v2372 = vsel %vm1729, 1, 0
          %v2373 = vsel %vm1730, 1, 0
          %v2374 = vsel %vm1731, 1, 0
          %vm2375 = vcmp.eq.s32.totalorder %v2343, 1
          %vm2376 = vcmp.eq.s32.totalorder %v2344, 1
          %vm2377 = vcmp.eq.s32.totalorder %v2345, 1
          %vm2378 = vcmp.eq.s32.totalorder %v2346, 1
          %vm2379 = vcmp.eq.s32.totalorder %v2347, 1
          %vm2380 = vcmp.eq.s32.totalorder %v2348, 1
          %vm2381 = vcmp.eq.s32.totalorder %v2349, 1
          %vm2382 = vcmp.eq.s32.totalorder %v2350, 1
          %vm2383 = vcmp.eq.s32.totalorder %v2351, 1
          %vm2384 = vcmp.eq.s32.totalorder %v2352, 1
          %vm2385 = vcmp.eq.s32.totalorder %v2353, 1
          %vm2386 = vcmp.eq.s32.totalorder %v2354, 1
          %vm2387 = vcmp.eq.s32.totalorder %v2355, 1
          %vm2388 = vcmp.eq.s32.totalorder %v2356, 1
          %vm2389 = vcmp.eq.s32.totalorder %v2357, 1
          %vm2390 = vcmp.eq.s32.totalorder %v2358, 1
          %vm2391 = vcmp.eq.s32.totalorder %v2359, 1
          %vm2392 = vcmp.eq.s32.totalorder %v2360, 1
          %vm2393 = vcmp.eq.s32.totalorder %v2361, 1
          %vm2394 = vcmp.eq.s32.totalorder %v2362, 1
          %vm2395 = vcmp.eq.s32.totalorder %v2363, 1
          %vm2396 = vcmp.eq.s32.totalorder %v2364, 1
          %vm2397 = vcmp.eq.s32.totalorder %v2365, 1
          %vm2398 = vcmp.eq.s32.totalorder %v2366, 1
          %vm2399 = vcmp.eq.s32.totalorder %v2367, 1
          %vm2400 = vcmp.eq.s32.totalorder %v2368, 1
          %vm2401 = vcmp.eq.s32.totalorder %v2369, 1
          %vm2402 = vcmp.eq.s32.totalorder %v2370, 1
          %vm2403 = vcmp.eq.s32.totalorder %v2371, 1
          %vm2404 = vcmp.eq.s32.totalorder %v2372, 1
          %vm2405 = vcmp.eq.s32.totalorder %v2373, 1
          %vm2406 = vcmp.eq.s32.totalorder %v2374, 1
          %v2407 = vsel %vm2375, %v2341, 0.0
          %v2408 = vsel %vm2376, %v2340, 0.0
          %v2409 = vsel %vm2377, %v2339, 0.0
          %v2410 = vsel %vm2378, %v2338, 0.0
          %v2411 = vsel %vm2379, %v2337, 0.0
          %v2412 = vsel %vm2380, %v2336, 0.0
          %v2413 = vsel %vm2381, %v2335, 0.0
          %v2414 = vsel %vm2382, %v2334, 0.0
          %v2415 = vsel %vm2383, %v2333, 0.0
          %v2416 = vsel %vm2384, %v2332, 0.0
          %v2417 = vsel %vm2385, %v2331, 0.0
          %v2418 = vsel %vm2386, %v2330, 0.0
          %v2419 = vsel %vm2387, %v2329, 0.0
          %v2420 = vsel %vm2388, %v2328, 0.0
          %v2421 = vsel %vm2389, %v2327, 0.0
          %v2422 = vsel %vm2390, %v2326, 0.0
          %v2423 = vsel %vm2391, %v2325, 0.0
          %v2424 = vsel %vm2392, %v2324, 0.0
          %v2425 = vsel %vm2393, %v2323, 0.0
          %v2426 = vsel %vm2394, %v2322, 0.0
          %v2427 = vsel %vm2395, %v2321, 0.0
          %v2428 = vsel %vm2396, %v2320, 0.0
          %v2429 = vsel %vm2397, %v2319, 0.0
          %v2430 = vsel %vm2398, %v2318, 0.0
          %v2431 = vsel %vm2399, %v2317, 0.0
          %v2432 = vsel %vm2400, %v2316, 0.0
          %v2433 = vsel %vm2401, %v2315, 0.0
          %v2434 = vsel %vm2402, %v2314, 0.0
          %v2435 = vsel %vm2403, %v2313, 0.0
          %v2436 = vsel %vm2404, %v2312, 0.0
          %v2437 = vsel %vm2405, %v2311, 0.0
          %v2438 = vsel %vm2406, %v2342, 0.0
          %v2439 = vpack.c.bf16 %v2408, %v2407
          %v2440 = vpack.c.bf16 %v2410, %v2409
          %v2441 = vpack.c.bf16 %v2412, %v2411
          %v2442 = vpack.c.bf16 %v2414, %v2413
          %v2443 = vpack.c.bf16 %v2416, %v2415
          %v2444 = vpack.c.bf16 %v2418, %v2417
          %v2445 = vpack.c.bf16 %v2420, %v2419
          %v2446 = vpack.c.bf16 %v2422, %v2421
          %v2447 = vpack.c.bf16 %v2424, %v2423
          %v2448 = vpack.c.bf16 %v2426, %v2425
          %v2449 = vpack.c.bf16 %v2428, %v2427
          %v2450 = vpack.c.bf16 %v2430, %v2429
          %v2451 = vpack.c.bf16 %v2432, %v2431
          %v2452 = vpack.c.bf16 %v2434, %v2433
          %v2453 = vpack.c.bf16 %v2436, %v2435
          %v2454 = vpack.c.bf16 %v2438, %v2437
          %s2455 = scalar_lea.vmem [#allocation2], 144
          %2456 = vst [vmem:[%s2455 + $0x8] sm:$0xff] %v2439
          %2457 = vst [vmem:[%s2455 + $0x10] sm:$0xff] %v2440
          %2458 = vst [vmem:[%s2455 + $0x18] sm:$0xff] %v2441
          %2459 = vst [vmem:[%s2455 + $0x20] sm:$0xff] %v2442
          %2460 = vst [vmem:[%s2455 + $0x28] sm:$0xff] %v2443
          %2461 = vst [vmem:[%s2455 + $0x30] sm:$0xff] %v2444
          %2462 = vst [vmem:[%s2455 + $0x38] sm:$0xff] %v2445
          %2463 = vst [vmem:[%s2455 + $0x40] sm:$0xff] %v2446
          %2464 = vst [vmem:[%s2455 + $0x48] sm:$0xff] %v2447
          %2465 = vst [vmem:[%s2455 + $0x50] sm:$0xff] %v2448
          %2466 = vst [vmem:[%s2455 + $0x58] sm:$0xff] %v2449
          %2467 = vst [vmem:[%s2455 + $0x60] sm:$0xff] %v2450
          %2468 = vst [vmem:[%s2455 + $0x68] sm:$0xff] %v2451
          %2469 = vst [vmem:[%s2455 + $0x70] sm:$0xff] %v2452
          %2470 = vst [vmem:[%s2455 + $0x78] sm:$0xff] %v2453
          %2471 = vst [vmem:[%s2455 + $0x80] sm:$0xff] %v2454
          %v2472 = vrot.slane %v2214, 7
          %v2473 = vrot.slane %v2215, 7
          %v2474 = vrot.slane %v2216, 7
          %v2475 = vrot.slane %v2217, 7
          %v2476 = vrot.slane %v2218, 7
          %v2477 = vrot.slane %v2219, 7
          %v2478 = vrot.slane %v2220, 7
          %v2479 = vrot.slane %v2221, 7
          %v2480 = vrot.slane %v2222, 7
          %v2481 = vrot.slane %v2223, 7
          %v2482 = vrot.slane %v2224, 7
          %v2483 = vrot.slane %v2225, 7
          %v2484 = vrot.slane %v2226, 7
          %v2485 = vrot.slane %v2227, 7
          %v2486 = vrot.slane %v2228, 7
          %v2487 = vrot.slane %v2229, 7
          %v2488 = vrot.slane %v2230, 7
          %v2489 = vrot.slane %v2231, 7
          %v2490 = vrot.slane %v2232, 7
          %v2491 = vrot.slane %v2233, 7
          %v2492 = vrot.slane %v2234, 7
          %v2493 = vrot.slane %v2235, 7
          %v2494 = vrot.slane %v2236, 7
          %v2495 = vrot.slane %v2237, 7
          %v2496 = vrot.slane %v2238, 7
          %v2497 = vrot.slane %v2239, 7
          %v2498 = vrot.slane %v2240, 7
          %v2499 = vrot.slane %v2241, 7
          %v2500 = vrot.slane %v2242, 7
          %v2501 = vrot.slane %v2243, 7
          %v2502 = vrot.slane %v2244, 7
          %v2503 = vrot.slane %v2245, 7
          %vm2504 = vcmp.lt.s32.totalorder %v1284, 1
          %v2505 = vsel %vm2504, %v2502, %v2503
          %v2506 = vsel %vm2504, %v2501, %v2502
          %v2507 = vsel %vm2504, %v2500, %v2501
          %v2508 = vsel %vm2504, %v2499, %v2500
          %v2509 = vsel %vm2504, %v2498, %v2499
          %v2510 = vsel %vm2504, %v2497, %v2498
          %v2511 = vsel %vm2504, %v2496, %v2497
          %v2512 = vsel %vm2504, %v2495, %v2496
          %v2513 = vsel %vm2504, %v2494, %v2495
          %v2514 = vsel %vm2504, %v2493, %v2494
          %v2515 = vsel %vm2504, %v2492, %v2493
          %v2516 = vsel %vm2504, %v2491, %v2492
          %v2517 = vsel %vm2504, %v2490, %v2491
          %v2518 = vsel %vm2504, %v2489, %v2490
          %v2519 = vsel %vm2504, %v2488, %v2489
          %v2520 = vsel %vm2504, %v2487, %v2488
          %v2521 = vsel %vm2504, %v2486, %v2487
          %v2522 = vsel %vm2504, %v2485, %v2486
          %v2523 = vsel %vm2504, %v2484, %v2485
          %v2524 = vsel %vm2504, %v2483, %v2484
          %v2525 = vsel %vm2504, %v2482, %v2483
          %v2526 = vsel %vm2504, %v2481, %v2482
          %v2527 = vsel %vm2504, %v2480, %v2481
          %v2528 = vsel %vm2504, %v2479, %v2480
          %v2529 = vsel %vm2504, %v2478, %v2479
          %v2530 = vsel %vm2504, %v2477, %v2478
          %v2531 = vsel %vm2504, %v2476, %v2477
          %v2532 = vsel %vm2504, %v2475, %v2476
          %v2533 = vsel %vm2504, %v2474, %v2475
          %v2534 = vsel %vm2504, %v2473, %v2474
          %v2535 = vsel %vm2504, %v2472, %v2473
          %v2536 = vsel %vm2504, %v2503, %v2472
          %v2537 = vsel %vm1732, 1, 0
          %v2538 = vsel %vm1733, 1, 0
          %v2539 = vsel %vm1734, 1, 0
          %v2540 = vsel %vm1735, 1, 0
          %v2541 = vsel %vm1736, 1, 0
          %v2542 = vsel %vm1737, 1, 0
          %v2543 = vsel %vm1738, 1, 0
          %v2544 = vsel %vm1739, 1, 0
          %v2545 = vsel %vm1740, 1, 0
          %v2546 = vsel %vm1741, 1, 0
          %v2547 = vsel %vm1742, 1, 0
          %v2548 = vsel %vm1743, 1, 0
          %v2549 = vsel %vm1744, 1, 0
          %v2550 = vsel %vm1745, 1, 0
          %v2551 = vsel %vm1746, 1, 0
          %v2552 = vsel %vm1747, 1, 0
          %v2553 = vsel %vm1748, 1, 0
          %v2554 = vsel %vm1749, 1, 0
          %v2555 = vsel %vm1750, 1, 0
          %v2556 = vsel %vm1751, 1, 0
          %v2557 = vsel %vm1752, 1, 0
          %v2558 = vsel %vm1753, 1, 0
          %v2559 = vsel %vm1754, 1, 0
          %v2560 = vsel %vm1755, 1, 0
          %v2561 = vsel %vm1756, 1, 0
          %v2562 = vsel %vm1757, 1, 0
          %v2563 = vsel %vm1758, 1, 0
          %v2564 = vsel %vm1759, 1, 0
          %v2565 = vsel %vm1760, 1, 0
          %v2566 = vsel %vm1761, 1, 0
          %v2567 = vsel %vm1762, 1, 0
          %v2568 = vsel %vm1763, 1, 0
          %vm2569 = vcmp.eq.s32.totalorder %v2537, 1
          %vm2570 = vcmp.eq.s32.totalorder %v2538, 1
          %vm2571 = vcmp.eq.s32.totalorder %v2539, 1
          %vm2572 = vcmp.eq.s32.totalorder %v2540, 1
          %vm2573 = vcmp.eq.s32.totalorder %v2541, 1
          %vm2574 = vcmp.eq.s32.totalorder %v2542, 1
          %vm2575 = vcmp.eq.s32.totalorder %v2543, 1
          %vm2576 = vcmp.eq.s32.totalorder %v2544, 1
          %vm2577 = vcmp.eq.s32.totalorder %v2545, 1
          %vm2578 = vcmp.eq.s32.totalorder %v2546, 1
          %vm2579 = vcmp.eq.s32.totalorder %v2547, 1
          %vm2580 = vcmp.eq.s32.totalorder %v2548, 1
          %vm2581 = vcmp.eq.s32.totalorder %v2549, 1
          %vm2582 = vcmp.eq.s32.totalorder %v2550, 1
          %vm2583 = vcmp.eq.s32.totalorder %v2551, 1
          %vm2584 = vcmp.eq.s32.totalorder %v2552, 1
          %vm2585 = vcmp.eq.s32.totalorder %v2553, 1
          %vm2586 = vcmp.eq.s32.totalorder %v2554, 1
          %vm2587 = vcmp.eq.s32.totalorder %v2555, 1
          %vm2588 = vcmp.eq.s32.totalorder %v2556, 1
          %vm2589 = vcmp.eq.s32.totalorder %v2557, 1
          %vm2590 = vcmp.eq.s32.totalorder %v2558, 1
          %vm2591 = vcmp.eq.s32.totalorder %v2559, 1
          %vm2592 = vcmp.eq.s32.totalorder %v2560, 1
          %vm2593 = vcmp.eq.s32.totalorder %v2561, 1
          %vm2594 = vcmp.eq.s32.totalorder %v2562, 1
          %vm2595 = vcmp.eq.s32.totalorder %v2563, 1
          %vm2596 = vcmp.eq.s32.totalorder %v2564, 1
          %vm2597 = vcmp.eq.s32.totalorder %v2565, 1
          %vm2598 = vcmp.eq.s32.totalorder %v2566, 1
          %vm2599 = vcmp.eq.s32.totalorder %v2567, 1
          %vm2600 = vcmp.eq.s32.totalorder %v2568, 1
          %v2601 = vsel %vm2569, %v2536, 0.0
          %v2602 = vsel %vm2570, %v2535, 0.0
          %v2603 = vsel %vm2571, %v2534, 0.0
          %v2604 = vsel %vm2572, %v2533, 0.0
          %v2605 = vsel %vm2573, %v2532, 0.0
          %v2606 = vsel %vm2574, %v2531, 0.0
          %v2607 = vsel %vm2575, %v2530, 0.0
          %v2608 = vsel %vm2576, %v2529, 0.0
          %v2609 = vsel %vm2577, %v2528, 0.0
          %v2610 = vsel %vm2578, %v2527, 0.0
          %v2611 = vsel %vm2579, %v2526, 0.0
          %v2612 = vsel %vm2580, %v2525, 0.0
          %v2613 = vsel %vm2581, %v2524, 0.0
          %v2614 = vsel %vm2582, %v2523, 0.0
          %v2615 = vsel %vm2583, %v2522, 0.0
          %v2616 = vsel %vm2584, %v2521, 0.0
          %v2617 = vsel %vm2585, %v2520, 0.0
          %v2618 = vsel %vm2586, %v2519, 0.0
          %v2619 = vsel %vm2587, %v2518, 0.0
          %v2620 = vsel %vm2588, %v2517, 0.0
          %v2621 = vsel %vm2589, %v2516, 0.0
          %v2622 = vsel %vm2590, %v2515, 0.0
          %v2623 = vsel %vm2591, %v2514, 0.0
          %v2624 = vsel %vm2592, %v2513, 0.0
          %v2625 = vsel %vm2593, %v2512, 0.0
          %v2626 = vsel %vm2594, %v2511, 0.0
          %v2627 = vsel %vm2595, %v2510, 0.0
          %v2628 = vsel %vm2596, %v2509, 0.0
          %v2629 = vsel %vm2597, %v2508, 0.0
          %v2630 = vsel %vm2598, %v2507, 0.0
          %v2631 = vsel %vm2599, %v2506, 0.0
          %v2632 = vsel %vm2600, %v2505, 0.0
          %v2633 = vpack.c.bf16 %v2602, %v2601
          %v2634 = vpack.c.bf16 %v2604, %v2603
          %v2635 = vpack.c.bf16 %v2606, %v2605
          %v2636 = vpack.c.bf16 %v2608, %v2607
          %v2637 = vpack.c.bf16 %v2610, %v2609
          %v2638 = vpack.c.bf16 %v2612, %v2611
          %v2639 = vpack.c.bf16 %v2614, %v2613
          %v2640 = vpack.c.bf16 %v2616, %v2615
          %v2641 = vpack.c.bf16 %v2618, %v2617
          %v2642 = vpack.c.bf16 %v2620, %v2619
          %v2643 = vpack.c.bf16 %v2622, %v2621
          %v2644 = vpack.c.bf16 %v2624, %v2623
          %v2645 = vpack.c.bf16 %v2626, %v2625
          %v2646 = vpack.c.bf16 %v2628, %v2627
          %v2647 = vpack.c.bf16 %v2630, %v2629
          %v2648 = vpack.c.bf16 %v2632, %v2631
          %s2649 = scalar_lea.vmem [#allocation2], 288
          %2650 = vst [vmem:[%s2649 + $0x8] sm:$0xff] %v2633
          %2651 = vst [vmem:[%s2649 + $0x10] sm:$0xff] %v2634
          %2652 = vst [vmem:[%s2649 + $0x18] sm:$0xff] %v2635
          %2653 = vst [vmem:[%s2649 + $0x20] sm:$0xff] %v2636
          %2654 = vst [vmem:[%s2649 + $0x28] sm:$0xff] %v2637
          %2655 = vst [vmem:[%s2649 + $0x30] sm:$0xff] %v2638
          %2656 = vst [vmem:[%s2649 + $0x38] sm:$0xff] %v2639
          %2657 = vst [vmem:[%s2649 + $0x40] sm:$0xff] %v2640
          %2658 = vst [vmem:[%s2649 + $0x48] sm:$0xff] %v2641
          %2659 = vst [vmem:[%s2649 + $0x50] sm:$0xff] %v2642
          %2660 = vst [vmem:[%s2649 + $0x58] sm:$0xff] %v2643
          %2661 = vst [vmem:[%s2649 + $0x60] sm:$0xff] %v2644
          %2662 = vst [vmem:[%s2649 + $0x68] sm:$0xff] %v2645
          %2663 = vst [vmem:[%s2649 + $0x70] sm:$0xff] %v2646
          %2664 = vst [vmem:[%s2649 + $0x78] sm:$0xff] %v2647
          %2665 = vst [vmem:[%s2649 + $0x80] sm:$0xff] %v2648
          %v2666 = vld [vmem:[%s2649] sm:$0xff]
          %v2667 = vld [vmem:[%s2649 + $0x8] sm:$0xff]
          %v2668 = vld [vmem:[%s2649 + $0x10] sm:$0xff]
          %v2669 = vld [vmem:[%s2649 + $0x18] sm:$0xff]
          %v2670 = vld [vmem:[%s2649 + $0x20] sm:$0xff]
          %v2671 = vld [vmem:[%s2649 + $0x28] sm:$0xff]
          %v2672 = vld [vmem:[%s2649 + $0x30] sm:$0xff]
          %v2673 = vld [vmem:[%s2649 + $0x38] sm:$0xff]
          %v2674 = vld [vmem:[%s2649 + $0x40] sm:$0xff]
          %v2675 = vld [vmem:[%s2649 + $0x48] sm:$0xff]
          %v2676 = vld [vmem:[%s2649 + $0x50] sm:$0xff]
          %v2677 = vld [vmem:[%s2649 + $0x58] sm:$0xff]
          %v2678 = vld [vmem:[%s2649 + $0x60] sm:$0xff]
          %v2679 = vld [vmem:[%s2649 + $0x68] sm:$0xff]
          %v2680 = vld [vmem:[%s2649 + $0x70] sm:$0xff]
          %v2681 = vld [vmem:[%s2649 + $0x78] sm:$0xff]
          %s2682 = smul.u32 %s1765, 9
          %s2683 = smul.u32 %s2682, 16
          %s2684 = smul.addr %s2683, 4
          %s2685 = scalar_lea.vmem [#allocation3], %s2684
          %v2686 = vld [vmem:[%s2685] sm:$0xf]
          %v2687 = vld [vmem:[%s2685 + $0x4] sm:$0xf]
          %v2688 = vld [vmem:[%s2685 + $0x8] sm:$0xf]
          %v2689 = vld [vmem:[%s2685 + $0xc] sm:$0xf]
          %v2690 = vld [vmem:[%s2685 + $0x10] sm:$0xf]
          %v2691 = vld [vmem:[%s2685 + $0x14] sm:$0xf]
          %v2692 = vld [vmem:[%s2685 + $0x18] sm:$0xf]
          %v2693 = vld [vmem:[%s2685 + $0x1c] sm:$0xf]
          %v2694 = vld [vmem:[%s2685 + $0x20] sm:$0xf]
          %v2695 = vld [vmem:[%s2685 + $0x24] sm:$0xf]
          %v2696 = vld [vmem:[%s2685 + $0x28] sm:$0xf]
          %v2697 = vld [vmem:[%s2685 + $0x2c] sm:$0xf]
          %v2698 = vld [vmem:[%s2685 + $0x30] sm:$0xf]
          %v2699 = vld [vmem:[%s2685 + $0x34] sm:$0xf]
          %v2700 = vld [vmem:[%s2685 + $0x38] sm:$0xf]
          %v2701 = vld [vmem:[%s2685 + $0x3c] sm:$0xf]
          %v2702 = vld [vmem:[#allocation2] sm:$0xff]
          %v2703 = vld [vmem:[#allocation2 + $0x8] sm:$0xff]
          %v2704 = vld [vmem:[#allocation2 + $0x10] sm:$0xff]
          %v2705 = vld [vmem:[#allocation2 + $0x18] sm:$0xff]
          %v2706 = vld [vmem:[#allocation2 + $0x20] sm:$0xff]
          %v2707 = vld [vmem:[#allocation2 + $0x28] sm:$0xff]
          %v2708 = vld [vmem:[#allocation2 + $0x30] sm:$0xff]
          %v2709 = vld [vmem:[#allocation2 + $0x38] sm:$0xff]
          %v2710 = vld [vmem:[#allocation2 + $0x40] sm:$0xff]
          %v2711 = vld [vmem:[#allocation2 + $0x48] sm:$0xff]
          %v2712 = vld [vmem:[#allocation2 + $0x50] sm:$0xff]
          %v2713 = vld [vmem:[#allocation2 + $0x58] sm:$0xff]
          %v2714 = vld [vmem:[#allocation2 + $0x60] sm:$0xff]
          %v2715 = vld [vmem:[#allocation2 + $0x68] sm:$0xff]
          %v2716 = vld [vmem:[#allocation2 + $0x70] sm:$0xff]
          %v2717 = vld [vmem:[#allocation2 + $0x78] sm:$0xff]
          %s2718 = sadd.s32 %s2682, 1
          %s2719 = smul.u32 %s2718, 16
          %s2720 = smul.addr %s2719, 4
          %s2721 = scalar_lea.vmem [#allocation3], %s2720
          %v2722 = vld [vmem:[%s2721] sm:$0xf]
          %v2723 = vld [vmem:[%s2721 + $0x4] sm:$0xf]
          %v2724 = vld [vmem:[%s2721 + $0x8] sm:$0xf]
          %v2725 = vld [vmem:[%s2721 + $0xc] sm:$0xf]
          %v2726 = vld [vmem:[%s2721 + $0x10] sm:$0xf]
          %v2727 = vld [vmem:[%s2721 + $0x14] sm:$0xf]
          %v2728 = vld [vmem:[%s2721 + $0x18] sm:$0xf]
          %v2729 = vld [vmem:[%s2721 + $0x1c] sm:$0xf]
          %v2730 = vld [vmem:[%s2721 + $0x20] sm:$0xf]
          %v2731 = vld [vmem:[%s2721 + $0x24] sm:$0xf]
          %v2732 = vld [vmem:[%s2721 + $0x28] sm:$0xf]
          %v2733 = vld [vmem:[%s2721 + $0x2c] sm:$0xf]
          %v2734 = vld [vmem:[%s2721 + $0x30] sm:$0xf]
          %v2735 = vld [vmem:[%s2721 + $0x34] sm:$0xf]
          %v2736 = vld [vmem:[%s2721 + $0x38] sm:$0xf]
          %v2737 = vld [vmem:[%s2721 + $0x3c] sm:$0xf]
          %v2754 = vunpack.c.l.b16 %v2722
          %v2755 = vunpack.c.l.b16 %v2723
          %v2756 = vunpack.c.l.b16 %v2724
          %v2757 = vunpack.c.l.b16 %v2725
          %v2758 = vunpack.c.l.b16 %v2726
          %v2759 = vunpack.c.l.b16 %v2727
          %v2760 = vunpack.c.l.b16 %v2728
          %v2761 = vunpack.c.l.b16 %v2729
          %v2762 = vunpack.c.l.b16 %v2730
          %v2763 = vunpack.c.l.b16 %v2731
          %v2764 = vunpack.c.l.b16 %v2732
          %v2765 = vunpack.c.l.b16 %v2733
          %v2766 = vunpack.c.l.b16 %v2734
          %v2767 = vunpack.c.l.b16 %v2735
          %v2768 = vunpack.c.l.b16 %v2736
          %v2769 = vunpack.c.l.b16 %v2737
          %v2770 = vpack.c.b16 %v2755, %v2754
          %v2771 = vpack.c.b16 %v2757, %v2756
          %v2772 = vpack.c.b16 %v2759, %v2758
          %v2773 = vpack.c.b16 %v2761, %v2760
          %v2774 = vpack.c.b16 %v2763, %v2762
          %v2775 = vpack.c.b16 %v2765, %v2764
          %v2776 = vpack.c.b16 %v2767, %v2766
          %v2777 = vpack.c.b16 %v2769, %v2768
          %2786 = vmatprep.subr.bf16.mxu0 0
          %2787 = vmatpush1.bf16.msra.mxu0 %v2770
          %2788 = vmatprep.subr.bf16.mxu0 0
          %2789 = vmatpush1.bf16.msra.mxu0 %v2771
          %2790 = vmatprep.subr.bf16.mxu0 0
          %2791 = vmatpush1.bf16.msra.mxu0 %v2772
          %2792 = vmatprep.subr.bf16.mxu0 0
          %2793 = vmatpush1.bf16.msra.mxu0 %v2773
          %2794 = vmatprep.subr.bf16.mxu0 0
          %2795 = vmatpush1.bf16.msra.mxu0 %v2774
          %2796 = vmatprep.subr.bf16.mxu0 0
          %2797 = vmatpush1.bf16.msra.mxu0 %v2775
          %2798 = vmatprep.subr.bf16.mxu0 0
          %2799 = vmatpush1.bf16.msra.mxu0 %v2776
          %2800 = vmatprep.subr.bf16.mxu0 0
          %2801 = vmatpush1.bf16.msra.mxu0 %v2777
          %2802 = vmatprep.subr.bf16.mxu0 0
          %2803 = vmatpush1.bf16.msra.mxu0 0
          %2804 = vmatprep.subr.bf16.mxu0 0
          %2805 = vmatpush1.bf16.msra.mxu0 0
          %2806 = vmatprep.subr.bf16.mxu0 0
          %2807 = vmatpush1.bf16.msra.mxu0 0
          %2808 = vmatprep.subr.bf16.mxu0 0
          %2809 = vmatpush1.bf16.msra.mxu0 0
          %2810 = vmatprep.subr.bf16.mxu0 0
          %2811 = vmatpush1.bf16.msra.mxu0 0
          %2812 = vmatprep.subr.bf16.mxu0 0
          %2813 = vmatpush1.bf16.msra.mxu0 0
          %2814 = vmatprep.subr.bf16.mxu0 0
          %2815 = vmatpush1.bf16.msra.mxu0 0
          %2816 = vmatprep.subr.bf16.mxu0 0
          %2817 = vmatpush1.bf16.msra.mxu0 0
          %2818 = vmatprep.mubr.bf16.mxu0 0
          %2819 = vmatmul.mubr.bf16.gmra.mrb[0].mxu0 %v2702
          %v2820 = vpop.f32.mrb[0].mxu0
          %v2821 = vadd.f32 0.0, %v2820
          %v2822 = vpop.f32.mrb[0].mxu0
          %v2823 = vpop.f32.mrb[0].mxu0
          %v2824 = vadd.f32 0.0, %v2823
          %v2825 = vpop.f32.mrb[0].mxu0
          %2826 = vmatprep.mubr.bf16.mxu0 0
          %2827 = vmatmul.mubr.bf16.gmra.mrb[0].mxu0 %v2703
          %v2828 = vpop.f32.mrb[0].mxu0
          %v2829 = vadd.f32 0.0, %v2828
          %v2830 = vpop.f32.mrb[0].mxu0
          %v2831 = vpop.f32.mrb[0].mxu0
          %v2832 = vadd.f32 0.0, %v2831
          %v2833 = vpop.f32.mrb[0].mxu0
          %2834 = vmatprep.mubr.bf16.mxu0 0
          %2835 = vmatmul.mubr.bf16.gmra.mrb[0].mxu0 %v2704
          %v2836 = vpop.f32.mrb[0].mxu0
          %v2837 = vadd.f32 0.0, %v2836
          %v2838 = vpop.f32.mrb[0].mxu0
          %v2839 = vpop.f32.mrb[0].mxu0
          %v2840 = vadd.f32 0.0, %v2839
          %v2841 = vpop.f32.mrb[0].mxu0
          %2842 = vmatprep.mubr.bf16.mxu0 0
          %2843 = vmatmul.mubr.bf16.gmra.mrb[0].mxu0 %v2705
          %v2844 = vpop.f32.mrb[0].mxu0
          %v2845 = vadd.f32 0.0, %v2844
          %v2846 = vpop.f32.mrb[0].mxu0
          %v2847 = vpop.f32.mrb[0].mxu0
          %v2848 = vadd.f32 0.0, %v2847
          %v2849 = vpop.f32.mrb[0].mxu0
          %2850 = vmatprep.mubr.bf16.mxu0 0
          %2851 = vmatmul.mubr.bf16.gmra.mrb[0].mxu0 %v2706
          %v2852 = vpop.f32.mrb[0].mxu0
          %v2853 = vadd.f32 0.0, %v2852
          %v2854 = vpop.f32.mrb[0].mxu0
          %v2855 = vpop.f32.mrb[0].mxu0
          %v2856 = vadd.f32 0.0, %v2855
          %v2857 = vpop.f32.mrb[0].mxu0
          %2858 = vmatprep.mubr.bf16.mxu0 0
          %2859 = vmatmul.mubr.bf16.gmra.mrb[0].mxu0 %v2707
          %v2860 = vpop.f32.mrb[0].mxu0
          %v2861 = vadd.f32 0.0, %v2860
          %v2862 = vpop.f32.mrb[0].mxu0
          %v2863 = vpop.f32.mrb[0].mxu0
          %v2864 = vadd.f32 0.0, %v2863
          %v2865 = vpop.f32.mrb[0].mxu0
          %2866 = vmatprep.mubr.bf16.mxu0 0
          %2867 = vmatmul.mubr.bf16.gmra.mrb[0].mxu0 %v2708
          %v2868 = vpop.f32.mrb[0].mxu0
          %v2869 = vadd.f32 0.0, %v2868
          %v2870 = vpop.f32.mrb[0].mxu0
          %v2871 = vpop.f32.mrb[0].mxu0
          %v2872 = vadd.f32 0.0, %v2871
          %v2873 = vpop.f32.mrb[0].mxu0
          %2874 = vmatprep.mubr.bf16.mxu0 0
          %2875 = vmatmul.mubr.bf16.gmra.mrb[0].mxu0 %v2709
          %v2876 = vpop.f32.mrb[0].mxu0
          %v2877 = vadd.f32 0.0, %v2876
          %v2878 = vpop.f32.mrb[0].mxu0
          %v2879 = vpop.f32.mrb[0].mxu0
          %v2880 = vadd.f32 0.0, %v2879
          %v2881 = vpop.f32.mrb[0].mxu0
          %2882 = vmatprep.mubr.bf16.mxu0 0
          %2883 = vmatmul.mubr.bf16.gmra.mrb[0].mxu0 %v2710
          %v2884 = vpop.f32.mrb[0].mxu0
          %v2885 = vadd.f32 0.0, %v2884
          %v2886 = vpop.f32.mrb[0].mxu0
          %v2887 = vpop.f32.mrb[0].mxu0
          %v2888 = vadd.f32 0.0, %v2887
          %v2889 = vpop.f32.mrb[0].mxu0
          %2890 = vmatprep.mubr.bf16.mxu0 0
          %2891 = vmatmul.mubr.bf16.gmra.mrb[0].mxu0 %v2711
          %v2892 = vpop.f32.mrb[0].mxu0
          %v2893 = vadd.f32 0.0, %v2892
          %v2894 = vpop.f32.mrb[0].mxu0
          %v2895 = vpop.f32.mrb[0].mxu0
          %v2896 = vadd.f32 0.0, %v2895
          %v2897 = vpop.f32.mrb[0].mxu0
          %2898 = vmatprep.mubr.bf16.mxu0 0
          %2899 = vmatmul.mubr.bf16.gmra.mrb[0].mxu0 %v2712
          %v2900 = vpop.f32.mrb[0].mxu0
          %v2901 = vadd.f32 0.0, %v2900
          %v2902 = vpop.f32.mrb[0].mxu0
          %v2903 = vpop.f32.mrb[0].mxu0
          %v2904 = vadd.f32 0.0, %v2903
          %v2905 = vpop.f32.mrb[0].mxu0
          %2906 = vmatprep.mubr.bf16.mxu0 0
          %2907 = vmatmul.mubr.bf16.gmra.mrb[0].mxu0 %v2713
          %v2908 = vpop.f32.mrb[0].mxu0
          %v2909 = vadd.f32 0.0, %v2908
          %v2910 = vpop.f32.mrb[0].mxu0
          %v2911 = vpop.f32.mrb[0].mxu0
          %v2912 = vadd.f32 0.0, %v2911
          %v2913 = vpop.f32.mrb[0].mxu0
          %2914 = vmatprep.mubr.bf16.mxu0 0
          %2915 = vmatmul.mubr.bf16.gmra.mrb[0].mxu0 %v2714
          %v2916 = vpop.f32.mrb[0].mxu0
          %v2917 = vadd.f32 0.0, %v2916
          %v2918 = vpop.f32.mrb[0].mxu0
          %v2919 = vpop.f32.mrb[0].mxu0
          %v2920 = vadd.f32 0.0, %v2919
          %v2921 = vpop.f32.mrb[0].mxu0
          %2922 = vmatprep.mubr.bf16.mxu0 0
          %2923 = vmatmul.mubr.bf16.gmra.mrb[0].mxu0 %v2715
          %v2924 = vpop.f32.mrb[0].mxu0
          %v2925 = vadd.f32 0.0, %v2924
          %v2926 = vpop.f32.mrb[0].mxu0
          %v2927 = vpop.f32.mrb[0].mxu0
          %v2928 = vadd.f32 0.0, %v2927
          %v2929 = vpop.f32.mrb[0].mxu0
          %2930 = vmatprep.mubr.bf16.mxu0 0
          %2931 = vmatmul.mubr.bf16.gmra.mrb[0].mxu0 %v2716
          %v2932 = vpop.f32.mrb[0].mxu0
          %v2933 = vadd.f32 0.0, %v2932
          %v2934 = vpop.f32.mrb[0].mxu0
          %v2935 = vpop.f32.mrb[0].mxu0
          %v2936 = vadd.f32 0.0, %v2935
          %v2937 = vpop.f32.mrb[0].mxu0
          %2938 = vmatprep.mubr.bf16.mxu0 0
          %2939 = vmatmul.mubr.bf16.gmra.mrb[0].mxu0 %v2717
          %v2940 = vpop.f32.mrb[0].mxu0
          %v2941 = vadd.f32 0.0, %v2940
          %v2942 = vpop.f32.mrb[0].mxu0
          %v2943 = vpop.f32.mrb[0].mxu0
          %v2944 = vadd.f32 0.0, %v2943
          %v2945 = vpop.f32.mrb[0].mxu0
          %2946 = vdwg.mxu0
          %v2963 = vunpack.c.l.b16 %v2686
          %v2964 = vunpack.c.l.b16 %v2687
          %v2965 = vunpack.c.l.b16 %v2688
          %v2966 = vunpack.c.l.b16 %v2689
          %v2967 = vunpack.c.l.b16 %v2690
          %v2968 = vunpack.c.l.b16 %v2691
          %v2969 = vunpack.c.l.b16 %v2692
          %v2970 = vunpack.c.l.b16 %v2693
          %v2971 = vunpack.c.l.b16 %v2694
          %v2972 = vunpack.c.l.b16 %v2695
          %v2973 = vunpack.c.l.b16 %v2696
          %v2974 = vunpack.c.l.b16 %v2697
          %v2975 = vunpack.c.l.b16 %v2698
          %v2976 = vunpack.c.l.b16 %v2699
          %v2977 = vunpack.c.l.b16 %v2700
          %v2978 = vunpack.c.l.b16 %v2701
          %v2979 = vpack.c.b16 %v2964, %v2963
          %v2980 = vpack.c.b16 %v2966, %v2965
          %v2981 = vpack.c.b16 %v2968, %v2967
          %v2982 = vpack.c.b16 %v2970, %v2969
          %v2983 = vpack.c.b16 %v2972, %v2971
          %v2984 = vpack.c.b16 %v2974, %v2973
          %v2985 = vpack.c.b16 %v2976, %v2975
          %v2986 = vpack.c.b16 %v2978, %v2977
          %2995 = vmatprep.subr.bf16.mxu0 0
          %2996 = vmatpush1.bf16.msra.mxu0 %v2979
          %2997 = vmatprep.subr.bf16.mxu0 0
          %2998 = vmatpush1.bf16.msra.mxu0 %v2980
          %2999 = vmatprep.subr.bf16.mxu0 0
          %3000 = vmatpush1.bf16.msra.mxu0 %v2981
          %3001 = vmatprep.subr.bf16.mxu0 0
          %3002 = vmatpush1.bf16.msra.mxu0 %v2982
          %3003 = vmatprep.subr.bf16.mxu0 0
          %3004 = vmatpush1.bf16.msra.mxu0 %v2983
          %3005 = vmatprep.subr.bf16.mxu0 0
          %3006 = vmatpush1.bf16.msra.mxu0 %v2984
          %3007 = vmatprep.subr.bf16.mxu0 0
          %3008 = vmatpush1.bf16.msra.mxu0 %v2985
          %3009 = vmatprep.subr.bf16.mxu0 0
          %3010 = vmatpush1.bf16.msra.mxu0 %v2986
          %3011 = vmatprep.subr.bf16.mxu0 0
          %3012 = vmatpush1.bf16.msra.mxu0 0
          %3013 = vmatprep.subr.bf16.mxu0 0
          %3014 = vmatpush1.bf16.msra.mxu0 0
          %3015 = vmatprep.subr.bf16.mxu0 0
          %3016 = vmatpush1.bf16.msra.mxu0 0
          %3017 = vmatprep.subr.bf16.mxu0 0
          %3018 = vmatpush1.bf16.msra.mxu0 0
          %3019 = vmatprep.subr.bf16.mxu0 0
          %3020 = vmatpush1.bf16.msra.mxu0 0
          %3021 = vmatprep.subr.bf16.mxu0 0
          %3022 = vmatpush1.bf16.msra.mxu0 0
          %3023 = vmatprep.subr.bf16.mxu0 0
          %3024 = vmatpush1.bf16.msra.mxu0 0
          %3025 = vmatprep.subr.bf16.mxu0 0
          %3026 = vmatpush1.bf16.msra.mxu0 0
          %3027 = vmatprep.mubr.bf16.mxu0 0
          %3028 = vmatmul.mubr.bf16.gmra.mrb[0].mxu0 %v2666
          %v3029 = vpop.f32.mrb[0].mxu0
          %v3030 = vadd.f32 %v2821, %v3029
          %v3031 = vpop.f32.mrb[0].mxu0
          %v3032 = vpop.f32.mrb[0].mxu0
          %v3033 = vadd.f32 %v2824, %v3032
          %v3034 = vpop.f32.mrb[0].mxu0
          %3035 = vmatprep.mubr.bf16.mxu0 0
          %3036 = vmatmul.mubr.bf16.gmra.mrb[0].mxu0 %v2667
          %v3037 = vpop.f32.mrb[0].mxu0
          %v3038 = vadd.f32 %v2829, %v3037
          %v3039 = vpop.f32.mrb[0].mxu0
          %v3040 = vpop.f32.mrb[0].mxu0
          %v3041 = vadd.f32 %v2832, %v3040
          %v3042 = vpop.f32.mrb[0].mxu0
          %3043 = vmatprep.mubr.bf16.mxu0 0
          %3044 = vmatmul.mubr.bf16.gmra.mrb[0].mxu0 %v2668
          %v3045 = vpop.f32.mrb[0].mxu0
          %v3046 = vadd.f32 %v2837, %v3045
          %v3047 = vpop.f32.mrb[0].mxu0
          %v3048 = vpop.f32.mrb[0].mxu0
          %v3049 = vadd.f32 %v2840, %v3048
          %v3050 = vpop.f32.mrb[0].mxu0
          %3051 = vmatprep.mubr.bf16.mxu0 0
          %3052 = vmatmul.mubr.bf16.gmra.mrb[0].mxu0 %v2669
          %v3053 = vpop.f32.mrb[0].mxu0
          %v3054 = vadd.f32 %v2845, %v3053
          %v3055 = vpop.f32.mrb[0].mxu0
          %v3056 = vpop.f32.mrb[0].mxu0
          %v3057 = vadd.f32 %v2848, %v3056
          %v3058 = vpop.f32.mrb[0].mxu0
          %3059 = vmatprep.mubr.bf16.mxu0 0
          %3060 = vmatmul.mubr.bf16.gmra.mrb[0].mxu0 %v2670
          %v3061 = vpop.f32.mrb[0].mxu0
          %v3062 = vadd.f32 %v2853, %v3061
          %v3063 = vpop.f32.mrb[0].mxu0
          %v3064 = vpop.f32.mrb[0].mxu0
          %v3065 = vadd.f32 %v2856, %v3064
          %v3066 = vpop.f32.mrb[0].mxu0
          %3067 = vmatprep.mubr.bf16.mxu0 0
          %3068 = vmatmul.mubr.bf16.gmra.mrb[0].mxu0 %v2671
          %v3069 = vpop.f32.mrb[0].mxu0
          %v3070 = vadd.f32 %v2861, %v3069
          %v3071 = vpop.f32.mrb[0].mxu0
          %v3072 = vpop.f32.mrb[0].mxu0
          %v3073 = vadd.f32 %v2864, %v3072
          %v3074 = vpop.f32.mrb[0].mxu0
          %3075 = vmatprep.mubr.bf16.mxu0 0
          %3076 = vmatmul.mubr.bf16.gmra.mrb[0].mxu0 %v2672
          %v3077 = vpop.f32.mrb[0].mxu0
          %v3078 = vadd.f32 %v2869, %v3077
          %v3079 = vpop.f32.mrb[0].mxu0
          %v3080 = vpop.f32.mrb[0].mxu0
          %v3081 = vadd.f32 %v2872, %v3080
          %v3082 = vpop.f32.mrb[0].mxu0
          %3083 = vmatprep.mubr.bf16.mxu0 0
          %3084 = vmatmul.mubr.bf16.gmra.mrb[0].mxu0 %v2673
          %v3085 = vpop.f32.mrb[0].mxu0
          %v3086 = vadd.f32 %v2877, %v3085
          %v3087 = vpop.f32.mrb[0].mxu0
          %v3088 = vpop.f32.mrb[0].mxu0
          %v3089 = vadd.f32 %v2880, %v3088
          %v3090 = vpop.f32.mrb[0].mxu0
          %3091 = vmatprep.mubr.bf16.mxu0 0
          %3092 = vmatmul.mubr.bf16.gmra.mrb[0].mxu0 %v2674
          %v3093 = vpop.f32.mrb[0].mxu0
          %v3094 = vadd.f32 %v2885, %v3093
          %v3095 = vpop.f32.mrb[0].mxu0
          %v3096 = vpop.f32.mrb[0].mxu0
          %v3097 = vadd.f32 %v2888, %v3096
          %v3098 = vpop.f32.mrb[0].mxu0
          %3099 = vmatprep.mubr.bf16.mxu0 0
          %3100 = vmatmul.mubr.bf16.gmra.mrb[0].mxu0 %v2675
          %v3101 = vpop.f32.mrb[0].mxu0
          %v3102 = vadd.f32 %v2893, %v3101
          %v3103 = vpop.f32.mrb[0].mxu0
          %v3104 = vpop.f32.mrb[0].mxu0
          %v3105 = vadd.f32 %v2896, %v3104
          %v3106 = vpop.f32.mrb[0].mxu0
          %3107 = vmatprep.mubr.bf16.mxu0 0
          %3108 = vmatmul.mubr.bf16.gmra.mrb[0].mxu0 %v2676
          %v3109 = vpop.f32.mrb[0].mxu0
          %v3110 = vadd.f32 %v2901, %v3109
          %v3111 = vpop.f32.mrb[0].mxu0
          %v3112 = vpop.f32.mrb[0].mxu0
          %v3113 = vadd.f32 %v2904, %v3112
          %v3114 = vpop.f32.mrb[0].mxu0
          %3115 = vmatprep.mubr.bf16.mxu0 0
          %3116 = vmatmul.mubr.bf16.gmra.mrb[0].mxu0 %v2677
          %v3117 = vpop.f32.mrb[0].mxu0
          %v3118 = vadd.f32 %v2909, %v3117
          %v3119 = vpop.f32.mrb[0].mxu0
          %v3120 = vpop.f32.mrb[0].mxu0
          %v3121 = vadd.f32 %v2912, %v3120
          %v3122 = vpop.f32.mrb[0].mxu0
          %3123 = vmatprep.mubr.bf16.mxu0 0
          %3124 = vmatmul.mubr.bf16.gmra.mrb[0].mxu0 %v2678
          %v3125 = vpop.f32.mrb[0].mxu0
          %v3126 = vadd.f32 %v2917, %v3125
          %v3127 = vpop.f32.mrb[0].mxu0
          %v3128 = vpop.f32.mrb[0].mxu0
          %v3129 = vadd.f32 %v2920, %v3128
          %v3130 = vpop.f32.mrb[0].mxu0
          %3131 = vmatprep.mubr.bf16.mxu0 0
          %3132 = vmatmul.mubr.bf16.gmra.mrb[0].mxu0 %v2679
          %v3133 = vpop.f32.mrb[0].mxu0
          %v3134 = vadd.f32 %v2925, %v3133
          %v3135 = vpop.f32.mrb[0].mxu0
          %v3136 = vpop.f32.mrb[0].mxu0
          %v3137 = vadd.f32 %v2928, %v3136
          %v3138 = vpop.f32.mrb[0].mxu0
          %3139 = vmatprep.mubr.bf16.mxu0 0
          %3140 = vmatmul.mubr.bf16.gmra.mrb[0].mxu0 %v2680
          %v3141 = vpop.f32.mrb[0].mxu0
          %v3142 = vadd.f32 %v2933, %v3141
          %v3143 = vpop.f32.mrb[0].mxu0
          %v3144 = vpop.f32.mrb[0].mxu0
          %v3145 = vadd.f32 %v2936, %v3144
          %v3146 = vpop.f32.mrb[0].mxu0
          %3147 = vmatprep.mubr.bf16.mxu0 0
          %3148 = vmatmul.mubr.bf16.gmra.mrb[0].mxu0 %v2681
          %v3149 = vpop.f32.mrb[0].mxu0
          %v3150 = vadd.f32 %v2941, %v3149
          %v3151 = vpop.f32.mrb[0].mxu0
          %v3152 = vpop.f32.mrb[0].mxu0
          %v3153 = vadd.f32 %v2944, %v3152
          %v3154 = vpop.f32.mrb[0].mxu0
          %3155 = vdwg.mxu0
          %v3156 = vld [vmem:[%s2455] sm:$0xff]
          %v3157 = vld [vmem:[%s2455 + $0x8] sm:$0xff]
          %v3158 = vld [vmem:[%s2455 + $0x10] sm:$0xff]
          %v3159 = vld [vmem:[%s2455 + $0x18] sm:$0xff]
          %v3160 = vld [vmem:[%s2455 + $0x20] sm:$0xff]
          %v3161 = vld [vmem:[%s2455 + $0x28] sm:$0xff]
          %v3162 = vld [vmem:[%s2455 + $0x30] sm:$0xff]
          %v3163 = vld [vmem:[%s2455 + $0x38] sm:$0xff]
          %v3164 = vld [vmem:[%s2455 + $0x40] sm:$0xff]
          %v3165 = vld [vmem:[%s2455 + $0x48] sm:$0xff]
          %v3166 = vld [vmem:[%s2455 + $0x50] sm:$0xff]
          %v3167 = vld [vmem:[%s2455 + $0x58] sm:$0xff]
          %v3168 = vld [vmem:[%s2455 + $0x60] sm:$0xff]
          %v3169 = vld [vmem:[%s2455 + $0x68] sm:$0xff]
          %v3170 = vld [vmem:[%s2455 + $0x70] sm:$0xff]
          %v3171 = vld [vmem:[%s2455 + $0x78] sm:$0xff]
          %s3172 = sadd.s32 %s2682, 2
          %s3173 = smul.u32 %s3172, 16
          %s3174 = smul.addr %s3173, 4
          %s3175 = scalar_lea.vmem [#allocation3], %s3174
          %v3176 = vld [vmem:[%s3175] sm:$0xf]
          %v3177 = vld [vmem:[%s3175 + $0x4] sm:$0xf]
          %v3178 = vld [vmem:[%s3175 + $0x8] sm:$0xf]
          %v3179 = vld [vmem:[%s3175 + $0xc] sm:$0xf]
          %v3180 = vld [vmem:[%s3175 + $0x10] sm:$0xf]
          %v3181 = vld [vmem:[%s3175 + $0x14] sm:$0xf]
          %v3182 = vld [vmem:[%s3175 + $0x18] sm:$0xf]
          %v3183 = vld [vmem:[%s3175 + $0x1c] sm:$0xf]
          %v3184 = vld [vmem:[%s3175 + $0x20] sm:$0xf]
          %v3185 = vld [vmem:[%s3175 + $0x24] sm:$0xf]
          %v3186 = vld [vmem:[%s3175 + $0x28] sm:$0xf]
          %v3187 = vld [vmem:[%s3175 + $0x2c] sm:$0xf]
          %v3188 = vld [vmem:[%s3175 + $0x30] sm:$0xf]
          %v3189 = vld [vmem:[%s3175 + $0x34] sm:$0xf]
          %v3190 = vld [vmem:[%s3175 + $0x38] sm:$0xf]
          %v3191 = vld [vmem:[%s3175 + $0x3c] sm:$0xf]
          %v3208 = vunpack.c.l.b16 %v3176
          %v3209 = vunpack.c.l.b16 %v3177
          %v3210 = vunpack.c.l.b16 %v3178
          %v3211 = vunpack.c.l.b16 %v3179
          %v3212 = vunpack.c.l.b16 %v3180
          %v3213 = vunpack.c.l.b16 %v3181
          %v3214 = vunpack.c.l.b16 %v3182
          %v3215 = vunpack.c.l.b16 %v3183
          %v3216 = vunpack.c.l.b16 %v3184
          %v3217 = vunpack.c.l.b16 %v3185
          %v3218 = vunpack.c.l.b16 %v3186
          %v3219 = vunpack.c.l.b16 %v3187
          %v3220 = vunpack.c.l.b16 %v3188
          %v3221 = vunpack.c.l.b16 %v3189
          %v3222 = vunpack.c.l.b16 %v3190
          %v3223 = vunpack.c.l.b16 %v3191
          %v3224 = vpack.c.b16 %v3209, %v3208
          %v3225 = vpack.c.b16 %v3211, %v3210
          %v3226 = vpack.c.b16 %v3213, %v3212
          %v3227 = vpack.c.b16 %v3215, %v3214
          %v3228 = vpack.c.b16 %v3217, %v3216
          %v3229 = vpack.c.b16 %v3219, %v3218
          %v3230 = vpack.c.b16 %v3221, %v3220
          %v3231 = vpack.c.b16 %v3223, %v3222
          %3240 = vmatprep.subr.bf16.mxu0 0
          %3241 = vmatpush1.bf16.msra.mxu0 %v3224
          %3242 = vmatprep.subr.bf16.mxu0 0
          %3243 = vmatpush1.bf16.msra.mxu0 %v3225
          %3244 = vmatprep.subr.bf16.mxu0 0
          %3245 = vmatpush1.bf16.msra.mxu0 %v3226
          %3246 = vmatprep.subr.bf16.mxu0 0
          %3247 = vmatpush1.bf16.msra.mxu0 %v3227
          %3248 = vmatprep.subr.bf16.mxu0 0
          %3249 = vmatpush1.bf16.msra.mxu0 %v3228
          %3250 = vmatprep.subr.bf16.mxu0 0
          %3251 = vmatpush1.bf16.msra.mxu0 %v3229
          %3252 = vmatprep.subr.bf16.mxu0 0
          %3253 = vmatpush1.bf16.msra.mxu0 %v3230
          %3254 = vmatprep.subr.bf16.mxu0 0
          %3255 = vmatpush1.bf16.msra.mxu0 %v3231
          %3256 = vmatprep.subr.bf16.mxu0 0
          %3257 = vmatpush1.bf16.msra.mxu0 0
          %3258 = vmatprep.subr.bf16.mxu0 0
          %3259 = vmatpush1.bf16.msra.mxu0 0
          %3260 = vmatprep.subr.bf16.mxu0 0
          %3261 = vmatpush1.bf16.msra.mxu0 0
          %3262 = vmatprep.subr.bf16.mxu0 0
          %3263 = vmatpush1.bf16.msra.mxu0 0
          %3264 = vmatprep.subr.bf16.mxu0 0
          %3265 = vmatpush1.bf16.msra.mxu0 0
          %3266 = vmatprep.subr.bf16.mxu0 0
          %3267 = vmatpush1.bf16.msra.mxu0 0
          %3268 = vmatprep.subr.bf16.mxu0 0
          %3269 = vmatpush1.bf16.msra.mxu0 0
          %3270 = vmatprep.subr.bf16.mxu0 0
          %3271 = vmatpush1.bf16.msra.mxu0 0
          %3272 = vmatprep.mubr.bf16.mxu0 0
          %3273 = vmatmul.mubr.bf16.gmra.mrb[0].mxu0 %v3156
          %v3274 = vpop.f32.mrb[0].mxu0
          %v3275 = vadd.f32 0.0, %v3274
          %v3276 = vpop.f32.mrb[0].mxu0
          %v3277 = vpop.f32.mrb[0].mxu0
          %v3278 = vadd.f32 0.0, %v3277
          %v3279 = vpop.f32.mrb[0].mxu0
          %3280 = vmatprep.mubr.bf16.mxu0 0
          %3281 = vmatmul.mubr.bf16.gmra.mrb[0].mxu0 %v3157
          %v3282 = vpop.f32.mrb[0].mxu0
          %v3283 = vadd.f32 0.0, %v3282
          %v3284 = vpop.f32.mrb[0].mxu0
          %v3285 = vpop.f32.mrb[0].mxu0
          %v3286 = vadd.f32 0.0, %v3285
          %v3287 = vpop.f32.mrb[0].mxu0
          %3288 = vmatprep.mubr.bf16.mxu0 0
          %3289 = vmatmul.mubr.bf16.gmra.mrb[0].mxu0 %v3158
          %v3290 = vpop.f32.mrb[0].mxu0
          %v3291 = vadd.f32 0.0, %v3290
          %v3292 = vpop.f32.mrb[0].mxu0
          %v3293 = vpop.f32.mrb[0].mxu0
          %v3294 = vadd.f32 0.0, %v3293
          %v3295 = vpop.f32.mrb[0].mxu0
          %3296 = vmatprep.mubr.bf16.mxu0 0
          %3297 = vmatmul.mubr.bf16.gmra.mrb[0].mxu0 %v3159
          %v3298 = vpop.f32.mrb[0].mxu0
          %v3299 = vadd.f32 0.0, %v3298
          %v3300 = vpop.f32.mrb[0].mxu0
          %v3301 = vpop.f32.mrb[0].mxu0
          %v3302 = vadd.f32 0.0, %v3301
          %v3303 = vpop.f32.mrb[0].mxu0
          %3304 = vmatprep.mubr.bf16.mxu0 0
          %3305 = vmatmul.mubr.bf16.gmra.mrb[0].mxu0 %v3160
          %v3306 = vpop.f32.mrb[0].mxu0
          %v3307 = vadd.f32 0.0, %v3306
          %v3308 = vpop.f32.mrb[0].mxu0
          %v3309 = vpop.f32.mrb[0].mxu0
          %v3310 = vadd.f32 0.0, %v3309
          %v3311 = vpop.f32.mrb[0].mxu0
          %3312 = vmatprep.mubr.bf16.mxu0 0
          %3313 = vmatmul.mubr.bf16.gmra.mrb[0].mxu0 %v3161
          %v3314 = vpop.f32.mrb[0].mxu0
          %v3315 = vadd.f32 0.0, %v3314
          %v3316 = vpop.f32.mrb[0].mxu0
          %v3317 = vpop.f32.mrb[0].mxu0
          %v3318 = vadd.f32 0.0, %v3317
          %v3319 = vpop.f32.mrb[0].mxu0
          %3320 = vmatprep.mubr.bf16.mxu0 0
          %3321 = vmatmul.mubr.bf16.gmra.mrb[0].mxu0 %v3162
          %v3322 = vpop.f32.mrb[0].mxu0
          %v3323 = vadd.f32 0.0, %v3322
          %v3324 = vpop.f32.mrb[0].mxu0
          %v3325 = vpop.f32.mrb[0].mxu0
          %v3326 = vadd.f32 0.0, %v3325
          %v3327 = vpop.f32.mrb[0].mxu0
          %3328 = vmatprep.mubr.bf16.mxu0 0
          %3329 = vmatmul.mubr.bf16.gmra.mrb[0].mxu0 %v3163
          %v3330 = vpop.f32.mrb[0].mxu0
          %v3331 = vadd.f32 0.0, %v3330
          %v3332 = vpop.f32.mrb[0].mxu0
          %v3333 = vpop.f32.mrb[0].mxu0
          %v3334 = vadd.f32 0.0, %v3333
          %v3335 = vpop.f32.mrb[0].mxu0
          %3336 = vmatprep.mubr.bf16.mxu0 0
          %3337 = vmatmul.mubr.bf16.gmra.mrb[0].mxu0 %v3164
          %v3338 = vpop.f32.mrb[0].mxu0
          %v3339 = vadd.f32 0.0, %v3338
          %v3340 = vpop.f32.mrb[0].mxu0
          %v3341 = vpop.f32.mrb[0].mxu0
          %v3342 = vadd.f32 0.0, %v3341
          %v3343 = vpop.f32.mrb[0].mxu0
          %3344 = vmatprep.mubr.bf16.mxu0 0
          %3345 = vmatmul.mubr.bf16.gmra.mrb[0].mxu0 %v3165
          %v3346 = vpop.f32.mrb[0].mxu0
          %v3347 = vadd.f32 0.0, %v3346
          %v3348 = vpop.f32.mrb[0].mxu0
          %v3349 = vpop.f32.mrb[0].mxu0
          %v3350 = vadd.f32 0.0, %v3349
          %v3351 = vpop.f32.mrb[0].mxu0
          %3352 = vmatprep.mubr.bf16.mxu0 0
          %3353 = vmatmul.mubr.bf16.gmra.mrb[0].mxu0 %v3166
          %v3354 = vpop.f32.mrb[0].mxu0
          %v3355 = vadd.f32 0.0, %v3354
          %v3356 = vpop.f32.mrb[0].mxu0
          %v3357 = vpop.f32.mrb[0].mxu0
          %v3358 = vadd.f32 0.0, %v3357
          %v3359 = vpop.f32.mrb[0].mxu0
          %3360 = vmatprep.mubr.bf16.mxu0 0
          %3361 = vmatmul.mubr.bf16.gmra.mrb[0].mxu0 %v3167
          %v3362 = vpop.f32.mrb[0].mxu0
          %v3363 = vadd.f32 0.0, %v3362
          %v3364 = vpop.f32.mrb[0].mxu0
          %v3365 = vpop.f32.mrb[0].mxu0
          %v3366 = vadd.f32 0.0, %v3365
          %v3367 = vpop.f32.mrb[0].mxu0
          %3368 = vmatprep.mubr.bf16.mxu0 0
          %3369 = vmatmul.mubr.bf16.gmra.mrb[0].mxu0 %v3168
          %v3370 = vpop.f32.mrb[0].mxu0
          %v3371 = vadd.f32 0.0, %v3370
          %v3372 = vpop.f32.mrb[0].mxu0
          %v3373 = vpop.f32.mrb[0].mxu0
          %v3374 = vadd.f32 0.0, %v3373
          %v3375 = vpop.f32.mrb[0].mxu0
          %3376 = vmatprep.mubr.bf16.mxu0 0
          %3377 = vmatmul.mubr.bf16.gmra.mrb[0].mxu0 %v3169
          %v3378 = vpop.f32.mrb[0].mxu0
          %v3379 = vadd.f32 0.0, %v3378
          %v3380 = vpop.f32.mrb[0].mxu0
          %v3381 = vpop.f32.mrb[0].mxu0
          %v3382 = vadd.f32 0.0, %v3381
          %v3383 = vpop.f32.mrb[0].mxu0
          %3384 = vmatprep.mubr.bf16.mxu0 0
          %3385 = vmatmul.mubr.bf16.gmra.mrb[0].mxu0 %v3170
          %v3386 = vpop.f32.mrb[0].mxu0
          %v3387 = vadd.f32 0.0, %v3386
          %v3388 = vpop.f32.mrb[0].mxu0
          %v3389 = vpop.f32.mrb[0].mxu0
          %v3390 = vadd.f32 0.0, %v3389
          %v3391 = vpop.f32.mrb[0].mxu0
          %3392 = vmatprep.mubr.bf16.mxu0 0
          %3393 = vmatmul.mubr.bf16.gmra.mrb[0].mxu0 %v3171
          %v3394 = vpop.f32.mrb[0].mxu0
          %v3395 = vadd.f32 0.0, %v3394
          %v3396 = vpop.f32.mrb[0].mxu0
          %v3397 = vpop.f32.mrb[0].mxu0
          %v3398 = vadd.f32 0.0, %v3397
          %v3399 = vpop.f32.mrb[0].mxu0
          %3400 = vdwg.mxu0
          %v3401 = vadd.f32 %v3030, %v3275
          %v3402 = vadd.f32 %v3033, %v3278
          %v3403 = vadd.f32 %v3038, %v3283
          %v3404 = vadd.f32 %v3041, %v3286
          %v3405 = vadd.f32 %v3046, %v3291
          %v3406 = vadd.f32 %v3049, %v3294
          %v3407 = vadd.f32 %v3054, %v3299
          %v3408 = vadd.f32 %v3057, %v3302
          %v3409 = vadd.f32 %v3062, %v3307
          %v3410 = vadd.f32 %v3065, %v3310
          %v3411 = vadd.f32 %v3070, %v3315
          %v3412 = vadd.f32 %v3073, %v3318
          %v3413 = vadd.f32 %v3078, %v3323
          %v3414 = vadd.f32 %v3081, %v3326
          %v3415 = vadd.f32 %v3086, %v3331
          %v3416 = vadd.f32 %v3089, %v3334
          %v3417 = vadd.f32 %v3094, %v3339
          %v3418 = vadd.f32 %v3097, %v3342
          %v3419 = vadd.f32 %v3102, %v3347
          %v3420 = vadd.f32 %v3105, %v3350
          %v3421 = vadd.f32 %v3110, %v3355
          %v3422 = vadd.f32 %v3113, %v3358
          %v3423 = vadd.f32 %v3118, %v3363
          %v3424 = vadd.f32 %v3121, %v3366
          %v3425 = vadd.f32 %v3126, %v3371
          %v3426 = vadd.f32 %v3129, %v3374
          %v3427 = vadd.f32 %v3134, %v3379
          %v3428 = vadd.f32 %v3137, %v3382
          %v3429 = vadd.f32 %v3142, %v3387
          %v3430 = vadd.f32 %v3145, %v3390
          %v3431 = vadd.f32 %v3150, %v3395
          %v3432 = vadd.f32 %v3153, %v3398
          %v3433 = vld [vmem:[%s2649 + $0x8] sm:$0xff]
          %v3434 = vld [vmem:[%s2649 + $0x10] sm:$0xff]
          %v3435 = vld [vmem:[%s2649 + $0x18] sm:$0xff]
          %v3436 = vld [vmem:[%s2649 + $0x20] sm:$0xff]
          %v3437 = vld [vmem:[%s2649 + $0x28] sm:$0xff]
          %v3438 = vld [vmem:[%s2649 + $0x30] sm:$0xff]
          %v3439 = vld [vmem:[%s2649 + $0x38] sm:$0xff]
          %v3440 = vld [vmem:[%s2649 + $0x40] sm:$0xff]
          %v3441 = vld [vmem:[%s2649 + $0x48] sm:$0xff]
          %v3442 = vld [vmem:[%s2649 + $0x50] sm:$0xff]
          %v3443 = vld [vmem:[%s2649 + $0x58] sm:$0xff]
          %v3444 = vld [vmem:[%s2649 + $0x60] sm:$0xff]
          %v3445 = vld [vmem:[%s2649 + $0x68] sm:$0xff]
          %v3446 = vld [vmem:[%s2649 + $0x70] sm:$0xff]
          %v3447 = vld [vmem:[%s2649 + $0x78] sm:$0xff]
          %v3448 = vld [vmem:[%s2649 + $0x80] sm:$0xff]
          %s3449 = sadd.s32 %s2682, 3
          %s3450 = smul.u32 %s3449, 16
          %s3451 = smul.addr %s3450, 4
          %s3452 = scalar_lea.vmem [#allocation3], %s3451
          %v3453 = vld [vmem:[%s3452] sm:$0xf]
          %v3454 = vld [vmem:[%s3452 + $0x4] sm:$0xf]
          %v3455 = vld [vmem:[%s3452 + $0x8] sm:$0xf]
          %v3456 = vld [vmem:[%s3452 + $0xc] sm:$0xf]
          %v3457 = vld [vmem:[%s3452 + $0x10] sm:$0xf]
          %v3458 = vld [vmem:[%s3452 + $0x14] sm:$0xf]
          %v3459 = vld [vmem:[%s3452 + $0x18] sm:$0xf]
          %v3460 = vld [vmem:[%s3452 + $0x1c] sm:$0xf]
          %v3461 = vld [vmem:[%s3452 + $0x20] sm:$0xf]
          %v3462 = vld [vmem:[%s3452 + $0x24] sm:$0xf]
          %v3463 = vld [vmem:[%s3452 + $0x28] sm:$0xf]
          %v3464 = vld [vmem:[%s3452 + $0x2c] sm:$0xf]
          %v3465 = vld [vmem:[%s3452 + $0x30] sm:$0xf]
          %v3466 = vld [vmem:[%s3452 + $0x34] sm:$0xf]
          %v3467 = vld [vmem:[%s3452 + $0x38] sm:$0xf]
          %v3468 = vld [vmem:[%s3452 + $0x3c] sm:$0xf]
          %v3485 = vunpack.c.l.b16 %v3453
          %v3486 = vunpack.c.l.b16 %v3454
          %v3487 = vunpack.c.l.b16 %v3455
          %v3488 = vunpack.c.l.b16 %v3456
          %v3489 = vunpack.c.l.b16 %v3457
          %v3490 = vunpack.c.l.b16 %v3458
          %v3491 = vunpack.c.l.b16 %v3459
          %v3492 = vunpack.c.l.b16 %v3460
          %v3493 = vunpack.c.l.b16 %v3461
          %v3494 = vunpack.c.l.b16 %v3462
          %v3495 = vunpack.c.l.b16 %v3463
          %v3496 = vunpack.c.l.b16 %v3464
          %v3497 = vunpack.c.l.b16 %v3465
          %v3498 = vunpack.c.l.b16 %v3466
          %v3499 = vunpack.c.l.b16 %v3467
          %v3500 = vunpack.c.l.b16 %v3468
          %v3501 = vpack.c.b16 %v3486, %v3485
          %v3502 = vpack.c.b16 %v3488, %v3487
          %v3503 = vpack.c.b16 %v3490, %v3489
          %v3504 = vpack.c.b16 %v3492, %v3491
          %v3505 = vpack.c.b16 %v3494, %v3493
          %v3506 = vpack.c.b16 %v3496, %v3495
          %v3507 = vpack.c.b16 %v3498, %v3497
          %v3508 = vpack.c.b16 %v3500, %v3499
          %3517 = vmatprep.subr.bf16.mxu0 0
          %3518 = vmatpush1.bf16.msra.mxu0 %v3501
          %3519 = vmatprep.subr.bf16.mxu0 0
          %3520 = vmatpush1.bf16.msra.mxu0 %v3502
          %3521 = vmatprep.subr.bf16.mxu0 0
          %3522 = vmatpush1.bf16.msra.mxu0 %v3503
          %3523 = vmatprep.subr.bf16.mxu0 0
          %3524 = vmatpush1.bf16.msra.mxu0 %v3504
          %3525 = vmatprep.subr.bf16.mxu0 0
          %3526 = vmatpush1.bf16.msra.mxu0 %v3505
          %3527 = vmatprep.subr.bf16.mxu0 0
          %3528 = vmatpush1.bf16.msra.mxu0 %v3506
          %3529 = vmatprep.subr.bf16.mxu0 0
          %3530 = vmatpush1.bf16.msra.mxu0 %v3507
          %3531 = vmatprep.subr.bf16.mxu0 0
          %3532 = vmatpush1.bf16.msra.mxu0 %v3508
          %3533 = vmatprep.subr.bf16.mxu0 0
          %3534 = vmatpush1.bf16.msra.mxu0 0
          %3535 = vmatprep.subr.bf16.mxu0 0
          %3536 = vmatpush1.bf16.msra.mxu0 0
          %3537 = vmatprep.subr.bf16.mxu0 0
          %3538 = vmatpush1.bf16.msra.mxu0 0
          %3539 = vmatprep.subr.bf16.mxu0 0
          %3540 = vmatpush1.bf16.msra.mxu0 0
          %3541 = vmatprep.subr.bf16.mxu0 0
          %3542 = vmatpush1.bf16.msra.mxu0 0
          %3543 = vmatprep.subr.bf16.mxu0 0
          %3544 = vmatpush1.bf16.msra.mxu0 0
          %3545 = vmatprep.subr.bf16.mxu0 0
          %3546 = vmatpush1.bf16.msra.mxu0 0
          %3547 = vmatprep.subr.bf16.mxu0 0
          %3548 = vmatpush1.bf16.msra.mxu0 0
          %3549 = vmatprep.mubr.bf16.mxu0 0
          %3550 = vmatmul.mubr.bf16.gmra.mrb[0].mxu0 %v3433
          %v3551 = vpop.f32.mrb[0].mxu0
          %v3552 = vadd.f32 0.0, %v3551
          %v3553 = vpop.f32.mrb[0].mxu0
          %v3554 = vpop.f32.mrb[0].mxu0
          %v3555 = vadd.f32 0.0, %v3554
          %v3556 = vpop.f32.mrb[0].mxu0
          %3557 = vmatprep.mubr.bf16.mxu0 0
          %3558 = vmatmul.mubr.bf16.gmra.mrb[0].mxu0 %v3434
          %v3559 = vpop.f32.mrb[0].mxu0
          %v3560 = vadd.f32 0.0, %v3559
          %v3561 = vpop.f32.mrb[0].mxu0
          %v3562 = vpop.f32.mrb[0].mxu0
          %v3563 = vadd.f32 0.0, %v3562
          %v3564 = vpop.f32.mrb[0].mxu0
          %3565 = vmatprep.mubr.bf16.mxu0 0
          %3566 = vmatmul.mubr.bf16.gmra.mrb[0].mxu0 %v3435
          %v3567 = vpop.f32.mrb[0].mxu0
          %v3568 = vadd.f32 0.0, %v3567
          %v3569 = vpop.f32.mrb[0].mxu0
          %v3570 = vpop.f32.mrb[0].mxu0
          %v3571 = vadd.f32 0.0, %v3570
          %v3572 = vpop.f32.mrb[0].mxu0
          %3573 = vmatprep.mubr.bf16.mxu0 0
          %3574 = vmatmul.mubr.bf16.gmra.mrb[0].mxu0 %v3436
          %v3575 = vpop.f32.mrb[0].mxu0
          %v3576 = vadd.f32 0.0, %v3575
          %v3577 = vpop.f32.mrb[0].mxu0
          %v3578 = vpop.f32.mrb[0].mxu0
          %v3579 = vadd.f32 0.0, %v3578
          %v3580 = vpop.f32.mrb[0].mxu0
          %3581 = vmatprep.mubr.bf16.mxu0 0
          %3582 = vmatmul.mubr.bf16.gmra.mrb[0].mxu0 %v3437
          %v3583 = vpop.f32.mrb[0].mxu0
          %v3584 = vadd.f32 0.0, %v3583
          %v3585 = vpop.f32.mrb[0].mxu0
          %v3586 = vpop.f32.mrb[0].mxu0
          %v3587 = vadd.f32 0.0, %v3586
          %v3588 = vpop.f32.mrb[0].mxu0
          %3589 = vmatprep.mubr.bf16.mxu0 0
          %3590 = vmatmul.mubr.bf16.gmra.mrb[0].mxu0 %v3438
          %v3591 = vpop.f32.mrb[0].mxu0
          %v3592 = vadd.f32 0.0, %v3591
          %v3593 = vpop.f32.mrb[0].mxu0
          %v3594 = vpop.f32.mrb[0].mxu0
          %v3595 = vadd.f32 0.0, %v3594
          %v3596 = vpop.f32.mrb[0].mxu0
          %3597 = vmatprep.mubr.bf16.mxu0 0
          %3598 = vmatmul.mubr.bf16.gmra.mrb[0].mxu0 %v3439
          %v3599 = vpop.f32.mrb[0].mxu0
          %v3600 = vadd.f32 0.0, %v3599
          %v3601 = vpop.f32.mrb[0].mxu0
          %v3602 = vpop.f32.mrb[0].mxu0
          %v3603 = vadd.f32 0.0, %v3602
          %v3604 = vpop.f32.mrb[0].mxu0
          %3605 = vmatprep.mubr.bf16.mxu0 0
          %3606 = vmatmul.mubr.bf16.gmra.mrb[0].mxu0 %v3440
          %v3607 = vpop.f32.mrb[0].mxu0
          %v3608 = vadd.f32 0.0, %v3607
          %v3609 = vpop.f32.mrb[0].mxu0
          %v3610 = vpop.f32.mrb[0].mxu0
          %v3611 = vadd.f32 0.0, %v3610
          %v3612 = vpop.f32.mrb[0].mxu0
          %3613 = vmatprep.mubr.bf16.mxu0 0
          %3614 = vmatmul.mubr.bf16.gmra.mrb[0].mxu0 %v3441
          %v3615 = vpop.f32.mrb[0].mxu0
          %v3616 = vadd.f32 0.0, %v3615
          %v3617 = vpop.f32.mrb[0].mxu0
          %v3618 = vpop.f32.mrb[0].mxu0
          %v3619 = vadd.f32 0.0, %v3618
          %v3620 = vpop.f32.mrb[0].mxu0
          %3621 = vmatprep.mubr.bf16.mxu0 0
          %3622 = vmatmul.mubr.bf16.gmra.mrb[0].mxu0 %v3442
          %v3623 = vpop.f32.mrb[0].mxu0
          %v3624 = vadd.f32 0.0, %v3623
          %v3625 = vpop.f32.mrb[0].mxu0
          %v3626 = vpop.f32.mrb[0].mxu0
          %v3627 = vadd.f32 0.0, %v3626
          %v3628 = vpop.f32.mrb[0].mxu0
          %3629 = vmatprep.mubr.bf16.mxu0 0
          %3630 = vmatmul.mubr.bf16.gmra.mrb[0].mxu0 %v3443
          %v3631 = vpop.f32.mrb[0].mxu0
          %v3632 = vadd.f32 0.0, %v3631
          %v3633 = vpop.f32.mrb[0].mxu0
          %v3634 = vpop.f32.mrb[0].mxu0
          %v3635 = vadd.f32 0.0, %v3634
          %v3636 = vpop.f32.mrb[0].mxu0
          %3637 = vmatprep.mubr.bf16.mxu0 0
          %3638 = vmatmul.mubr.bf16.gmra.mrb[0].mxu0 %v3444
          %v3639 = vpop.f32.mrb[0].mxu0
          %v3640 = vadd.f32 0.0, %v3639
          %v3641 = vpop.f32.mrb[0].mxu0
          %v3642 = vpop.f32.mrb[0].mxu0
          %v3643 = vadd.f32 0.0, %v3642
          %v3644 = vpop.f32.mrb[0].mxu0
          %3645 = vmatprep.mubr.bf16.mxu0 0
          %3646 = vmatmul.mubr.bf16.gmra.mrb[0].mxu0 %v3445
          %v3647 = vpop.f32.mrb[0].mxu0
          %v3648 = vadd.f32 0.0, %v3647
          %v3649 = vpop.f32.mrb[0].mxu0
          %v3650 = vpop.f32.mrb[0].mxu0
          %v3651 = vadd.f32 0.0, %v3650
          %v3652 = vpop.f32.mrb[0].mxu0
          %3653 = vmatprep.mubr.bf16.mxu0 0
          %3654 = vmatmul.mubr.bf16.gmra.mrb[0].mxu0 %v3446
          %v3655 = vpop.f32.mrb[0].mxu0
          %v3656 = vadd.f32 0.0, %v3655
          %v3657 = vpop.f32.mrb[0].mxu0
          %v3658 = vpop.f32.mrb[0].mxu0
          %v3659 = vadd.f32 0.0, %v3658
          %v3660 = vpop.f32.mrb[0].mxu0
          %3661 = vmatprep.mubr.bf16.mxu0 0
          %3662 = vmatmul.mubr.bf16.gmra.mrb[0].mxu0 %v3447
          %v3663 = vpop.f32.mrb[0].mxu0
          %v3664 = vadd.f32 0.0, %v3663
          %v3665 = vpop.f32.mrb[0].mxu0
          %v3666 = vpop.f32.mrb[0].mxu0
          %v3667 = vadd.f32 0.0, %v3666
          %v3668 = vpop.f32.mrb[0].mxu0
          %3669 = vmatprep.mubr.bf16.mxu0 0
          %3670 = vmatmul.mubr.bf16.gmra.mrb[0].mxu0 %v3448
          %v3671 = vpop.f32.mrb[0].mxu0
          %v3672 = vadd.f32 0.0, %v3671
          %v3673 = vpop.f32.mrb[0].mxu0
          %v3674 = vpop.f32.mrb[0].mxu0
          %v3675 = vadd.f32 0.0, %v3674
          %v3676 = vpop.f32.mrb[0].mxu0
          %3677 = vdwg.mxu0
          %v3678 = vadd.f32 %v3401, %v3552
          %v3679 = vadd.f32 %v3402, %v3555
          %v3680 = vadd.f32 %v3403, %v3560
          %v3681 = vadd.f32 %v3404, %v3563
          %v3682 = vadd.f32 %v3405, %v3568
          %v3683 = vadd.f32 %v3406, %v3571
          %v3684 = vadd.f32 %v3407, %v3576
          %v3685 = vadd.f32 %v3408, %v3579
          %v3686 = vadd.f32 %v3409, %v3584
          %v3687 = vadd.f32 %v3410, %v3587
          %v3688 = vadd.f32 %v3411, %v3592
          %v3689 = vadd.f32 %v3412, %v3595
          %v3690 = vadd.f32 %v3413, %v3600
          %v3691 = vadd.f32 %v3414, %v3603
          %v3692 = vadd.f32 %v3415, %v3608
          %v3693 = vadd.f32 %v3416, %v3611
          %v3694 = vadd.f32 %v3417, %v3616
          %v3695 = vadd.f32 %v3418, %v3619
          %v3696 = vadd.f32 %v3419, %v3624
          %v3697 = vadd.f32 %v3420, %v3627
          %v3698 = vadd.f32 %v3421, %v3632
          %v3699 = vadd.f32 %v3422, %v3635
          %v3700 = vadd.f32 %v3423, %v3640
          %v3701 = vadd.f32 %v3424, %v3643
          %v3702 = vadd.f32 %v3425, %v3648
          %v3703 = vadd.f32 %v3426, %v3651
          %v3704 = vadd.f32 %v3427, %v3656
          %v3705 = vadd.f32 %v3428, %v3659
          %v3706 = vadd.f32 %v3429, %v3664
          %v3707 = vadd.f32 %v3430, %v3667
          %v3708 = vadd.f32 %v3431, %v3672
          %v3709 = vadd.f32 %v3432, %v3675
          %v3710 = vld [vmem:[#allocation2 + $0x8] sm:$0xff]
          %v3711 = vld [vmem:[#allocation2 + $0x10] sm:$0xff]
          %v3712 = vld [vmem:[#allocation2 + $0x18] sm:$0xff]
          %v3713 = vld [vmem:[#allocation2 + $0x20] sm:$0xff]
          %v3714 = vld [vmem:[#allocation2 + $0x28] sm:$0xff]
          %v3715 = vld [vmem:[#allocation2 + $0x30] sm:$0xff]
          %v3716 = vld [vmem:[#allocation2 + $0x38] sm:$0xff]
          %v3717 = vld [vmem:[#allocation2 + $0x40] sm:$0xff]
          %v3718 = vld [vmem:[#allocation2 + $0x48] sm:$0xff]
          %v3719 = vld [vmem:[#allocation2 + $0x50] sm:$0xff]
          %v3720 = vld [vmem:[#allocation2 + $0x58] sm:$0xff]
          %v3721 = vld [vmem:[#allocation2 + $0x60] sm:$0xff]
          %v3722 = vld [vmem:[#allocation2 + $0x68] sm:$0xff]
          %v3723 = vld [vmem:[#allocation2 + $0x70] sm:$0xff]
          %v3724 = vld [vmem:[#allocation2 + $0x78] sm:$0xff]
          %v3725 = vld [vmem:[#allocation2 + $0x80] sm:$0xff]
          %s3726 = sadd.s32 %s2682, 4
          %s3727 = smul.u32 %s3726, 16
          %s3728 = smul.addr %s3727, 4
          %s3729 = scalar_lea.vmem [#allocation3], %s3728
          %v3730 = vld [vmem:[%s3729] sm:$0xf]
          %v3731 = vld [vmem:[%s3729 + $0x4] sm:$0xf]
          %v3732 = vld [vmem:[%s3729 + $0x8] sm:$0xf]
          %v3733 = vld [vmem:[%s3729 + $0xc] sm:$0xf]
          %v3734 = vld [vmem:[%s3729 + $0x10] sm:$0xf]
          %v3735 = vld [vmem:[%s3729 + $0x14] sm:$0xf]
          %v3736 = vld [vmem:[%s3729 + $0x18] sm:$0xf]
          %v3737 = vld [vmem:[%s3729 + $0x1c] sm:$0xf]
          %v3738 = vld [vmem:[%s3729 + $0x20] sm:$0xf]
          %v3739 = vld [vmem:[%s3729 + $0x24] sm:$0xf]
          %v3740 = vld [vmem:[%s3729 + $0x28] sm:$0xf]
          %v3741 = vld [vmem:[%s3729 + $0x2c] sm:$0xf]
          %v3742 = vld [vmem:[%s3729 + $0x30] sm:$0xf]
          %v3743 = vld [vmem:[%s3729 + $0x34] sm:$0xf]
          %v3744 = vld [vmem:[%s3729 + $0x38] sm:$0xf]
          %v3745 = vld [vmem:[%s3729 + $0x3c] sm:$0xf]
          %v3762 = vunpack.c.l.b16 %v3730
          %v3763 = vunpack.c.l.b16 %v3731
          %v3764 = vunpack.c.l.b16 %v3732
          %v3765 = vunpack.c.l.b16 %v3733
          %v3766 = vunpack.c.l.b16 %v3734
          %v3767 = vunpack.c.l.b16 %v3735
          %v3768 = vunpack.c.l.b16 %v3736
          %v3769 = vunpack.c.l.b16 %v3737
          %v3770 = vunpack.c.l.b16 %v3738
          %v3771 = vunpack.c.l.b16 %v3739
          %v3772 = vunpack.c.l.b16 %v3740
          %v3773 = vunpack.c.l.b16 %v3741
          %v3774 = vunpack.c.l.b16 %v3742
          %v3775 = vunpack.c.l.b16 %v3743
          %v3776 = vunpack.c.l.b16 %v3744
          %v3777 = vunpack.c.l.b16 %v3745
          %v3778 = vpack.c.b16 %v3763, %v3762
          %v3779 = vpack.c.b16 %v3765, %v3764
          %v3780 = vpack.c.b16 %v3767, %v3766
          %v3781 = vpack.c.b16 %v3769, %v3768
          %v3782 = vpack.c.b16 %v3771, %v3770
          %v3783 = vpack.c.b16 %v3773, %v3772
          %v3784 = vpack.c.b16 %v3775, %v3774
          %v3785 = vpack.c.b16 %v3777, %v3776
          %3794 = vmatprep.subr.bf16.mxu0 0
          %3795 = vmatpush1.bf16.msra.mxu0 %v3778
          %3796 = vmatprep.subr.bf16.mxu0 0
          %3797 = vmatpush1.bf16.msra.mxu0 %v3779
          %3798 = vmatprep.subr.bf16.mxu0 0
          %3799 = vmatpush1.bf16.msra.mxu0 %v3780
          %3800 = vmatprep.subr.bf16.mxu0 0
          %3801 = vmatpush1.bf16.msra.mxu0 %v3781
          %3802 = vmatprep.subr.bf16.mxu0 0
          %3803 = vmatpush1.bf16.msra.mxu0 %v3782
          %3804 = vmatprep.subr.bf16.mxu0 0
          %3805 = vmatpush1.bf16.msra.mxu0 %v3783
          %3806 = vmatprep.subr.bf16.mxu0 0
          %3807 = vmatpush1.bf16.msra.mxu0 %v3784
          %3808 = vmatprep.subr.bf16.mxu0 0
          %3809 = vmatpush1.bf16.msra.mxu0 %v3785
          %3810 = vmatprep.subr.bf16.mxu0 0
          %3811 = vmatpush1.bf16.msra.mxu0 0
          %3812 = vmatprep.subr.bf16.mxu0 0
          %3813 = vmatpush1.bf16.msra.mxu0 0
          %3814 = vmatprep.subr.bf16.mxu0 0
          %3815 = vmatpush1.bf16.msra.mxu0 0
          %3816 = vmatprep.subr.bf16.mxu0 0
          %3817 = vmatpush1.bf16.msra.mxu0 0
          %3818 = vmatprep.subr.bf16.mxu0 0
          %3819 = vmatpush1.bf16.msra.mxu0 0
          %3820 = vmatprep.subr.bf16.mxu0 0
          %3821 = vmatpush1.bf16.msra.mxu0 0
          %3822 = vmatprep.subr.bf16.mxu0 0
          %3823 = vmatpush1.bf16.msra.mxu0 0
          %3824 = vmatprep.subr.bf16.mxu0 0
          %3825 = vmatpush1.bf16.msra.mxu0 0
          %3826 = vmatprep.mubr.bf16.mxu0 0
          %3827 = vmatmul.mubr.bf16.gmra.mrb[0].mxu0 %v3710
          %v3828 = vpop.f32.mrb[0].mxu0
          %v3829 = vadd.f32 0.0, %v3828
          %v3830 = vpop.f32.mrb[0].mxu0
          %v3831 = vpop.f32.mrb[0].mxu0
          %v3832 = vadd.f32 0.0, %v3831
          %v3833 = vpop.f32.mrb[0].mxu0
          %3834 = vmatprep.mubr.bf16.mxu0 0
          %3835 = vmatmul.mubr.bf16.gmra.mrb[0].mxu0 %v3711
          %v3836 = vpop.f32.mrb[0].mxu0
          %v3837 = vadd.f32 0.0, %v3836
          %v3838 = vpop.f32.mrb[0].mxu0
          %v3839 = vpop.f32.mrb[0].mxu0
          %v3840 = vadd.f32 0.0, %v3839
          %v3841 = vpop.f32.mrb[0].mxu0
          %3842 = vmatprep.mubr.bf16.mxu0 0
          %3843 = vmatmul.mubr.bf16.gmra.mrb[0].mxu0 %v3712
          %v3844 = vpop.f32.mrb[0].mxu0
          %v3845 = vadd.f32 0.0, %v3844
          %v3846 = vpop.f32.mrb[0].mxu0
          %v3847 = vpop.f32.mrb[0].mxu0
          %v3848 = vadd.f32 0.0, %v3847
          %v3849 = vpop.f32.mrb[0].mxu0
          %3850 = vmatprep.mubr.bf16.mxu0 0
          %3851 = vmatmul.mubr.bf16.gmra.mrb[0].mxu0 %v3713
          %v3852 = vpop.f32.mrb[0].mxu0
          %v3853 = vadd.f32 0.0, %v3852
          %v3854 = vpop.f32.mrb[0].mxu0
          %v3855 = vpop.f32.mrb[0].mxu0
          %v3856 = vadd.f32 0.0, %v3855
          %v3857 = vpop.f32.mrb[0].mxu0
          %3858 = vmatprep.mubr.bf16.mxu0 0
          %3859 = vmatmul.mubr.bf16.gmra.mrb[0].mxu0 %v3714
          %v3860 = vpop.f32.mrb[0].mxu0
          %v3861 = vadd.f32 0.0, %v3860
          %v3862 = vpop.f32.mrb[0].mxu0
          %v3863 = vpop.f32.mrb[0].mxu0
          %v3864 = vadd.f32 0.0, %v3863
          %v3865 = vpop.f32.mrb[0].mxu0
          %3866 = vmatprep.mubr.bf16.mxu0 0
          %3867 = vmatmul.mubr.bf16.gmra.mrb[0].mxu0 %v3715
          %v3868 = vpop.f32.mrb[0].mxu0
          %v3869 = vadd.f32 0.0, %v3868
          %v3870 = vpop.f32.mrb[0].mxu0
          %v3871 = vpop.f32.mrb[0].mxu0
          %v3872 = vadd.f32 0.0, %v3871
          %v3873 = vpop.f32.mrb[0].mxu0
          %3874 = vmatprep.mubr.bf16.mxu0 0
          %3875 = vmatmul.mubr.bf16.gmra.mrb[0].mxu0 %v3716
          %v3876 = vpop.f32.mrb[0].mxu0
          %v3877 = vadd.f32 0.0, %v3876
          %v3878 = vpop.f32.mrb[0].mxu0
          %v3879 = vpop.f32.mrb[0].mxu0
          %v3880 = vadd.f32 0.0, %v3879
          %v3881 = vpop.f32.mrb[0].mxu0
          %3882 = vmatprep.mubr.bf16.mxu0 0
          %3883 = vmatmul.mubr.bf16.gmra.mrb[0].mxu0 %v3717
          %v3884 = vpop.f32.mrb[0].mxu0
          %v3885 = vadd.f32 0.0, %v3884
          %v3886 = vpop.f32.mrb[0].mxu0
          %v3887 = vpop.f32.mrb[0].mxu0
          %v3888 = vadd.f32 0.0, %v3887
          %v3889 = vpop.f32.mrb[0].mxu0
          %3890 = vmatprep.mubr.bf16.mxu0 0
          %3891 = vmatmul.mubr.bf16.gmra.mrb[0].mxu0 %v3718
          %v3892 = vpop.f32.mrb[0].mxu0
          %v3893 = vadd.f32 0.0, %v3892
          %v3894 = vpop.f32.mrb[0].mxu0
          %v3895 = vpop.f32.mrb[0].mxu0
          %v3896 = vadd.f32 0.0, %v3895
          %v3897 = vpop.f32.mrb[0].mxu0
          %3898 = vmatprep.mubr.bf16.mxu0 0
          %3899 = vmatmul.mubr.bf16.gmra.mrb[0].mxu0 %v3719
          %v3900 = vpop.f32.mrb[0].mxu0
          %v3901 = vadd.f32 0.0, %v3900
          %v3902 = vpop.f32.mrb[0].mxu0
          %v3903 = vpop.f32.mrb[0].mxu0
          %v3904 = vadd.f32 0.0, %v3903
          %v3905 = vpop.f32.mrb[0].mxu0
          %3906 = vmatprep.mubr.bf16.mxu0 0
          %3907 = vmatmul.mubr.bf16.gmra.mrb[0].mxu0 %v3720
          %v3908 = vpop.f32.mrb[0].mxu0
          %v3909 = vadd.f32 0.0, %v3908
          %v3910 = vpop.f32.mrb[0].mxu0
          %v3911 = vpop.f32.mrb[0].mxu0
          %v3912 = vadd.f32 0.0, %v3911
          %v3913 = vpop.f32.mrb[0].mxu0
          %3914 = vmatprep.mubr.bf16.mxu0 0
          %3915 = vmatmul.mubr.bf16.gmra.mrb[0].mxu0 %v3721
          %v3916 = vpop.f32.mrb[0].mxu0
          %v3917 = vadd.f32 0.0, %v3916
          %v3918 = vpop.f32.mrb[0].mxu0
          %v3919 = vpop.f32.mrb[0].mxu0
          %v3920 = vadd.f32 0.0, %v3919
          %v3921 = vpop.f32.mrb[0].mxu0
          %3922 = vmatprep.mubr.bf16.mxu0 0
          %3923 = vmatmul.mubr.bf16.gmra.mrb[0].mxu0 %v3722
          %v3924 = vpop.f32.mrb[0].mxu0
          %v3925 = vadd.f32 0.0, %v3924
          %v3926 = vpop.f32.mrb[0].mxu0
          %v3927 = vpop.f32.mrb[0].mxu0
          %v3928 = vadd.f32 0.0, %v3927
          %v3929 = vpop.f32.mrb[0].mxu0
          %3930 = vmatprep.mubr.bf16.mxu0 0
          %3931 = vmatmul.mubr.bf16.gmra.mrb[0].mxu0 %v3723
          %v3932 = vpop.f32.mrb[0].mxu0
          %v3933 = vadd.f32 0.0, %v3932
          %v3934 = vpop.f32.mrb[0].mxu0
          %v3935 = vpop.f32.mrb[0].mxu0
          %v3936 = vadd.f32 0.0, %v3935
          %v3937 = vpop.f32.mrb[0].mxu0
          %3938 = vmatprep.mubr.bf16.mxu0 0
          %3939 = vmatmul.mubr.bf16.gmra.mrb[0].mxu0 %v3724
          %v3940 = vpop.f32.mrb[0].mxu0
          %v3941 = vadd.f32 0.0, %v3940
          %v3942 = vpop.f32.mrb[0].mxu0
          %v3943 = vpop.f32.mrb[0].mxu0
          %v3944 = vadd.f32 0.0, %v3943
          %v3945 = vpop.f32.mrb[0].mxu0
          %3946 = vmatprep.mubr.bf16.mxu0 0
          %3947 = vmatmul.mubr.bf16.gmra.mrb[0].mxu0 %v3725
          %v3948 = vpop.f32.mrb[0].mxu0
          %v3949 = vadd.f32 0.0, %v3948
          %v3950 = vpop.f32.mrb[0].mxu0
          %v3951 = vpop.f32.mrb[0].mxu0
          %v3952 = vadd.f32 0.0, %v3951
          %v3953 = vpop.f32.mrb[0].mxu0
          %3954 = vdwg.mxu0
          %v3955 = vadd.f32 %v3678, %v3829
          %v3956 = vadd.f32 %v3679, %v3832
          %v3957 = vadd.f32 %v3680, %v3837
          %v3958 = vadd.f32 %v3681, %v3840
          %v3959 = vadd.f32 %v3682, %v3845
          %v3960 = vadd.f32 %v3683, %v3848
          %v3961 = vadd.f32 %v3684, %v3853
          %v3962 = vadd.f32 %v3685, %v3856
          %v3963 = vadd.f32 %v3686, %v3861
          %v3964 = vadd.f32 %v3687, %v3864
          %v3965 = vadd.f32 %v3688, %v3869
          %v3966 = vadd.f32 %v3689, %v3872
          %v3967 = vadd.f32 %v3690, %v3877
          %v3968 = vadd.f32 %v3691, %v3880
          %v3969 = vadd.f32 %v3692, %v3885
          %v3970 = vadd.f32 %v3693, %v3888
          %v3971 = vadd.f32 %v3694, %v3893
          %v3972 = vadd.f32 %v3695, %v3896
          %v3973 = vadd.f32 %v3696, %v3901
          %v3974 = vadd.f32 %v3697, %v3904
          %v3975 = vadd.f32 %v3698, %v3909
          %v3976 = vadd.f32 %v3699, %v3912
          %v3977 = vadd.f32 %v3700, %v3917
          %v3978 = vadd.f32 %v3701, %v3920
          %v3979 = vadd.f32 %v3702, %v3925
          %v3980 = vadd.f32 %v3703, %v3928
          %v3981 = vadd.f32 %v3704, %v3933
          %v3982 = vadd.f32 %v3705, %v3936
          %v3983 = vadd.f32 %v3706, %v3941
          %v3984 = vadd.f32 %v3707, %v3944
          %v3985 = vadd.f32 %v3708, %v3949
          %v3986 = vadd.f32 %v3709, %v3952
          %v3987 = vld [vmem:[%s2455 + $0x8] sm:$0xff]
          %v3988 = vld [vmem:[%s2455 + $0x10] sm:$0xff]
          %v3989 = vld [vmem:[%s2455 + $0x18] sm:$0xff]
          %v3990 = vld [vmem:[%s2455 + $0x20] sm:$0xff]
          %v3991 = vld [vmem:[%s2455 + $0x28] sm:$0xff]
          %v3992 = vld [vmem:[%s2455 + $0x30] sm:$0xff]
          %v3993 = vld [vmem:[%s2455 + $0x38] sm:$0xff]
          %v3994 = vld [vmem:[%s2455 + $0x40] sm:$0xff]
          %v3995 = vld [vmem:[%s2455 + $0x48] sm:$0xff]
          %v3996 = vld [vmem:[%s2455 + $0x50] sm:$0xff]
          %v3997 = vld [vmem:[%s2455 + $0x58] sm:$0xff]
          %v3998 = vld [vmem:[%s2455 + $0x60] sm:$0xff]
          %v3999 = vld [vmem:[%s2455 + $0x68] sm:$0xff]
          %v4000 = vld [vmem:[%s2455 + $0x70] sm:$0xff]
          %v4001 = vld [vmem:[%s2455 + $0x78] sm:$0xff]
          %v4002 = vld [vmem:[%s2455 + $0x80] sm:$0xff]
          %s4003 = sadd.s32 %s2682, 5
          %s4004 = smul.u32 %s4003, 16
          %s4005 = smul.addr %s4004, 4
          %s4006 = scalar_lea.vmem [#allocation3], %s4005
          %v4007 = vld [vmem:[%s4006] sm:$0xf]
          %v4008 = vld [vmem:[%s4006 + $0x4] sm:$0xf]
          %v4009 = vld [vmem:[%s4006 + $0x8] sm:$0xf]
          %v4010 = vld [vmem:[%s4006 + $0xc] sm:$0xf]
          %v4011 = vld [vmem:[%s4006 + $0x10] sm:$0xf]
          %v4012 = vld [vmem:[%s4006 + $0x14] sm:$0xf]
          %v4013 = vld [vmem:[%s4006 + $0x18] sm:$0xf]
          %v4014 = vld [vmem:[%s4006 + $0x1c] sm:$0xf]
          %v4015 = vld [vmem:[%s4006 + $0x20] sm:$0xf]
          %v4016 = vld [vmem:[%s4006 + $0x24] sm:$0xf]
          %v4017 = vld [vmem:[%s4006 + $0x28] sm:$0xf]
          %v4018 = vld [vmem:[%s4006 + $0x2c] sm:$0xf]
          %v4019 = vld [vmem:[%s4006 + $0x30] sm:$0xf]
          %v4020 = vld [vmem:[%s4006 + $0x34] sm:$0xf]
          %v4021 = vld [vmem:[%s4006 + $0x38] sm:$0xf]
          %v4022 = vld [vmem:[%s4006 + $0x3c] sm:$0xf]
          %v4039 = vunpack.c.l.b16 %v4007
          %v4040 = vunpack.c.l.b16 %v4008
          %v4041 = vunpack.c.l.b16 %v4009
          %v4042 = vunpack.c.l.b16 %v4010
          %v4043 = vunpack.c.l.b16 %v4011
          %v4044 = vunpack.c.l.b16 %v4012
          %v4045 = vunpack.c.l.b16 %v4013
          %v4046 = vunpack.c.l.b16 %v4014
          %v4047 = vunpack.c.l.b16 %v4015
          %v4048 = vunpack.c.l.b16 %v4016
          %v4049 = vunpack.c.l.b16 %v4017
          %v4050 = vunpack.c.l.b16 %v4018
          %v4051 = vunpack.c.l.b16 %v4019
          %v4052 = vunpack.c.l.b16 %v4020
          %v4053 = vunpack.c.l.b16 %v4021
          %v4054 = vunpack.c.l.b16 %v4022
          %v4055 = vpack.c.b16 %v4040, %v4039
          %v4056 = vpack.c.b16 %v4042, %v4041
          %v4057 = vpack.c.b16 %v4044, %v4043
          %v4058 = vpack.c.b16 %v4046, %v4045
          %v4059 = vpack.c.b16 %v4048, %v4047
          %v4060 = vpack.c.b16 %v4050, %v4049
          %v4061 = vpack.c.b16 %v4052, %v4051
          %v4062 = vpack.c.b16 %v4054, %v4053
          %4071 = vmatprep.subr.bf16.mxu0 0
          %4072 = vmatpush1.bf16.msra.mxu0 %v4055
          %4073 = vmatprep.subr.bf16.mxu0 0
          %4074 = vmatpush1.bf16.msra.mxu0 %v4056
          %4075 = vmatprep.subr.bf16.mxu0 0
          %4076 = vmatpush1.bf16.msra.mxu0 %v4057
          %4077 = vmatprep.subr.bf16.mxu0 0
          %4078 = vmatpush1.bf16.msra.mxu0 %v4058
          %4079 = vmatprep.subr.bf16.mxu0 0
          %4080 = vmatpush1.bf16.msra.mxu0 %v4059
          %4081 = vmatprep.subr.bf16.mxu0 0
          %4082 = vmatpush1.bf16.msra.mxu0 %v4060
          %4083 = vmatprep.subr.bf16.mxu0 0
          %4084 = vmatpush1.bf16.msra.mxu0 %v4061
          %4085 = vmatprep.subr.bf16.mxu0 0
          %4086 = vmatpush1.bf16.msra.mxu0 %v4062
          %4087 = vmatprep.subr.bf16.mxu0 0
          %4088 = vmatpush1.bf16.msra.mxu0 0
          %4089 = vmatprep.subr.bf16.mxu0 0
          %4090 = vmatpush1.bf16.msra.mxu0 0
          %4091 = vmatprep.subr.bf16.mxu0 0
          %4092 = vmatpush1.bf16.msra.mxu0 0
          %4093 = vmatprep.subr.bf16.mxu0 0
          %4094 = vmatpush1.bf16.msra.mxu0 0
          %4095 = vmatprep.subr.bf16.mxu0 0
          %4096 = vmatpush1.bf16.msra.mxu0 0
          %4097 = vmatprep.subr.bf16.mxu0 0
          %4098 = vmatpush1.bf16.msra.mxu0 0
          %4099 = vmatprep.subr.bf16.mxu0 0
          %4100 = vmatpush1.bf16.msra.mxu0 0
          %4101 = vmatprep.subr.bf16.mxu0 0
          %4102 = vmatpush1.bf16.msra.mxu0 0
          %4103 = vmatprep.mubr.bf16.mxu0 0
          %4104 = vmatmul.mubr.bf16.gmra.mrb[0].mxu0 %v3987
          %v4105 = vpop.f32.mrb[0].mxu0
          %v4106 = vadd.f32 0.0, %v4105
          %v4107 = vpop.f32.mrb[0].mxu0
          %v4108 = vpop.f32.mrb[0].mxu0
          %v4109 = vadd.f32 0.0, %v4108
          %v4110 = vpop.f32.mrb[0].mxu0
          %4111 = vmatprep.mubr.bf16.mxu0 0
          %4112 = vmatmul.mubr.bf16.gmra.mrb[0].mxu0 %v3988
          %v4113 = vpop.f32.mrb[0].mxu0
          %v4114 = vadd.f32 0.0, %v4113
          %v4115 = vpop.f32.mrb[0].mxu0
          %v4116 = vpop.f32.mrb[0].mxu0
          %v4117 = vadd.f32 0.0, %v4116
          %v4118 = vpop.f32.mrb[0].mxu0
          %4119 = vmatprep.mubr.bf16.mxu0 0
          %4120 = vmatmul.mubr.bf16.gmra.mrb[0].mxu0 %v3989
          %v4121 = vpop.f32.mrb[0].mxu0
          %v4122 = vadd.f32 0.0, %v4121
          %v4123 = vpop.f32.mrb[0].mxu0
          %v4124 = vpop.f32.mrb[0].mxu0
          %v4125 = vadd.f32 0.0, %v4124
          %v4126 = vpop.f32.mrb[0].mxu0
          %4127 = vmatprep.mubr.bf16.mxu0 0
          %4128 = vmatmul.mubr.bf16.gmra.mrb[0].mxu0 %v3990
          %v4129 = vpop.f32.mrb[0].mxu0
          %v4130 = vadd.f32 0.0, %v4129
          %v4131 = vpop.f32.mrb[0].mxu0
          %v4132 = vpop.f32.mrb[0].mxu0
          %v4133 = vadd.f32 0.0, %v4132
          %v4134 = vpop.f32.mrb[0].mxu0
          %4135 = vmatprep.mubr.bf16.mxu0 0
          %4136 = vmatmul.mubr.bf16.gmra.mrb[0].mxu0 %v3991
          %v4137 = vpop.f32.mrb[0].mxu0
          %v4138 = vadd.f32 0.0, %v4137
          %v4139 = vpop.f32.mrb[0].mxu0
          %v4140 = vpop.f32.mrb[0].mxu0
          %v4141 = vadd.f32 0.0, %v4140
          %v4142 = vpop.f32.mrb[0].mxu0
          %4143 = vmatprep.mubr.bf16.mxu0 0
          %4144 = vmatmul.mubr.bf16.gmra.mrb[0].mxu0 %v3992
          %v4145 = vpop.f32.mrb[0].mxu0
          %v4146 = vadd.f32 0.0, %v4145
          %v4147 = vpop.f32.mrb[0].mxu0
          %v4148 = vpop.f32.mrb[0].mxu0
          %v4149 = vadd.f32 0.0, %v4148
          %v4150 = vpop.f32.mrb[0].mxu0
          %4151 = vmatprep.mubr.bf16.mxu0 0
          %4152 = vmatmul.mubr.bf16.gmra.mrb[0].mxu0 %v3993
          %v4153 = vpop.f32.mrb[0].mxu0
          %v4154 = vadd.f32 0.0, %v4153
          %v4155 = vpop.f32.mrb[0].mxu0
          %v4156 = vpop.f32.mrb[0].mxu0
          %v4157 = vadd.f32 0.0, %v4156
          %v4158 = vpop.f32.mrb[0].mxu0
          %4159 = vmatprep.mubr.bf16.mxu0 0
          %4160 = vmatmul.mubr.bf16.gmra.mrb[0].mxu0 %v3994
          %v4161 = vpop.f32.mrb[0].mxu0
          %v4162 = vadd.f32 0.0, %v4161
          %v4163 = vpop.f32.mrb[0].mxu0
          %v4164 = vpop.f32.mrb[0].mxu0
          %v4165 = vadd.f32 0.0, %v4164
          %v4166 = vpop.f32.mrb[0].mxu0
          %4167 = vmatprep.mubr.bf16.mxu0 0
          %4168 = vmatmul.mubr.bf16.gmra.mrb[0].mxu0 %v3995
          %v4169 = vpop.f32.mrb[0].mxu0
          %v4170 = vadd.f32 0.0, %v4169
          %v4171 = vpop.f32.mrb[0].mxu0
          %v4172 = vpop.f32.mrb[0].mxu0
          %v4173 = vadd.f32 0.0, %v4172
          %v4174 = vpop.f32.mrb[0].mxu0
          %4175 = vmatprep.mubr.bf16.mxu0 0
          %4176 = vmatmul.mubr.bf16.gmra.mrb[0].mxu0 %v3996
          %v4177 = vpop.f32.mrb[0].mxu0
          %v4178 = vadd.f32 0.0, %v4177
          %v4179 = vpop.f32.mrb[0].mxu0
          %v4180 = vpop.f32.mrb[0].mxu0
          %v4181 = vadd.f32 0.0, %v4180
          %v4182 = vpop.f32.mrb[0].mxu0
          %4183 = vmatprep.mubr.bf16.mxu0 0
          %4184 = vmatmul.mubr.bf16.gmra.mrb[0].mxu0 %v3997
          %v4185 = vpop.f32.mrb[0].mxu0
          %v4186 = vadd.f32 0.0, %v4185
          %v4187 = vpop.f32.mrb[0].mxu0
          %v4188 = vpop.f32.mrb[0].mxu0
          %v4189 = vadd.f32 0.0, %v4188
          %v4190 = vpop.f32.mrb[0].mxu0
          %4191 = vmatprep.mubr.bf16.mxu0 0
          %4192 = vmatmul.mubr.bf16.gmra.mrb[0].mxu0 %v3998
          %v4193 = vpop.f32.mrb[0].mxu0
          %v4194 = vadd.f32 0.0, %v4193
          %v4195 = vpop.f32.mrb[0].mxu0
          %v4196 = vpop.f32.mrb[0].mxu0
          %v4197 = vadd.f32 0.0, %v4196
          %v4198 = vpop.f32.mrb[0].mxu0
          %4199 = vmatprep.mubr.bf16.mxu0 0
          %4200 = vmatmul.mubr.bf16.gmra.mrb[0].mxu0 %v3999
          %v4201 = vpop.f32.mrb[0].mxu0
          %v4202 = vadd.f32 0.0, %v4201
          %v4203 = vpop.f32.mrb[0].mxu0
          %v4204 = vpop.f32.mrb[0].mxu0
          %v4205 = vadd.f32 0.0, %v4204
          %v4206 = vpop.f32.mrb[0].mxu0
          %4207 = vmatprep.mubr.bf16.mxu0 0
          %4208 = vmatmul.mubr.bf16.gmra.mrb[0].mxu0 %v4000
          %v4209 = vpop.f32.mrb[0].mxu0
          %v4210 = vadd.f32 0.0, %v4209
          %v4211 = vpop.f32.mrb[0].mxu0
          %v4212 = vpop.f32.mrb[0].mxu0
          %v4213 = vadd.f32 0.0, %v4212
          %v4214 = vpop.f32.mrb[0].mxu0
          %4215 = vmatprep.mubr.bf16.mxu0 0
          %4216 = vmatmul.mubr.bf16.gmra.mrb[0].mxu0 %v4001
          %v4217 = vpop.f32.mrb[0].mxu0
          %v4218 = vadd.f32 0.0, %v4217
          %v4219 = vpop.f32.mrb[0].mxu0
          %v4220 = vpop.f32.mrb[0].mxu0
          %v4221 = vadd.f32 0.0, %v4220
          %v4222 = vpop.f32.mrb[0].mxu0
          %4223 = vmatprep.mubr.bf16.mxu0 0
          %4224 = vmatmul.mubr.bf16.gmra.mrb[0].mxu0 %v4002
          %v4225 = vpop.f32.mrb[0].mxu0
          %v4226 = vadd.f32 0.0, %v4225
          %v4227 = vpop.f32.mrb[0].mxu0
          %v4228 = vpop.f32.mrb[0].mxu0
          %v4229 = vadd.f32 0.0, %v4228
          %v4230 = vpop.f32.mrb[0].mxu0
          %4231 = vdwg.mxu0
          %v4232 = vadd.f32 %v3955, %v4106
          %v4233 = vadd.f32 %v3956, %v4109
          %v4234 = vadd.f32 %v3957, %v4114
          %v4235 = vadd.f32 %v3958, %v4117
          %v4236 = vadd.f32 %v3959, %v4122
          %v4237 = vadd.f32 %v3960, %v4125
          %v4238 = vadd.f32 %v3961, %v4130
          %v4239 = vadd.f32 %v3962, %v4133
          %v4240 = vadd.f32 %v3963, %v4138
          %v4241 = vadd.f32 %v3964, %v4141
          %v4242 = vadd.f32 %v3965, %v4146
          %v4243 = vadd.f32 %v3966, %v4149
          %v4244 = vadd.f32 %v3967, %v4154
          %v4245 = vadd.f32 %v3968, %v4157
          %v4246 = vadd.f32 %v3969, %v4162
          %v4247 = vadd.f32 %v3970, %v4165
          %v4248 = vadd.f32 %v3971, %v4170
          %v4249 = vadd.f32 %v3972, %v4173
          %v4250 = vadd.f32 %v3973, %v4178
          %v4251 = vadd.f32 %v3974, %v4181
          %v4252 = vadd.f32 %v3975, %v4186
          %v4253 = vadd.f32 %v3976, %v4189
          %v4254 = vadd.f32 %v3977, %v4194
          %v4255 = vadd.f32 %v3978, %v4197
          %v4256 = vadd.f32 %v3979, %v4202
          %v4257 = vadd.f32 %v3980, %v4205
          %v4258 = vadd.f32 %v3981, %v4210
          %v4259 = vadd.f32 %v3982, %v4213
          %v4260 = vadd.f32 %v3983, %v4218
          %v4261 = vadd.f32 %v3984, %v4221
          %v4262 = vadd.f32 %v3985, %v4226
          %v4263 = vadd.f32 %v3986, %v4229
          %v4264 = vld [vmem:[%s2649 + $0x10] sm:$0xff]
          %v4265 = vld [vmem:[%s2649 + $0x18] sm:$0xff]
          %v4266 = vld [vmem:[%s2649 + $0x20] sm:$0xff]
          %v4267 = vld [vmem:[%s2649 + $0x28] sm:$0xff]
          %v4268 = vld [vmem:[%s2649 + $0x30] sm:$0xff]
          %v4269 = vld [vmem:[%s2649 + $0x38] sm:$0xff]
          %v4270 = vld [vmem:[%s2649 + $0x40] sm:$0xff]
          %v4271 = vld [vmem:[%s2649 + $0x48] sm:$0xff]
          %v4272 = vld [vmem:[%s2649 + $0x50] sm:$0xff]
          %v4273 = vld [vmem:[%s2649 + $0x58] sm:$0xff]
          %v4274 = vld [vmem:[%s2649 + $0x60] sm:$0xff]
          %v4275 = vld [vmem:[%s2649 + $0x68] sm:$0xff]
          %v4276 = vld [vmem:[%s2649 + $0x70] sm:$0xff]
          %v4277 = vld [vmem:[%s2649 + $0x78] sm:$0xff]
          %v4278 = vld [vmem:[%s2649 + $0x80] sm:$0xff]
          %v4279 = vld [vmem:[%s2649 + $0x88] sm:$0xff]
          %s4280 = sadd.s32 %s2682, 6
          %s4281 = smul.u32 %s4280, 16
          %s4282 = smul.addr %s4281, 4
          %s4283 = scalar_lea.vmem [#allocation3], %s4282
          %v4284 = vld [vmem:[%s4283] sm:$0xf]
          %v4285 = vld [vmem:[%s4283 + $0x4] sm:$0xf]
          %v4286 = vld [vmem:[%s4283 + $0x8] sm:$0xf]
          %v4287 = vld [vmem:[%s4283 + $0xc] sm:$0xf]
          %v4288 = vld [vmem:[%s4283 + $0x10] sm:$0xf]
          %v4289 = vld [vmem:[%s4283 + $0x14] sm:$0xf]
          %v4290 = vld [vmem:[%s4283 + $0x18] sm:$0xf]
          %v4291 = vld [vmem:[%s4283 + $0x1c] sm:$0xf]
          %v4292 = vld [vmem:[%s4283 + $0x20] sm:$0xf]
          %v4293 = vld [vmem:[%s4283 + $0x24] sm:$0xf]
          %v4294 = vld [vmem:[%s4283 + $0x28] sm:$0xf]
          %v4295 = vld [vmem:[%s4283 + $0x2c] sm:$0xf]
          %v4296 = vld [vmem:[%s4283 + $0x30] sm:$0xf]
          %v4297 = vld [vmem:[%s4283 + $0x34] sm:$0xf]
          %v4298 = vld [vmem:[%s4283 + $0x38] sm:$0xf]
          %v4299 = vld [vmem:[%s4283 + $0x3c] sm:$0xf]
          %v4316 = vunpack.c.l.b16 %v4284
          %v4317 = vunpack.c.l.b16 %v4285
          %v4318 = vunpack.c.l.b16 %v4286
          %v4319 = vunpack.c.l.b16 %v4287
          %v4320 = vunpack.c.l.b16 %v4288
          %v4321 = vunpack.c.l.b16 %v4289
          %v4322 = vunpack.c.l.b16 %v4290
          %v4323 = vunpack.c.l.b16 %v4291
          %v4324 = vunpack.c.l.b16 %v4292
          %v4325 = vunpack.c.l.b16 %v4293
          %v4326 = vunpack.c.l.b16 %v4294
          %v4327 = vunpack.c.l.b16 %v4295
          %v4328 = vunpack.c.l.b16 %v4296
          %v4329 = vunpack.c.l.b16 %v4297
          %v4330 = vunpack.c.l.b16 %v4298
          %v4331 = vunpack.c.l.b16 %v4299
          %v4332 = vpack.c.b16 %v4317, %v4316
          %v4333 = vpack.c.b16 %v4319, %v4318
          %v4334 = vpack.c.b16 %v4321, %v4320
          %v4335 = vpack.c.b16 %v4323, %v4322
          %v4336 = vpack.c.b16 %v4325, %v4324
          %v4337 = vpack.c.b16 %v4327, %v4326
          %v4338 = vpack.c.b16 %v4329, %v4328
          %v4339 = vpack.c.b16 %v4331, %v4330
          %4348 = vmatprep.subr.bf16.mxu0 0
          %4349 = vmatpush1.bf16.msra.mxu0 %v4332
          %4350 = vmatprep.subr.bf16.mxu0 0
          %4351 = vmatpush1.bf16.msra.mxu0 %v4333
          %4352 = vmatprep.subr.bf16.mxu0 0
          %4353 = vmatpush1.bf16.msra.mxu0 %v4334
          %4354 = vmatprep.subr.bf16.mxu0 0
          %4355 = vmatpush1.bf16.msra.mxu0 %v4335
          %4356 = vmatprep.subr.bf16.mxu0 0
          %4357 = vmatpush1.bf16.msra.mxu0 %v4336
          %4358 = vmatprep.subr.bf16.mxu0 0
          %4359 = vmatpush1.bf16.msra.mxu0 %v4337
          %4360 = vmatprep.subr.bf16.mxu0 0
          %4361 = vmatpush1.bf16.msra.mxu0 %v4338
          %4362 = vmatprep.subr.bf16.mxu0 0
          %4363 = vmatpush1.bf16.msra.mxu0 %v4339
          %4364 = vmatprep.subr.bf16.mxu0 0
          %4365 = vmatpush1.bf16.msra.mxu0 0
          %4366 = vmatprep.subr.bf16.mxu0 0
          %4367 = vmatpush1.bf16.msra.mxu0 0
          %4368 = vmatprep.subr.bf16.mxu0 0
          %4369 = vmatpush1.bf16.msra.mxu0 0
          %4370 = vmatprep.subr.bf16.mxu0 0
          %4371 = vmatpush1.bf16.msra.mxu0 0
          %4372 = vmatprep.subr.bf16.mxu0 0
          %4373 = vmatpush1.bf16.msra.mxu0 0
          %4374 = vmatprep.subr.bf16.mxu0 0
          %4375 = vmatpush1.bf16.msra.mxu0 0
          %4376 = vmatprep.subr.bf16.mxu0 0
          %4377 = vmatpush1.bf16.msra.mxu0 0
          %4378 = vmatprep.subr.bf16.mxu0 0
          %4379 = vmatpush1.bf16.msra.mxu0 0
          %4380 = vmatprep.mubr.bf16.mxu0 0
          %4381 = vmatmul.mubr.bf16.gmra.mrb[0].mxu0 %v4264
          %v4382 = vpop.f32.mrb[0].mxu0
          %v4383 = vadd.f32 0.0, %v4382
          %v4384 = vpop.f32.mrb[0].mxu0
          %v4385 = vpop.f32.mrb[0].mxu0
          %v4386 = vadd.f32 0.0, %v4385
          %v4387 = vpop.f32.mrb[0].mxu0
          %4388 = vmatprep.mubr.bf16.mxu0 0
          %4389 = vmatmul.mubr.bf16.gmra.mrb[0].mxu0 %v4265
          %v4390 = vpop.f32.mrb[0].mxu0
          %v4391 = vadd.f32 0.0, %v4390
          %v4392 = vpop.f32.mrb[0].mxu0
          %v4393 = vpop.f32.mrb[0].mxu0
          %v4394 = vadd.f32 0.0, %v4393
          %v4395 = vpop.f32.mrb[0].mxu0
          %4396 = vmatprep.mubr.bf16.mxu0 0
          %4397 = vmatmul.mubr.bf16.gmra.mrb[0].mxu0 %v4266
          %v4398 = vpop.f32.mrb[0].mxu0
          %v4399 = vadd.f32 0.0, %v4398
          %v4400 = vpop.f32.mrb[0].mxu0
          %v4401 = vpop.f32.mrb[0].mxu0
          %v4402 = vadd.f32 0.0, %v4401
          %v4403 = vpop.f32.mrb[0].mxu0
          %4404 = vmatprep.mubr.bf16.mxu0 0
          %4405 = vmatmul.mubr.bf16.gmra.mrb[0].mxu0 %v4267
          %v4406 = vpop.f32.mrb[0].mxu0
          %v4407 = vadd.f32 0.0, %v4406
          %v4408 = vpop.f32.mrb[0].mxu0
          %v4409 = vpop.f32.mrb[0].mxu0
          %v4410 = vadd.f32 0.0, %v4409
          %v4411 = vpop.f32.mrb[0].mxu0
          %4412 = vmatprep.mubr.bf16.mxu0 0
          %4413 = vmatmul.mubr.bf16.gmra.mrb[0].mxu0 %v4268
          %v4414 = vpop.f32.mrb[0].mxu0
          %v4415 = vadd.f32 0.0, %v4414
          %v4416 = vpop.f32.mrb[0].mxu0
          %v4417 = vpop.f32.mrb[0].mxu0
          %v4418 = vadd.f32 0.0, %v4417
          %v4419 = vpop.f32.mrb[0].mxu0
          %4420 = vmatprep.mubr.bf16.mxu0 0
          %4421 = vmatmul.mubr.bf16.gmra.mrb[0].mxu0 %v4269
          %v4422 = vpop.f32.mrb[0].mxu0
          %v4423 = vadd.f32 0.0, %v4422
          %v4424 = vpop.f32.mrb[0].mxu0
          %v4425 = vpop.f32.mrb[0].mxu0
          %v4426 = vadd.f32 0.0, %v4425
          %v4427 = vpop.f32.mrb[0].mxu0
          %4428 = vmatprep.mubr.bf16.mxu0 0
          %4429 = vmatmul.mubr.bf16.gmra.mrb[0].mxu0 %v4270
          %v4430 = vpop.f32.mrb[0].mxu0
          %v4431 = vadd.f32 0.0, %v4430
          %v4432 = vpop.f32.mrb[0].mxu0
          %v4433 = vpop.f32.mrb[0].mxu0
          %v4434 = vadd.f32 0.0, %v4433
          %v4435 = vpop.f32.mrb[0].mxu0
          %4436 = vmatprep.mubr.bf16.mxu0 0
          %4437 = vmatmul.mubr.bf16.gmra.mrb[0].mxu0 %v4271
          %v4438 = vpop.f32.mrb[0].mxu0
          %v4439 = vadd.f32 0.0, %v4438
          %v4440 = vpop.f32.mrb[0].mxu0
          %v4441 = vpop.f32.mrb[0].mxu0
          %v4442 = vadd.f32 0.0, %v4441
          %v4443 = vpop.f32.mrb[0].mxu0
          %4444 = vmatprep.mubr.bf16.mxu0 0
          %4445 = vmatmul.mubr.bf16.gmra.mrb[0].mxu0 %v4272
          %v4446 = vpop.f32.mrb[0].mxu0
          %v4447 = vadd.f32 0.0, %v4446
          %v4448 = vpop.f32.mrb[0].mxu0
          %v4449 = vpop.f32.mrb[0].mxu0
          %v4450 = vadd.f32 0.0, %v4449
          %v4451 = vpop.f32.mrb[0].mxu0
          %4452 = vmatprep.mubr.bf16.mxu0 0
          %4453 = vmatmul.mubr.bf16.gmra.mrb[0].mxu0 %v4273
          %v4454 = vpop.f32.mrb[0].mxu0
          %v4455 = vadd.f32 0.0, %v4454
          %v4456 = vpop.f32.mrb[0].mxu0
          %v4457 = vpop.f32.mrb[0].mxu0
          %v4458 = vadd.f32 0.0, %v4457
          %v4459 = vpop.f32.mrb[0].mxu0
          %4460 = vmatprep.mubr.bf16.mxu0 0
          %4461 = vmatmul.mubr.bf16.gmra.mrb[0].mxu0 %v4274
          %v4462 = vpop.f32.mrb[0].mxu0
          %v4463 = vadd.f32 0.0, %v4462
          %v4464 = vpop.f32.mrb[0].mxu0
          %v4465 = vpop.f32.mrb[0].mxu0
          %v4466 = vadd.f32 0.0, %v4465
          %v4467 = vpop.f32.mrb[0].mxu0
          %4468 = vmatprep.mubr.bf16.mxu0 0
          %4469 = vmatmul.mubr.bf16.gmra.mrb[0].mxu0 %v4275
          %v4470 = vpop.f32.mrb[0].mxu0
          %v4471 = vadd.f32 0.0, %v4470
          %v4472 = vpop.f32.mrb[0].mxu0
          %v4473 = vpop.f32.mrb[0].mxu0
          %v4474 = vadd.f32 0.0, %v4473
          %v4475 = vpop.f32.mrb[0].mxu0
          %4476 = vmatprep.mubr.bf16.mxu0 0
          %4477 = vmatmul.mubr.bf16.gmra.mrb[0].mxu0 %v4276
          %v4478 = vpop.f32.mrb[0].mxu0
          %v4479 = vadd.f32 0.0, %v4478
          %v4480 = vpop.f32.mrb[0].mxu0
          %v4481 = vpop.f32.mrb[0].mxu0
          %v4482 = vadd.f32 0.0, %v4481
          %v4483 = vpop.f32.mrb[0].mxu0
          %4484 = vmatprep.mubr.bf16.mxu0 0
          %4485 = vmatmul.mubr.bf16.gmra.mrb[0].mxu0 %v4277
          %v4486 = vpop.f32.mrb[0].mxu0
          %v4487 = vadd.f32 0.0, %v4486
          %v4488 = vpop.f32.mrb[0].mxu0
          %v4489 = vpop.f32.mrb[0].mxu0
          %v4490 = vadd.f32 0.0, %v4489
          %v4491 = vpop.f32.mrb[0].mxu0
          %4492 = vmatprep.mubr.bf16.mxu0 0
          %4493 = vmatmul.mubr.bf16.gmra.mrb[0].mxu0 %v4278
          %v4494 = vpop.f32.mrb[0].mxu0
          %v4495 = vadd.f32 0.0, %v4494
          %v4496 = vpop.f32.mrb[0].mxu0
          %v4497 = vpop.f32.mrb[0].mxu0
          %v4498 = vadd.f32 0.0, %v4497
          %v4499 = vpop.f32.mrb[0].mxu0
          %4500 = vmatprep.mubr.bf16.mxu0 0
          %4501 = vmatmul.mubr.bf16.gmra.mrb[0].mxu0 %v4279
          %v4502 = vpop.f32.mrb[0].mxu0
          %v4503 = vadd.f32 0.0, %v4502
          %v4504 = vpop.f32.mrb[0].mxu0
          %v4505 = vpop.f32.mrb[0].mxu0
          %v4506 = vadd.f32 0.0, %v4505
          %v4507 = vpop.f32.mrb[0].mxu0
          %4508 = vdwg.mxu0
          %v4509 = vadd.f32 %v4232, %v4383
          %v4510 = vadd.f32 %v4233, %v4386
          %v4511 = vadd.f32 %v4234, %v4391
          %v4512 = vadd.f32 %v4235, %v4394
          %v4513 = vadd.f32 %v4236, %v4399
          %v4514 = vadd.f32 %v4237, %v4402
          %v4515 = vadd.f32 %v4238, %v4407
          %v4516 = vadd.f32 %v4239, %v4410
          %v4517 = vadd.f32 %v4240, %v4415
          %v4518 = vadd.f32 %v4241, %v4418
          %v4519 = vadd.f32 %v4242, %v4423
          %v4520 = vadd.f32 %v4243, %v4426
          %v4521 = vadd.f32 %v4244, %v4431
          %v4522 = vadd.f32 %v4245, %v4434
          %v4523 = vadd.f32 %v4246, %v4439
          %v4524 = vadd.f32 %v4247, %v4442
          %v4525 = vadd.f32 %v4248, %v4447
          %v4526 = vadd.f32 %v4249, %v4450
          %v4527 = vadd.f32 %v4250, %v4455
          %v4528 = vadd.f32 %v4251, %v4458
          %v4529 = vadd.f32 %v4252, %v4463
          %v4530 = vadd.f32 %v4253, %v4466
          %v4531 = vadd.f32 %v4254, %v4471
          %v4532 = vadd.f32 %v4255, %v4474
          %v4533 = vadd.f32 %v4256, %v4479
          %v4534 = vadd.f32 %v4257, %v4482
          %v4535 = vadd.f32 %v4258, %v4487
          %v4536 = vadd.f32 %v4259, %v4490
          %v4537 = vadd.f32 %v4260, %v4495
          %v4538 = vadd.f32 %v4261, %v4498
          %v4539 = vadd.f32 %v4262, %v4503
          %v4540 = vadd.f32 %v4263, %v4506
          %v4541 = vld [vmem:[#allocation2 + $0x10] sm:$0xff]
          %v4542 = vld [vmem:[#allocation2 + $0x18] sm:$0xff]
          %v4543 = vld [vmem:[#allocation2 + $0x20] sm:$0xff]
          %v4544 = vld [vmem:[#allocation2 + $0x28] sm:$0xff]
          %v4545 = vld [vmem:[#allocation2 + $0x30] sm:$0xff]
          %v4546 = vld [vmem:[#allocation2 + $0x38] sm:$0xff]
          %v4547 = vld [vmem:[#allocation2 + $0x40] sm:$0xff]
          %v4548 = vld [vmem:[#allocation2 + $0x48] sm:$0xff]
          %v4549 = vld [vmem:[#allocation2 + $0x50] sm:$0xff]
          %v4550 = vld [vmem:[#allocation2 + $0x58] sm:$0xff]
          %v4551 = vld [vmem:[#allocation2 + $0x60] sm:$0xff]
          %v4552 = vld [vmem:[#allocation2 + $0x68] sm:$0xff]
          %v4553 = vld [vmem:[#allocation2 + $0x70] sm:$0xff]
          %v4554 = vld [vmem:[#allocation2 + $0x78] sm:$0xff]
          %v4555 = vld [vmem:[#allocation2 + $0x80] sm:$0xff]
          %v4556 = vld [vmem:[#allocation2 + $0x88] sm:$0xff]
          %s4557 = sadd.s32 %s2682, 7
          %s4558 = smul.u32 %s4557, 16
          %s4559 = smul.addr %s4558, 4
          %s4560 = scalar_lea.vmem [#allocation3], %s4559
          %v4561 = vld [vmem:[%s4560] sm:$0xf]
          %v4562 = vld [vmem:[%s4560 + $0x4] sm:$0xf]
          %v4563 = vld [vmem:[%s4560 + $0x8] sm:$0xf]
          %v4564 = vld [vmem:[%s4560 + $0xc] sm:$0xf]
          %v4565 = vld [vmem:[%s4560 + $0x10] sm:$0xf]
          %v4566 = vld [vmem:[%s4560 + $0x14] sm:$0xf]
          %v4567 = vld [vmem:[%s4560 + $0x18] sm:$0xf]
          %v4568 = vld [vmem:[%s4560 + $0x1c] sm:$0xf]
          %v4569 = vld [vmem:[%s4560 + $0x20] sm:$0xf]
          %v4570 = vld [vmem:[%s4560 + $0x24] sm:$0xf]
          %v4571 = vld [vmem:[%s4560 + $0x28] sm:$0xf]
          %v4572 = vld [vmem:[%s4560 + $0x2c] sm:$0xf]
          %v4573 = vld [vmem:[%s4560 + $0x30] sm:$0xf]
          %v4574 = vld [vmem:[%s4560 + $0x34] sm:$0xf]
          %v4575 = vld [vmem:[%s4560 + $0x38] sm:$0xf]
          %v4576 = vld [vmem:[%s4560 + $0x3c] sm:$0xf]
          %v4593 = vunpack.c.l.b16 %v4561
          %v4594 = vunpack.c.l.b16 %v4562
          %v4595 = vunpack.c.l.b16 %v4563
          %v4596 = vunpack.c.l.b16 %v4564
          %v4597 = vunpack.c.l.b16 %v4565
          %v4598 = vunpack.c.l.b16 %v4566
          %v4599 = vunpack.c.l.b16 %v4567
          %v4600 = vunpack.c.l.b16 %v4568
          %v4601 = vunpack.c.l.b16 %v4569
          %v4602 = vunpack.c.l.b16 %v4570
          %v4603 = vunpack.c.l.b16 %v4571
          %v4604 = vunpack.c.l.b16 %v4572
          %v4605 = vunpack.c.l.b16 %v4573
          %v4606 = vunpack.c.l.b16 %v4574
          %v4607 = vunpack.c.l.b16 %v4575
          %v4608 = vunpack.c.l.b16 %v4576
          %v4609 = vpack.c.b16 %v4594, %v4593
          %v4610 = vpack.c.b16 %v4596, %v4595
          %v4611 = vpack.c.b16 %v4598, %v4597
          %v4612 = vpack.c.b16 %v4600, %v4599
          %v4613 = vpack.c.b16 %v4602, %v4601
          %v4614 = vpack.c.b16 %v4604, %v4603
          %v4615 = vpack.c.b16 %v4606, %v4605
          %v4616 = vpack.c.b16 %v4608, %v4607
          %4625 = vmatprep.subr.bf16.mxu0 0
          %4626 = vmatpush1.bf16.msra.mxu0 %v4609
          %4627 = vmatprep.subr.bf16.mxu0 0
          %4628 = vmatpush1.bf16.msra.mxu0 %v4610
          %4629 = vmatprep.subr.bf16.mxu0 0
          %4630 = vmatpush1.bf16.msra.mxu0 %v4611
          %4631 = vmatprep.subr.bf16.mxu0 0
          %4632 = vmatpush1.bf16.msra.mxu0 %v4612
          %4633 = vmatprep.subr.bf16.mxu0 0
          %4634 = vmatpush1.bf16.msra.mxu0 %v4613
          %4635 = vmatprep.subr.bf16.mxu0 0
          %4636 = vmatpush1.bf16.msra.mxu0 %v4614
          %4637 = vmatprep.subr.bf16.mxu0 0
          %4638 = vmatpush1.bf16.msra.mxu0 %v4615
          %4639 = vmatprep.subr.bf16.mxu0 0
          %4640 = vmatpush1.bf16.msra.mxu0 %v4616
          %4641 = vmatprep.subr.bf16.mxu0 0
          %4642 = vmatpush1.bf16.msra.mxu0 0
          %4643 = vmatprep.subr.bf16.mxu0 0
          %4644 = vmatpush1.bf16.msra.mxu0 0
          %4645 = vmatprep.subr.bf16.mxu0 0
          %4646 = vmatpush1.bf16.msra.mxu0 0
          %4647 = vmatprep.subr.bf16.mxu0 0
          %4648 = vmatpush1.bf16.msra.mxu0 0
          %4649 = vmatprep.subr.bf16.mxu0 0
          %4650 = vmatpush1.bf16.msra.mxu0 0
          %4651 = vmatprep.subr.bf16.mxu0 0
          %4652 = vmatpush1.bf16.msra.mxu0 0
          %4653 = vmatprep.subr.bf16.mxu0 0
          %4654 = vmatpush1.bf16.msra.mxu0 0
          %4655 = vmatprep.subr.bf16.mxu0 0
          %4656 = vmatpush1.bf16.msra.mxu0 0
          %4657 = vmatprep.mubr.bf16.mxu0 0
          %4658 = vmatmul.mubr.bf16.gmra.mrb[0].mxu0 %v4541
          %v4659 = vpop.f32.mrb[0].mxu0
          %v4660 = vadd.f32 0.0, %v4659
          %v4661 = vpop.f32.mrb[0].mxu0
          %v4662 = vpop.f32.mrb[0].mxu0
          %v4663 = vadd.f32 0.0, %v4662
          %v4664 = vpop.f32.mrb[0].mxu0
          %4665 = vmatprep.mubr.bf16.mxu0 0
          %4666 = vmatmul.mubr.bf16.gmra.mrb[0].mxu0 %v4542
          %v4667 = vpop.f32.mrb[0].mxu0
          %v4668 = vadd.f32 0.0, %v4667
          %v4669 = vpop.f32.mrb[0].mxu0
          %v4670 = vpop.f32.mrb[0].mxu0
          %v4671 = vadd.f32 0.0, %v4670
          %v4672 = vpop.f32.mrb[0].mxu0
          %4673 = vmatprep.mubr.bf16.mxu0 0
          %4674 = vmatmul.mubr.bf16.gmra.mrb[0].mxu0 %v4543
          %v4675 = vpop.f32.mrb[0].mxu0
          %v4676 = vadd.f32 0.0, %v4675
          %v4677 = vpop.f32.mrb[0].mxu0
          %v4678 = vpop.f32.mrb[0].mxu0
          %v4679 = vadd.f32 0.0, %v4678
          %v4680 = vpop.f32.mrb[0].mxu0
          %4681 = vmatprep.mubr.bf16.mxu0 0
          %4682 = vmatmul.mubr.bf16.gmra.mrb[0].mxu0 %v4544
          %v4683 = vpop.f32.mrb[0].mxu0
          %v4684 = vadd.f32 0.0, %v4683
          %v4685 = vpop.f32.mrb[0].mxu0
          %v4686 = vpop.f32.mrb[0].mxu0
          %v4687 = vadd.f32 0.0, %v4686
          %v4688 = vpop.f32.mrb[0].mxu0
          %4689 = vmatprep.mubr.bf16.mxu0 0
          %4690 = vmatmul.mubr.bf16.gmra.mrb[0].mxu0 %v4545
          %v4691 = vpop.f32.mrb[0].mxu0
          %v4692 = vadd.f32 0.0, %v4691
          %v4693 = vpop.f32.mrb[0].mxu0
          %v4694 = vpop.f32.mrb[0].mxu0
          %v4695 = vadd.f32 0.0, %v4694
          %v4696 = vpop.f32.mrb[0].mxu0
          %4697 = vmatprep.mubr.bf16.mxu0 0
          %4698 = vmatmul.mubr.bf16.gmra.mrb[0].mxu0 %v4546
          %v4699 = vpop.f32.mrb[0].mxu0
          %v4700 = vadd.f32 0.0, %v4699
          %v4701 = vpop.f32.mrb[0].mxu0
          %v4702 = vpop.f32.mrb[0].mxu0
          %v4703 = vadd.f32 0.0, %v4702
          %v4704 = vpop.f32.mrb[0].mxu0
          %4705 = vmatprep.mubr.bf16.mxu0 0
          %4706 = vmatmul.mubr.bf16.gmra.mrb[0].mxu0 %v4547
          %v4707 = vpop.f32.mrb[0].mxu0
          %v4708 = vadd.f32 0.0, %v4707
          %v4709 = vpop.f32.mrb[0].mxu0
          %v4710 = vpop.f32.mrb[0].mxu0
          %v4711 = vadd.f32 0.0, %v4710
          %v4712 = vpop.f32.mrb[0].mxu0
          %4713 = vmatprep.mubr.bf16.mxu0 0
          %4714 = vmatmul.mubr.bf16.gmra.mrb[0].mxu0 %v4548
          %v4715 = vpop.f32.mrb[0].mxu0
          %v4716 = vadd.f32 0.0, %v4715
          %v4717 = vpop.f32.mrb[0].mxu0
          %v4718 = vpop.f32.mrb[0].mxu0
          %v4719 = vadd.f32 0.0, %v4718
          %v4720 = vpop.f32.mrb[0].mxu0
          %4721 = vmatprep.mubr.bf16.mxu0 0
          %4722 = vmatmul.mubr.bf16.gmra.mrb[0].mxu0 %v4549
          %v4723 = vpop.f32.mrb[0].mxu0
          %v4724 = vadd.f32 0.0, %v4723
          %v4725 = vpop.f32.mrb[0].mxu0
          %v4726 = vpop.f32.mrb[0].mxu0
          %v4727 = vadd.f32 0.0, %v4726
          %v4728 = vpop.f32.mrb[0].mxu0
          %4729 = vmatprep.mubr.bf16.mxu0 0
          %4730 = vmatmul.mubr.bf16.gmra.mrb[0].mxu0 %v4550
          %v4731 = vpop.f32.mrb[0].mxu0
          %v4732 = vadd.f32 0.0, %v4731
          %v4733 = vpop.f32.mrb[0].mxu0
          %v4734 = vpop.f32.mrb[0].mxu0
          %v4735 = vadd.f32 0.0, %v4734
          %v4736 = vpop.f32.mrb[0].mxu0
          %4737 = vmatprep.mubr.bf16.mxu0 0
          %4738 = vmatmul.mubr.bf16.gmra.mrb[0].mxu0 %v4551
          %v4739 = vpop.f32.mrb[0].mxu0
          %v4740 = vadd.f32 0.0, %v4739
          %v4741 = vpop.f32.mrb[0].mxu0
          %v4742 = vpop.f32.mrb[0].mxu0
          %v4743 = vadd.f32 0.0, %v4742
          %v4744 = vpop.f32.mrb[0].mxu0
          %4745 = vmatprep.mubr.bf16.mxu0 0
          %4746 = vmatmul.mubr.bf16.gmra.mrb[0].mxu0 %v4552
          %v4747 = vpop.f32.mrb[0].mxu0
          %v4748 = vadd.f32 0.0, %v4747
          %v4749 = vpop.f32.mrb[0].mxu0
          %v4750 = vpop.f32.mrb[0].mxu0
          %v4751 = vadd.f32 0.0, %v4750
          %v4752 = vpop.f32.mrb[0].mxu0
          %4753 = vmatprep.mubr.bf16.mxu0 0
          %4754 = vmatmul.mubr.bf16.gmra.mrb[0].mxu0 %v4553
          %v4755 = vpop.f32.mrb[0].mxu0
          %v4756 = vadd.f32 0.0, %v4755
          %v4757 = vpop.f32.mrb[0].mxu0
          %v4758 = vpop.f32.mrb[0].mxu0
          %v4759 = vadd.f32 0.0, %v4758
          %v4760 = vpop.f32.mrb[0].mxu0
          %4761 = vmatprep.mubr.bf16.mxu0 0
          %4762 = vmatmul.mubr.bf16.gmra.mrb[0].mxu0 %v4554
          %v4763 = vpop.f32.mrb[0].mxu0
          %v4764 = vadd.f32 0.0, %v4763
          %v4765 = vpop.f32.mrb[0].mxu0
          %v4766 = vpop.f32.mrb[0].mxu0
          %v4767 = vadd.f32 0.0, %v4766
          %v4768 = vpop.f32.mrb[0].mxu0
          %4769 = vmatprep.mubr.bf16.mxu0 0
          %4770 = vmatmul.mubr.bf16.gmra.mrb[0].mxu0 %v4555
          %v4771 = vpop.f32.mrb[0].mxu0
          %v4772 = vadd.f32 0.0, %v4771
          %v4773 = vpop.f32.mrb[0].mxu0
          %v4774 = vpop.f32.mrb[0].mxu0
          %v4775 = vadd.f32 0.0, %v4774
          %v4776 = vpop.f32.mrb[0].mxu0
          %4777 = vmatprep.mubr.bf16.mxu0 0
          %4778 = vmatmul.mubr.bf16.gmra.mrb[0].mxu0 %v4556
          %v4779 = vpop.f32.mrb[0].mxu0
          %v4780 = vadd.f32 0.0, %v4779
          %v4781 = vpop.f32.mrb[0].mxu0
          %v4782 = vpop.f32.mrb[0].mxu0
          %v4783 = vadd.f32 0.0, %v4782
          %v4784 = vpop.f32.mrb[0].mxu0
          %4785 = vdwg.mxu0
          %v4786 = vadd.f32 %v4509, %v4660
          %v4787 = vadd.f32 %v4510, %v4663
          %v4788 = vadd.f32 %v4511, %v4668
          %v4789 = vadd.f32 %v4512, %v4671
          %v4790 = vadd.f32 %v4513, %v4676
          %v4791 = vadd.f32 %v4514, %v4679
          %v4792 = vadd.f32 %v4515, %v4684
          %v4793 = vadd.f32 %v4516, %v4687
          %v4794 = vadd.f32 %v4517, %v4692
          %v4795 = vadd.f32 %v4518, %v4695
          %v4796 = vadd.f32 %v4519, %v4700
          %v4797 = vadd.f32 %v4520, %v4703
          %v4798 = vadd.f32 %v4521, %v4708
          %v4799 = vadd.f32 %v4522, %v4711
          %v4800 = vadd.f32 %v4523, %v4716
          %v4801 = vadd.f32 %v4524, %v4719
          %v4802 = vadd.f32 %v4525, %v4724
          %v4803 = vadd.f32 %v4526, %v4727
          %v4804 = vadd.f32 %v4527, %v4732
          %v4805 = vadd.f32 %v4528, %v4735
          %v4806 = vadd.f32 %v4529, %v4740
          %v4807 = vadd.f32 %v4530, %v4743
          %v4808 = vadd.f32 %v4531, %v4748
          %v4809 = vadd.f32 %v4532, %v4751
          %v4810 = vadd.f32 %v4533, %v4756
          %v4811 = vadd.f32 %v4534, %v4759
          %v4812 = vadd.f32 %v4535, %v4764
          %v4813 = vadd.f32 %v4536, %v4767
          %v4814 = vadd.f32 %v4537, %v4772
          %v4815 = vadd.f32 %v4538, %v4775
          %v4816 = vadd.f32 %v4539, %v4780
          %v4817 = vadd.f32 %v4540, %v4783
          %v4818 = vld [vmem:[%s2455 + $0x10] sm:$0xff]
          %v4819 = vld [vmem:[%s2455 + $0x18] sm:$0xff]
          %v4820 = vld [vmem:[%s2455 + $0x20] sm:$0xff]
          %v4821 = vld [vmem:[%s2455 + $0x28] sm:$0xff]
          %v4822 = vld [vmem:[%s2455 + $0x30] sm:$0xff]
          %v4823 = vld [vmem:[%s2455 + $0x38] sm:$0xff]
          %v4824 = vld [vmem:[%s2455 + $0x40] sm:$0xff]
          %v4825 = vld [vmem:[%s2455 + $0x48] sm:$0xff]
          %v4826 = vld [vmem:[%s2455 + $0x50] sm:$0xff]
          %v4827 = vld [vmem:[%s2455 + $0x58] sm:$0xff]
          %v4828 = vld [vmem:[%s2455 + $0x60] sm:$0xff]
          %v4829 = vld [vmem:[%s2455 + $0x68] sm:$0xff]
          %v4830 = vld [vmem:[%s2455 + $0x70] sm:$0xff]
          %v4831 = vld [vmem:[%s2455 + $0x78] sm:$0xff]
          %v4832 = vld [vmem:[%s2455 + $0x80] sm:$0xff]
          %v4833 = vld [vmem:[%s2455 + $0x88] sm:$0xff]
          %s4834 = sadd.s32 %s2682, 8
          %s4835 = smul.u32 %s4834, 16
          %s4836 = smul.addr %s4835, 4
          %s4837 = scalar_lea.vmem [#allocation3], %s4836
          %v4838 = vld [vmem:[%s4837] sm:$0xf]
          %v4839 = vld [vmem:[%s4837 + $0x4] sm:$0xf]
          %v4840 = vld [vmem:[%s4837 + $0x8] sm:$0xf]
          %v4841 = vld [vmem:[%s4837 + $0xc] sm:$0xf]
          %v4842 = vld [vmem:[%s4837 + $0x10] sm:$0xf]
          %v4843 = vld [vmem:[%s4837 + $0x14] sm:$0xf]
          %v4844 = vld [vmem:[%s4837 + $0x18] sm:$0xf]
          %v4845 = vld [vmem:[%s4837 + $0x1c] sm:$0xf]
          %v4846 = vld [vmem:[%s4837 + $0x20] sm:$0xf]
          %v4847 = vld [vmem:[%s4837 + $0x24] sm:$0xf]
          %v4848 = vld [vmem:[%s4837 + $0x28] sm:$0xf]
          %v4849 = vld [vmem:[%s4837 + $0x2c] sm:$0xf]
          %v4850 = vld [vmem:[%s4837 + $0x30] sm:$0xf]
          %v4851 = vld [vmem:[%s4837 + $0x34] sm:$0xf]
          %v4852 = vld [vmem:[%s4837 + $0x38] sm:$0xf]
          %v4853 = vld [vmem:[%s4837 + $0x3c] sm:$0xf]
          %v4870 = vunpack.c.l.b16 %v4838
          %v4871 = vunpack.c.l.b16 %v4839
          %v4872 = vunpack.c.l.b16 %v4840
          %v4873 = vunpack.c.l.b16 %v4841
          %v4874 = vunpack.c.l.b16 %v4842
          %v4875 = vunpack.c.l.b16 %v4843
          %v4876 = vunpack.c.l.b16 %v4844
          %v4877 = vunpack.c.l.b16 %v4845
          %v4878 = vunpack.c.l.b16 %v4846
          %v4879 = vunpack.c.l.b16 %v4847
          %v4880 = vunpack.c.l.b16 %v4848
          %v4881 = vunpack.c.l.b16 %v4849
          %v4882 = vunpack.c.l.b16 %v4850
          %v4883 = vunpack.c.l.b16 %v4851
          %v4884 = vunpack.c.l.b16 %v4852
          %v4885 = vunpack.c.l.b16 %v4853
          %v4886 = vpack.c.b16 %v4871, %v4870
          %v4887 = vpack.c.b16 %v4873, %v4872
          %v4888 = vpack.c.b16 %v4875, %v4874
          %v4889 = vpack.c.b16 %v4877, %v4876
          %v4890 = vpack.c.b16 %v4879, %v4878
          %v4891 = vpack.c.b16 %v4881, %v4880
          %v4892 = vpack.c.b16 %v4883, %v4882
          %v4893 = vpack.c.b16 %v4885, %v4884
          %4902 = vmatprep.subr.bf16.mxu0 0
          %4903 = vmatpush1.bf16.msra.mxu0 %v4886
          %4904 = vmatprep.subr.bf16.mxu0 0
          %4905 = vmatpush1.bf16.msra.mxu0 %v4887
          %4906 = vmatprep.subr.bf16.mxu0 0
          %4907 = vmatpush1.bf16.msra.mxu0 %v4888
          %4908 = vmatprep.subr.bf16.mxu0 0
          %4909 = vmatpush1.bf16.msra.mxu0 %v4889
          %4910 = vmatprep.subr.bf16.mxu0 0
          %4911 = vmatpush1.bf16.msra.mxu0 %v4890
          %4912 = vmatprep.subr.bf16.mxu0 0
          %4913 = vmatpush1.bf16.msra.mxu0 %v4891
          %4914 = vmatprep.subr.bf16.mxu0 0
          %4915 = vmatpush1.bf16.msra.mxu0 %v4892
          %4916 = vmatprep.subr.bf16.mxu0 0
          %4917 = vmatpush1.bf16.msra.mxu0 %v4893
          %4918 = vmatprep.subr.bf16.mxu0 0
          %4919 = vmatpush1.bf16.msra.mxu0 0
          %4920 = vmatprep.subr.bf16.mxu0 0
          %4921 = vmatpush1.bf16.msra.mxu0 0
          %4922 = vmatprep.subr.bf16.mxu0 0
          %4923 = vmatpush1.bf16.msra.mxu0 0
          %4924 = vmatprep.subr.bf16.mxu0 0
          %4925 = vmatpush1.bf16.msra.mxu0 0
          %4926 = vmatprep.subr.bf16.mxu0 0
          %4927 = vmatpush1.bf16.msra.mxu0 0
          %4928 = vmatprep.subr.bf16.mxu0 0
          %4929 = vmatpush1.bf16.msra.mxu0 0
          %4930 = vmatprep.subr.bf16.mxu0 0
          %4931 = vmatpush1.bf16.msra.mxu0 0
          %4932 = vmatprep.subr.bf16.mxu0 0
          %4933 = vmatpush1.bf16.msra.mxu0 0
          %4934 = vmatprep.mubr.bf16.mxu0 0
          %4935 = vmatmul.mubr.bf16.gmra.mrb[0].mxu0 %v4818
          %v4936 = vpop.f32.mrb[0].mxu0
          %v4937 = vadd.f32 0.0, %v4936
          %v4938 = vpop.f32.mrb[0].mxu0
          %v4939 = vpop.f32.mrb[0].mxu0
          %v4940 = vadd.f32 0.0, %v4939
          %v4941 = vpop.f32.mrb[0].mxu0
          %4942 = vmatprep.mubr.bf16.mxu0 0
          %4943 = vmatmul.mubr.bf16.gmra.mrb[0].mxu0 %v4819
          %v4944 = vpop.f32.mrb[0].mxu0
          %v4945 = vadd.f32 0.0, %v4944
          %v4946 = vpop.f32.mrb[0].mxu0
          %v4947 = vpop.f32.mrb[0].mxu0
          %v4948 = vadd.f32 0.0, %v4947
          %v4949 = vpop.f32.mrb[0].mxu0
          %4950 = vmatprep.mubr.bf16.mxu0 0
          %4951 = vmatmul.mubr.bf16.gmra.mrb[0].mxu0 %v4820
          %v4952 = vpop.f32.mrb[0].mxu0
          %v4953 = vadd.f32 0.0, %v4952
          %v4954 = vpop.f32.mrb[0].mxu0
          %v4955 = vpop.f32.mrb[0].mxu0
          %v4956 = vadd.f32 0.0, %v4955
          %v4957 = vpop.f32.mrb[0].mxu0
          %4958 = vmatprep.mubr.bf16.mxu0 0
          %4959 = vmatmul.mubr.bf16.gmra.mrb[0].mxu0 %v4821
          %v4960 = vpop.f32.mrb[0].mxu0
          %v4961 = vadd.f32 0.0, %v4960
          %v4962 = vpop.f32.mrb[0].mxu0
          %v4963 = vpop.f32.mrb[0].mxu0
          %v4964 = vadd.f32 0.0, %v4963
          %v4965 = vpop.f32.mrb[0].mxu0
          %4966 = vmatprep.mubr.bf16.mxu0 0
          %4967 = vmatmul.mubr.bf16.gmra.mrb[0].mxu0 %v4822
          %v4968 = vpop.f32.mrb[0].mxu0
          %v4969 = vadd.f32 0.0, %v4968
          %v4970 = vpop.f32.mrb[0].mxu0
          %v4971 = vpop.f32.mrb[0].mxu0
          %v4972 = vadd.f32 0.0, %v4971
          %v4973 = vpop.f32.mrb[0].mxu0
          %4974 = vmatprep.mubr.bf16.mxu0 0
          %4975 = vmatmul.mubr.bf16.gmra.mrb[0].mxu0 %v4823
          %v4976 = vpop.f32.mrb[0].mxu0
          %v4977 = vadd.f32 0.0, %v4976
          %v4978 = vpop.f32.mrb[0].mxu0
          %v4979 = vpop.f32.mrb[0].mxu0
          %v4980 = vadd.f32 0.0, %v4979
          %v4981 = vpop.f32.mrb[0].mxu0
          %4982 = vmatprep.mubr.bf16.mxu0 0
          %4983 = vmatmul.mubr.bf16.gmra.mrb[0].mxu0 %v4824
          %v4984 = vpop.f32.mrb[0].mxu0
          %v4985 = vadd.f32 0.0, %v4984
          %v4986 = vpop.f32.mrb[0].mxu0
          %v4987 = vpop.f32.mrb[0].mxu0
          %v4988 = vadd.f32 0.0, %v4987
          %v4989 = vpop.f32.mrb[0].mxu0
          %4990 = vmatprep.mubr.bf16.mxu0 0
          %4991 = vmatmul.mubr.bf16.gmra.mrb[0].mxu0 %v4825
          %v4992 = vpop.f32.mrb[0].mxu0
          %v4993 = vadd.f32 0.0, %v4992
          %v4994 = vpop.f32.mrb[0].mxu0
          %v4995 = vpop.f32.mrb[0].mxu0
          %v4996 = vadd.f32 0.0, %v4995
          %v4997 = vpop.f32.mrb[0].mxu0
          %4998 = vmatprep.mubr.bf16.mxu0 0
          %4999 = vmatmul.mubr.bf16.gmra.mrb[0].mxu0 %v4826
          %v5000 = vpop.f32.mrb[0].mxu0
          %v5001 = vadd.f32 0.0, %v5000
          %v5002 = vpop.f32.mrb[0].mxu0
          %v5003 = vpop.f32.mrb[0].mxu0
          %v5004 = vadd.f32 0.0, %v5003
          %v5005 = vpop.f32.mrb[0].mxu0
          %5006 = vmatprep.mubr.bf16.mxu0 0
          %5007 = vmatmul.mubr.bf16.gmra.mrb[0].mxu0 %v4827
          %v5008 = vpop.f32.mrb[0].mxu0
          %v5009 = vadd.f32 0.0, %v5008
          %v5010 = vpop.f32.mrb[0].mxu0
          %v5011 = vpop.f32.mrb[0].mxu0
          %v5012 = vadd.f32 0.0, %v5011
          %v5013 = vpop.f32.mrb[0].mxu0
          %5014 = vmatprep.mubr.bf16.mxu0 0
          %5015 = vmatmul.mubr.bf16.gmra.mrb[0].mxu0 %v4828
          %v5016 = vpop.f32.mrb[0].mxu0
          %v5017 = vadd.f32 0.0, %v5016
          %v5018 = vpop.f32.mrb[0].mxu0
          %v5019 = vpop.f32.mrb[0].mxu0
          %v5020 = vadd.f32 0.0, %v5019
          %v5021 = vpop.f32.mrb[0].mxu0
          %5022 = vmatprep.mubr.bf16.mxu0 0
          %5023 = vmatmul.mubr.bf16.gmra.mrb[0].mxu0 %v4829
          %v5024 = vpop.f32.mrb[0].mxu0
          %v5025 = vadd.f32 0.0, %v5024
          %v5026 = vpop.f32.mrb[0].mxu0
          %v5027 = vpop.f32.mrb[0].mxu0
          %v5028 = vadd.f32 0.0, %v5027
          %v5029 = vpop.f32.mrb[0].mxu0
          %5030 = vmatprep.mubr.bf16.mxu0 0
          %5031 = vmatmul.mubr.bf16.gmra.mrb[0].mxu0 %v4830
          %v5032 = vpop.f32.mrb[0].mxu0
          %v5033 = vadd.f32 0.0, %v5032
          %v5034 = vpop.f32.mrb[0].mxu0
          %v5035 = vpop.f32.mrb[0].mxu0
          %v5036 = vadd.f32 0.0, %v5035
          %v5037 = vpop.f32.mrb[0].mxu0
          %5038 = vmatprep.mubr.bf16.mxu0 0
          %5039 = vmatmul.mubr.bf16.gmra.mrb[0].mxu0 %v4831
          %v5040 = vpop.f32.mrb[0].mxu0
          %v5041 = vadd.f32 0.0, %v5040
          %v5042 = vpop.f32.mrb[0].mxu0
          %v5043 = vpop.f32.mrb[0].mxu0
          %v5044 = vadd.f32 0.0, %v5043
          %v5045 = vpop.f32.mrb[0].mxu0
          %5046 = vmatprep.mubr.bf16.mxu0 0
          %5047 = vmatmul.mubr.bf16.gmra.mrb[0].mxu0 %v4832
          %v5048 = vpop.f32.mrb[0].mxu0
          %v5049 = vadd.f32 0.0, %v5048
          %v5050 = vpop.f32.mrb[0].mxu0
          %v5051 = vpop.f32.mrb[0].mxu0
          %v5052 = vadd.f32 0.0, %v5051
          %v5053 = vpop.f32.mrb[0].mxu0
          %5054 = vmatprep.mubr.bf16.mxu0 0
          %5055 = vmatmul.mubr.bf16.gmra.mrb[0].mxu0 %v4833
          %v5056 = vpop.f32.mrb[0].mxu0
          %v5057 = vadd.f32 0.0, %v5056
          %v5058 = vpop.f32.mrb[0].mxu0
          %v5059 = vpop.f32.mrb[0].mxu0
          %v5060 = vadd.f32 0.0, %v5059
          %v5061 = vpop.f32.mrb[0].mxu0
          %5062 = vdwg.mxu0
          %v5063 = vadd.f32 %v4786, %v4937
          %v5064 = vadd.f32 %v4787, %v4940
          %v5065 = vadd.f32 %v4788, %v4945
          %v5066 = vadd.f32 %v4789, %v4948
          %v5067 = vadd.f32 %v4790, %v4953
          %v5068 = vadd.f32 %v4791, %v4956
          %v5069 = vadd.f32 %v4792, %v4961
          %v5070 = vadd.f32 %v4793, %v4964
          %v5071 = vadd.f32 %v4794, %v4969
          %v5072 = vadd.f32 %v4795, %v4972
          %v5073 = vadd.f32 %v4796, %v4977
          %v5074 = vadd.f32 %v4797, %v4980
          %v5075 = vadd.f32 %v4798, %v4985
          %v5076 = vadd.f32 %v4799, %v4988
          %v5077 = vadd.f32 %v4800, %v4993
          %v5078 = vadd.f32 %v4801, %v4996
          %v5079 = vadd.f32 %v4802, %v5001
          %v5080 = vadd.f32 %v4803, %v5004
          %v5081 = vadd.f32 %v4804, %v5009
          %v5082 = vadd.f32 %v4805, %v5012
          %v5083 = vadd.f32 %v4806, %v5017
          %v5084 = vadd.f32 %v4807, %v5020
          %v5085 = vadd.f32 %v4808, %v5025
          %v5086 = vadd.f32 %v4809, %v5028
          %v5087 = vadd.f32 %v4810, %v5033
          %v5088 = vadd.f32 %v4811, %v5036
          %v5089 = vadd.f32 %v4812, %v5041
          %v5090 = vadd.f32 %v4813, %v5044
          %v5091 = vadd.f32 %v4814, %v5049
          %v5092 = vadd.f32 %v4815, %v5052
          %v5093 = vadd.f32 %v4816, %v5057
          %v5094 = vadd.f32 %v4817, %v5060
          %s5095 = scalar_lea.vmem %s8, %s1765
          %v5096 = vld [vmem:[%s5095] sm:$0x1]
          %v5098 = vlaneseq
          %v5099 = vshrl.u32 %v5098, 7
          %v5100 = vsub.s32 0, %v5099
          %v5101 = vrot.slane %v5096, %v5100
          %v5103 = vadd.f32 %v5063, %v5101
          %v5104 = vadd.f32 %v5064, %v5101
          %v5105 = vadd.f32 %v5065, %v5101
          %v5106 = vadd.f32 %v5066, %v5101
          %v5107 = vadd.f32 %v5067, %v5101
          %v5108 = vadd.f32 %v5068, %v5101
          %v5109 = vadd.f32 %v5069, %v5101
          %v5110 = vadd.f32 %v5070, %v5101
          %v5111 = vadd.f32 %v5071, %v5101
          %v5112 = vadd.f32 %v5072, %v5101
          %v5113 = vadd.f32 %v5073, %v5101
          %v5114 = vadd.f32 %v5074, %v5101
          %v5115 = vadd.f32 %v5075, %v5101
          %v5116 = vadd.f32 %v5076, %v5101
          %v5117 = vadd.f32 %v5077, %v5101
          %v5118 = vadd.f32 %v5078, %v5101
          %v5119 = vadd.f32 %v5079, %v5101
          %v5120 = vadd.f32 %v5080, %v5101
          %v5121 = vadd.f32 %v5081, %v5101
          %v5122 = vadd.f32 %v5082, %v5101
          %v5123 = vadd.f32 %v5083, %v5101
          %v5124 = vadd.f32 %v5084, %v5101
          %v5125 = vadd.f32 %v5085, %v5101
          %v5126 = vadd.f32 %v5086, %v5101
          %v5127 = vadd.f32 %v5087, %v5101
          %v5128 = vadd.f32 %v5088, %v5101
          %v5129 = vadd.f32 %v5089, %v5101
          %v5130 = vadd.f32 %v5090, %v5101
          %v5131 = vadd.f32 %v5091, %v5101
          %v5132 = vadd.f32 %v5092, %v5101
          %v5133 = vadd.f32 %v5093, %v5101
          %v5134 = vadd.f32 %v5094, %v5101
          %v5135 = vsub.f32 0.0, %v5103
          %v5136 = vsub.f32 0.0, %v5104
          %v5137 = vsub.f32 0.0, %v5105
          %v5138 = vsub.f32 0.0, %v5106
          %v5139 = vsub.f32 0.0, %v5107
          %v5140 = vsub.f32 0.0, %v5108
          %v5141 = vsub.f32 0.0, %v5109
          %v5142 = vsub.f32 0.0, %v5110
          %v5143 = vsub.f32 0.0, %v5111
          %v5144 = vsub.f32 0.0, %v5112
          %v5145 = vsub.f32 0.0, %v5113
          %v5146 = vsub.f32 0.0, %v5114
          %v5147 = vsub.f32 0.0, %v5115
          %v5148 = vsub.f32 0.0, %v5116
          %v5149 = vsub.f32 0.0, %v5117
          %v5150 = vsub.f32 0.0, %v5118
          %v5151 = vsub.f32 0.0, %v5119
          %v5152 = vsub.f32 0.0, %v5120
          %v5153 = vsub.f32 0.0, %v5121
          %v5154 = vsub.f32 0.0, %v5122
          %v5155 = vsub.f32 0.0, %v5123
          %v5156 = vsub.f32 0.0, %v5124
          %v5157 = vsub.f32 0.0, %v5125
          %v5158 = vsub.f32 0.0, %v5126
          %v5159 = vsub.f32 0.0, %v5127
          %v5160 = vsub.f32 0.0, %v5128
          %v5161 = vsub.f32 0.0, %v5129
          %v5162 = vsub.f32 0.0, %v5130
          %v5163 = vsub.f32 0.0, %v5131
          %v5164 = vsub.f32 0.0, %v5132
          %v5165 = vsub.f32 0.0, %v5133
          %v5166 = vsub.f32 0.0, %v5134
          %v5167 = vmul.f32 %v5135, 1.442695
          %v5168 = vpow.pop %v5167
          %v5169 = vmul.f32 %v5136, 1.442695
          %v5170 = vpow.pop %v5169
          %v5171 = vmul.f32 %v5137, 1.442695
          %v5172 = vpow.pop %v5171
          %v5173 = vmul.f32 %v5138, 1.442695
          %v5174 = vpow.pop %v5173
          %v5175 = vmul.f32 %v5139, 1.442695
          %v5176 = vpow.pop %v5175
          %v5177 = vmul.f32 %v5140, 1.442695
          %v5178 = vpow.pop %v5177
          %v5179 = vmul.f32 %v5141, 1.442695
          %v5180 = vpow.pop %v5179
          %v5181 = vmul.f32 %v5142, 1.442695
          %v5182 = vpow.pop %v5181
          %v5183 = vmul.f32 %v5143, 1.442695
          %v5184 = vpow.pop %v5183
          %v5185 = vmul.f32 %v5144, 1.442695
          %v5186 = vpow.pop %v5185
          %v5187 = vmul.f32 %v5145, 1.442695
          %v5188 = vpow.pop %v5187
          %v5189 = vmul.f32 %v5146, 1.442695
          %v5190 = vpow.pop %v5189
          %v5191 = vmul.f32 %v5147, 1.442695
          %v5192 = vpow.pop %v5191
          %v5193 = vmul.f32 %v5148, 1.442695
          %v5194 = vpow.pop %v5193
          %v5195 = vmul.f32 %v5149, 1.442695
          %v5196 = vpow.pop %v5195
          %v5197 = vmul.f32 %v5150, 1.442695
          %v5198 = vpow.pop %v5197
          %v5199 = vmul.f32 %v5151, 1.442695
          %v5200 = vpow.pop %v5199
          %v5201 = vmul.f32 %v5152, 1.442695
          %v5202 = vpow.pop %v5201
          %v5203 = vmul.f32 %v5153, 1.442695
          %v5204 = vpow.pop %v5203
          %v5205 = vmul.f32 %v5154, 1.442695
          %v5206 = vpow.pop %v5205
          %v5207 = vmul.f32 %v5155, 1.442695
          %v5208 = vpow.pop %v5207
          %v5209 = vmul.f32 %v5156, 1.442695
          %v5210 = vpow.pop %v5209
          %v5211 = vmul.f32 %v5157, 1.442695
          %v5212 = vpow.pop %v5211
          %v5213 = vmul.f32 %v5158, 1.442695
          %v5214 = vpow.pop %v5213
          %v5215 = vmul.f32 %v5159, 1.442695
          %v5216 = vpow.pop %v5215
          %v5217 = vmul.f32 %v5160, 1.442695
          %v5218 = vpow.pop %v5217
          %v5219 = vmul.f32 %v5161, 1.442695
          %v5220 = vpow.pop %v5219
          %v5221 = vmul.f32 %v5162, 1.442695
          %v5222 = vpow.pop %v5221
          %v5223 = vmul.f32 %v5163, 1.442695
          %v5224 = vpow.pop %v5223
          %v5225 = vmul.f32 %v5164, 1.442695
          %v5226 = vpow.pop %v5225
          %v5227 = vmul.f32 %v5165, 1.442695
          %v5228 = vpow.pop %v5227
          %v5229 = vmul.f32 %v5166, 1.442695
          %v5230 = vpow.pop %v5229
          %v5231 = vadd.f32 %v5168, 1.0
          %v5232 = vadd.f32 %v5170, 1.0
          %v5233 = vadd.f32 %v5172, 1.0
          %v5234 = vadd.f32 %v5174, 1.0
          %v5235 = vadd.f32 %v5176, 1.0
          %v5236 = vadd.f32 %v5178, 1.0
          %v5237 = vadd.f32 %v5180, 1.0
          %v5238 = vadd.f32 %v5182, 1.0
          %v5239 = vadd.f32 %v5184, 1.0
          %v5240 = vadd.f32 %v5186, 1.0
          %v5241 = vadd.f32 %v5188, 1.0
          %v5242 = vadd.f32 %v5190, 1.0
          %v5243 = vadd.f32 %v5192, 1.0
          %v5244 = vadd.f32 %v5194, 1.0
          %v5245 = vadd.f32 %v5196, 1.0
          %v5246 = vadd.f32 %v5198, 1.0
          %v5247 = vadd.f32 %v5200, 1.0
          %v5248 = vadd.f32 %v5202, 1.0
          %v5249 = vadd.f32 %v5204, 1.0
          %v5250 = vadd.f32 %v5206, 1.0
          %v5251 = vadd.f32 %v5208, 1.0
          %v5252 = vadd.f32 %v5210, 1.0
          %v5253 = vadd.f32 %v5212, 1.0
          %v5254 = vadd.f32 %v5214, 1.0
          %v5255 = vadd.f32 %v5216, 1.0
          %v5256 = vadd.f32 %v5218, 1.0
          %v5257 = vadd.f32 %v5220, 1.0
          %v5258 = vadd.f32 %v5222, 1.0
          %v5259 = vadd.f32 %v5224, 1.0
          %v5260 = vadd.f32 %v5226, 1.0
          %v5261 = vadd.f32 %v5228, 1.0
          %v5262 = vadd.f32 %v5230, 1.0
          %v5263 = vrcp.pop %v5231
          %v5264 = vrcp.pop %v5232
          %v5265 = vrcp.pop %v5233
          %v5266 = vrcp.pop %v5234
          %v5267 = vrcp.pop %v5235
          %v5268 = vrcp.pop %v5236
          %v5269 = vrcp.pop %v5237
          %v5270 = vrcp.pop %v5238
          %v5271 = vrcp.pop %v5239
          %v5272 = vrcp.pop %v5240
          %v5273 = vrcp.pop %v5241
          %v5274 = vrcp.pop %v5242
          %v5275 = vrcp.pop %v5243
          %v5276 = vrcp.pop %v5244
          %v5277 = vrcp.pop %v5245
          %v5278 = vrcp.pop %v5246
          %v5279 = vrcp.pop %v5247
          %v5280 = vrcp.pop %v5248
          %v5281 = vrcp.pop %v5249
          %v5282 = vrcp.pop %v5250
          %v5283 = vrcp.pop %v5251
          %v5284 = vrcp.pop %v5252
          %v5285 = vrcp.pop %v5253
          %v5286 = vrcp.pop %v5254
          %v5287 = vrcp.pop %v5255
          %v5288 = vrcp.pop %v5256
          %v5289 = vrcp.pop %v5257
          %v5290 = vrcp.pop %v5258
          %v5291 = vrcp.pop %v5259
          %v5292 = vrcp.pop %v5260
          %v5293 = vrcp.pop %v5261
          %v5294 = vrcp.pop %v5262
          %v5295 = vmul.f32 %v5103, %v5263
          %v5296 = vmul.f32 %v5104, %v5264
          %v5297 = vmul.f32 %v5105, %v5265
          %v5298 = vmul.f32 %v5106, %v5266
          %v5299 = vmul.f32 %v5107, %v5267
          %v5300 = vmul.f32 %v5108, %v5268
          %v5301 = vmul.f32 %v5109, %v5269
          %v5302 = vmul.f32 %v5110, %v5270
          %v5303 = vmul.f32 %v5111, %v5271
          %v5304 = vmul.f32 %v5112, %v5272
          %v5305 = vmul.f32 %v5113, %v5273
          %v5306 = vmul.f32 %v5114, %v5274
          %v5307 = vmul.f32 %v5115, %v5275
          %v5308 = vmul.f32 %v5116, %v5276
          %v5309 = vmul.f32 %v5117, %v5277
          %v5310 = vmul.f32 %v5118, %v5278
          %v5311 = vmul.f32 %v5119, %v5279
          %v5312 = vmul.f32 %v5120, %v5280
          %v5313 = vmul.f32 %v5121, %v5281
          %v5314 = vmul.f32 %v5122, %v5282
          %v5315 = vmul.f32 %v5123, %v5283
          %v5316 = vmul.f32 %v5124, %v5284
          %v5317 = vmul.f32 %v5125, %v5285
          %v5318 = vmul.f32 %v5126, %v5286
          %v5319 = vmul.f32 %v5127, %v5287
          %v5320 = vmul.f32 %v5128, %v5288
          %v5321 = vmul.f32 %v5129, %v5289
          %v5322 = vmul.f32 %v5130, %v5290
          %v5323 = vmul.f32 %v5131, %v5291
          %v5324 = vmul.f32 %v5132, %v5292
          %v5325 = vmul.f32 %v5133, %v5293
          %v5326 = vmul.f32 %v5134, %v5294
          %v5327 = vadd.f32 %v1770, %v5295
          %v5328 = vadd.f32 %v1771, %v5296
          %v5329 = vadd.f32 %v1772, %v5297
          %v5330 = vadd.f32 %v1773, %v5298
          %v5331 = vadd.f32 %v1774, %v5299
          %v5332 = vadd.f32 %v1775, %v5300
          %v5333 = vadd.f32 %v1776, %v5301
          %v5334 = vadd.f32 %v1777, %v5302
          %v5335 = vadd.f32 %v1778, %v5303
          %v5336 = vadd.f32 %v1779, %v5304
          %v5337 = vadd.f32 %v1780, %v5305
          %v5338 = vadd.f32 %v1781, %v5306
          %v5339 = vadd.f32 %v1782, %v5307
          %v5340 = vadd.f32 %v1783, %v5308
          %v5341 = vadd.f32 %v1784, %v5309
          %v5342 = vadd.f32 %v1785, %v5310
          %v5343 = vadd.f32 %v1786, %v5311
          %v5344 = vadd.f32 %v1787, %v5312
          %v5345 = vadd.f32 %v1788, %v5313
          %v5346 = vadd.f32 %v1789, %v5314
          %v5347 = vadd.f32 %v1790, %v5315
          %v5348 = vadd.f32 %v1791, %v5316
          %v5349 = vadd.f32 %v1792, %v5317
          %v5350 = vadd.f32 %v1793, %v5318
          %v5351 = vadd.f32 %v1794, %v5319
          %v5352 = vadd.f32 %v1795, %v5320
          %v5353 = vadd.f32 %v1796, %v5321
          %v5354 = vadd.f32 %v1797, %v5322
          %v5355 = vadd.f32 %v1798, %v5323
          %v5356 = vadd.f32 %v1799, %v5324
          %v5357 = vadd.f32 %v1800, %v5325
          %v5358 = vadd.f32 %v1801, %v5326
        $region77: #{tpu_custom_call.1} parent=67 // loop_footer
          %s1769 = sadd.s32 1, %s1765
        $region78: #{tpu_custom_call.1} parent=67 // loop_footer_branch
          %1764 = sbr.rel target = $region74
        $region79: #{tpu_custom_call.1} parent=67 // loop_exit
          _
        %v5359 = vpack.c.bf16 %v1771, %v1770
        %v5360 = vpack.c.bf16 %v1773, %v1772
        %v5361 = vpack.c.bf16 %v1775, %v1774
        %v5362 = vpack.c.bf16 %v1777, %v1776
        %v5363 = vpack.c.bf16 %v1779, %v1778
        %v5364 = vpack.c.bf16 %v1781, %v1780
        %v5365 = vpack.c.bf16 %v1783, %v1782
        %v5366 = vpack.c.bf16 %v1785, %v1784
        %v5367 = vpack.c.bf16 %v1787, %v1786
        %v5368 = vpack.c.bf16 %v1789, %v1788
        %v5369 = vpack.c.bf16 %v1791, %v1790
        %v5370 = vpack.c.bf16 %v1793, %v1792
        %v5371 = vpack.c.bf16 %v1795, %v1794
        %v5372 = vpack.c.bf16 %v1797, %v1796
        %v5373 = vpack.c.bf16 %v1799, %v1798
        %v5374 = vpack.c.bf16 %v1801, %v1800
        %v5375 = vld [vmem:[%s9] sm:$0xf]
        %v5376 = vld [vmem:[%s9 + $0x4] sm:$0xf]
        %v5377 = vld [vmem:[%s9 + $0x8] sm:$0xf]
        %v5378 = vld [vmem:[%s9 + $0xc] sm:$0xf]
        %v5379 = vld [vmem:[%s9 + $0x10] sm:$0xf]
        %v5380 = vld [vmem:[%s9 + $0x14] sm:$0xf]
        %v5381 = vld [vmem:[%s9 + $0x18] sm:$0xf]
        %v5382 = vld [vmem:[%s9 + $0x1c] sm:$0xf]
        %v5383 = vld [vmem:[%s9 + $0x20] sm:$0xf]
        %v5384 = vld [vmem:[%s9 + $0x24] sm:$0xf]
        %v5385 = vld [vmem:[%s9 + $0x28] sm:$0xf]
        %v5386 = vld [vmem:[%s9 + $0x2c] sm:$0xf]
        %v5387 = vld [vmem:[%s9 + $0x30] sm:$0xf]
        %v5388 = vld [vmem:[%s9 + $0x34] sm:$0xf]
        %v5389 = vld [vmem:[%s9 + $0x38] sm:$0xf]
        %v5390 = vld [vmem:[%s9 + $0x3c] sm:$0xf]
        %v5391 = vld [vmem:[%s10] sm:$0xf]
        %v5392 = vld [vmem:[%s10 + $0x4] sm:$0xf]
        %v5393 = vld [vmem:[%s10 + $0x8] sm:$0xf]
        %v5394 = vld [vmem:[%s10 + $0xc] sm:$0xf]
        %v5395 = vld [vmem:[%s10 + $0x10] sm:$0xf]
        %v5396 = vld [vmem:[%s10 + $0x14] sm:$0xf]
        %v5397 = vld [vmem:[%s10 + $0x18] sm:$0xf]
        %v5398 = vld [vmem:[%s10 + $0x1c] sm:$0xf]
        %v5399 = vld [vmem:[%s10 + $0x20] sm:$0xf]
        %v5400 = vld [vmem:[%s10 + $0x24] sm:$0xf]
        %v5401 = vld [vmem:[%s10 + $0x28] sm:$0xf]
        %v5402 = vld [vmem:[%s10 + $0x2c] sm:$0xf]
        %v5403 = vld [vmem:[%s10 + $0x30] sm:$0xf]
        %v5404 = vld [vmem:[%s10 + $0x34] sm:$0xf]
        %v5405 = vld [vmem:[%s10 + $0x38] sm:$0xf]
        %v5406 = vld [vmem:[%s10 + $0x3c] sm:$0xf]
        %v5423 = vunpack.c.l.b16 %v5391
        %v5424 = vunpack.c.l.b16 %v5392
        %v5425 = vunpack.c.l.b16 %v5393
        %v5426 = vunpack.c.l.b16 %v5394
        %v5427 = vunpack.c.l.b16 %v5395
        %v5428 = vunpack.c.l.b16 %v5396
        %v5429 = vunpack.c.l.b16 %v5397
        %v5430 = vunpack.c.l.b16 %v5398
        %v5431 = vunpack.c.l.b16 %v5399
        %v5432 = vunpack.c.l.b16 %v5400
        %v5433 = vunpack.c.l.b16 %v5401
        %v5434 = vunpack.c.l.b16 %v5402
        %v5435 = vunpack.c.l.b16 %v5403
        %v5436 = vunpack.c.l.b16 %v5404
        %v5437 = vunpack.c.l.b16 %v5405
        %v5438 = vunpack.c.l.b16 %v5406
        %v5439 = vpack.c.b16 %v5424, %v5423
        %v5440 = vpack.c.b16 %v5426, %v5425
        %v5441 = vpack.c.b16 %v5428, %v5427
        %v5442 = vpack.c.b16 %v5430, %v5429
        %v5443 = vpack.c.b16 %v5432, %v5431
        %v5444 = vpack.c.b16 %v5434, %v5433
        %v5445 = vpack.c.b16 %v5436, %v5435
        %v5446 = vpack.c.b16 %v5438, %v5437
        %5455 = vmatprep.subr.bf16.mxu0 0
        %5456 = vmatpush1.bf16.msra.mxu0 %v5439
        %5457 = vmatprep.subr.bf16.mxu0 0
        %5458 = vmatpush1.bf16.msra.mxu0 %v5440
        %5459 = vmatprep.subr.bf16.mxu0 0
        %5460 = vmatpush1.bf16.msra.mxu0 %v5441
        %5461 = vmatprep.subr.bf16.mxu0 0
        %5462 = vmatpush1.bf16.msra.mxu0 %v5442
        %5463 = vmatprep.subr.bf16.mxu0 0
        %5464 = vmatpush1.bf16.msra.mxu0 %v5443
        %5465 = vmatprep.subr.bf16.mxu0 0
        %5466 = vmatpush1.bf16.msra.mxu0 %v5444
        %5467 = vmatprep.subr.bf16.mxu0 0
        %5468 = vmatpush1.bf16.msra.mxu0 %v5445
        %5469 = vmatprep.subr.bf16.mxu0 0
        %5470 = vmatpush1.bf16.msra.mxu0 %v5446
        %5471 = vmatprep.subr.bf16.mxu0 0
        %5472 = vmatpush1.bf16.msra.mxu0 0
        %5473 = vmatprep.subr.bf16.mxu0 0
        %5474 = vmatpush1.bf16.msra.mxu0 0
        %5475 = vmatprep.subr.bf16.mxu0 0
        %5476 = vmatpush1.bf16.msra.mxu0 0
        %5477 = vmatprep.subr.bf16.mxu0 0
        %5478 = vmatpush1.bf16.msra.mxu0 0
        %5479 = vmatprep.subr.bf16.mxu0 0
        %5480 = vmatpush1.bf16.msra.mxu0 0
        %5481 = vmatprep.subr.bf16.mxu0 0
        %5482 = vmatpush1.bf16.msra.mxu0 0
        %5483 = vmatprep.subr.bf16.mxu0 0
        %5484 = vmatpush1.bf16.msra.mxu0 0
        %5485 = vmatprep.subr.bf16.mxu0 0
        %5486 = vmatpush1.bf16.msra.mxu0 0
        %5487 = vmatprep.mubr.bf16.mxu0 0
        %5488 = vmatmul.mubr.bf16.gmra.mrb[0].mxu0 %v1267
        %v5489 = vpop.f32.mrb[0].mxu0
        %v5490 = vadd.f32 0.0, %v5489
        %v5491 = vpop.f32.mrb[0].mxu0
        %v5492 = vpop.f32.mrb[0].mxu0
        %v5493 = vadd.f32 0.0, %v5492
        %v5494 = vpop.f32.mrb[0].mxu0
        %5495 = vmatprep.mubr.bf16.mxu0 0
        %5496 = vmatmul.mubr.bf16.gmra.mrb[0].mxu0 %v1268
        %v5497 = vpop.f32.mrb[0].mxu0
        %v5498 = vadd.f32 0.0, %v5497
        %v5499 = vpop.f32.mrb[0].mxu0
        %v5500 = vpop.f32.mrb[0].mxu0
        %v5501 = vadd.f32 0.0, %v5500
        %v5502 = vpop.f32.mrb[0].mxu0
        %5503 = vmatprep.mubr.bf16.mxu0 0
        %5504 = vmatmul.mubr.bf16.gmra.mrb[0].mxu0 %v1269
        %v5505 = vpop.f32.mrb[0].mxu0
        %v5506 = vadd.f32 0.0, %v5505
        %v5507 = vpop.f32.mrb[0].mxu0
        %v5508 = vpop.f32.mrb[0].mxu0
        %v5509 = vadd.f32 0.0, %v5508
        %v5510 = vpop.f32.mrb[0].mxu0
        %5511 = vmatprep.mubr.bf16.mxu0 0
        %5512 = vmatmul.mubr.bf16.gmra.mrb[0].mxu0 %v1270
        %v5513 = vpop.f32.mrb[0].mxu0
        %v5514 = vadd.f32 0.0, %v5513
        %v5515 = vpop.f32.mrb[0].mxu0
        %v5516 = vpop.f32.mrb[0].mxu0
        %v5517 = vadd.f32 0.0, %v5516
        %v5518 = vpop.f32.mrb[0].mxu0
        %5519 = vmatprep.mubr.bf16.mxu0 0
        %5520 = vmatmul.mubr.bf16.gmra.mrb[0].mxu0 %v1271
        %v5521 = vpop.f32.mrb[0].mxu0
        %v5522 = vadd.f32 0.0, %v5521
        %v5523 = vpop.f32.mrb[0].mxu0
        %v5524 = vpop.f32.mrb[0].mxu0
        %v5525 = vadd.f32 0.0, %v5524
        %v5526 = vpop.f32.mrb[0].mxu0
        %5527 = vmatprep.mubr.bf16.mxu0 0
        %5528 = vmatmul.mubr.bf16.gmra.mrb[0].mxu0 %v1272
        %v5529 = vpop.f32.mrb[0].mxu0
        %v5530 = vadd.f32 0.0, %v5529
        %v5531 = vpop.f32.mrb[0].mxu0
        %v5532 = vpop.f32.mrb[0].mxu0
        %v5533 = vadd.f32 0.0, %v5532
        %v5534 = vpop.f32.mrb[0].mxu0
        %5535 = vmatprep.mubr.bf16.mxu0 0
        %5536 = vmatmul.mubr.bf16.gmra.mrb[0].mxu0 %v1273
        %v5537 = vpop.f32.mrb[0].mxu0
        %v5538 = vadd.f32 0.0, %v5537
        %v5539 = vpop.f32.mrb[0].mxu0
        %v5540 = vpop.f32.mrb[0].mxu0
        %v5541 = vadd.f32 0.0, %v5540
        %v5542 = vpop.f32.mrb[0].mxu0
        %5543 = vmatprep.mubr.bf16.mxu0 0
        %5544 = vmatmul.mubr.bf16.gmra.mrb[0].mxu0 %v1274
        %v5545 = vpop.f32.mrb[0].mxu0
        %v5546 = vadd.f32 0.0, %v5545
        %v5547 = vpop.f32.mrb[0].mxu0
        %v5548 = vpop.f32.mrb[0].mxu0
        %v5549 = vadd.f32 0.0, %v5548
        %v5550 = vpop.f32.mrb[0].mxu0
        %5551 = vmatprep.mubr.bf16.mxu0 0
        %5552 = vmatmul.mubr.bf16.gmra.mrb[0].mxu0 %v1275
        %v5553 = vpop.f32.mrb[0].mxu0
        %v5554 = vadd.f32 0.0, %v5553
        %v5555 = vpop.f32.mrb[0].mxu0
        %v5556 = vpop.f32.mrb[0].mxu0
        %v5557 = vadd.f32 0.0, %v5556
        %v5558 = vpop.f32.mrb[0].mxu0
        %5559 = vmatprep.mubr.bf16.mxu0 0
        %5560 = vmatmul.mubr.bf16.gmra.mrb[0].mxu0 %v1276
        %v5561 = vpop.f32.mrb[0].mxu0
        %v5562 = vadd.f32 0.0, %v5561
        %v5563 = vpop.f32.mrb[0].mxu0
        %v5564 = vpop.f32.mrb[0].mxu0
        %v5565 = vadd.f32 0.0, %v5564
        %v5566 = vpop.f32.mrb[0].mxu0
        %5567 = vmatprep.mubr.bf16.mxu0 0
        %5568 = vmatmul.mubr.bf16.gmra.mrb[0].mxu0 %v1277
        %v5569 = vpop.f32.mrb[0].mxu0
        %v5570 = vadd.f32 0.0, %v5569
        %v5571 = vpop.f32.mrb[0].mxu0
        %v5572 = vpop.f32.mrb[0].mxu0
        %v5573 = vadd.f32 0.0, %v5572
        %v5574 = vpop.f32.mrb[0].mxu0
        %5575 = vmatprep.mubr.bf16.mxu0 0
        %5576 = vmatmul.mubr.bf16.gmra.mrb[0].mxu0 %v1278
        %v5577 = vpop.f32.mrb[0].mxu0
        %v5578 = vadd.f32 0.0, %v5577
        %v5579 = vpop.f32.mrb[0].mxu0
        %v5580 = vpop.f32.mrb[0].mxu0
        %v5581 = vadd.f32 0.0, %v5580
        %v5582 = vpop.f32.mrb[0].mxu0
        %5583 = vmatprep.mubr.bf16.mxu0 0
        %5584 = vmatmul.mubr.bf16.gmra.mrb[0].mxu0 %v1279
        %v5585 = vpop.f32.mrb[0].mxu0
        %v5586 = vadd.f32 0.0, %v5585
        %v5587 = vpop.f32.mrb[0].mxu0
        %v5588 = vpop.f32.mrb[0].mxu0
        %v5589 = vadd.f32 0.0, %v5588
        %v5590 = vpop.f32.mrb[0].mxu0
        %5591 = vmatprep.mubr.bf16.mxu0 0
        %5592 = vmatmul.mubr.bf16.gmra.mrb[0].mxu0 %v1280
        %v5593 = vpop.f32.mrb[0].mxu0
        %v5594 = vadd.f32 0.0, %v5593
        %v5595 = vpop.f32.mrb[0].mxu0
        %v5596 = vpop.f32.mrb[0].mxu0
        %v5597 = vadd.f32 0.0, %v5596
        %v5598 = vpop.f32.mrb[0].mxu0
        %5599 = vmatprep.mubr.bf16.mxu0 0
        %5600 = vmatmul.mubr.bf16.gmra.mrb[0].mxu0 %v1281
        %v5601 = vpop.f32.mrb[0].mxu0
        %v5602 = vadd.f32 0.0, %v5601
        %v5603 = vpop.f32.mrb[0].mxu0
        %v5604 = vpop.f32.mrb[0].mxu0
        %v5605 = vadd.f32 0.0, %v5604
        %v5606 = vpop.f32.mrb[0].mxu0
        %5607 = vmatprep.mubr.bf16.mxu0 0
        %5608 = vmatmul.mubr.bf16.gmra.mrb[0].mxu0 %v1282
        %v5609 = vpop.f32.mrb[0].mxu0
        %v5610 = vadd.f32 0.0, %v5609
        %v5611 = vpop.f32.mrb[0].mxu0
        %v5612 = vpop.f32.mrb[0].mxu0
        %v5613 = vadd.f32 0.0, %v5612
        %v5614 = vpop.f32.mrb[0].mxu0
        %5615 = vdwg.mxu0
        %v5632 = vunpack.c.l.b16 %v5375
        %v5633 = vunpack.c.l.b16 %v5376
        %v5634 = vunpack.c.l.b16 %v5377
        %v5635 = vunpack.c.l.b16 %v5378
        %v5636 = vunpack.c.l.b16 %v5379
        %v5637 = vunpack.c.l.b16 %v5380
        %v5638 = vunpack.c.l.b16 %v5381
        %v5639 = vunpack.c.l.b16 %v5382
        %v5640 = vunpack.c.l.b16 %v5383
        %v5641 = vunpack.c.l.b16 %v5384
        %v5642 = vunpack.c.l.b16 %v5385
        %v5643 = vunpack.c.l.b16 %v5386
        %v5644 = vunpack.c.l.b16 %v5387
        %v5645 = vunpack.c.l.b16 %v5388
        %v5646 = vunpack.c.l.b16 %v5389
        %v5647 = vunpack.c.l.b16 %v5390
        %v5648 = vpack.c.b16 %v5633, %v5632
        %v5649 = vpack.c.b16 %v5635, %v5634
        %v5650 = vpack.c.b16 %v5637, %v5636
        %v5651 = vpack.c.b16 %v5639, %v5638
        %v5652 = vpack.c.b16 %v5641, %v5640
        %v5653 = vpack.c.b16 %v5643, %v5642
        %v5654 = vpack.c.b16 %v5645, %v5644
        %v5655 = vpack.c.b16 %v5647, %v5646
        %5664 = vmatprep.subr.bf16.mxu0 0
        %5665 = vmatpush1.bf16.msra.mxu0 %v5648
        %5666 = vmatprep.subr.bf16.mxu0 0
        %5667 = vmatpush1.bf16.msra.mxu0 %v5649
        %5668 = vmatprep.subr.bf16.mxu0 0
        %5669 = vmatpush1.bf16.msra.mxu0 %v5650
        %5670 = vmatprep.subr.bf16.mxu0 0
        %5671 = vmatpush1.bf16.msra.mxu0 %v5651
        %5672 = vmatprep.subr.bf16.mxu0 0
        %5673 = vmatpush1.bf16.msra.mxu0 %v5652
        %5674 = vmatprep.subr.bf16.mxu0 0
        %5675 = vmatpush1.bf16.msra.mxu0 %v5653
        %5676 = vmatprep.subr.bf16.mxu0 0
        %5677 = vmatpush1.bf16.msra.mxu0 %v5654
        %5678 = vmatprep.subr.bf16.mxu0 0
        %5679 = vmatpush1.bf16.msra.mxu0 %v5655
        %5680 = vmatprep.subr.bf16.mxu0 0
        %5681 = vmatpush1.bf16.msra.mxu0 0
        %5682 = vmatprep.subr.bf16.mxu0 0
        %5683 = vmatpush1.bf16.msra.mxu0 0
        %5684 = vmatprep.subr.bf16.mxu0 0
        %5685 = vmatpush1.bf16.msra.mxu0 0
        %5686 = vmatprep.subr.bf16.mxu0 0
        %5687 = vmatpush1.bf16.msra.mxu0 0
        %5688 = vmatprep.subr.bf16.mxu0 0
        %5689 = vmatpush1.bf16.msra.mxu0 0
        %5690 = vmatprep.subr.bf16.mxu0 0
        %5691 = vmatpush1.bf16.msra.mxu0 0
        %5692 = vmatprep.subr.bf16.mxu0 0
        %5693 = vmatpush1.bf16.msra.mxu0 0
        %5694 = vmatprep.subr.bf16.mxu0 0
        %5695 = vmatpush1.bf16.msra.mxu0 0
        %5696 = vmatprep.mubr.bf16.mxu0 0
        %5697 = vmatmul.mubr.bf16.gmra.mrb[0].mxu0 %v5359
        %v5698 = vpop.f32.mrb[0].mxu0
        %v5699 = vadd.f32 %v5490, %v5698
        %v5700 = vpop.f32.mrb[0].mxu0
        %v5701 = vpop.f32.mrb[0].mxu0
        %v5702 = vadd.f32 %v5493, %v5701
        %v5703 = vpop.f32.mrb[0].mxu0
        %5704 = vmatprep.mubr.bf16.mxu0 0
        %5705 = vmatmul.mubr.bf16.gmra.mrb[0].mxu0 %v5360
        %v5706 = vpop.f32.mrb[0].mxu0
        %v5707 = vadd.f32 %v5498, %v5706
        %v5708 = vpop.f32.mrb[0].mxu0
        %v5709 = vpop.f32.mrb[0].mxu0
        %v5710 = vadd.f32 %v5501, %v5709
        %v5711 = vpop.f32.mrb[0].mxu0
        %5712 = vmatprep.mubr.bf16.mxu0 0
        %5713 = vmatmul.mubr.bf16.gmra.mrb[0].mxu0 %v5361
        %v5714 = vpop.f32.mrb[0].mxu0
        %v5715 = vadd.f32 %v5506, %v5714
        %v5716 = vpop.f32.mrb[0].mxu0
        %v5717 = vpop.f32.mrb[0].mxu0
        %v5718 = vadd.f32 %v5509, %v5717
        %v5719 = vpop.f32.mrb[0].mxu0
        %5720 = vmatprep.mubr.bf16.mxu0 0
        %5721 = vmatmul.mubr.bf16.gmra.mrb[0].mxu0 %v5362
        %v5722 = vpop.f32.mrb[0].mxu0
        %v5723 = vadd.f32 %v5514, %v5722
        %v5724 = vpop.f32.mrb[0].mxu0
        %v5725 = vpop.f32.mrb[0].mxu0
        %v5726 = vadd.f32 %v5517, %v5725
        %v5727 = vpop.f32.mrb[0].mxu0
        %5728 = vmatprep.mubr.bf16.mxu0 0
        %5729 = vmatmul.mubr.bf16.gmra.mrb[0].mxu0 %v5363
        %v5730 = vpop.f32.mrb[0].mxu0
        %v5731 = vadd.f32 %v5522, %v5730
        %v5732 = vpop.f32.mrb[0].mxu0
        %v5733 = vpop.f32.mrb[0].mxu0
        %v5734 = vadd.f32 %v5525, %v5733
        %v5735 = vpop.f32.mrb[0].mxu0
        %5736 = vmatprep.mubr.bf16.mxu0 0
        %5737 = vmatmul.mubr.bf16.gmra.mrb[0].mxu0 %v5364
        %v5738 = vpop.f32.mrb[0].mxu0
        %v5739 = vadd.f32 %v5530, %v5738
        %v5740 = vpop.f32.mrb[0].mxu0
        %v5741 = vpop.f32.mrb[0].mxu0
        %v5742 = vadd.f32 %v5533, %v5741
        %v5743 = vpop.f32.mrb[0].mxu0
        %5744 = vmatprep.mubr.bf16.mxu0 0
        %5745 = vmatmul.mubr.bf16.gmra.mrb[0].mxu0 %v5365
        %v5746 = vpop.f32.mrb[0].mxu0
        %v5747 = vadd.f32 %v5538, %v5746
        %v5748 = vpop.f32.mrb[0].mxu0
        %v5749 = vpop.f32.mrb[0].mxu0
        %v5750 = vadd.f32 %v5541, %v5749
        %v5751 = vpop.f32.mrb[0].mxu0
        %5752 = vmatprep.mubr.bf16.mxu0 0
        %5753 = vmatmul.mubr.bf16.gmra.mrb[0].mxu0 %v5366
        %v5754 = vpop.f32.mrb[0].mxu0
        %v5755 = vadd.f32 %v5546, %v5754
        %v5756 = vpop.f32.mrb[0].mxu0
        %v5757 = vpop.f32.mrb[0].mxu0
        %v5758 = vadd.f32 %v5549, %v5757
        %v5759 = vpop.f32.mrb[0].mxu0
        %5760 = vmatprep.mubr.bf16.mxu0 0
        %5761 = vmatmul.mubr.bf16.gmra.mrb[0].mxu0 %v5367
        %v5762 = vpop.f32.mrb[0].mxu0
        %v5763 = vadd.f32 %v5554, %v5762
        %v5764 = vpop.f32.mrb[0].mxu0
        %v5765 = vpop.f32.mrb[0].mxu0
        %v5766 = vadd.f32 %v5557, %v5765
        %v5767 = vpop.f32.mrb[0].mxu0
        %5768 = vmatprep.mubr.bf16.mxu0 0
        %5769 = vmatmul.mubr.bf16.gmra.mrb[0].mxu0 %v5368
        %v5770 = vpop.f32.mrb[0].mxu0
        %v5771 = vadd.f32 %v5562, %v5770
        %v5772 = vpop.f32.mrb[0].mxu0
        %v5773 = vpop.f32.mrb[0].mxu0
        %v5774 = vadd.f32 %v5565, %v5773
        %v5775 = vpop.f32.mrb[0].mxu0
        %5776 = vmatprep.mubr.bf16.mxu0 0
        %5777 = vmatmul.mubr.bf16.gmra.mrb[0].mxu0 %v5369
        %v5778 = vpop.f32.mrb[0].mxu0
        %v5779 = vadd.f32 %v5570, %v5778
        %v5780 = vpop.f32.mrb[0].mxu0
        %v5781 = vpop.f32.mrb[0].mxu0
        %v5782 = vadd.f32 %v5573, %v5781
        %v5783 = vpop.f32.mrb[0].mxu0
        %5784 = vmatprep.mubr.bf16.mxu0 0
        %5785 = vmatmul.mubr.bf16.gmra.mrb[0].mxu0 %v5370
        %v5786 = vpop.f32.mrb[0].mxu0
        %v5787 = vadd.f32 %v5578, %v5786
        %v5788 = vpop.f32.mrb[0].mxu0
        %v5789 = vpop.f32.mrb[0].mxu0
        %v5790 = vadd.f32 %v5581, %v5789
        %v5791 = vpop.f32.mrb[0].mxu0
        %5792 = vmatprep.mubr.bf16.mxu0 0
        %5793 = vmatmul.mubr.bf16.gmra.mrb[0].mxu0 %v5371
        %v5794 = vpop.f32.mrb[0].mxu0
        %v5795 = vadd.f32 %v5586, %v5794
        %v5796 = vpop.f32.mrb[0].mxu0
        %v5797 = vpop.f32.mrb[0].mxu0
        %v5798 = vadd.f32 %v5589, %v5797
        %v5799 = vpop.f32.mrb[0].mxu0
        %5800 = vmatprep.mubr.bf16.mxu0 0
        %5801 = vmatmul.mubr.bf16.gmra.mrb[0].mxu0 %v5372
        %v5802 = vpop.f32.mrb[0].mxu0
        %v5803 = vadd.f32 %v5594, %v5802
        %v5804 = vpop.f32.mrb[0].mxu0
        %v5805 = vpop.f32.mrb[0].mxu0
        %v5806 = vadd.f32 %v5597, %v5805
        %v5807 = vpop.f32.mrb[0].mxu0
        %5808 = vmatprep.mubr.bf16.mxu0 0
        %5809 = vmatmul.mubr.bf16.gmra.mrb[0].mxu0 %v5373
        %v5810 = vpop.f32.mrb[0].mxu0
        %v5811 = vadd.f32 %v5602, %v5810
        %v5812 = vpop.f32.mrb[0].mxu0
        %v5813 = vpop.f32.mrb[0].mxu0
        %v5814 = vadd.f32 %v5605, %v5813
        %v5815 = vpop.f32.mrb[0].mxu0
        %5816 = vmatprep.mubr.bf16.mxu0 0
        %5817 = vmatmul.mubr.bf16.gmra.mrb[0].mxu0 %v5374
        %v5818 = vpop.f32.mrb[0].mxu0
        %v5819 = vadd.f32 %v5610, %v5818
        %v5820 = vpop.f32.mrb[0].mxu0
        %v5821 = vpop.f32.mrb[0].mxu0
        %v5822 = vadd.f32 %v5613, %v5821
        %v5823 = vpop.f32.mrb[0].mxu0
        %5824 = vdwg.mxu0
        %v5825 = vld [vmem:[%s11] sm:$0x1]
        %v5827 = vlaneseq
        %v5828 = vshrl.u32 %v5827, 7
        %v5829 = vsub.s32 0, %v5828
        %v5830 = vrot.slane %v5825, %v5829
        %v5832 = vadd.f32 %v5699, %v5830
        %v5833 = vadd.f32 %v5702, %v5830
        %v5834 = vadd.f32 %v5707, %v5830
        %v5835 = vadd.f32 %v5710, %v5830
        %v5836 = vadd.f32 %v5715, %v5830
        %v5837 = vadd.f32 %v5718, %v5830
        %v5838 = vadd.f32 %v5723, %v5830
        %v5839 = vadd.f32 %v5726, %v5830
        %v5840 = vadd.f32 %v5731, %v5830
        %v5841 = vadd.f32 %v5734, %v5830
        %v5842 = vadd.f32 %v5739, %v5830
        %v5843 = vadd.f32 %v5742, %v5830
        %v5844 = vadd.f32 %v5747, %v5830
        %v5845 = vadd.f32 %v5750, %v5830
        %v5846 = vadd.f32 %v5755, %v5830
        %v5847 = vadd.f32 %v5758, %v5830
        %v5848 = vadd.f32 %v5763, %v5830
        %v5849 = vadd.f32 %v5766, %v5830
        %v5850 = vadd.f32 %v5771, %v5830
        %v5851 = vadd.f32 %v5774, %v5830
        %v5852 = vadd.f32 %v5779, %v5830
        %v5853 = vadd.f32 %v5782, %v5830
        %v5854 = vadd.f32 %v5787, %v5830
        %v5855 = vadd.f32 %v5790, %v5830
        %v5856 = vadd.f32 %v5795, %v5830
        %v5857 = vadd.f32 %v5798, %v5830
        %v5858 = vadd.f32 %v5803, %v5830
        %v5859 = vadd.f32 %v5806, %v5830
        %v5860 = vadd.f32 %v5811, %v5830
        %v5861 = vadd.f32 %v5814, %v5830
        %v5862 = vadd.f32 %v5819, %v5830
        %v5863 = vadd.f32 %v5822, %v5830
        %v5864 = vsub.f32 0.0, %v5832
        %v5865 = vsub.f32 0.0, %v5833
        %v5866 = vsub.f32 0.0, %v5834
        %v5867 = vsub.f32 0.0, %v5835
        %v5868 = vsub.f32 0.0, %v5836
        %v5869 = vsub.f32 0.0, %v5837
        %v5870 = vsub.f32 0.0, %v5838
        %v5871 = vsub.f32 0.0, %v5839
        %v5872 = vsub.f32 0.0, %v5840
        %v5873 = vsub.f32 0.0, %v5841
        %v5874 = vsub.f32 0.0, %v5842
        %v5875 = vsub.f32 0.0, %v5843
        %v5876 = vsub.f32 0.0, %v5844
        %v5877 = vsub.f32 0.0, %v5845
        %v5878 = vsub.f32 0.0, %v5846
        %v5879 = vsub.f32 0.0, %v5847
        %v5880 = vsub.f32 0.0, %v5848
        %v5881 = vsub.f32 0.0, %v5849
        %v5882 = vsub.f32 0.0, %v5850
        %v5883 = vsub.f32 0.0, %v5851
        %v5884 = vsub.f32 0.0, %v5852
        %v5885 = vsub.f32 0.0, %v5853
        %v5886 = vsub.f32 0.0, %v5854
        %v5887 = vsub.f32 0.0, %v5855
        %v5888 = vsub.f32 0.0, %v5856
        %v5889 = vsub.f32 0.0, %v5857
        %v5890 = vsub.f32 0.0, %v5858
        %v5891 = vsub.f32 0.0, %v5859
        %v5892 = vsub.f32 0.0, %v5860
        %v5893 = vsub.f32 0.0, %v5861
        %v5894 = vsub.f32 0.0, %v5862
        %v5895 = vsub.f32 0.0, %v5863
        %v5896 = vmul.f32 %v5864, 1.442695
        %v5897 = vpow.pop %v5896
        %v5898 = vmul.f32 %v5865, 1.442695
        %v5899 = vpow.pop %v5898
        %v5900 = vmul.f32 %v5866, 1.442695
        %v5901 = vpow.pop %v5900
        %v5902 = vmul.f32 %v5867, 1.442695
        %v5903 = vpow.pop %v5902
        %v5904 = vmul.f32 %v5868, 1.442695
        %v5905 = vpow.pop %v5904
        %v5906 = vmul.f32 %v5869, 1.442695
        %v5907 = vpow.pop %v5906
        %v5908 = vmul.f32 %v5870, 1.442695
        %v5909 = vpow.pop %v5908
        %v5910 = vmul.f32 %v5871, 1.442695
        %v5911 = vpow.pop %v5910
        %v5912 = vmul.f32 %v5872, 1.442695
        %v5913 = vpow.pop %v5912
        %v5914 = vmul.f32 %v5873, 1.442695
        %v5915 = vpow.pop %v5914
        %v5916 = vmul.f32 %v5874, 1.442695
        %v5917 = vpow.pop %v5916
        %v5918 = vmul.f32 %v5875, 1.442695
        %v5919 = vpow.pop %v5918
        %v5920 = vmul.f32 %v5876, 1.442695
        %v5921 = vpow.pop %v5920
        %v5922 = vmul.f32 %v5877, 1.442695
        %v5923 = vpow.pop %v5922
        %v5924 = vmul.f32 %v5878, 1.442695
        %v5925 = vpow.pop %v5924
        %v5926 = vmul.f32 %v5879, 1.442695
        %v5927 = vpow.pop %v5926
        %v5928 = vmul.f32 %v5880, 1.442695
        %v5929 = vpow.pop %v5928
        %v5930 = vmul.f32 %v5881, 1.442695
        %v5931 = vpow.pop %v5930
        %v5932 = vmul.f32 %v5882, 1.442695
        %v5933 = vpow.pop %v5932
        %v5934 = vmul.f32 %v5883, 1.442695
        %v5935 = vpow.pop %v5934
        %v5936 = vmul.f32 %v5884, 1.442695
        %v5937 = vpow.pop %v5936
        %v5938 = vmul.f32 %v5885, 1.442695
        %v5939 = vpow.pop %v5938
        %v5940 = vmul.f32 %v5886, 1.442695
        %v5941 = vpow.pop %v5940
        %v5942 = vmul.f32 %v5887, 1.442695
        %v5943 = vpow.pop %v5942
        %v5944 = vmul.f32 %v5888, 1.442695
        %v5945 = vpow.pop %v5944
        %v5946 = vmul.f32 %v5889, 1.442695
        %v5947 = vpow.pop %v5946
        %v5948 = vmul.f32 %v5890, 1.442695
        %v5949 = vpow.pop %v5948
        %v5950 = vmul.f32 %v5891, 1.442695
        %v5951 = vpow.pop %v5950
        %v5952 = vmul.f32 %v5892, 1.442695
        %v5953 = vpow.pop %v5952
        %v5954 = vmul.f32 %v5893, 1.442695
        %v5955 = vpow.pop %v5954
        %v5956 = vmul.f32 %v5894, 1.442695
        %v5957 = vpow.pop %v5956
        %v5958 = vmul.f32 %v5895, 1.442695
        %v5959 = vpow.pop %v5958
        %v5960 = vadd.f32 %v5897, 1.0
        %v5961 = vadd.f32 %v5899, 1.0
        %v5962 = vadd.f32 %v5901, 1.0
        %v5963 = vadd.f32 %v5903, 1.0
        %v5964 = vadd.f32 %v5905, 1.0
        %v5965 = vadd.f32 %v5907, 1.0
        %v5966 = vadd.f32 %v5909, 1.0
        %v5967 = vadd.f32 %v5911, 1.0
        %v5968 = vadd.f32 %v5913, 1.0
        %v5969 = vadd.f32 %v5915, 1.0
        %v5970 = vadd.f32 %v5917, 1.0
        %v5971 = vadd.f32 %v5919, 1.0
        %v5972 = vadd.f32 %v5921, 1.0
        %v5973 = vadd.f32 %v5923, 1.0
        %v5974 = vadd.f32 %v5925, 1.0
        %v5975 = vadd.f32 %v5927, 1.0
        %v5976 = vadd.f32 %v5929, 1.0
        %v5977 = vadd.f32 %v5931, 1.0
        %v5978 = vadd.f32 %v5933, 1.0
        %v5979 = vadd.f32 %v5935, 1.0
        %v5980 = vadd.f32 %v5937, 1.0
        %v5981 = vadd.f32 %v5939, 1.0
        %v5982 = vadd.f32 %v5941, 1.0
        %v5983 = vadd.f32 %v5943, 1.0
        %v5984 = vadd.f32 %v5945, 1.0
        %v5985 = vadd.f32 %v5947, 1.0
        %v5986 = vadd.f32 %v5949, 1.0
        %v5987 = vadd.f32 %v5951, 1.0
        %v5988 = vadd.f32 %v5953, 1.0
        %v5989 = vadd.f32 %v5955, 1.0
        %v5990 = vadd.f32 %v5957, 1.0
        %v5991 = vadd.f32 %v5959, 1.0
        %v5992 = vrcp.pop %v5960
        %v5993 = vrcp.pop %v5961
        %v5994 = vrcp.pop %v5962
        %v5995 = vrcp.pop %v5963
        %v5996 = vrcp.pop %v5964
        %v5997 = vrcp.pop %v5965
        %v5998 = vrcp.pop %v5966
        %v5999 = vrcp.pop %v5967
        %v6000 = vrcp.pop %v5968
        %v6001 = vrcp.pop %v5969
        %v6002 = vrcp.pop %v5970
        %v6003 = vrcp.pop %v5971
        %v6004 = vrcp.pop %v5972
        %v6005 = vrcp.pop %v5973
        %v6006 = vrcp.pop %v5974
        %v6007 = vrcp.pop %v5975
        %v6008 = vrcp.pop %v5976
        %v6009 = vrcp.pop %v5977
        %v6010 = vrcp.pop %v5978
        %v6011 = vrcp.pop %v5979
        %v6012 = vrcp.pop %v5980
        %v6013 = vrcp.pop %v5981
        %v6014 = vrcp.pop %v5982
        %v6015 = vrcp.pop %v5983
        %v6016 = vrcp.pop %v5984
        %v6017 = vrcp.pop %v5985
        %v6018 = vrcp.pop %v5986
        %v6019 = vrcp.pop %v5987
        %v6020 = vrcp.pop %v5988
        %v6021 = vrcp.pop %v5989
        %v6022 = vrcp.pop %v5990
        %v6023 = vrcp.pop %v5991
        %v6024 = vmul.f32 %v5832, %v5992
        %v6025 = vmul.f32 %v5833, %v5993
        %v6026 = vmul.f32 %v5834, %v5994
        %v6027 = vmul.f32 %v5835, %v5995
        %v6028 = vmul.f32 %v5836, %v5996
        %v6029 = vmul.f32 %v5837, %v5997
        %v6030 = vmul.f32 %v5838, %v5998
        %v6031 = vmul.f32 %v5839, %v5999
        %v6032 = vmul.f32 %v5840, %v6000
        %v6033 = vmul.f32 %v5841, %v6001
        %v6034 = vmul.f32 %v5842, %v6002
        %v6035 = vmul.f32 %v5843, %v6003
        %v6036 = vmul.f32 %v5844, %v6004
        %v6037 = vmul.f32 %v5845, %v6005
        %v6038 = vmul.f32 %v5846, %v6006
        %v6039 = vmul.f32 %v5847, %v6007
        %v6040 = vmul.f32 %v5848, %v6008
        %v6041 = vmul.f32 %v5849, %v6009
        %v6042 = vmul.f32 %v5850, %v6010
        %v6043 = vmul.f32 %v5851, %v6011
        %v6044 = vmul.f32 %v5852, %v6012
        %v6045 = vmul.f32 %v5853, %v6013
        %v6046 = vmul.f32 %v5854, %v6014
        %v6047 = vmul.f32 %v5855, %v6015
        %v6048 = vmul.f32 %v5856, %v6016
        %v6049 = vmul.f32 %v5857, %v6017
        %v6050 = vmul.f32 %v5858, %v6018
        %v6051 = vmul.f32 %v5859, %v6019
        %v6052 = vmul.f32 %v5860, %v6020
        %v6053 = vmul.f32 %v5861, %v6021
        %v6054 = vmul.f32 %v5862, %v6022
        %v6055 = vmul.f32 %v5863, %v6023
        %6056 = vst [vmem:[%s421] sm:$0xff] %v6024
        %6057 = vst [vmem:[%s421 + $0x8] sm:$0xff] %v6025
        %6058 = vst [vmem:[%s421 + $0x10] sm:$0xff] %v6026
        %6059 = vst [vmem:[%s421 + $0x18] sm:$0xff] %v6027
        %6060 = vst [vmem:[%s421 + $0x20] sm:$0xff] %v6028
        %6061 = vst [vmem:[%s421 + $0x28] sm:$0xff] %v6029
        %6062 = vst [vmem:[%s421 + $0x30] sm:$0xff] %v6030
        %6063 = vst [vmem:[%s421 + $0x38] sm:$0xff] %v6031
        %6064 = vst [vmem:[%s421 + $0x40] sm:$0xff] %v6032
        %6065 = vst [vmem:[%s421 + $0x48] sm:$0xff] %v6033
        %6066 = vst [vmem:[%s421 + $0x50] sm:$0xff] %v6034
        %6067 = vst [vmem:[%s421 + $0x58] sm:$0xff] %v6035
        %6068 = vst [vmem:[%s421 + $0x60] sm:$0xff] %v6036
        %6069 = vst [vmem:[%s421 + $0x68] sm:$0xff] %v6037
        %6070 = vst [vmem:[%s421 + $0x70] sm:$0xff] %v6038
        %6071 = vst [vmem:[%s421 + $0x78] sm:$0xff] %v6039
        %6072 = vst [vmem:[%s421 + $0x80] sm:$0xff] %v6040
        %6073 = vst [vmem:[%s421 + $0x88] sm:$0xff] %v6041
        %6074 = vst [vmem:[%s421 + $0x90] sm:$0xff] %v6042
        %6075 = vst [vmem:[%s421 + $0x98] sm:$0xff] %v6043
        %6076 = vst [vmem:[%s421 + $0xa0] sm:$0xff] %v6044
        %6077 = vst [vmem:[%s421 + $0xa8] sm:$0xff] %v6045
        %6078 = vst [vmem:[%s421 + $0xb0] sm:$0xff] %v6046
        %6079 = vst [vmem:[%s421 + $0xb8] sm:$0xff] %v6047
        %6080 = vst [vmem:[%s421 + $0xc0] sm:$0xff] %v6048
        %6081 = vst [vmem:[%s421 + $0xc8] sm:$0xff] %v6049
        %6082 = vst [vmem:[%s421 + $0xd0] sm:$0xff] %v6050
        %6083 = vst [vmem:[%s421 + $0xd8] sm:$0xff] %v6051
        %6084 = vst [vmem:[%s421 + $0xe0] sm:$0xff] %v6052
        %6085 = vst [vmem:[%s421 + $0xe8] sm:$0xff] %v6053
        %6086 = vst [vmem:[%s421 + $0xf0] sm:$0xff] %v6054
        %6087 = vst [vmem:[%s421 + $0xf8] sm:$0xff] %v6055
        %s6088 = sand.u32 %s292, 1
        %s6089 = scalar_lea.sflag [#allocation5], %s6088
        %s6090 = sand.u32 %s292, 1
        %s6091 = smul.addr %s6090, 256
        %s6092 = scalar_lea.vmem [#allocation6], %s6091
        // Predicated region
        $region80: #{tpu_custom_call.1} parent=67 // pred_check
          %p6093 = pneg %p302
        $region81: #{tpu_custom_call.1} parent=67 // pred_check_branch
          %6095 = sbr.rel (%p6093) target = $region83
        $region82: #{tpu_custom_call.1} parent=67 // pred_region
          %s6097 = ssub.s32 4096, 4096
          %6098 = vsyncadd %s6089, %s6097
          %s6099 = smul.addr %s27, 32
          %s6100 = smul.addr %s6099, 128
          %s6101 = scalar_lea.hbm %s12, %s6100
          %s6102 = sshll.u32 %s6092, 4
          %s6103 = int_to_ptr.vmem [resolvable:$true] %s6102
          %6108 = dma.vmem_to_hbm [thread:$0]  %s6103, 4096, %s6101, %s6089, 128, 128, 8
        $region83: #{tpu_custom_call.1} parent=67 // pred_fallthru
          _
      $region68: #{tpu_custom_call.1} parent=5 // pred_fallthru
        _
      %p6109 = scmp.le.s32.totalorder 2, %s22
      // Predicated region
      $region84: #{tpu_custom_call.1} parent=5 // pred_check
        %p6110 = pneg %p6109
      $region85: #{tpu_custom_call.1} parent=5 // pred_check_branch
        %6112 = sbr.rel (%p6110) target = $region87
      $region86: #{tpu_custom_call.1} parent=5 // pred_region
        %s6113 = ssub.s32 %s22, 2
        // Predicated region
        $region88: #{tpu_custom_call.1} parent=86 // pred_check
          %p6114 = pneg %p308
        $region89: #{tpu_custom_call.1} parent=86 // pred_check_branch
          %6116 = sbr.rel (%p6114) target = $region91
        $region90: #{tpu_custom_call.1} parent=86 // pred_region
          %s6117 = sand.u32 %s293, 1
          %s6118 = scalar_lea.sflag [#allocation5], %s6117
          %s6119 = sand.u32 %s293, 1
          %s6120 = smul.addr %s6119, 256
          %s6121 = scalar_lea.vmem [#allocation6], %s6120
          %6122 = dma.done %s6118, 4096
        $region91: #{tpu_custom_call.1} parent=86 // pred_fallthru
          _
      $region87: #{tpu_custom_call.1} parent=5 // pred_fallthru
        _
    $region6: #{tpu_custom_call.1} parent=1 // loop_footer
      %s26 = sadd.s32 1, %s22
    $region7: #{tpu_custom_call.1} parent=1 // loop_footer_branch
      %21 = sbr.rel target = $region3
    $region8: #{tpu_custom_call.1} parent=1 // loop_exit
      _
    %6123 = vsyncpa [#allocation4], 1
    %s6124 = scalar_lea.sflag [#allocation4], 1
    %6125 = vsyncpa %s6124, 1
    %6126 = vsyncpa [#allocation5], 1
    %s6127 = scalar_lea.sflag [#allocation5], 1
    %6128 = vsyncpa %s6127, 1

</llo_original>
